<compile_context>
chip_gen: v6e
topology: v6e:2x2x1
jax: 0.10.0
libtpu: 0.0.40
codegen_flags: <defaults>
</compile_context>

<pallas_src>
import math

import jax
import jax.numpy as jnp
import numpy as np
from jax import lax
from jax.experimental import pallas as pl
from jax.experimental.pallas import tpu as pltpu

EPS = 1e-5  # PyTorch InstanceNorm2d default


def make_resnet_block_attn_kernel(C, H, W):
    """Build the fused resnet_block_attn kernel for a fixed (C, H, W)."""

    def reflect_pad1(y):
        # ReflectionPad2d(1) on a (C, H, W) slab.
        yp = jnp.concatenate([y[:, 1:2, :], y, y[:, H - 2:H - 1, :]], axis=1)
        yp = jnp.concatenate([yp[:, :, 1:2], yp, yp[:, :, W - 2:W - 1]], axis=2)
        return yp

    def shifted_windows(xpad):
        # Hoist the 9 shifted (C, H, W) windows out of the output-channel loop.
        wins = []
        for dy in range(3):
            for dx in range(3):
                wins.append(xpad[:, dy:dy + H, dx:dx + W])
        # Per-(input-channel, tap) planes: cheap leading-dim squeezes, each
        # reused by all C output channels.
        return [[wins[t][c] for t in range(9)] for c in range(C)]

    def conv_in_norm(planes, w_ref, relu):
        # 3x3 conv (weights as SMEM scalars, broadcast FMAs on the VPU) with
        # the non-affine InstanceNorm fused into the per-channel epilogue.
        # Conv bias is intentionally omitted: IN subtracts the per-channel
        # mean, so a constant bias cancels exactly.
        inv_hw = 1.0 / (H * W)
        outs = []
        for o in range(C):
            terms = []
            for c in range(C):
                base = (o * C + c) * 9
                for t in range(9):
                    terms.append(w_ref[base + t] * planes[c][t])
            # balanced add tree (depth ~log2(36)) instead of a serial chain
            while len(terms) > 1:
                terms = [terms[i] + terms[i + 1] if i + 1 < len(terms) else terms[i]
                         for i in range(0, len(terms), 2)]
            acc = terms[0]                                       # (H, W) f32
            m = jnp.sum(acc, keepdims=True) * inv_hw             # (1, 1)
            v = jnp.sum(acc * acc, keepdims=True) * inv_hw - m * m
            y = (acc - m) * lax.rsqrt(v + EPS)
            if relu:
                y = jnp.maximum(y, 0.0)
            outs.append(y)
        return jnp.stack(outs, axis=0)                           # (C, H, W)

    def kernel(x_ref, w1_ref, w2_ref, o_ref):
        x = x_ref[0]                                             # (C, H, W)
        y = conv_in_norm(shifted_windows(reflect_pad1(x)), w1_ref, relu=True)
        z = conv_in_norm(shifted_windows(reflect_pad1(y)), w2_ref, relu=False)
        o_ref[0] = x + z                                         # skip connection

    return kernel


def resnet_block_attn_forward(x, w1, b1, w2, b2):
    """x: (B, C, H, W) f32; w*: (C, C, 3, 3); b*: (C,).

    b1/b2 are accepted for interface parity with the PyTorch module but are
    not used: the non-affine InstanceNorm after each conv cancels them exactly.
    """
    del b1, b2
    B, C, H, W = x.shape
    kernel = make_resnet_block_attn_kernel(C, H, W)
    smem_spec = pl.BlockSpec(memory_space=pltpu.MemorySpace.SMEM)

    return pl.pallas_call(
        kernel,
        out_shape=jax.ShapeDtypeStruct((B, C, H, W), x.dtype),
        grid=(B,),
        in_specs=[
            pl.BlockSpec((1, C, H, W), lambda b: (b, 0, 0, 0)),
            smem_spec,  # w1 flat (OIHW, row-major)
            smem_spec,  # w2 flat
        ],
        out_specs=pl.BlockSpec((1, C, H, W), lambda b: (b, 0, 0, 0)),
        compiler_params=pltpu.CompilerParams(dimension_semantics=("parallel",)),
    )(x, w1.reshape(-1), w2.reshape(-1))


def reference_forward(x, w1, b1, w2, b2):
    """Pure-JAX reference matching the PyTorch resnet_block_attn (with bias)."""
    dn = ("NCHW", "OIHW", "NCHW")

    def in_norm(y):
        m = jnp.mean(y, axis=(2, 3), keepdims=True)
        v = jnp.mean((y - m) ** 2, axis=(2, 3), keepdims=True)
        return (y - m) * lax.rsqrt(v + EPS)

    xp = jnp.pad(x, ((0, 0), (0, 0), (1, 1), (1, 1)), mode="reflect")
    y = lax.conv_general_dilated(xp, w1, (1, 1), "VALID", dimension_numbers=dn)
    y = y + b1[None, :, None, None]
    y = jnp.maximum(in_norm(y), 0.0)
    yp = jnp.pad(y, ((0, 0), (0, 0), (1, 1), (1, 1)), mode="reflect")
    z = lax.conv_general_dilated(yp, w2, (1, 1), "VALID", dimension_numbers=dn)
    z = z + b2[None, :, None, None]
    z = in_norm(z)
    return x + z


if __name__ == "__main__":
    B, C, H, W = 2, 4, 16, 16
    key = jax.random.PRNGKey(0)
    kx, kw1, kb1, kw2, kb2 = jax.random.split(key, 5)

    x = jax.random.normal(kx, (B, C, H, W), dtype=jnp.float32)

    # Deterministic params, PyTorch-default-style uniform init.
    fan_in = C * 3 * 3
    bound = 1.0 / math.sqrt(fan_in)
    w1 = jax.random.uniform(kw1, (C, C, 3, 3), jnp.float32, -bound, bound)
    b1 = jax.random.uniform(kb1, (C,), jnp.float32, -bound, bound)
    w2 = jax.random.uniform(kw2, (C, C, 3, 3), jnp.float32, -bound, bound)
    b2 = jax.random.uniform(kb2, (C,), jnp.float32, -bound, bound)

    out = resnet_block_attn_forward(x, w1, b1, w2, b2)
    out = jax.block_until_ready(out)

    ref = jax.block_until_ready(reference_forward(x, w1, b1, w2, b2))
    np.testing.assert_allclose(np.asarray(out), np.asarray(ref),
                               rtol=1e-3, atol=1e-3)
    print("KERNEL_OK")
</pallas_src>

<mosaic_0001>
module attributes {stable_mosaic.version = 11 : i64} {
  func.func @kernel(%arg0: i32, %arg1: memref<1x4x16x16xf32, #tpu.memory_space<vmem>>, %arg2: memref<144xf32, #tpu.memory_space<smem>>, %arg3: memref<144xf32, #tpu.memory_space<smem>>, %arg4: memref<1x4x16x16xf32, #tpu.memory_space<vmem>>) attributes {dimension_semantics = [#tpu.dimension_semantics<parallel>], iteration_bounds = array<i64: 2>, scalar_prefetch = 0 : i64, scratch_operands = 0 : i64, tpu.core_type = #tpu.core_type<tc>, window_params = [{transform_indices = @transform_0, window_bounds = array<i64: 1, 4, 16, 16>}, {transform_indices = @transform_1, window_bounds = array<i64: 144>}, {transform_indices = @transform_2, window_bounds = array<i64: 144>}, {transform_indices = @transform_3, window_bounds = array<i64: 1, 4, 16, 16>}]} {
    %c0 = arith.constant 0 : index
    %c0_0 = arith.constant 0 : index
    %c0_1 = arith.constant 0 : index
    %c0_2 = arith.constant 0 : index
    %0 = vector.load %arg1[%c0, %c0_0, %c0_1, %c0_2] : memref<1x4x16x16xf32, #tpu.memory_space<vmem>>, vector<1x4x16x16xf32>
    %1 = vector.shape_cast %0 : vector<1x4x16x16xf32> to vector<4x16x16xf32>
    %2 = vector.extract_strided_slice %1 {offsets = [0, 1, 0], sizes = [4, 1, 16], strides = [1, 1, 1]} : vector<4x16x16xf32> to vector<4x1x16xf32>
    %3 = vector.extract_strided_slice %1 {offsets = [0, 14, 0], sizes = [4, 1, 16], strides = [1, 1, 1]} : vector<4x16x16xf32> to vector<4x1x16xf32>
    %4 = tpu.concatenate %2, %1, %3 in 1 : vector<4x1x16xf32>, vector<4x16x16xf32>, vector<4x1x16xf32> -> vector<4x18x16xf32>
    %5 = vector.extract_strided_slice %4 {offsets = [0, 0, 1], sizes = [4, 18, 1], strides = [1, 1, 1]} : vector<4x18x16xf32> to vector<4x18x1xf32>
    %6 = vector.extract_strided_slice %4 {offsets = [0, 0, 14], sizes = [4, 18, 1], strides = [1, 1, 1]} : vector<4x18x16xf32> to vector<4x18x1xf32>
    %7 = tpu.concatenate %5, %4, %6 in 2 : vector<4x18x1xf32>, vector<4x18x16xf32>, vector<4x18x1xf32> -> vector<4x18x18xf32>
    %8 = vector.extract_strided_slice %7 {offsets = [0, 0, 0], sizes = [4, 16, 16], strides = [1, 1, 1]} : vector<4x18x18xf32> to vector<4x16x16xf32>
    %9 = vector.extract_strided_slice %7 {offsets = [0, 0, 1], sizes = [4, 16, 16], strides = [1, 1, 1]} : vector<4x18x18xf32> to vector<4x16x16xf32>
    %10 = vector.extract_strided_slice %7 {offsets = [0, 0, 2], sizes = [4, 16, 16], strides = [1, 1, 1]} : vector<4x18x18xf32> to vector<4x16x16xf32>
    %11 = vector.extract_strided_slice %7 {offsets = [0, 1, 0], sizes = [4, 16, 16], strides = [1, 1, 1]} : vector<4x18x18xf32> to vector<4x16x16xf32>
    %12 = vector.extract_strided_slice %7 {offsets = [0, 1, 1], sizes = [4, 16, 16], strides = [1, 1, 1]} : vector<4x18x18xf32> to vector<4x16x16xf32>
    %13 = vector.extract_strided_slice %7 {offsets = [0, 1, 2], sizes = [4, 16, 16], strides = [1, 1, 1]} : vector<4x18x18xf32> to vector<4x16x16xf32>
    %14 = vector.extract_strided_slice %7 {offsets = [0, 2, 0], sizes = [4, 16, 16], strides = [1, 1, 1]} : vector<4x18x18xf32> to vector<4x16x16xf32>
    %15 = vector.extract_strided_slice %7 {offsets = [0, 2, 1], sizes = [4, 16, 16], strides = [1, 1, 1]} : vector<4x18x18xf32> to vector<4x16x16xf32>
    %16 = vector.extract_strided_slice %7 {offsets = [0, 2, 2], sizes = [4, 16, 16], strides = [1, 1, 1]} : vector<4x18x18xf32> to vector<4x16x16xf32>
    %17 = vector.extract_strided_slice %8 {offsets = [0, 0, 0], sizes = [1, 16, 16], strides = [1, 1, 1]} : vector<4x16x16xf32> to vector<1x16x16xf32>
    %18 = vector.shape_cast %17 : vector<1x16x16xf32> to vector<16x16xf32>
    %19 = vector.extract_strided_slice %9 {offsets = [0, 0, 0], sizes = [1, 16, 16], strides = [1, 1, 1]} : vector<4x16x16xf32> to vector<1x16x16xf32>
    %20 = vector.shape_cast %19 : vector<1x16x16xf32> to vector<16x16xf32>
    %21 = vector.extract_strided_slice %10 {offsets = [0, 0, 0], sizes = [1, 16, 16], strides = [1, 1, 1]} : vector<4x16x16xf32> to vector<1x16x16xf32>
    %22 = vector.shape_cast %21 : vector<1x16x16xf32> to vector<16x16xf32>
    %23 = vector.extract_strided_slice %11 {offsets = [0, 0, 0], sizes = [1, 16, 16], strides = [1, 1, 1]} : vector<4x16x16xf32> to vector<1x16x16xf32>
    %24 = vector.shape_cast %23 : vector<1x16x16xf32> to vector<16x16xf32>
    %25 = vector.extract_strided_slice %12 {offsets = [0, 0, 0], sizes = [1, 16, 16], strides = [1, 1, 1]} : vector<4x16x16xf32> to vector<1x16x16xf32>
    %26 = vector.shape_cast %25 : vector<1x16x16xf32> to vector<16x16xf32>
    %27 = vector.extract_strided_slice %13 {offsets = [0, 0, 0], sizes = [1, 16, 16], strides = [1, 1, 1]} : vector<4x16x16xf32> to vector<1x16x16xf32>
    %28 = vector.shape_cast %27 : vector<1x16x16xf32> to vector<16x16xf32>
    %29 = vector.extract_strided_slice %14 {offsets = [0, 0, 0], sizes = [1, 16, 16], strides = [1, 1, 1]} : vector<4x16x16xf32> to vector<1x16x16xf32>
    %30 = vector.shape_cast %29 : vector<1x16x16xf32> to vector<16x16xf32>
    %31 = vector.extract_strided_slice %15 {offsets = [0, 0, 0], sizes = [1, 16, 16], strides = [1, 1, 1]} : vector<4x16x16xf32> to vector<1x16x16xf32>
    %32 = vector.shape_cast %31 : vector<1x16x16xf32> to vector<16x16xf32>
    %33 = vector.extract_strided_slice %16 {offsets = [0, 0, 0], sizes = [1, 16, 16], strides = [1, 1, 1]} : vector<4x16x16xf32> to vector<1x16x16xf32>
    %34 = vector.shape_cast %33 : vector<1x16x16xf32> to vector<16x16xf32>
    %35 = vector.extract_strided_slice %8 {offsets = [1, 0, 0], sizes = [1, 16, 16], strides = [1, 1, 1]} : vector<4x16x16xf32> to vector<1x16x16xf32>
    %36 = vector.shape_cast %35 : vector<1x16x16xf32> to vector<16x16xf32>
    %37 = vector.extract_strided_slice %9 {offsets = [1, 0, 0], sizes = [1, 16, 16], strides = [1, 1, 1]} : vector<4x16x16xf32> to vector<1x16x16xf32>
    %38 = vector.shape_cast %37 : vector<1x16x16xf32> to vector<16x16xf32>
    %39 = vector.extract_strided_slice %10 {offsets = [1, 0, 0], sizes = [1, 16, 16], strides = [1, 1, 1]} : vector<4x16x16xf32> to vector<1x16x16xf32>
    %40 = vector.shape_cast %39 : vector<1x16x16xf32> to vector<16x16xf32>
    %41 = vector.extract_strided_slice %11 {offsets = [1, 0, 0], sizes = [1, 16, 16], strides = [1, 1, 1]} : vector<4x16x16xf32> to vector<1x16x16xf32>
    %42 = vector.shape_cast %41 : vector<1x16x16xf32> to vector<16x16xf32>
    %43 = vector.extract_strided_slice %12 {offsets = [1, 0, 0], sizes = [1, 16, 16], strides = [1, 1, 1]} : vector<4x16x16xf32> to vector<1x16x16xf32>
    %44 = vector.shape_cast %43 : vector<1x16x16xf32> to vector<16x16xf32>
    %45 = vector.extract_strided_slice %13 {offsets = [1, 0, 0], sizes = [1, 16, 16], strides = [1, 1, 1]} : vector<4x16x16xf32> to vector<1x16x16xf32>
    %46 = vector.shape_cast %45 : vector<1x16x16xf32> to vector<16x16xf32>
    %47 = vector.extract_strided_slice %14 {offsets = [1, 0, 0], sizes = [1, 16, 16], strides = [1, 1, 1]} : vector<4x16x16xf32> to vector<1x16x16xf32>
    %48 = vector.shape_cast %47 : vector<1x16x16xf32> to vector<16x16xf32>
    %49 = vector.extract_strided_slice %15 {offsets = [1, 0, 0], sizes = [1, 16, 16], strides = [1, 1, 1]} : vector<4x16x16xf32> to vector<1x16x16xf32>
    %50 = vector.shape_cast %49 : vector<1x16x16xf32> to vector<16x16xf32>
    %51 = vector.extract_strided_slice %16 {offsets = [1, 0, 0], sizes = [1, 16, 16], strides = [1, 1, 1]} : vector<4x16x16xf32> to vector<1x16x16xf32>
    %52 = vector.shape_cast %51 : vector<1x16x16xf32> to vector<16x16xf32>
    %53 = vector.extract_strided_slice %8 {offsets = [2, 0, 0], sizes = [1, 16, 16], strides = [1, 1, 1]} : vector<4x16x16xf32> to vector<1x16x16xf32>
    %54 = vector.shape_cast %53 : vector<1x16x16xf32> to vector<16x16xf32>
    %55 = vector.extract_strided_slice %9 {offsets = [2, 0, 0], sizes = [1, 16, 16], strides = [1, 1, 1]} : vector<4x16x16xf32> to vector<1x16x16xf32>
    %56 = vector.shape_cast %55 : vector<1x16x16xf32> to vector<16x16xf32>
    %57 = vector.extract_strided_slice %10 {offsets = [2, 0, 0], sizes = [1, 16, 16], strides = [1, 1, 1]} : vector<4x16x16xf32> to vector<1x16x16xf32>
    %58 = vector.shape_cast %57 : vector<1x16x16xf32> to vector<16x16xf32>
    %59 = vector.extract_strided_slice %11 {offsets = [2, 0, 0], sizes = [1, 16, 16], strides = [1, 1, 1]} : vector<4x16x16xf32> to vector<1x16x16xf32>
    %60 = vector.shape_cast %59 : vector<1x16x16xf32> to vector<16x16xf32>
    %61 = vector.extract_strided_slice %12 {offsets = [2, 0, 0], sizes = [1, 16, 16], strides = [1, 1, 1]} : vector<4x16x16xf32> to vector<1x16x16xf32>
    %62 = vector.shape_cast %61 : vector<1x16x16xf32> to vector<16x16xf32>
    %63 = vector.extract_strided_slice %13 {offsets = [2, 0, 0], sizes = [1, 16, 16], strides = [1, 1, 1]} : vector<4x16x16xf32> to vector<1x16x16xf32>
    %64 = vector.shape_cast %63 : vector<1x16x16xf32> to vector<16x16xf32>
    %65 = vector.extract_strided_slice %14 {offsets = [2, 0, 0], sizes = [1, 16, 16], strides = [1, 1, 1]} : vector<4x16x16xf32> to vector<1x16x16xf32>
    %66 = vector.shape_cast %65 : vector<1x16x16xf32> to vector<16x16xf32>
    %67 = vector.extract_strided_slice %15 {offsets = [2, 0, 0], sizes = [1, 16, 16], strides = [1, 1, 1]} : vector<4x16x16xf32> to vector<1x16x16xf32>
    %68 = vector.shape_cast %67 : vector<1x16x16xf32> to vector<16x16xf32>
    %69 = vector.extract_strided_slice %16 {offsets = [2, 0, 0], sizes = [1, 16, 16], strides = [1, 1, 1]} : vector<4x16x16xf32> to vector<1x16x16xf32>
    %70 = vector.shape_cast %69 : vector<1x16x16xf32> to vector<16x16xf32>
    %71 = vector.extract_strided_slice %8 {offsets = [3, 0, 0], sizes = [1, 16, 16], strides = [1, 1, 1]} : vector<4x16x16xf32> to vector<1x16x16xf32>
    %72 = vector.shape_cast %71 : vector<1x16x16xf32> to vector<16x16xf32>
    %73 = vector.extract_strided_slice %9 {offsets = [3, 0, 0], sizes = [1, 16, 16], strides = [1, 1, 1]} : vector<4x16x16xf32> to vector<1x16x16xf32>
    %74 = vector.shape_cast %73 : vector<1x16x16xf32> to vector<16x16xf32>
    %75 = vector.extract_strided_slice %10 {offsets = [3, 0, 0], sizes = [1, 16, 16], strides = [1, 1, 1]} : vector<4x16x16xf32> to vector<1x16x16xf32>
    %76 = vector.shape_cast %75 : vector<1x16x16xf32> to vector<16x16xf32>
    %77 = vector.extract_strided_slice %11 {offsets = [3, 0, 0], sizes = [1, 16, 16], strides = [1, 1, 1]} : vector<4x16x16xf32> to vector<1x16x16xf32>
    %78 = vector.shape_cast %77 : vector<1x16x16xf32> to vector<16x16xf32>
    %79 = vector.extract_strided_slice %12 {offsets = [3, 0, 0], sizes = [1, 16, 16], strides = [1, 1, 1]} : vector<4x16x16xf32> to vector<1x16x16xf32>
    %80 = vector.shape_cast %79 : vector<1x16x16xf32> to vector<16x16xf32>
    %81 = vector.extract_strided_slice %13 {offsets = [3, 0, 0], sizes = [1, 16, 16], strides = [1, 1, 1]} : vector<4x16x16xf32> to vector<1x16x16xf32>
    %82 = vector.shape_cast %81 : vector<1x16x16xf32> to vector<16x16xf32>
    %83 = vector.extract_strided_slice %14 {offsets = [3, 0, 0], sizes = [1, 16, 16], strides = [1, 1, 1]} : vector<4x16x16xf32> to vector<1x16x16xf32>
    %84 = vector.shape_cast %83 : vector<1x16x16xf32> to vector<16x16xf32>
    %85 = vector.extract_strided_slice %15 {offsets = [3, 0, 0], sizes = [1, 16, 16], strides = [1, 1, 1]} : vector<4x16x16xf32> to vector<1x16x16xf32>
    %86 = vector.shape_cast %85 : vector<1x16x16xf32> to vector<16x16xf32>
    %87 = vector.extract_strided_slice %16 {offsets = [3, 0, 0], sizes = [1, 16, 16], strides = [1, 1, 1]} : vector<4x16x16xf32> to vector<1x16x16xf32>
    %88 = vector.shape_cast %87 : vector<1x16x16xf32> to vector<16x16xf32>
    %c0_3 = arith.constant 0 : index
    %89 = memref.load %arg2[%c0_3] : memref<144xf32, #tpu.memory_space<smem>>
    %90 = vector.broadcast %89 : f32 to vector<16x16xf32>
    %91 = arith.mulf %90, %18 : vector<16x16xf32>
    %c1 = arith.constant 1 : index
    %92 = memref.load %arg2[%c1] : memref<144xf32, #tpu.memory_space<smem>>
    %93 = vector.broadcast %92 : f32 to vector<16x16xf32>
    %94 = arith.mulf %93, %20 : vector<16x16xf32>
    %c2 = arith.constant 2 : index
    %95 = memref.load %arg2[%c2] : memref<144xf32, #tpu.memory_space<smem>>
    %96 = vector.broadcast %95 : f32 to vector<16x16xf32>
    %97 = arith.mulf %96, %22 : vector<16x16xf32>
    %c3 = arith.constant 3 : index
    %98 = memref.load %arg2[%c3] : memref<144xf32, #tpu.memory_space<smem>>
    %99 = vector.broadcast %98 : f32 to vector<16x16xf32>
    %100 = arith.mulf %99, %24 : vector<16x16xf32>
    %c4 = arith.constant 4 : index
    %101 = memref.load %arg2[%c4] : memref<144xf32, #tpu.memory_space<smem>>
    %102 = vector.broadcast %101 : f32 to vector<16x16xf32>
    %103 = arith.mulf %102, %26 : vector<16x16xf32>
    %c5 = arith.constant 5 : index
    %104 = memref.load %arg2[%c5] : memref<144xf32, #tpu.memory_space<smem>>
    %105 = vector.broadcast %104 : f32 to vector<16x16xf32>
    %106 = arith.mulf %105, %28 : vector<16x16xf32>
    %c6 = arith.constant 6 : index
    %107 = memref.load %arg2[%c6] : memref<144xf32, #tpu.memory_space<smem>>
    %108 = vector.broadcast %107 : f32 to vector<16x16xf32>
    %109 = arith.mulf %108, %30 : vector<16x16xf32>
    %c7 = arith.constant 7 : index
    %110 = memref.load %arg2[%c7] : memref<144xf32, #tpu.memory_space<smem>>
    %111 = vector.broadcast %110 : f32 to vector<16x16xf32>
    %112 = arith.mulf %111, %32 : vector<16x16xf32>
    %c8 = arith.constant 8 : index
    %113 = memref.load %arg2[%c8] : memref<144xf32, #tpu.memory_space<smem>>
    %114 = vector.broadcast %113 : f32 to vector<16x16xf32>
    %115 = arith.mulf %114, %34 : vector<16x16xf32>
    %c9 = arith.constant 9 : index
    %116 = memref.load %arg2[%c9] : memref<144xf32, #tpu.memory_space<smem>>
    %117 = vector.broadcast %116 : f32 to vector<16x16xf32>
    %118 = arith.mulf %117, %36 : vector<16x16xf32>
    %c10 = arith.constant 10 : index
    %119 = memref.load %arg2[%c10] : memref<144xf32, #tpu.memory_space<smem>>
    %120 = vector.broadcast %119 : f32 to vector<16x16xf32>
    %121 = arith.mulf %120, %38 : vector<16x16xf32>
    %c11 = arith.constant 11 : index
    %122 = memref.load %arg2[%c11] : memref<144xf32, #tpu.memory_space<smem>>
    %123 = vector.broadcast %122 : f32 to vector<16x16xf32>
    %124 = arith.mulf %123, %40 : vector<16x16xf32>
    %c12 = arith.constant 12 : index
    %125 = memref.load %arg2[%c12] : memref<144xf32, #tpu.memory_space<smem>>
    %126 = vector.broadcast %125 : f32 to vector<16x16xf32>
    %127 = arith.mulf %126, %42 : vector<16x16xf32>
    %c13 = arith.constant 13 : index
    %128 = memref.load %arg2[%c13] : memref<144xf32, #tpu.memory_space<smem>>
    %129 = vector.broadcast %128 : f32 to vector<16x16xf32>
    %130 = arith.mulf %129, %44 : vector<16x16xf32>
    %c14 = arith.constant 14 : index
    %131 = memref.load %arg2[%c14] : memref<144xf32, #tpu.memory_space<smem>>
    %132 = vector.broadcast %131 : f32 to vector<16x16xf32>
    %133 = arith.mulf %132, %46 : vector<16x16xf32>
    %c15 = arith.constant 15 : index
    %134 = memref.load %arg2[%c15] : memref<144xf32, #tpu.memory_space<smem>>
    %135 = vector.broadcast %134 : f32 to vector<16x16xf32>
    %136 = arith.mulf %135, %48 : vector<16x16xf32>
    %c16 = arith.constant 16 : index
    %137 = memref.load %arg2[%c16] : memref<144xf32, #tpu.memory_space<smem>>
    %138 = vector.broadcast %137 : f32 to vector<16x16xf32>
    %139 = arith.mulf %138, %50 : vector<16x16xf32>
    %c17 = arith.constant 17 : index
    %140 = memref.load %arg2[%c17] : memref<144xf32, #tpu.memory_space<smem>>
    %141 = vector.broadcast %140 : f32 to vector<16x16xf32>
    %142 = arith.mulf %141, %52 : vector<16x16xf32>
    %c18 = arith.constant 18 : index
    %143 = memref.load %arg2[%c18] : memref<144xf32, #tpu.memory_space<smem>>
    %144 = vector.broadcast %143 : f32 to vector<16x16xf32>
    %145 = arith.mulf %144, %54 : vector<16x16xf32>
    %c19 = arith.constant 19 : index
    %146 = memref.load %arg2[%c19] : memref<144xf32, #tpu.memory_space<smem>>
    %147 = vector.broadcast %146 : f32 to vector<16x16xf32>
    %148 = arith.mulf %147, %56 : vector<16x16xf32>
    %c20 = arith.constant 20 : index
    %149 = memref.load %arg2[%c20] : memref<144xf32, #tpu.memory_space<smem>>
    %150 = vector.broadcast %149 : f32 to vector<16x16xf32>
    %151 = arith.mulf %150, %58 : vector<16x16xf32>
    %c21 = arith.constant 21 : index
    %152 = memref.load %arg2[%c21] : memref<144xf32, #tpu.memory_space<smem>>
    %153 = vector.broadcast %152 : f32 to vector<16x16xf32>
    %154 = arith.mulf %153, %60 : vector<16x16xf32>
    %c22 = arith.constant 22 : index
    %155 = memref.load %arg2[%c22] : memref<144xf32, #tpu.memory_space<smem>>
    %156 = vector.broadcast %155 : f32 to vector<16x16xf32>
    %157 = arith.mulf %156, %62 : vector<16x16xf32>
    %c23 = arith.constant 23 : index
    %158 = memref.load %arg2[%c23] : memref<144xf32, #tpu.memory_space<smem>>
    %159 = vector.broadcast %158 : f32 to vector<16x16xf32>
    %160 = arith.mulf %159, %64 : vector<16x16xf32>
    %c24 = arith.constant 24 : index
    %161 = memref.load %arg2[%c24] : memref<144xf32, #tpu.memory_space<smem>>
    %162 = vector.broadcast %161 : f32 to vector<16x16xf32>
    %163 = arith.mulf %162, %66 : vector<16x16xf32>
    %c25 = arith.constant 25 : index
    %164 = memref.load %arg2[%c25] : memref<144xf32, #tpu.memory_space<smem>>
    %165 = vector.broadcast %164 : f32 to vector<16x16xf32>
    %166 = arith.mulf %165, %68 : vector<16x16xf32>
    %c26 = arith.constant 26 : index
    %167 = memref.load %arg2[%c26] : memref<144xf32, #tpu.memory_space<smem>>
    %168 = vector.broadcast %167 : f32 to vector<16x16xf32>
    %169 = arith.mulf %168, %70 : vector<16x16xf32>
    %c27 = arith.constant 27 : index
    %170 = memref.load %arg2[%c27] : memref<144xf32, #tpu.memory_space<smem>>
    %171 = vector.broadcast %170 : f32 to vector<16x16xf32>
    %172 = arith.mulf %171, %72 : vector<16x16xf32>
    %c28 = arith.constant 28 : index
    %173 = memref.load %arg2[%c28] : memref<144xf32, #tpu.memory_space<smem>>
    %174 = vector.broadcast %173 : f32 to vector<16x16xf32>
    %175 = arith.mulf %174, %74 : vector<16x16xf32>
    %c29 = arith.constant 29 : index
    %176 = memref.load %arg2[%c29] : memref<144xf32, #tpu.memory_space<smem>>
    %177 = vector.broadcast %176 : f32 to vector<16x16xf32>
    %178 = arith.mulf %177, %76 : vector<16x16xf32>
    %c30 = arith.constant 30 : index
    %179 = memref.load %arg2[%c30] : memref<144xf32, #tpu.memory_space<smem>>
    %180 = vector.broadcast %179 : f32 to vector<16x16xf32>
    %181 = arith.mulf %180, %78 : vector<16x16xf32>
    %c31 = arith.constant 31 : index
    %182 = memref.load %arg2[%c31] : memref<144xf32, #tpu.memory_space<smem>>
    %183 = vector.broadcast %182 : f32 to vector<16x16xf32>
    %184 = arith.mulf %183, %80 : vector<16x16xf32>
    %c32 = arith.constant 32 : index
    %185 = memref.load %arg2[%c32] : memref<144xf32, #tpu.memory_space<smem>>
    %186 = vector.broadcast %185 : f32 to vector<16x16xf32>
    %187 = arith.mulf %186, %82 : vector<16x16xf32>
    %c33 = arith.constant 33 : index
    %188 = memref.load %arg2[%c33] : memref<144xf32, #tpu.memory_space<smem>>
    %189 = vector.broadcast %188 : f32 to vector<16x16xf32>
    %190 = arith.mulf %189, %84 : vector<16x16xf32>
    %c34 = arith.constant 34 : index
    %191 = memref.load %arg2[%c34] : memref<144xf32, #tpu.memory_space<smem>>
    %192 = vector.broadcast %191 : f32 to vector<16x16xf32>
    %193 = arith.mulf %192, %86 : vector<16x16xf32>
    %c35 = arith.constant 35 : index
    %194 = memref.load %arg2[%c35] : memref<144xf32, #tpu.memory_space<smem>>
    %195 = vector.broadcast %194 : f32 to vector<16x16xf32>
    %196 = arith.mulf %195, %88 : vector<16x16xf32>
    %197 = arith.addf %91, %94 : vector<16x16xf32>
    %198 = arith.addf %97, %100 : vector<16x16xf32>
    %199 = arith.addf %103, %106 : vector<16x16xf32>
    %200 = arith.addf %109, %112 : vector<16x16xf32>
    %201 = arith.addf %115, %118 : vector<16x16xf32>
    %202 = arith.addf %121, %124 : vector<16x16xf32>
    %203 = arith.addf %127, %130 : vector<16x16xf32>
    %204 = arith.addf %133, %136 : vector<16x16xf32>
    %205 = arith.addf %139, %142 : vector<16x16xf32>
    %206 = arith.addf %145, %148 : vector<16x16xf32>
    %207 = arith.addf %151, %154 : vector<16x16xf32>
    %208 = arith.addf %157, %160 : vector<16x16xf32>
    %209 = arith.addf %163, %166 : vector<16x16xf32>
    %210 = arith.addf %169, %172 : vector<16x16xf32>
    %211 = arith.addf %175, %178 : vector<16x16xf32>
    %212 = arith.addf %181, %184 : vector<16x16xf32>
    %213 = arith.addf %187, %190 : vector<16x16xf32>
    %214 = arith.addf %193, %196 : vector<16x16xf32>
    %215 = arith.addf %197, %198 : vector<16x16xf32>
    %216 = arith.addf %199, %200 : vector<16x16xf32>
    %217 = arith.addf %201, %202 : vector<16x16xf32>
    %218 = arith.addf %203, %204 : vector<16x16xf32>
    %219 = arith.addf %205, %206 : vector<16x16xf32>
    %220 = arith.addf %207, %208 : vector<16x16xf32>
    %221 = arith.addf %209, %210 : vector<16x16xf32>
    %222 = arith.addf %211, %212 : vector<16x16xf32>
    %223 = arith.addf %213, %214 : vector<16x16xf32>
    %224 = arith.addf %215, %216 : vector<16x16xf32>
    %225 = arith.addf %217, %218 : vector<16x16xf32>
    %226 = arith.addf %219, %220 : vector<16x16xf32>
    %227 = arith.addf %221, %222 : vector<16x16xf32>
    %228 = arith.addf %224, %225 : vector<16x16xf32>
    %229 = arith.addf %226, %227 : vector<16x16xf32>
    %230 = arith.addf %228, %229 : vector<16x16xf32>
    %231 = arith.addf %230, %223 : vector<16x16xf32>
    %232 = vector.shape_cast %231 : vector<16x16xf32> to vector<1x16x16xf32>
    %cst = arith.constant dense<0.000000e+00> : vector<1xf32>
    %233 = vector.multi_reduction <add>, %232, %cst [1, 2] : vector<1x16x16xf32> to vector<1xf32>
    %234 = vector.shape_cast %233 : vector<1xf32> to vector<1x1x1xf32>
    %235 = vector.extract %234[0, 0, 0] : f32 from vector<1x1x1xf32>
    %236 = vector.broadcast %235 : f32 to vector<1x1xf32>
    %cst_4 = arith.constant 3.906250e-03 : f32
    %237 = vector.broadcast %cst_4 : f32 to vector<1x1xf32>
    %238 = arith.mulf %236, %237 : vector<1x1xf32>
    %239 = arith.mulf %231, %231 : vector<16x16xf32>
    %240 = vector.shape_cast %239 : vector<16x16xf32> to vector<1x16x16xf32>
    %cst_5 = arith.constant dense<0.000000e+00> : vector<1xf32>
    %241 = vector.multi_reduction <add>, %240, %cst_5 [1, 2] : vector<1x16x16xf32> to vector<1xf32>
    %242 = vector.shape_cast %241 : vector<1xf32> to vector<1x1x1xf32>
    %243 = vector.extract %242[0, 0, 0] : f32 from vector<1x1x1xf32>
    %244 = vector.broadcast %243 : f32 to vector<1x1xf32>
    %cst_6 = arith.constant 3.906250e-03 : f32
    %245 = vector.broadcast %cst_6 : f32 to vector<1x1xf32>
    %246 = arith.mulf %244, %245 : vector<1x1xf32>
    %247 = arith.mulf %238, %238 : vector<1x1xf32>
    %248 = arith.subf %246, %247 : vector<1x1xf32>
    %249 = vector.broadcast %238 : vector<1x1xf32> to vector<16x16xf32>
    %250 = arith.subf %231, %249 : vector<16x16xf32>
    %cst_7 = arith.constant 9.99999974E-6 : f32
    %251 = vector.broadcast %cst_7 : f32 to vector<1x1xf32>
    %252 = arith.addf %248, %251 : vector<1x1xf32>
    %253 = math.rsqrt %252 : vector<1x1xf32>
    %254 = vector.broadcast %253 : vector<1x1xf32> to vector<16x16xf32>
    %255 = arith.mulf %250, %254 : vector<16x16xf32>
    %cst_8 = arith.constant 0.000000e+00 : f32
    %256 = vector.broadcast %cst_8 : f32 to vector<16x16xf32>
    %257 = arith.maximumf %255, %256 : vector<16x16xf32>
    %c36 = arith.constant 36 : index
    %258 = memref.load %arg2[%c36] : memref<144xf32, #tpu.memory_space<smem>>
    %259 = vector.broadcast %258 : f32 to vector<16x16xf32>
    %260 = arith.mulf %259, %18 : vector<16x16xf32>
    %c37 = arith.constant 37 : index
    %261 = memref.load %arg2[%c37] : memref<144xf32, #tpu.memory_space<smem>>
    %262 = vector.broadcast %261 : f32 to vector<16x16xf32>
    %263 = arith.mulf %262, %20 : vector<16x16xf32>
    %c38 = arith.constant 38 : index
    %264 = memref.load %arg2[%c38] : memref<144xf32, #tpu.memory_space<smem>>
    %265 = vector.broadcast %264 : f32 to vector<16x16xf32>
    %266 = arith.mulf %265, %22 : vector<16x16xf32>
    %c39 = arith.constant 39 : index
    %267 = memref.load %arg2[%c39] : memref<144xf32, #tpu.memory_space<smem>>
    %268 = vector.broadcast %267 : f32 to vector<16x16xf32>
    %269 = arith.mulf %268, %24 : vector<16x16xf32>
    %c40 = arith.constant 40 : index
    %270 = memref.load %arg2[%c40] : memref<144xf32, #tpu.memory_space<smem>>
    %271 = vector.broadcast %270 : f32 to vector<16x16xf32>
    %272 = arith.mulf %271, %26 : vector<16x16xf32>
    %c41 = arith.constant 41 : index
    %273 = memref.load %arg2[%c41] : memref<144xf32, #tpu.memory_space<smem>>
    %274 = vector.broadcast %273 : f32 to vector<16x16xf32>
    %275 = arith.mulf %274, %28 : vector<16x16xf32>
    %c42 = arith.constant 42 : index
    %276 = memref.load %arg2[%c42] : memref<144xf32, #tpu.memory_space<smem>>
    %277 = vector.broadcast %276 : f32 to vector<16x16xf32>
    %278 = arith.mulf %277, %30 : vector<16x16xf32>
    %c43 = arith.constant 43 : index
    %279 = memref.load %arg2[%c43] : memref<144xf32, #tpu.memory_space<smem>>
    %280 = vector.broadcast %279 : f32 to vector<16x16xf32>
    %281 = arith.mulf %280, %32 : vector<16x16xf32>
    %c44 = arith.constant 44 : index
    %282 = memref.load %arg2[%c44] : memref<144xf32, #tpu.memory_space<smem>>
    %283 = vector.broadcast %282 : f32 to vector<16x16xf32>
    %284 = arith.mulf %283, %34 : vector<16x16xf32>
    %c45 = arith.constant 45 : index
    %285 = memref.load %arg2[%c45] : memref<144xf32, #tpu.memory_space<smem>>
    %286 = vector.broadcast %285 : f32 to vector<16x16xf32>
    %287 = arith.mulf %286, %36 : vector<16x16xf32>
    %c46 = arith.constant 46 : index
    %288 = memref.load %arg2[%c46] : memref<144xf32, #tpu.memory_space<smem>>
    %289 = vector.broadcast %288 : f32 to vector<16x16xf32>
    %290 = arith.mulf %289, %38 : vector<16x16xf32>
    %c47 = arith.constant 47 : index
    %291 = memref.load %arg2[%c47] : memref<144xf32, #tpu.memory_space<smem>>
    %292 = vector.broadcast %291 : f32 to vector<16x16xf32>
    %293 = arith.mulf %292, %40 : vector<16x16xf32>
    %c48 = arith.constant 48 : index
    %294 = memref.load %arg2[%c48] : memref<144xf32, #tpu.memory_space<smem>>
    %295 = vector.broadcast %294 : f32 to vector<16x16xf32>
    %296 = arith.mulf %295, %42 : vector<16x16xf32>
    %c49 = arith.constant 49 : index
    %297 = memref.load %arg2[%c49] : memref<144xf32, #tpu.memory_space<smem>>
    %298 = vector.broadcast %297 : f32 to vector<16x16xf32>
    %299 = arith.mulf %298, %44 : vector<16x16xf32>
    %c50 = arith.constant 50 : index
    %300 = memref.load %arg2[%c50] : memref<144xf32, #tpu.memory_space<smem>>
    %301 = vector.broadcast %300 : f32 to vector<16x16xf32>
    %302 = arith.mulf %301, %46 : vector<16x16xf32>
    %c51 = arith.constant 51 : index
    %303 = memref.load %arg2[%c51] : memref<144xf32, #tpu.memory_space<smem>>
    %304 = vector.broadcast %303 : f32 to vector<16x16xf32>
    %305 = arith.mulf %304, %48 : vector<16x16xf32>
    %c52 = arith.constant 52 : index
    %306 = memref.load %arg2[%c52] : memref<144xf32, #tpu.memory_space<smem>>
    %307 = vector.broadcast %306 : f32 to vector<16x16xf32>
    %308 = arith.mulf %307, %50 : vector<16x16xf32>
    %c53 = arith.constant 53 : index
    %309 = memref.load %arg2[%c53] : memref<144xf32, #tpu.memory_space<smem>>
    %310 = vector.broadcast %309 : f32 to vector<16x16xf32>
    %311 = arith.mulf %310, %52 : vector<16x16xf32>
    %c54 = arith.constant 54 : index
    %312 = memref.load %arg2[%c54] : memref<144xf32, #tpu.memory_space<smem>>
    %313 = vector.broadcast %312 : f32 to vector<16x16xf32>
    %314 = arith.mulf %313, %54 : vector<16x16xf32>
    %c55 = arith.constant 55 : index
    %315 = memref.load %arg2[%c55] : memref<144xf32, #tpu.memory_space<smem>>
    %316 = vector.broadcast %315 : f32 to vector<16x16xf32>
    %317 = arith.mulf %316, %56 : vector<16x16xf32>
    %c56 = arith.constant 56 : index
    %318 = memref.load %arg2[%c56] : memref<144xf32, #tpu.memory_space<smem>>
    %319 = vector.broadcast %318 : f32 to vector<16x16xf32>
    %320 = arith.mulf %319, %58 : vector<16x16xf32>
    %c57 = arith.constant 57 : index
    %321 = memref.load %arg2[%c57] : memref<144xf32, #tpu.memory_space<smem>>
    %322 = vector.broadcast %321 : f32 to vector<16x16xf32>
    %323 = arith.mulf %322, %60 : vector<16x16xf32>
    %c58 = arith.constant 58 : index
    %324 = memref.load %arg2[%c58] : memref<144xf32, #tpu.memory_space<smem>>
    %325 = vector.broadcast %324 : f32 to vector<16x16xf32>
    %326 = arith.mulf %325, %62 : vector<16x16xf32>
    %c59 = arith.constant 59 : index
    %327 = memref.load %arg2[%c59] : memref<144xf32, #tpu.memory_space<smem>>
    %328 = vector.broadcast %327 : f32 to vector<16x16xf32>
    %329 = arith.mulf %328, %64 : vector<16x16xf32>
    %c60 = arith.constant 60 : index
    %330 = memref.load %arg2[%c60] : memref<144xf32, #tpu.memory_space<smem>>
    %331 = vector.broadcast %330 : f32 to vector<16x16xf32>
    %332 = arith.mulf %331, %66 : vector<16x16xf32>
    %c61 = arith.constant 61 : index
    %333 = memref.load %arg2[%c61] : memref<144xf32, #tpu.memory_space<smem>>
    %334 = vector.broadcast %333 : f32 to vector<16x16xf32>
    %335 = arith.mulf %334, %68 : vector<16x16xf32>
    %c62 = arith.constant 62 : index
    %336 = memref.load %arg2[%c62] : memref<144xf32, #tpu.memory_space<smem>>
    %337 = vector.broadcast %336 : f32 to vector<16x16xf32>
    %338 = arith.mulf %337, %70 : vector<16x16xf32>
    %c63 = arith.constant 63 : index
    %339 = memref.load %arg2[%c63] : memref<144xf32, #tpu.memory_space<smem>>
    %340 = vector.broadcast %339 : f32 to vector<16x16xf32>
    %341 = arith.mulf %340, %72 : vector<16x16xf32>
    %c64 = arith.constant 64 : index
    %342 = memref.load %arg2[%c64] : memref<144xf32, #tpu.memory_space<smem>>
    %343 = vector.broadcast %342 : f32 to vector<16x16xf32>
    %344 = arith.mulf %343, %74 : vector<16x16xf32>
    %c65 = arith.constant 65 : index
    %345 = memref.load %arg2[%c65] : memref<144xf32, #tpu.memory_space<smem>>
    %346 = vector.broadcast %345 : f32 to vector<16x16xf32>
    %347 = arith.mulf %346, %76 : vector<16x16xf32>
    %c66 = arith.constant 66 : index
    %348 = memref.load %arg2[%c66] : memref<144xf32, #tpu.memory_space<smem>>
    %349 = vector.broadcast %348 : f32 to vector<16x16xf32>
    %350 = arith.mulf %349, %78 : vector<16x16xf32>
    %c67 = arith.constant 67 : index
    %351 = memref.load %arg2[%c67] : memref<144xf32, #tpu.memory_space<smem>>
    %352 = vector.broadcast %351 : f32 to vector<16x16xf32>
    %353 = arith.mulf %352, %80 : vector<16x16xf32>
    %c68 = arith.constant 68 : index
    %354 = memref.load %arg2[%c68] : memref<144xf32, #tpu.memory_space<smem>>
    %355 = vector.broadcast %354 : f32 to vector<16x16xf32>
    %356 = arith.mulf %355, %82 : vector<16x16xf32>
    %c69 = arith.constant 69 : index
    %357 = memref.load %arg2[%c69] : memref<144xf32, #tpu.memory_space<smem>>
    %358 = vector.broadcast %357 : f32 to vector<16x16xf32>
    %359 = arith.mulf %358, %84 : vector<16x16xf32>
    %c70 = arith.constant 70 : index
    %360 = memref.load %arg2[%c70] : memref<144xf32, #tpu.memory_space<smem>>
    %361 = vector.broadcast %360 : f32 to vector<16x16xf32>
    %362 = arith.mulf %361, %86 : vector<16x16xf32>
    %c71 = arith.constant 71 : index
    %363 = memref.load %arg2[%c71] : memref<144xf32, #tpu.memory_space<smem>>
    %364 = vector.broadcast %363 : f32 to vector<16x16xf32>
    %365 = arith.mulf %364, %88 : vector<16x16xf32>
    %366 = arith.addf %260, %263 : vector<16x16xf32>
    %367 = arith.addf %266, %269 : vector<16x16xf32>
    %368 = arith.addf %272, %275 : vector<16x16xf32>
    %369 = arith.addf %278, %281 : vector<16x16xf32>
    %370 = arith.addf %284, %287 : vector<16x16xf32>
    %371 = arith.addf %290, %293 : vector<16x16xf32>
    %372 = arith.addf %296, %299 : vector<16x16xf32>
    %373 = arith.addf %302, %305 : vector<16x16xf32>
    %374 = arith.addf %308, %311 : vector<16x16xf32>
    %375 = arith.addf %314, %317 : vector<16x16xf32>
    %376 = arith.addf %320, %323 : vector<16x16xf32>
    %377 = arith.addf %326, %329 : vector<16x16xf32>
    %378 = arith.addf %332, %335 : vector<16x16xf32>
    %379 = arith.addf %338, %341 : vector<16x16xf32>
    %380 = arith.addf %344, %347 : vector<16x16xf32>
    %381 = arith.addf %350, %353 : vector<16x16xf32>
    %382 = arith.addf %356, %359 : vector<16x16xf32>
    %383 = arith.addf %362, %365 : vector<16x16xf32>
    %384 = arith.addf %366, %367 : vector<16x16xf32>
    %385 = arith.addf %368, %369 : vector<16x16xf32>
    %386 = arith.addf %370, %371 : vector<16x16xf32>
    %387 = arith.addf %372, %373 : vector<16x16xf32>
    %388 = arith.addf %374, %375 : vector<16x16xf32>
    %389 = arith.addf %376, %377 : vector<16x16xf32>
    %390 = arith.addf %378, %379 : vector<16x16xf32>
    %391 = arith.addf %380, %381 : vector<16x16xf32>
    %392 = arith.addf %382, %383 : vector<16x16xf32>
    %393 = arith.addf %384, %385 : vector<16x16xf32>
    %394 = arith.addf %386, %387 : vector<16x16xf32>
    %395 = arith.addf %388, %389 : vector<16x16xf32>
    %396 = arith.addf %390, %391 : vector<16x16xf32>
    %397 = arith.addf %393, %394 : vector<16x16xf32>
    %398 = arith.addf %395, %396 : vector<16x16xf32>
    %399 = arith.addf %397, %398 : vector<16x16xf32>
    %400 = arith.addf %399, %392 : vector<16x16xf32>
    %401 = vector.shape_cast %400 : vector<16x16xf32> to vector<1x16x16xf32>
    %cst_9 = arith.constant dense<0.000000e+00> : vector<1xf32>
    %402 = vector.multi_reduction <add>, %401, %cst_9 [1, 2] : vector<1x16x16xf32> to vector<1xf32>
    %403 = vector.shape_cast %402 : vector<1xf32> to vector<1x1x1xf32>
    %404 = vector.extract %403[0, 0, 0] : f32 from vector<1x1x1xf32>
    %405 = vector.broadcast %404 : f32 to vector<1x1xf32>
    %cst_10 = arith.constant 3.906250e-03 : f32
    %406 = vector.broadcast %cst_10 : f32 to vector<1x1xf32>
    %407 = arith.mulf %405, %406 : vector<1x1xf32>
    %408 = arith.mulf %400, %400 : vector<16x16xf32>
    %409 = vector.shape_cast %408 : vector<16x16xf32> to vector<1x16x16xf32>
    %cst_11 = arith.constant dense<0.000000e+00> : vector<1xf32>
    %410 = vector.multi_reduction <add>, %409, %cst_11 [1, 2] : vector<1x16x16xf32> to vector<1xf32>
    %411 = vector.shape_cast %410 : vector<1xf32> to vector<1x1x1xf32>
    %412 = vector.extract %411[0, 0, 0] : f32 from vector<1x1x1xf32>
    %413 = vector.broadcast %412 : f32 to vector<1x1xf32>
    %cst_12 = arith.constant 3.906250e-03 : f32
    %414 = vector.broadcast %cst_12 : f32 to vector<1x1xf32>
    %415 = arith.mulf %413, %414 : vector<1x1xf32>
    %416 = arith.mulf %407, %407 : vector<1x1xf32>
    %417 = arith.subf %415, %416 : vector<1x1xf32>
    %418 = vector.broadcast %407 : vector<1x1xf32> to vector<16x16xf32>
    %419 = arith.subf %400, %418 : vector<16x16xf32>
    %cst_13 = arith.constant 9.99999974E-6 : f32
    %420 = vector.broadcast %cst_13 : f32 to vector<1x1xf32>
    %421 = arith.addf %417, %420 : vector<1x1xf32>
    %422 = math.rsqrt %421 : vector<1x1xf32>
    %423 = vector.broadcast %422 : vector<1x1xf32> to vector<16x16xf32>
    %424 = arith.mulf %419, %423 : vector<16x16xf32>
    %cst_14 = arith.constant 0.000000e+00 : f32
    %425 = vector.broadcast %cst_14 : f32 to vector<16x16xf32>
    %426 = arith.maximumf %424, %425 : vector<16x16xf32>
    %c72 = arith.constant 72 : index
    %427 = memref.load %arg2[%c72] : memref<144xf32, #tpu.memory_space<smem>>
    %428 = vector.broadcast %427 : f32 to vector<16x16xf32>
    %429 = arith.mulf %428, %18 : vector<16x16xf32>
    %c73 = arith.constant 73 : index
    %430 = memref.load %arg2[%c73] : memref<144xf32, #tpu.memory_space<smem>>
    %431 = vector.broadcast %430 : f32 to vector<16x16xf32>
    %432 = arith.mulf %431, %20 : vector<16x16xf32>
    %c74 = arith.constant 74 : index
    %433 = memref.load %arg2[%c74] : memref<144xf32, #tpu.memory_space<smem>>
    %434 = vector.broadcast %433 : f32 to vector<16x16xf32>
    %435 = arith.mulf %434, %22 : vector<16x16xf32>
    %c75 = arith.constant 75 : index
    %436 = memref.load %arg2[%c75] : memref<144xf32, #tpu.memory_space<smem>>
    %437 = vector.broadcast %436 : f32 to vector<16x16xf32>
    %438 = arith.mulf %437, %24 : vector<16x16xf32>
    %c76 = arith.constant 76 : index
    %439 = memref.load %arg2[%c76] : memref<144xf32, #tpu.memory_space<smem>>
    %440 = vector.broadcast %439 : f32 to vector<16x16xf32>
    %441 = arith.mulf %440, %26 : vector<16x16xf32>
    %c77 = arith.constant 77 : index
    %442 = memref.load %arg2[%c77] : memref<144xf32, #tpu.memory_space<smem>>
    %443 = vector.broadcast %442 : f32 to vector<16x16xf32>
    %444 = arith.mulf %443, %28 : vector<16x16xf32>
    %c78 = arith.constant 78 : index
    %445 = memref.load %arg2[%c78] : memref<144xf32, #tpu.memory_space<smem>>
    %446 = vector.broadcast %445 : f32 to vector<16x16xf32>
    %447 = arith.mulf %446, %30 : vector<16x16xf32>
    %c79 = arith.constant 79 : index
    %448 = memref.load %arg2[%c79] : memref<144xf32, #tpu.memory_space<smem>>
    %449 = vector.broadcast %448 : f32 to vector<16x16xf32>
    %450 = arith.mulf %449, %32 : vector<16x16xf32>
    %c80 = arith.constant 80 : index
    %451 = memref.load %arg2[%c80] : memref<144xf32, #tpu.memory_space<smem>>
    %452 = vector.broadcast %451 : f32 to vector<16x16xf32>
    %453 = arith.mulf %452, %34 : vector<16x16xf32>
    %c81 = arith.constant 81 : index
    %454 = memref.load %arg2[%c81] : memref<144xf32, #tpu.memory_space<smem>>
    %455 = vector.broadcast %454 : f32 to vector<16x16xf32>
    %456 = arith.mulf %455, %36 : vector<16x16xf32>
    %c82 = arith.constant 82 : index
    %457 = memref.load %arg2[%c82] : memref<144xf32, #tpu.memory_space<smem>>
    %458 = vector.broadcast %457 : f32 to vector<16x16xf32>
    %459 = arith.mulf %458, %38 : vector<16x16xf32>
    %c83 = arith.constant 83 : index
    %460 = memref.load %arg2[%c83] : memref<144xf32, #tpu.memory_space<smem>>
    %461 = vector.broadcast %460 : f32 to vector<16x16xf32>
    %462 = arith.mulf %461, %40 : vector<16x16xf32>
    %c84 = arith.constant 84 : index
    %463 = memref.load %arg2[%c84] : memref<144xf32, #tpu.memory_space<smem>>
    %464 = vector.broadcast %463 : f32 to vector<16x16xf32>
    %465 = arith.mulf %464, %42 : vector<16x16xf32>
    %c85 = arith.constant 85 : index
    %466 = memref.load %arg2[%c85] : memref<144xf32, #tpu.memory_space<smem>>
    %467 = vector.broadcast %466 : f32 to vector<16x16xf32>
    %468 = arith.mulf %467, %44 : vector<16x16xf32>
    %c86 = arith.constant 86 : index
    %469 = memref.load %arg2[%c86] : memref<144xf32, #tpu.memory_space<smem>>
    %470 = vector.broadcast %469 : f32 to vector<16x16xf32>
    %471 = arith.mulf %470, %46 : vector<16x16xf32>
    %c87 = arith.constant 87 : index
    %472 = memref.load %arg2[%c87] : memref<144xf32, #tpu.memory_space<smem>>
    %473 = vector.broadcast %472 : f32 to vector<16x16xf32>
    %474 = arith.mulf %473, %48 : vector<16x16xf32>
    %c88 = arith.constant 88 : index
    %475 = memref.load %arg2[%c88] : memref<144xf32, #tpu.memory_space<smem>>
    %476 = vector.broadcast %475 : f32 to vector<16x16xf32>
    %477 = arith.mulf %476, %50 : vector<16x16xf32>
    %c89 = arith.constant 89 : index
    %478 = memref.load %arg2[%c89] : memref<144xf32, #tpu.memory_space<smem>>
    %479 = vector.broadcast %478 : f32 to vector<16x16xf32>
    %480 = arith.mulf %479, %52 : vector<16x16xf32>
    %c90 = arith.constant 90 : index
    %481 = memref.load %arg2[%c90] : memref<144xf32, #tpu.memory_space<smem>>
    %482 = vector.broadcast %481 : f32 to vector<16x16xf32>
    %483 = arith.mulf %482, %54 : vector<16x16xf32>
    %c91 = arith.constant 91 : index
    %484 = memref.load %arg2[%c91] : memref<144xf32, #tpu.memory_space<smem>>
    %485 = vector.broadcast %484 : f32 to vector<16x16xf32>
    %486 = arith.mulf %485, %56 : vector<16x16xf32>
    %c92 = arith.constant 92 : index
    %487 = memref.load %arg2[%c92] : memref<144xf32, #tpu.memory_space<smem>>
    %488 = vector.broadcast %487 : f32 to vector<16x16xf32>
    %489 = arith.mulf %488, %58 : vector<16x16xf32>
    %c93 = arith.constant 93 : index
    %490 = memref.load %arg2[%c93] : memref<144xf32, #tpu.memory_space<smem>>
    %491 = vector.broadcast %490 : f32 to vector<16x16xf32>
    %492 = arith.mulf %491, %60 : vector<16x16xf32>
    %c94 = arith.constant 94 : index
    %493 = memref.load %arg2[%c94] : memref<144xf32, #tpu.memory_space<smem>>
    %494 = vector.broadcast %493 : f32 to vector<16x16xf32>
    %495 = arith.mulf %494, %62 : vector<16x16xf32>
    %c95 = arith.constant 95 : index
    %496 = memref.load %arg2[%c95] : memref<144xf32, #tpu.memory_space<smem>>
    %497 = vector.broadcast %496 : f32 to vector<16x16xf32>
    %498 = arith.mulf %497, %64 : vector<16x16xf32>
    %c96 = arith.constant 96 : index
    %499 = memref.load %arg2[%c96] : memref<144xf32, #tpu.memory_space<smem>>
    %500 = vector.broadcast %499 : f32 to vector<16x16xf32>
    %501 = arith.mulf %500, %66 : vector<16x16xf32>
    %c97 = arith.constant 97 : index
    %502 = memref.load %arg2[%c97] : memref<144xf32, #tpu.memory_space<smem>>
    %503 = vector.broadcast %502 : f32 to vector<16x16xf32>
    %504 = arith.mulf %503, %68 : vector<16x16xf32>
    %c98 = arith.constant 98 : index
    %505 = memref.load %arg2[%c98] : memref<144xf32, #tpu.memory_space<smem>>
    %506 = vector.broadcast %505 : f32 to vector<16x16xf32>
    %507 = arith.mulf %506, %70 : vector<16x16xf32>
    %c99 = arith.constant 99 : index
    %508 = memref.load %arg2[%c99] : memref<144xf32, #tpu.memory_space<smem>>
    %509 = vector.broadcast %508 : f32 to vector<16x16xf32>
    %510 = arith.mulf %509, %72 : vector<16x16xf32>
    %c100 = arith.constant 100 : index
    %511 = memref.load %arg2[%c100] : memref<144xf32, #tpu.memory_space<smem>>
    %512 = vector.broadcast %511 : f32 to vector<16x16xf32>
    %513 = arith.mulf %512, %74 : vector<16x16xf32>
    %c101 = arith.constant 101 : index
    %514 = memref.load %arg2[%c101] : memref<144xf32, #tpu.memory_space<smem>>
    %515 = vector.broadcast %514 : f32 to vector<16x16xf32>
    %516 = arith.mulf %515, %76 : vector<16x16xf32>
    %c102 = arith.constant 102 : index
    %517 = memref.load %arg2[%c102] : memref<144xf32, #tpu.memory_space<smem>>
    %518 = vector.broadcast %517 : f32 to vector<16x16xf32>
    %519 = arith.mulf %518, %78 : vector<16x16xf32>
    %c103 = arith.constant 103 : index
    %520 = memref.load %arg2[%c103] : memref<144xf32, #tpu.memory_space<smem>>
    %521 = vector.broadcast %520 : f32 to vector<16x16xf32>
    %522 = arith.mulf %521, %80 : vector<16x16xf32>
    %c104 = arith.constant 104 : index
    %523 = memref.load %arg2[%c104] : memref<144xf32, #tpu.memory_space<smem>>
    %524 = vector.broadcast %523 : f32 to vector<16x16xf32>
    %525 = arith.mulf %524, %82 : vector<16x16xf32>
    %c105 = arith.constant 105 : index
    %526 = memref.load %arg2[%c105] : memref<144xf32, #tpu.memory_space<smem>>
    %527 = vector.broadcast %526 : f32 to vector<16x16xf32>
    %528 = arith.mulf %527, %84 : vector<16x16xf32>
    %c106 = arith.constant 106 : index
    %529 = memref.load %arg2[%c106] : memref<144xf32, #tpu.memory_space<smem>>
    %530 = vector.broadcast %529 : f32 to vector<16x16xf32>
    %531 = arith.mulf %530, %86 : vector<16x16xf32>
    %c107 = arith.constant 107 : index
    %532 = memref.load %arg2[%c107] : memref<144xf32, #tpu.memory_space<smem>>
    %533 = vector.broadcast %532 : f32 to vector<16x16xf32>
    %534 = arith.mulf %533, %88 : vector<16x16xf32>
    %535 = arith.addf %429, %432 : vector<16x16xf32>
    %536 = arith.addf %435, %438 : vector<16x16xf32>
    %537 = arith.addf %441, %444 : vector<16x16xf32>
    %538 = arith.addf %447, %450 : vector<16x16xf32>
    %539 = arith.addf %453, %456 : vector<16x16xf32>
    %540 = arith.addf %459, %462 : vector<16x16xf32>
    %541 = arith.addf %465, %468 : vector<16x16xf32>
    %542 = arith.addf %471, %474 : vector<16x16xf32>
    %543 = arith.addf %477, %480 : vector<16x16xf32>
    %544 = arith.addf %483, %486 : vector<16x16xf32>
    %545 = arith.addf %489, %492 : vector<16x16xf32>
    %546 = arith.addf %495, %498 : vector<16x16xf32>
    %547 = arith.addf %501, %504 : vector<16x16xf32>
    %548 = arith.addf %507, %510 : vector<16x16xf32>
    %549 = arith.addf %513, %516 : vector<16x16xf32>
    %550 = arith.addf %519, %522 : vector<16x16xf32>
    %551 = arith.addf %525, %528 : vector<16x16xf32>
    %552 = arith.addf %531, %534 : vector<16x16xf32>
    %553 = arith.addf %535, %536 : vector<16x16xf32>
    %554 = arith.addf %537, %538 : vector<16x16xf32>
    %555 = arith.addf %539, %540 : vector<16x16xf32>
    %556 = arith.addf %541, %542 : vector<16x16xf32>
    %557 = arith.addf %543, %544 : vector<16x16xf32>
    %558 = arith.addf %545, %546 : vector<16x16xf32>
    %559 = arith.addf %547, %548 : vector<16x16xf32>
    %560 = arith.addf %549, %550 : vector<16x16xf32>
    %561 = arith.addf %551, %552 : vector<16x16xf32>
    %562 = arith.addf %553, %554 : vector<16x16xf32>
    %563 = arith.addf %555, %556 : vector<16x16xf32>
    %564 = arith.addf %557, %558 : vector<16x16xf32>
    %565 = arith.addf %559, %560 : vector<16x16xf32>
    %566 = arith.addf %562, %563 : vector<16x16xf32>
    %567 = arith.addf %564, %565 : vector<16x16xf32>
    %568 = arith.addf %566, %567 : vector<16x16xf32>
    %569 = arith.addf %568, %561 : vector<16x16xf32>
    %570 = vector.shape_cast %569 : vector<16x16xf32> to vector<1x16x16xf32>
    %cst_15 = arith.constant dense<0.000000e+00> : vector<1xf32>
    %571 = vector.multi_reduction <add>, %570, %cst_15 [1, 2] : vector<1x16x16xf32> to vector<1xf32>
    %572 = vector.shape_cast %571 : vector<1xf32> to vector<1x1x1xf32>
    %573 = vector.extract %572[0, 0, 0] : f32 from vector<1x1x1xf32>
    %574 = vector.broadcast %573 : f32 to vector<1x1xf32>
    %cst_16 = arith.constant 3.906250e-03 : f32
    %575 = vector.broadcast %cst_16 : f32 to vector<1x1xf32>
    %576 = arith.mulf %574, %575 : vector<1x1xf32>
    %577 = arith.mulf %569, %569 : vector<16x16xf32>
    %578 = vector.shape_cast %577 : vector<16x16xf32> to vector<1x16x16xf32>
    %cst_17 = arith.constant dense<0.000000e+00> : vector<1xf32>
    %579 = vector.multi_reduction <add>, %578, %cst_17 [1, 2] : vector<1x16x16xf32> to vector<1xf32>
    %580 = vector.shape_cast %579 : vector<1xf32> to vector<1x1x1xf32>
    %581 = vector.extract %580[0, 0, 0] : f32 from vector<1x1x1xf32>
    %582 = vector.broadcast %581 : f32 to vector<1x1xf32>
    %cst_18 = arith.constant 3.906250e-03 : f32
    %583 = vector.broadcast %cst_18 : f32 to vector<1x1xf32>
    %584 = arith.mulf %582, %583 : vector<1x1xf32>
    %585 = arith.mulf %576, %576 : vector<1x1xf32>
    %586 = arith.subf %584, %585 : vector<1x1xf32>
    %587 = vector.broadcast %576 : vector<1x1xf32> to vector<16x16xf32>
    %588 = arith.subf %569, %587 : vector<16x16xf32>
    %cst_19 = arith.constant 9.99999974E-6 : f32
    %589 = vector.broadcast %cst_19 : f32 to vector<1x1xf32>
    %590 = arith.addf %586, %589 : vector<1x1xf32>
    %591 = math.rsqrt %590 : vector<1x1xf32>
    %592 = vector.broadcast %591 : vector<1x1xf32> to vector<16x16xf32>
    %593 = arith.mulf %588, %592 : vector<16x16xf32>
    %cst_20 = arith.constant 0.000000e+00 : f32
    %594 = vector.broadcast %cst_20 : f32 to vector<16x16xf32>
    %595 = arith.maximumf %593, %594 : vector<16x16xf32>
    %c108 = arith.constant 108 : index
    %596 = memref.load %arg2[%c108] : memref<144xf32, #tpu.memory_space<smem>>
    %597 = vector.broadcast %596 : f32 to vector<16x16xf32>
    %598 = arith.mulf %597, %18 : vector<16x16xf32>
    %c109 = arith.constant 109 : index
    %599 = memref.load %arg2[%c109] : memref<144xf32, #tpu.memory_space<smem>>
    %600 = vector.broadcast %599 : f32 to vector<16x16xf32>
    %601 = arith.mulf %600, %20 : vector<16x16xf32>
    %c110 = arith.constant 110 : index
    %602 = memref.load %arg2[%c110] : memref<144xf32, #tpu.memory_space<smem>>
    %603 = vector.broadcast %602 : f32 to vector<16x16xf32>
    %604 = arith.mulf %603, %22 : vector<16x16xf32>
    %c111 = arith.constant 111 : index
    %605 = memref.load %arg2[%c111] : memref<144xf32, #tpu.memory_space<smem>>
    %606 = vector.broadcast %605 : f32 to vector<16x16xf32>
    %607 = arith.mulf %606, %24 : vector<16x16xf32>
    %c112 = arith.constant 112 : index
    %608 = memref.load %arg2[%c112] : memref<144xf32, #tpu.memory_space<smem>>
    %609 = vector.broadcast %608 : f32 to vector<16x16xf32>
    %610 = arith.mulf %609, %26 : vector<16x16xf32>
    %c113 = arith.constant 113 : index
    %611 = memref.load %arg2[%c113] : memref<144xf32, #tpu.memory_space<smem>>
    %612 = vector.broadcast %611 : f32 to vector<16x16xf32>
    %613 = arith.mulf %612, %28 : vector<16x16xf32>
    %c114 = arith.constant 114 : index
    %614 = memref.load %arg2[%c114] : memref<144xf32, #tpu.memory_space<smem>>
    %615 = vector.broadcast %614 : f32 to vector<16x16xf32>
    %616 = arith.mulf %615, %30 : vector<16x16xf32>
    %c115 = arith.constant 115 : index
    %617 = memref.load %arg2[%c115] : memref<144xf32, #tpu.memory_space<smem>>
    %618 = vector.broadcast %617 : f32 to vector<16x16xf32>
    %619 = arith.mulf %618, %32 : vector<16x16xf32>
    %c116 = arith.constant 116 : index
    %620 = memref.load %arg2[%c116] : memref<144xf32, #tpu.memory_space<smem>>
    %621 = vector.broadcast %620 : f32 to vector<16x16xf32>
    %622 = arith.mulf %621, %34 : vector<16x16xf32>
    %c117 = arith.constant 117 : index
    %623 = memref.load %arg2[%c117] : memref<144xf32, #tpu.memory_space<smem>>
    %624 = vector.broadcast %623 : f32 to vector<16x16xf32>
    %625 = arith.mulf %624, %36 : vector<16x16xf32>
    %c118 = arith.constant 118 : index
    %626 = memref.load %arg2[%c118] : memref<144xf32, #tpu.memory_space<smem>>
    %627 = vector.broadcast %626 : f32 to vector<16x16xf32>
    %628 = arith.mulf %627, %38 : vector<16x16xf32>
    %c119 = arith.constant 119 : index
    %629 = memref.load %arg2[%c119] : memref<144xf32, #tpu.memory_space<smem>>
    %630 = vector.broadcast %629 : f32 to vector<16x16xf32>
    %631 = arith.mulf %630, %40 : vector<16x16xf32>
    %c120 = arith.constant 120 : index
    %632 = memref.load %arg2[%c120] : memref<144xf32, #tpu.memory_space<smem>>
    %633 = vector.broadcast %632 : f32 to vector<16x16xf32>
    %634 = arith.mulf %633, %42 : vector<16x16xf32>
    %c121 = arith.constant 121 : index
    %635 = memref.load %arg2[%c121] : memref<144xf32, #tpu.memory_space<smem>>
    %636 = vector.broadcast %635 : f32 to vector<16x16xf32>
    %637 = arith.mulf %636, %44 : vector<16x16xf32>
    %c122 = arith.constant 122 : index
    %638 = memref.load %arg2[%c122] : memref<144xf32, #tpu.memory_space<smem>>
    %639 = vector.broadcast %638 : f32 to vector<16x16xf32>
    %640 = arith.mulf %639, %46 : vector<16x16xf32>
    %c123 = arith.constant 123 : index
    %641 = memref.load %arg2[%c123] : memref<144xf32, #tpu.memory_space<smem>>
    %642 = vector.broadcast %641 : f32 to vector<16x16xf32>
    %643 = arith.mulf %642, %48 : vector<16x16xf32>
    %c124 = arith.constant 124 : index
    %644 = memref.load %arg2[%c124] : memref<144xf32, #tpu.memory_space<smem>>
    %645 = vector.broadcast %644 : f32 to vector<16x16xf32>
    %646 = arith.mulf %645, %50 : vector<16x16xf32>
    %c125 = arith.constant 125 : index
    %647 = memref.load %arg2[%c125] : memref<144xf32, #tpu.memory_space<smem>>
    %648 = vector.broadcast %647 : f32 to vector<16x16xf32>
    %649 = arith.mulf %648, %52 : vector<16x16xf32>
    %c126 = arith.constant 126 : index
    %650 = memref.load %arg2[%c126] : memref<144xf32, #tpu.memory_space<smem>>
    %651 = vector.broadcast %650 : f32 to vector<16x16xf32>
    %652 = arith.mulf %651, %54 : vector<16x16xf32>
    %c127 = arith.constant 127 : index
    %653 = memref.load %arg2[%c127] : memref<144xf32, #tpu.memory_space<smem>>
    %654 = vector.broadcast %653 : f32 to vector<16x16xf32>
    %655 = arith.mulf %654, %56 : vector<16x16xf32>
    %c128 = arith.constant 128 : index
    %656 = memref.load %arg2[%c128] : memref<144xf32, #tpu.memory_space<smem>>
    %657 = vector.broadcast %656 : f32 to vector<16x16xf32>
    %658 = arith.mulf %657, %58 : vector<16x16xf32>
    %c129 = arith.constant 129 : index
    %659 = memref.load %arg2[%c129] : memref<144xf32, #tpu.memory_space<smem>>
    %660 = vector.broadcast %659 : f32 to vector<16x16xf32>
    %661 = arith.mulf %660, %60 : vector<16x16xf32>
    %c130 = arith.constant 130 : index
    %662 = memref.load %arg2[%c130] : memref<144xf32, #tpu.memory_space<smem>>
    %663 = vector.broadcast %662 : f32 to vector<16x16xf32>
    %664 = arith.mulf %663, %62 : vector<16x16xf32>
    %c131 = arith.constant 131 : index
    %665 = memref.load %arg2[%c131] : memref<144xf32, #tpu.memory_space<smem>>
    %666 = vector.broadcast %665 : f32 to vector<16x16xf32>
    %667 = arith.mulf %666, %64 : vector<16x16xf32>
    %c132 = arith.constant 132 : index
    %668 = memref.load %arg2[%c132] : memref<144xf32, #tpu.memory_space<smem>>
    %669 = vector.broadcast %668 : f32 to vector<16x16xf32>
    %670 = arith.mulf %669, %66 : vector<16x16xf32>
    %c133 = arith.constant 133 : index
    %671 = memref.load %arg2[%c133] : memref<144xf32, #tpu.memory_space<smem>>
    %672 = vector.broadcast %671 : f32 to vector<16x16xf32>
    %673 = arith.mulf %672, %68 : vector<16x16xf32>
    %c134 = arith.constant 134 : index
    %674 = memref.load %arg2[%c134] : memref<144xf32, #tpu.memory_space<smem>>
    %675 = vector.broadcast %674 : f32 to vector<16x16xf32>
    %676 = arith.mulf %675, %70 : vector<16x16xf32>
    %c135 = arith.constant 135 : index
    %677 = memref.load %arg2[%c135] : memref<144xf32, #tpu.memory_space<smem>>
    %678 = vector.broadcast %677 : f32 to vector<16x16xf32>
    %679 = arith.mulf %678, %72 : vector<16x16xf32>
    %c136 = arith.constant 136 : index
    %680 = memref.load %arg2[%c136] : memref<144xf32, #tpu.memory_space<smem>>
    %681 = vector.broadcast %680 : f32 to vector<16x16xf32>
    %682 = arith.mulf %681, %74 : vector<16x16xf32>
    %c137 = arith.constant 137 : index
    %683 = memref.load %arg2[%c137] : memref<144xf32, #tpu.memory_space<smem>>
    %684 = vector.broadcast %683 : f32 to vector<16x16xf32>
    %685 = arith.mulf %684, %76 : vector<16x16xf32>
    %c138 = arith.constant 138 : index
    %686 = memref.load %arg2[%c138] : memref<144xf32, #tpu.memory_space<smem>>
    %687 = vector.broadcast %686 : f32 to vector<16x16xf32>
    %688 = arith.mulf %687, %78 : vector<16x16xf32>
    %c139 = arith.constant 139 : index
    %689 = memref.load %arg2[%c139] : memref<144xf32, #tpu.memory_space<smem>>
    %690 = vector.broadcast %689 : f32 to vector<16x16xf32>
    %691 = arith.mulf %690, %80 : vector<16x16xf32>
    %c140 = arith.constant 140 : index
    %692 = memref.load %arg2[%c140] : memref<144xf32, #tpu.memory_space<smem>>
    %693 = vector.broadcast %692 : f32 to vector<16x16xf32>
    %694 = arith.mulf %693, %82 : vector<16x16xf32>
    %c141 = arith.constant 141 : index
    %695 = memref.load %arg2[%c141] : memref<144xf32, #tpu.memory_space<smem>>
    %696 = vector.broadcast %695 : f32 to vector<16x16xf32>
    %697 = arith.mulf %696, %84 : vector<16x16xf32>
    %c142 = arith.constant 142 : index
    %698 = memref.load %arg2[%c142] : memref<144xf32, #tpu.memory_space<smem>>
    %699 = vector.broadcast %698 : f32 to vector<16x16xf32>
    %700 = arith.mulf %699, %86 : vector<16x16xf32>
    %c143 = arith.constant 143 : index
    %701 = memref.load %arg2[%c143] : memref<144xf32, #tpu.memory_space<smem>>
    %702 = vector.broadcast %701 : f32 to vector<16x16xf32>
    %703 = arith.mulf %702, %88 : vector<16x16xf32>
    %704 = arith.addf %598, %601 : vector<16x16xf32>
    %705 = arith.addf %604, %607 : vector<16x16xf32>
    %706 = arith.addf %610, %613 : vector<16x16xf32>
    %707 = arith.addf %616, %619 : vector<16x16xf32>
    %708 = arith.addf %622, %625 : vector<16x16xf32>
    %709 = arith.addf %628, %631 : vector<16x16xf32>
    %710 = arith.addf %634, %637 : vector<16x16xf32>
    %711 = arith.addf %640, %643 : vector<16x16xf32>
    %712 = arith.addf %646, %649 : vector<16x16xf32>
    %713 = arith.addf %652, %655 : vector<16x16xf32>
    %714 = arith.addf %658, %661 : vector<16x16xf32>
    %715 = arith.addf %664, %667 : vector<16x16xf32>
    %716 = arith.addf %670, %673 : vector<16x16xf32>
    %717 = arith.addf %676, %679 : vector<16x16xf32>
    %718 = arith.addf %682, %685 : vector<16x16xf32>
    %719 = arith.addf %688, %691 : vector<16x16xf32>
    %720 = arith.addf %694, %697 : vector<16x16xf32>
    %721 = arith.addf %700, %703 : vector<16x16xf32>
    %722 = arith.addf %704, %705 : vector<16x16xf32>
    %723 = arith.addf %706, %707 : vector<16x16xf32>
    %724 = arith.addf %708, %709 : vector<16x16xf32>
    %725 = arith.addf %710, %711 : vector<16x16xf32>
    %726 = arith.addf %712, %713 : vector<16x16xf32>
    %727 = arith.addf %714, %715 : vector<16x16xf32>
    %728 = arith.addf %716, %717 : vector<16x16xf32>
    %729 = arith.addf %718, %719 : vector<16x16xf32>
    %730 = arith.addf %720, %721 : vector<16x16xf32>
    %731 = arith.addf %722, %723 : vector<16x16xf32>
    %732 = arith.addf %724, %725 : vector<16x16xf32>
    %733 = arith.addf %726, %727 : vector<16x16xf32>
    %734 = arith.addf %728, %729 : vector<16x16xf32>
    %735 = arith.addf %731, %732 : vector<16x16xf32>
    %736 = arith.addf %733, %734 : vector<16x16xf32>
    %737 = arith.addf %735, %736 : vector<16x16xf32>
    %738 = arith.addf %737, %730 : vector<16x16xf32>
    %739 = vector.shape_cast %738 : vector<16x16xf32> to vector<1x16x16xf32>
    %cst_21 = arith.constant dense<0.000000e+00> : vector<1xf32>
    %740 = vector.multi_reduction <add>, %739, %cst_21 [1, 2] : vector<1x16x16xf32> to vector<1xf32>
    %741 = vector.shape_cast %740 : vector<1xf32> to vector<1x1x1xf32>
    %742 = vector.extract %741[0, 0, 0] : f32 from vector<1x1x1xf32>
    %743 = vector.broadcast %742 : f32 to vector<1x1xf32>
    %cst_22 = arith.constant 3.906250e-03 : f32
    %744 = vector.broadcast %cst_22 : f32 to vector<1x1xf32>
    %745 = arith.mulf %743, %744 : vector<1x1xf32>
    %746 = arith.mulf %738, %738 : vector<16x16xf32>
    %747 = vector.shape_cast %746 : vector<16x16xf32> to vector<1x16x16xf32>
    %cst_23 = arith.constant dense<0.000000e+00> : vector<1xf32>
    %748 = vector.multi_reduction <add>, %747, %cst_23 [1, 2] : vector<1x16x16xf32> to vector<1xf32>
    %749 = vector.shape_cast %748 : vector<1xf32> to vector<1x1x1xf32>
    %750 = vector.extract %749[0, 0, 0] : f32 from vector<1x1x1xf32>
    %751 = vector.broadcast %750 : f32 to vector<1x1xf32>
    %cst_24 = arith.constant 3.906250e-03 : f32
    %752 = vector.broadcast %cst_24 : f32 to vector<1x1xf32>
    %753 = arith.mulf %751, %752 : vector<1x1xf32>
    %754 = arith.mulf %745, %745 : vector<1x1xf32>
    %755 = arith.subf %753, %754 : vector<1x1xf32>
    %756 = vector.broadcast %745 : vector<1x1xf32> to vector<16x16xf32>
    %757 = arith.subf %738, %756 : vector<16x16xf32>
    %cst_25 = arith.constant 9.99999974E-6 : f32
    %758 = vector.broadcast %cst_25 : f32 to vector<1x1xf32>
    %759 = arith.addf %755, %758 : vector<1x1xf32>
    %760 = math.rsqrt %759 : vector<1x1xf32>
    %761 = vector.broadcast %760 : vector<1x1xf32> to vector<16x16xf32>
    %762 = arith.mulf %757, %761 : vector<16x16xf32>
    %cst_26 = arith.constant 0.000000e+00 : f32
    %763 = vector.broadcast %cst_26 : f32 to vector<16x16xf32>
    %764 = arith.maximumf %762, %763 : vector<16x16xf32>
    %765 = vector.shape_cast %257 : vector<16x16xf32> to vector<1x16x16xf32>
    %766 = vector.shape_cast %426 : vector<16x16xf32> to vector<1x16x16xf32>
    %767 = vector.shape_cast %595 : vector<16x16xf32> to vector<1x16x16xf32>
    %768 = vector.shape_cast %764 : vector<16x16xf32> to vector<1x16x16xf32>
    %769 = tpu.concatenate %765, %766, %767, %768 in 0 : vector<1x16x16xf32>, vector<1x16x16xf32>, vector<1x16x16xf32>, vector<1x16x16xf32> -> vector<4x16x16xf32>
    %770 = vector.extract_strided_slice %769 {offsets = [0, 1, 0], sizes = [4, 1, 16], strides = [1, 1, 1]} : vector<4x16x16xf32> to vector<4x1x16xf32>
    %771 = vector.extract_strided_slice %769 {offsets = [0, 14, 0], sizes = [4, 1, 16], strides = [1, 1, 1]} : vector<4x16x16xf32> to vector<4x1x16xf32>
    %772 = tpu.concatenate %770, %769, %771 in 1 : vector<4x1x16xf32>, vector<4x16x16xf32>, vector<4x1x16xf32> -> vector<4x18x16xf32>
    %773 = vector.extract_strided_slice %772 {offsets = [0, 0, 1], sizes = [4, 18, 1], strides = [1, 1, 1]} : vector<4x18x16xf32> to vector<4x18x1xf32>
    %774 = vector.extract_strided_slice %772 {offsets = [0, 0, 14], sizes = [4, 18, 1], strides = [1, 1, 1]} : vector<4x18x16xf32> to vector<4x18x1xf32>
    %775 = tpu.concatenate %773, %772, %774 in 2 : vector<4x18x1xf32>, vector<4x18x16xf32>, vector<4x18x1xf32> -> vector<4x18x18xf32>
    %776 = vector.extract_strided_slice %775 {offsets = [0, 0, 0], sizes = [4, 16, 16], strides = [1, 1, 1]} : vector<4x18x18xf32> to vector<4x16x16xf32>
    %777 = vector.extract_strided_slice %775 {offsets = [0, 0, 1], sizes = [4, 16, 16], strides = [1, 1, 1]} : vector<4x18x18xf32> to vector<4x16x16xf32>
    %778 = vector.extract_strided_slice %775 {offsets = [0, 0, 2], sizes = [4, 16, 16], strides = [1, 1, 1]} : vector<4x18x18xf32> to vector<4x16x16xf32>
    %779 = vector.extract_strided_slice %775 {offsets = [0, 1, 0], sizes = [4, 16, 16], strides = [1, 1, 1]} : vector<4x18x18xf32> to vector<4x16x16xf32>
    %780 = vector.extract_strided_slice %775 {offsets = [0, 1, 1], sizes = [4, 16, 16], strides = [1, 1, 1]} : vector<4x18x18xf32> to vector<4x16x16xf32>
    %781 = vector.extract_strided_slice %775 {offsets = [0, 1, 2], sizes = [4, 16, 16], strides = [1, 1, 1]} : vector<4x18x18xf32> to vector<4x16x16xf32>
    %782 = vector.extract_strided_slice %775 {offsets = [0, 2, 0], sizes = [4, 16, 16], strides = [1, 1, 1]} : vector<4x18x18xf32> to vector<4x16x16xf32>
    %783 = vector.extract_strided_slice %775 {offsets = [0, 2, 1], sizes = [4, 16, 16], strides = [1, 1, 1]} : vector<4x18x18xf32> to vector<4x16x16xf32>
    %784 = vector.extract_strided_slice %775 {offsets = [0, 2, 2], sizes = [4, 16, 16], strides = [1, 1, 1]} : vector<4x18x18xf32> to vector<4x16x16xf32>
    %785 = vector.extract_strided_slice %776 {offsets = [0, 0, 0], sizes = [1, 16, 16], strides = [1, 1, 1]} : vector<4x16x16xf32> to vector<1x16x16xf32>
    %786 = vector.shape_cast %785 : vector<1x16x16xf32> to vector<16x16xf32>
    %787 = vector.extract_strided_slice %777 {offsets = [0, 0, 0], sizes = [1, 16, 16], strides = [1, 1, 1]} : vector<4x16x16xf32> to vector<1x16x16xf32>
    %788 = vector.shape_cast %787 : vector<1x16x16xf32> to vector<16x16xf32>
    %789 = vector.extract_strided_slice %778 {offsets = [0, 0, 0], sizes = [1, 16, 16], strides = [1, 1, 1]} : vector<4x16x16xf32> to vector<1x16x16xf32>
    %790 = vector.shape_cast %789 : vector<1x16x16xf32> to vector<16x16xf32>
    %791 = vector.extract_strided_slice %779 {offsets = [0, 0, 0], sizes = [1, 16, 16], strides = [1, 1, 1]} : vector<4x16x16xf32> to vector<1x16x16xf32>
    %792 = vector.shape_cast %791 : vector<1x16x16xf32> to vector<16x16xf32>
    %793 = vector.extract_strided_slice %780 {offsets = [0, 0, 0], sizes = [1, 16, 16], strides = [1, 1, 1]} : vector<4x16x16xf32> to vector<1x16x16xf32>
    %794 = vector.shape_cast %793 : vector<1x16x16xf32> to vector<16x16xf32>
    %795 = vector.extract_strided_slice %781 {offsets = [0, 0, 0], sizes = [1, 16, 16], strides = [1, 1, 1]} : vector<4x16x16xf32> to vector<1x16x16xf32>
    %796 = vector.shape_cast %795 : vector<1x16x16xf32> to vector<16x16xf32>
    %797 = vector.extract_strided_slice %782 {offsets = [0, 0, 0], sizes = [1, 16, 16], strides = [1, 1, 1]} : vector<4x16x16xf32> to vector<1x16x16xf32>
    %798 = vector.shape_cast %797 : vector<1x16x16xf32> to vector<16x16xf32>
    %799 = vector.extract_strided_slice %783 {offsets = [0, 0, 0], sizes = [1, 16, 16], strides = [1, 1, 1]} : vector<4x16x16xf32> to vector<1x16x16xf32>
    %800 = vector.shape_cast %799 : vector<1x16x16xf32> to vector<16x16xf32>
    %801 = vector.extract_strided_slice %784 {offsets = [0, 0, 0], sizes = [1, 16, 16], strides = [1, 1, 1]} : vector<4x16x16xf32> to vector<1x16x16xf32>
    %802 = vector.shape_cast %801 : vector<1x16x16xf32> to vector<16x16xf32>
    %803 = vector.extract_strided_slice %776 {offsets = [1, 0, 0], sizes = [1, 16, 16], strides = [1, 1, 1]} : vector<4x16x16xf32> to vector<1x16x16xf32>
    %804 = vector.shape_cast %803 : vector<1x16x16xf32> to vector<16x16xf32>
    %805 = vector.extract_strided_slice %777 {offsets = [1, 0, 0], sizes = [1, 16, 16], strides = [1, 1, 1]} : vector<4x16x16xf32> to vector<1x16x16xf32>
    %806 = vector.shape_cast %805 : vector<1x16x16xf32> to vector<16x16xf32>
    %807 = vector.extract_strided_slice %778 {offsets = [1, 0, 0], sizes = [1, 16, 16], strides = [1, 1, 1]} : vector<4x16x16xf32> to vector<1x16x16xf32>
    %808 = vector.shape_cast %807 : vector<1x16x16xf32> to vector<16x16xf32>
    %809 = vector.extract_strided_slice %779 {offsets = [1, 0, 0], sizes = [1, 16, 16], strides = [1, 1, 1]} : vector<4x16x16xf32> to vector<1x16x16xf32>
    %810 = vector.shape_cast %809 : vector<1x16x16xf32> to vector<16x16xf32>
    %811 = vector.extract_strided_slice %780 {offsets = [1, 0, 0], sizes = [1, 16, 16], strides = [1, 1, 1]} : vector<4x16x16xf32> to vector<1x16x16xf32>
    %812 = vector.shape_cast %811 : vector<1x16x16xf32> to vector<16x16xf32>
    %813 = vector.extract_strided_slice %781 {offsets = [1, 0, 0], sizes = [1, 16, 16], strides = [1, 1, 1]} : vector<4x16x16xf32> to vector<1x16x16xf32>
    %814 = vector.shape_cast %813 : vector<1x16x16xf32> to vector<16x16xf32>
    %815 = vector.extract_strided_slice %782 {offsets = [1, 0, 0], sizes = [1, 16, 16], strides = [1, 1, 1]} : vector<4x16x16xf32> to vector<1x16x16xf32>
    %816 = vector.shape_cast %815 : vector<1x16x16xf32> to vector<16x16xf32>
    %817 = vector.extract_strided_slice %783 {offsets = [1, 0, 0], sizes = [1, 16, 16], strides = [1, 1, 1]} : vector<4x16x16xf32> to vector<1x16x16xf32>
    %818 = vector.shape_cast %817 : vector<1x16x16xf32> to vector<16x16xf32>
    %819 = vector.extract_strided_slice %784 {offsets = [1, 0, 0], sizes = [1, 16, 16], strides = [1, 1, 1]} : vector<4x16x16xf32> to vector<1x16x16xf32>
    %820 = vector.shape_cast %819 : vector<1x16x16xf32> to vector<16x16xf32>
    %821 = vector.extract_strided_slice %776 {offsets = [2, 0, 0], sizes = [1, 16, 16], strides = [1, 1, 1]} : vector<4x16x16xf32> to vector<1x16x16xf32>
    %822 = vector.shape_cast %821 : vector<1x16x16xf32> to vector<16x16xf32>
    %823 = vector.extract_strided_slice %777 {offsets = [2, 0, 0], sizes = [1, 16, 16], strides = [1, 1, 1]} : vector<4x16x16xf32> to vector<1x16x16xf32>
    %824 = vector.shape_cast %823 : vector<1x16x16xf32> to vector<16x16xf32>
    %825 = vector.extract_strided_slice %778 {offsets = [2, 0, 0], sizes = [1, 16, 16], strides = [1, 1, 1]} : vector<4x16x16xf32> to vector<1x16x16xf32>
    %826 = vector.shape_cast %825 : vector<1x16x16xf32> to vector<16x16xf32>
    %827 = vector.extract_strided_slice %779 {offsets = [2, 0, 0], sizes = [1, 16, 16], strides = [1, 1, 1]} : vector<4x16x16xf32> to vector<1x16x16xf32>
    %828 = vector.shape_cast %827 : vector<1x16x16xf32> to vector<16x16xf32>
    %829 = vector.extract_strided_slice %780 {offsets = [2, 0, 0], sizes = [1, 16, 16], strides = [1, 1, 1]} : vector<4x16x16xf32> to vector<1x16x16xf32>
    %830 = vector.shape_cast %829 : vector<1x16x16xf32> to vector<16x16xf32>
    %831 = vector.extract_strided_slice %781 {offsets = [2, 0, 0], sizes = [1, 16, 16], strides = [1, 1, 1]} : vector<4x16x16xf32> to vector<1x16x16xf32>
    %832 = vector.shape_cast %831 : vector<1x16x16xf32> to vector<16x16xf32>
    %833 = vector.extract_strided_slice %782 {offsets = [2, 0, 0], sizes = [1, 16, 16], strides = [1, 1, 1]} : vector<4x16x16xf32> to vector<1x16x16xf32>
    %834 = vector.shape_cast %833 : vector<1x16x16xf32> to vector<16x16xf32>
    %835 = vector.extract_strided_slice %783 {offsets = [2, 0, 0], sizes = [1, 16, 16], strides = [1, 1, 1]} : vector<4x16x16xf32> to vector<1x16x16xf32>
    %836 = vector.shape_cast %835 : vector<1x16x16xf32> to vector<16x16xf32>
    %837 = vector.extract_strided_slice %784 {offsets = [2, 0, 0], sizes = [1, 16, 16], strides = [1, 1, 1]} : vector<4x16x16xf32> to vector<1x16x16xf32>
    %838 = vector.shape_cast %837 : vector<1x16x16xf32> to vector<16x16xf32>
    %839 = vector.extract_strided_slice %776 {offsets = [3, 0, 0], sizes = [1, 16, 16], strides = [1, 1, 1]} : vector<4x16x16xf32> to vector<1x16x16xf32>
    %840 = vector.shape_cast %839 : vector<1x16x16xf32> to vector<16x16xf32>
    %841 = vector.extract_strided_slice %777 {offsets = [3, 0, 0], sizes = [1, 16, 16], strides = [1, 1, 1]} : vector<4x16x16xf32> to vector<1x16x16xf32>
    %842 = vector.shape_cast %841 : vector<1x16x16xf32> to vector<16x16xf32>
    %843 = vector.extract_strided_slice %778 {offsets = [3, 0, 0], sizes = [1, 16, 16], strides = [1, 1, 1]} : vector<4x16x16xf32> to vector<1x16x16xf32>
    %844 = vector.shape_cast %843 : vector<1x16x16xf32> to vector<16x16xf32>
    %845 = vector.extract_strided_slice %779 {offsets = [3, 0, 0], sizes = [1, 16, 16], strides = [1, 1, 1]} : vector<4x16x16xf32> to vector<1x16x16xf32>
    %846 = vector.shape_cast %845 : vector<1x16x16xf32> to vector<16x16xf32>
    %847 = vector.extract_strided_slice %780 {offsets = [3, 0, 0], sizes = [1, 16, 16], strides = [1, 1, 1]} : vector<4x16x16xf32> to vector<1x16x16xf32>
    %848 = vector.shape_cast %847 : vector<1x16x16xf32> to vector<16x16xf32>
    %849 = vector.extract_strided_slice %781 {offsets = [3, 0, 0], sizes = [1, 16, 16], strides = [1, 1, 1]} : vector<4x16x16xf32> to vector<1x16x16xf32>
    %850 = vector.shape_cast %849 : vector<1x16x16xf32> to vector<16x16xf32>
    %851 = vector.extract_strided_slice %782 {offsets = [3, 0, 0], sizes = [1, 16, 16], strides = [1, 1, 1]} : vector<4x16x16xf32> to vector<1x16x16xf32>
    %852 = vector.shape_cast %851 : vector<1x16x16xf32> to vector<16x16xf32>
    %853 = vector.extract_strided_slice %783 {offsets = [3, 0, 0], sizes = [1, 16, 16], strides = [1, 1, 1]} : vector<4x16x16xf32> to vector<1x16x16xf32>
    %854 = vector.shape_cast %853 : vector<1x16x16xf32> to vector<16x16xf32>
    %855 = vector.extract_strided_slice %784 {offsets = [3, 0, 0], sizes = [1, 16, 16], strides = [1, 1, 1]} : vector<4x16x16xf32> to vector<1x16x16xf32>
    %856 = vector.shape_cast %855 : vector<1x16x16xf32> to vector<16x16xf32>
    %c0_27 = arith.constant 0 : index
    %857 = memref.load %arg3[%c0_27] : memref<144xf32, #tpu.memory_space<smem>>
    %858 = vector.broadcast %857 : f32 to vector<16x16xf32>
    %859 = arith.mulf %858, %786 : vector<16x16xf32>
    %c1_28 = arith.constant 1 : index
    %860 = memref.load %arg3[%c1_28] : memref<144xf32, #tpu.memory_space<smem>>
    %861 = vector.broadcast %860 : f32 to vector<16x16xf32>
    %862 = arith.mulf %861, %788 : vector<16x16xf32>
    %c2_29 = arith.constant 2 : index
    %863 = memref.load %arg3[%c2_29] : memref<144xf32, #tpu.memory_space<smem>>
    %864 = vector.broadcast %863 : f32 to vector<16x16xf32>
    %865 = arith.mulf %864, %790 : vector<16x16xf32>
    %c3_30 = arith.constant 3 : index
    %866 = memref.load %arg3[%c3_30] : memref<144xf32, #tpu.memory_space<smem>>
    %867 = vector.broadcast %866 : f32 to vector<16x16xf32>
    %868 = arith.mulf %867, %792 : vector<16x16xf32>
    %c4_31 = arith.constant 4 : index
    %869 = memref.load %arg3[%c4_31] : memref<144xf32, #tpu.memory_space<smem>>
    %870 = vector.broadcast %869 : f32 to vector<16x16xf32>
    %871 = arith.mulf %870, %794 : vector<16x16xf32>
    %c5_32 = arith.constant 5 : index
    %872 = memref.load %arg3[%c5_32] : memref<144xf32, #tpu.memory_space<smem>>
    %873 = vector.broadcast %872 : f32 to vector<16x16xf32>
    %874 = arith.mulf %873, %796 : vector<16x16xf32>
    %c6_33 = arith.constant 6 : index
    %875 = memref.load %arg3[%c6_33] : memref<144xf32, #tpu.memory_space<smem>>
    %876 = vector.broadcast %875 : f32 to vector<16x16xf32>
    %877 = arith.mulf %876, %798 : vector<16x16xf32>
    %c7_34 = arith.constant 7 : index
    %878 = memref.load %arg3[%c7_34] : memref<144xf32, #tpu.memory_space<smem>>
    %879 = vector.broadcast %878 : f32 to vector<16x16xf32>
    %880 = arith.mulf %879, %800 : vector<16x16xf32>
    %c8_35 = arith.constant 8 : index
    %881 = memref.load %arg3[%c8_35] : memref<144xf32, #tpu.memory_space<smem>>
    %882 = vector.broadcast %881 : f32 to vector<16x16xf32>
    %883 = arith.mulf %882, %802 : vector<16x16xf32>
    %c9_36 = arith.constant 9 : index
    %884 = memref.load %arg3[%c9_36] : memref<144xf32, #tpu.memory_space<smem>>
    %885 = vector.broadcast %884 : f32 to vector<16x16xf32>
    %886 = arith.mulf %885, %804 : vector<16x16xf32>
    %c10_37 = arith.constant 10 : index
    %887 = memref.load %arg3[%c10_37] : memref<144xf32, #tpu.memory_space<smem>>
    %888 = vector.broadcast %887 : f32 to vector<16x16xf32>
    %889 = arith.mulf %888, %806 : vector<16x16xf32>
    %c11_38 = arith.constant 11 : index
    %890 = memref.load %arg3[%c11_38] : memref<144xf32, #tpu.memory_space<smem>>
    %891 = vector.broadcast %890 : f32 to vector<16x16xf32>
    %892 = arith.mulf %891, %808 : vector<16x16xf32>
    %c12_39 = arith.constant 12 : index
    %893 = memref.load %arg3[%c12_39] : memref<144xf32, #tpu.memory_space<smem>>
    %894 = vector.broadcast %893 : f32 to vector<16x16xf32>
    %895 = arith.mulf %894, %810 : vector<16x16xf32>
    %c13_40 = arith.constant 13 : index
    %896 = memref.load %arg3[%c13_40] : memref<144xf32, #tpu.memory_space<smem>>
    %897 = vector.broadcast %896 : f32 to vector<16x16xf32>
    %898 = arith.mulf %897, %812 : vector<16x16xf32>
    %c14_41 = arith.constant 14 : index
    %899 = memref.load %arg3[%c14_41] : memref<144xf32, #tpu.memory_space<smem>>
    %900 = vector.broadcast %899 : f32 to vector<16x16xf32>
    %901 = arith.mulf %900, %814 : vector<16x16xf32>
    %c15_42 = arith.constant 15 : index
    %902 = memref.load %arg3[%c15_42] : memref<144xf32, #tpu.memory_space<smem>>
    %903 = vector.broadcast %902 : f32 to vector<16x16xf32>
    %904 = arith.mulf %903, %816 : vector<16x16xf32>
    %c16_43 = arith.constant 16 : index
    %905 = memref.load %arg3[%c16_43] : memref<144xf32, #tpu.memory_space<smem>>
    %906 = vector.broadcast %905 : f32 to vector<16x16xf32>
    %907 = arith.mulf %906, %818 : vector<16x16xf32>
    %c17_44 = arith.constant 17 : index
    %908 = memref.load %arg3[%c17_44] : memref<144xf32, #tpu.memory_space<smem>>
    %909 = vector.broadcast %908 : f32 to vector<16x16xf32>
    %910 = arith.mulf %909, %820 : vector<16x16xf32>
    %c18_45 = arith.constant 18 : index
    %911 = memref.load %arg3[%c18_45] : memref<144xf32, #tpu.memory_space<smem>>
    %912 = vector.broadcast %911 : f32 to vector<16x16xf32>
    %913 = arith.mulf %912, %822 : vector<16x16xf32>
    %c19_46 = arith.constant 19 : index
    %914 = memref.load %arg3[%c19_46] : memref<144xf32, #tpu.memory_space<smem>>
    %915 = vector.broadcast %914 : f32 to vector<16x16xf32>
    %916 = arith.mulf %915, %824 : vector<16x16xf32>
    %c20_47 = arith.constant 20 : index
    %917 = memref.load %arg3[%c20_47] : memref<144xf32, #tpu.memory_space<smem>>
    %918 = vector.broadcast %917 : f32 to vector<16x16xf32>
    %919 = arith.mulf %918, %826 : vector<16x16xf32>
    %c21_48 = arith.constant 21 : index
    %920 = memref.load %arg3[%c21_48] : memref<144xf32, #tpu.memory_space<smem>>
    %921 = vector.broadcast %920 : f32 to vector<16x16xf32>
    %922 = arith.mulf %921, %828 : vector<16x16xf32>
    %c22_49 = arith.constant 22 : index
    %923 = memref.load %arg3[%c22_49] : memref<144xf32, #tpu.memory_space<smem>>
    %924 = vector.broadcast %923 : f32 to vector<16x16xf32>
    %925 = arith.mulf %924, %830 : vector<16x16xf32>
    %c23_50 = arith.constant 23 : index
    %926 = memref.load %arg3[%c23_50] : memref<144xf32, #tpu.memory_space<smem>>
    %927 = vector.broadcast %926 : f32 to vector<16x16xf32>
    %928 = arith.mulf %927, %832 : vector<16x16xf32>
    %c24_51 = arith.constant 24 : index
    %929 = memref.load %arg3[%c24_51] : memref<144xf32, #tpu.memory_space<smem>>
    %930 = vector.broadcast %929 : f32 to vector<16x16xf32>
    %931 = arith.mulf %930, %834 : vector<16x16xf32>
    %c25_52 = arith.constant 25 : index
    %932 = memref.load %arg3[%c25_52] : memref<144xf32, #tpu.memory_space<smem>>
    %933 = vector.broadcast %932 : f32 to vector<16x16xf32>
    %934 = arith.mulf %933, %836 : vector<16x16xf32>
    %c26_53 = arith.constant 26 : index
    %935 = memref.load %arg3[%c26_53] : memref<144xf32, #tpu.memory_space<smem>>
    %936 = vector.broadcast %935 : f32 to vector<16x16xf32>
    %937 = arith.mulf %936, %838 : vector<16x16xf32>
    %c27_54 = arith.constant 27 : index
    %938 = memref.load %arg3[%c27_54] : memref<144xf32, #tpu.memory_space<smem>>
    %939 = vector.broadcast %938 : f32 to vector<16x16xf32>
    %940 = arith.mulf %939, %840 : vector<16x16xf32>
    %c28_55 = arith.constant 28 : index
    %941 = memref.load %arg3[%c28_55] : memref<144xf32, #tpu.memory_space<smem>>
    %942 = vector.broadcast %941 : f32 to vector<16x16xf32>
    %943 = arith.mulf %942, %842 : vector<16x16xf32>
    %c29_56 = arith.constant 29 : index
    %944 = memref.load %arg3[%c29_56] : memref<144xf32, #tpu.memory_space<smem>>
    %945 = vector.broadcast %944 : f32 to vector<16x16xf32>
    %946 = arith.mulf %945, %844 : vector<16x16xf32>
    %c30_57 = arith.constant 30 : index
    %947 = memref.load %arg3[%c30_57] : memref<144xf32, #tpu.memory_space<smem>>
    %948 = vector.broadcast %947 : f32 to vector<16x16xf32>
    %949 = arith.mulf %948, %846 : vector<16x16xf32>
    %c31_58 = arith.constant 31 : index
    %950 = memref.load %arg3[%c31_58] : memref<144xf32, #tpu.memory_space<smem>>
    %951 = vector.broadcast %950 : f32 to vector<16x16xf32>
    %952 = arith.mulf %951, %848 : vector<16x16xf32>
    %c32_59 = arith.constant 32 : index
    %953 = memref.load %arg3[%c32_59] : memref<144xf32, #tpu.memory_space<smem>>
    %954 = vector.broadcast %953 : f32 to vector<16x16xf32>
    %955 = arith.mulf %954, %850 : vector<16x16xf32>
    %c33_60 = arith.constant 33 : index
    %956 = memref.load %arg3[%c33_60] : memref<144xf32, #tpu.memory_space<smem>>
    %957 = vector.broadcast %956 : f32 to vector<16x16xf32>
    %958 = arith.mulf %957, %852 : vector<16x16xf32>
    %c34_61 = arith.constant 34 : index
    %959 = memref.load %arg3[%c34_61] : memref<144xf32, #tpu.memory_space<smem>>
    %960 = vector.broadcast %959 : f32 to vector<16x16xf32>
    %961 = arith.mulf %960, %854 : vector<16x16xf32>
    %c35_62 = arith.constant 35 : index
    %962 = memref.load %arg3[%c35_62] : memref<144xf32, #tpu.memory_space<smem>>
    %963 = vector.broadcast %962 : f32 to vector<16x16xf32>
    %964 = arith.mulf %963, %856 : vector<16x16xf32>
    %965 = arith.addf %859, %862 : vector<16x16xf32>
    %966 = arith.addf %865, %868 : vector<16x16xf32>
    %967 = arith.addf %871, %874 : vector<16x16xf32>
    %968 = arith.addf %877, %880 : vector<16x16xf32>
    %969 = arith.addf %883, %886 : vector<16x16xf32>
    %970 = arith.addf %889, %892 : vector<16x16xf32>
    %971 = arith.addf %895, %898 : vector<16x16xf32>
    %972 = arith.addf %901, %904 : vector<16x16xf32>
    %973 = arith.addf %907, %910 : vector<16x16xf32>
    %974 = arith.addf %913, %916 : vector<16x16xf32>
    %975 = arith.addf %919, %922 : vector<16x16xf32>
    %976 = arith.addf %925, %928 : vector<16x16xf32>
    %977 = arith.addf %931, %934 : vector<16x16xf32>
    %978 = arith.addf %937, %940 : vector<16x16xf32>
    %979 = arith.addf %943, %946 : vector<16x16xf32>
    %980 = arith.addf %949, %952 : vector<16x16xf32>
    %981 = arith.addf %955, %958 : vector<16x16xf32>
    %982 = arith.addf %961, %964 : vector<16x16xf32>
    %983 = arith.addf %965, %966 : vector<16x16xf32>
    %984 = arith.addf %967, %968 : vector<16x16xf32>
    %985 = arith.addf %969, %970 : vector<16x16xf32>
    %986 = arith.addf %971, %972 : vector<16x16xf32>
    %987 = arith.addf %973, %974 : vector<16x16xf32>
    %988 = arith.addf %975, %976 : vector<16x16xf32>
    %989 = arith.addf %977, %978 : vector<16x16xf32>
    %990 = arith.addf %979, %980 : vector<16x16xf32>
    %991 = arith.addf %981, %982 : vector<16x16xf32>
    %992 = arith.addf %983, %984 : vector<16x16xf32>
    %993 = arith.addf %985, %986 : vector<16x16xf32>
    %994 = arith.addf %987, %988 : vector<16x16xf32>
    %995 = arith.addf %989, %990 : vector<16x16xf32>
    %996 = arith.addf %992, %993 : vector<16x16xf32>
    %997 = arith.addf %994, %995 : vector<16x16xf32>
    %998 = arith.addf %996, %997 : vector<16x16xf32>
    %999 = arith.addf %998, %991 : vector<16x16xf32>
    %1000 = vector.shape_cast %999 : vector<16x16xf32> to vector<1x16x16xf32>
    %cst_63 = arith.constant dense<0.000000e+00> : vector<1xf32>
    %1001 = vector.multi_reduction <add>, %1000, %cst_63 [1, 2] : vector<1x16x16xf32> to vector<1xf32>
    %1002 = vector.shape_cast %1001 : vector<1xf32> to vector<1x1x1xf32>
    %1003 = vector.extract %1002[0, 0, 0] : f32 from vector<1x1x1xf32>
    %1004 = vector.broadcast %1003 : f32 to vector<1x1xf32>
    %cst_64 = arith.constant 3.906250e-03 : f32
    %1005 = vector.broadcast %cst_64 : f32 to vector<1x1xf32>
    %1006 = arith.mulf %1004, %1005 : vector<1x1xf32>
    %1007 = arith.mulf %999, %999 : vector<16x16xf32>
    %1008 = vector.shape_cast %1007 : vector<16x16xf32> to vector<1x16x16xf32>
    %cst_65 = arith.constant dense<0.000000e+00> : vector<1xf32>
    %1009 = vector.multi_reduction <add>, %1008, %cst_65 [1, 2] : vector<1x16x16xf32> to vector<1xf32>
    %1010 = vector.shape_cast %1009 : vector<1xf32> to vector<1x1x1xf32>
    %1011 = vector.extract %1010[0, 0, 0] : f32 from vector<1x1x1xf32>
    %1012 = vector.broadcast %1011 : f32 to vector<1x1xf32>
    %cst_66 = arith.constant 3.906250e-03 : f32
    %1013 = vector.broadcast %cst_66 : f32 to vector<1x1xf32>
    %1014 = arith.mulf %1012, %1013 : vector<1x1xf32>
    %1015 = arith.mulf %1006, %1006 : vector<1x1xf32>
    %1016 = arith.subf %1014, %1015 : vector<1x1xf32>
    %1017 = vector.broadcast %1006 : vector<1x1xf32> to vector<16x16xf32>
    %1018 = arith.subf %999, %1017 : vector<16x16xf32>
    %cst_67 = arith.constant 9.99999974E-6 : f32
    %1019 = vector.broadcast %cst_67 : f32 to vector<1x1xf32>
    %1020 = arith.addf %1016, %1019 : vector<1x1xf32>
    %1021 = math.rsqrt %1020 : vector<1x1xf32>
    %1022 = vector.broadcast %1021 : vector<1x1xf32> to vector<16x16xf32>
    %1023 = arith.mulf %1018, %1022 : vector<16x16xf32>
    %c36_68 = arith.constant 36 : index
    %1024 = memref.load %arg3[%c36_68] : memref<144xf32, #tpu.memory_space<smem>>
    %1025 = vector.broadcast %1024 : f32 to vector<16x16xf32>
    %1026 = arith.mulf %1025, %786 : vector<16x16xf32>
    %c37_69 = arith.constant 37 : index
    %1027 = memref.load %arg3[%c37_69] : memref<144xf32, #tpu.memory_space<smem>>
    %1028 = vector.broadcast %1027 : f32 to vector<16x16xf32>
    %1029 = arith.mulf %1028, %788 : vector<16x16xf32>
    %c38_70 = arith.constant 38 : index
    %1030 = memref.load %arg3[%c38_70] : memref<144xf32, #tpu.memory_space<smem>>
    %1031 = vector.broadcast %1030 : f32 to vector<16x16xf32>
    %1032 = arith.mulf %1031, %790 : vector<16x16xf32>
    %c39_71 = arith.constant 39 : index
    %1033 = memref.load %arg3[%c39_71] : memref<144xf32, #tpu.memory_space<smem>>
    %1034 = vector.broadcast %1033 : f32 to vector<16x16xf32>
    %1035 = arith.mulf %1034, %792 : vector<16x16xf32>
    %c40_72 = arith.constant 40 : index
    %1036 = memref.load %arg3[%c40_72] : memref<144xf32, #tpu.memory_space<smem>>
    %1037 = vector.broadcast %1036 : f32 to vector<16x16xf32>
    %1038 = arith.mulf %1037, %794 : vector<16x16xf32>
    %c41_73 = arith.constant 41 : index
    %1039 = memref.load %arg3[%c41_73] : memref<144xf32, #tpu.memory_space<smem>>
    %1040 = vector.broadcast %1039 : f32 to vector<16x16xf32>
    %1041 = arith.mulf %1040, %796 : vector<16x16xf32>
    %c42_74 = arith.constant 42 : index
    %1042 = memref.load %arg3[%c42_74] : memref<144xf32, #tpu.memory_space<smem>>
    %1043 = vector.broadcast %1042 : f32 to vector<16x16xf32>
    %1044 = arith.mulf %1043, %798 : vector<16x16xf32>
    %c43_75 = arith.constant 43 : index
    %1045 = memref.load %arg3[%c43_75] : memref<144xf32, #tpu.memory_space<smem>>
    %1046 = vector.broadcast %1045 : f32 to vector<16x16xf32>
    %1047 = arith.mulf %1046, %800 : vector<16x16xf32>
    %c44_76 = arith.constant 44 : index
    %1048 = memref.load %arg3[%c44_76] : memref<144xf32, #tpu.memory_space<smem>>
    %1049 = vector.broadcast %1048 : f32 to vector<16x16xf32>
    %1050 = arith.mulf %1049, %802 : vector<16x16xf32>
    %c45_77 = arith.constant 45 : index
    %1051 = memref.load %arg3[%c45_77] : memref<144xf32, #tpu.memory_space<smem>>
    %1052 = vector.broadcast %1051 : f32 to vector<16x16xf32>
    %1053 = arith.mulf %1052, %804 : vector<16x16xf32>
    %c46_78 = arith.constant 46 : index
    %1054 = memref.load %arg3[%c46_78] : memref<144xf32, #tpu.memory_space<smem>>
    %1055 = vector.broadcast %1054 : f32 to vector<16x16xf32>
    %1056 = arith.mulf %1055, %806 : vector<16x16xf32>
    %c47_79 = arith.constant 47 : index
    %1057 = memref.load %arg3[%c47_79] : memref<144xf32, #tpu.memory_space<smem>>
    %1058 = vector.broadcast %1057 : f32 to vector<16x16xf32>
    %1059 = arith.mulf %1058, %808 : vector<16x16xf32>
    %c48_80 = arith.constant 48 : index
    %1060 = memref.load %arg3[%c48_80] : memref<144xf32, #tpu.memory_space<smem>>
    %1061 = vector.broadcast %1060 : f32 to vector<16x16xf32>
    %1062 = arith.mulf %1061, %810 : vector<16x16xf32>
    %c49_81 = arith.constant 49 : index
    %1063 = memref.load %arg3[%c49_81] : memref<144xf32, #tpu.memory_space<smem>>
    %1064 = vector.broadcast %1063 : f32 to vector<16x16xf32>
    %1065 = arith.mulf %1064, %812 : vector<16x16xf32>
    %c50_82 = arith.constant 50 : index
    %1066 = memref.load %arg3[%c50_82] : memref<144xf32, #tpu.memory_space<smem>>
    %1067 = vector.broadcast %1066 : f32 to vector<16x16xf32>
    %1068 = arith.mulf %1067, %814 : vector<16x16xf32>
    %c51_83 = arith.constant 51 : index
    %1069 = memref.load %arg3[%c51_83] : memref<144xf32, #tpu.memory_space<smem>>
    %1070 = vector.broadcast %1069 : f32 to vector<16x16xf32>
    %1071 = arith.mulf %1070, %816 : vector<16x16xf32>
    %c52_84 = arith.constant 52 : index
    %1072 = memref.load %arg3[%c52_84] : memref<144xf32, #tpu.memory_space<smem>>
    %1073 = vector.broadcast %1072 : f32 to vector<16x16xf32>
    %1074 = arith.mulf %1073, %818 : vector<16x16xf32>
    %c53_85 = arith.constant 53 : index
    %1075 = memref.load %arg3[%c53_85] : memref<144xf32, #tpu.memory_space<smem>>
    %1076 = vector.broadcast %1075 : f32 to vector<16x16xf32>
    %1077 = arith.mulf %1076, %820 : vector<16x16xf32>
    %c54_86 = arith.constant 54 : index
    %1078 = memref.load %arg3[%c54_86] : memref<144xf32, #tpu.memory_space<smem>>
    %1079 = vector.broadcast %1078 : f32 to vector<16x16xf32>
    %1080 = arith.mulf %1079, %822 : vector<16x16xf32>
    %c55_87 = arith.constant 55 : index
    %1081 = memref.load %arg3[%c55_87] : memref<144xf32, #tpu.memory_space<smem>>
    %1082 = vector.broadcast %1081 : f32 to vector<16x16xf32>
    %1083 = arith.mulf %1082, %824 : vector<16x16xf32>
    %c56_88 = arith.constant 56 : index
    %1084 = memref.load %arg3[%c56_88] : memref<144xf32, #tpu.memory_space<smem>>
    %1085 = vector.broadcast %1084 : f32 to vector<16x16xf32>
    %1086 = arith.mulf %1085, %826 : vector<16x16xf32>
    %c57_89 = arith.constant 57 : index
    %1087 = memref.load %arg3[%c57_89] : memref<144xf32, #tpu.memory_space<smem>>
    %1088 = vector.broadcast %1087 : f32 to vector<16x16xf32>
    %1089 = arith.mulf %1088, %828 : vector<16x16xf32>
    %c58_90 = arith.constant 58 : index
    %1090 = memref.load %arg3[%c58_90] : memref<144xf32, #tpu.memory_space<smem>>
    %1091 = vector.broadcast %1090 : f32 to vector<16x16xf32>
    %1092 = arith.mulf %1091, %830 : vector<16x16xf32>
    %c59_91 = arith.constant 59 : index
    %1093 = memref.load %arg3[%c59_91] : memref<144xf32, #tpu.memory_space<smem>>
    %1094 = vector.broadcast %1093 : f32 to vector<16x16xf32>
    %1095 = arith.mulf %1094, %832 : vector<16x16xf32>
    %c60_92 = arith.constant 60 : index
    %1096 = memref.load %arg3[%c60_92] : memref<144xf32, #tpu.memory_space<smem>>
    %1097 = vector.broadcast %1096 : f32 to vector<16x16xf32>
    %1098 = arith.mulf %1097, %834 : vector<16x16xf32>
    %c61_93 = arith.constant 61 : index
    %1099 = memref.load %arg3[%c61_93] : memref<144xf32, #tpu.memory_space<smem>>
    %1100 = vector.broadcast %1099 : f32 to vector<16x16xf32>
    %1101 = arith.mulf %1100, %836 : vector<16x16xf32>
    %c62_94 = arith.constant 62 : index
    %1102 = memref.load %arg3[%c62_94] : memref<144xf32, #tpu.memory_space<smem>>
    %1103 = vector.broadcast %1102 : f32 to vector<16x16xf32>
    %1104 = arith.mulf %1103, %838 : vector<16x16xf32>
    %c63_95 = arith.constant 63 : index
    %1105 = memref.load %arg3[%c63_95] : memref<144xf32, #tpu.memory_space<smem>>
    %1106 = vector.broadcast %1105 : f32 to vector<16x16xf32>
    %1107 = arith.mulf %1106, %840 : vector<16x16xf32>
    %c64_96 = arith.constant 64 : index
    %1108 = memref.load %arg3[%c64_96] : memref<144xf32, #tpu.memory_space<smem>>
    %1109 = vector.broadcast %1108 : f32 to vector<16x16xf32>
    %1110 = arith.mulf %1109, %842 : vector<16x16xf32>
    %c65_97 = arith.constant 65 : index
    %1111 = memref.load %arg3[%c65_97] : memref<144xf32, #tpu.memory_space<smem>>
    %1112 = vector.broadcast %1111 : f32 to vector<16x16xf32>
    %1113 = arith.mulf %1112, %844 : vector<16x16xf32>
    %c66_98 = arith.constant 66 : index
    %1114 = memref.load %arg3[%c66_98] : memref<144xf32, #tpu.memory_space<smem>>
    %1115 = vector.broadcast %1114 : f32 to vector<16x16xf32>
    %1116 = arith.mulf %1115, %846 : vector<16x16xf32>
    %c67_99 = arith.constant 67 : index
    %1117 = memref.load %arg3[%c67_99] : memref<144xf32, #tpu.memory_space<smem>>
    %1118 = vector.broadcast %1117 : f32 to vector<16x16xf32>
    %1119 = arith.mulf %1118, %848 : vector<16x16xf32>
    %c68_100 = arith.constant 68 : index
    %1120 = memref.load %arg3[%c68_100] : memref<144xf32, #tpu.memory_space<smem>>
    %1121 = vector.broadcast %1120 : f32 to vector<16x16xf32>
    %1122 = arith.mulf %1121, %850 : vector<16x16xf32>
    %c69_101 = arith.constant 69 : index
    %1123 = memref.load %arg3[%c69_101] : memref<144xf32, #tpu.memory_space<smem>>
    %1124 = vector.broadcast %1123 : f32 to vector<16x16xf32>
    %1125 = arith.mulf %1124, %852 : vector<16x16xf32>
    %c70_102 = arith.constant 70 : index
    %1126 = memref.load %arg3[%c70_102] : memref<144xf32, #tpu.memory_space<smem>>
    %1127 = vector.broadcast %1126 : f32 to vector<16x16xf32>
    %1128 = arith.mulf %1127, %854 : vector<16x16xf32>
    %c71_103 = arith.constant 71 : index
    %1129 = memref.load %arg3[%c71_103] : memref<144xf32, #tpu.memory_space<smem>>
    %1130 = vector.broadcast %1129 : f32 to vector<16x16xf32>
    %1131 = arith.mulf %1130, %856 : vector<16x16xf32>
    %1132 = arith.addf %1026, %1029 : vector<16x16xf32>
    %1133 = arith.addf %1032, %1035 : vector<16x16xf32>
    %1134 = arith.addf %1038, %1041 : vector<16x16xf32>
    %1135 = arith.addf %1044, %1047 : vector<16x16xf32>
    %1136 = arith.addf %1050, %1053 : vector<16x16xf32>
    %1137 = arith.addf %1056, %1059 : vector<16x16xf32>
    %1138 = arith.addf %1062, %1065 : vector<16x16xf32>
    %1139 = arith.addf %1068, %1071 : vector<16x16xf32>
    %1140 = arith.addf %1074, %1077 : vector<16x16xf32>
    %1141 = arith.addf %1080, %1083 : vector<16x16xf32>
    %1142 = arith.addf %1086, %1089 : vector<16x16xf32>
    %1143 = arith.addf %1092, %1095 : vector<16x16xf32>
    %1144 = arith.addf %1098, %1101 : vector<16x16xf32>
    %1145 = arith.addf %1104, %1107 : vector<16x16xf32>
    %1146 = arith.addf %1110, %1113 : vector<16x16xf32>
    %1147 = arith.addf %1116, %1119 : vector<16x16xf32>
    %1148 = arith.addf %1122, %1125 : vector<16x16xf32>
    %1149 = arith.addf %1128, %1131 : vector<16x16xf32>
    %1150 = arith.addf %1132, %1133 : vector<16x16xf32>
    %1151 = arith.addf %1134, %1135 : vector<16x16xf32>
    %1152 = arith.addf %1136, %1137 : vector<16x16xf32>
    %1153 = arith.addf %1138, %1139 : vector<16x16xf32>
    %1154 = arith.addf %1140, %1141 : vector<16x16xf32>
    %1155 = arith.addf %1142, %1143 : vector<16x16xf32>
    %1156 = arith.addf %1144, %1145 : vector<16x16xf32>
    %1157 = arith.addf %1146, %1147 : vector<16x16xf32>
    %1158 = arith.addf %1148, %1149 : vector<16x16xf32>
    %1159 = arith.addf %1150, %1151 : vector<16x16xf32>
    %1160 = arith.addf %1152, %1153 : vector<16x16xf32>
    %1161 = arith.addf %1154, %1155 : vector<16x16xf32>
    %1162 = arith.addf %1156, %1157 : vector<16x16xf32>
    %1163 = arith.addf %1159, %1160 : vector<16x16xf32>
    %1164 = arith.addf %1161, %1162 : vector<16x16xf32>
    %1165 = arith.addf %1163, %1164 : vector<16x16xf32>
    %1166 = arith.addf %1165, %1158 : vector<16x16xf32>
    %1167 = vector.shape_cast %1166 : vector<16x16xf32> to vector<1x16x16xf32>
    %cst_104 = arith.constant dense<0.000000e+00> : vector<1xf32>
    %1168 = vector.multi_reduction <add>, %1167, %cst_104 [1, 2] : vector<1x16x16xf32> to vector<1xf32>
    %1169 = vector.shape_cast %1168 : vector<1xf32> to vector<1x1x1xf32>
    %1170 = vector.extract %1169[0, 0, 0] : f32 from vector<1x1x1xf32>
    %1171 = vector.broadcast %1170 : f32 to vector<1x1xf32>
    %cst_105 = arith.constant 3.906250e-03 : f32
    %1172 = vector.broadcast %cst_105 : f32 to vector<1x1xf32>
    %1173 = arith.mulf %1171, %1172 : vector<1x1xf32>
    %1174 = arith.mulf %1166, %1166 : vector<16x16xf32>
    %1175 = vector.shape_cast %1174 : vector<16x16xf32> to vector<1x16x16xf32>
    %cst_106 = arith.constant dense<0.000000e+00> : vector<1xf32>
    %1176 = vector.multi_reduction <add>, %1175, %cst_106 [1, 2] : vector<1x16x16xf32> to vector<1xf32>
    %1177 = vector.shape_cast %1176 : vector<1xf32> to vector<1x1x1xf32>
    %1178 = vector.extract %1177[0, 0, 0] : f32 from vector<1x1x1xf32>
    %1179 = vector.broadcast %1178 : f32 to vector<1x1xf32>
    %cst_107 = arith.constant 3.906250e-03 : f32
    %1180 = vector.broadcast %cst_107 : f32 to vector<1x1xf32>
    %1181 = arith.mulf %1179, %1180 : vector<1x1xf32>
    %1182 = arith.mulf %1173, %1173 : vector<1x1xf32>
    %1183 = arith.subf %1181, %1182 : vector<1x1xf32>
    %1184 = vector.broadcast %1173 : vector<1x1xf32> to vector<16x16xf32>
    %1185 = arith.subf %1166, %1184 : vector<16x16xf32>
    %cst_108 = arith.constant 9.99999974E-6 : f32
    %1186 = vector.broadcast %cst_108 : f32 to vector<1x1xf32>
    %1187 = arith.addf %1183, %1186 : vector<1x1xf32>
    %1188 = math.rsqrt %1187 : vector<1x1xf32>
    %1189 = vector.broadcast %1188 : vector<1x1xf32> to vector<16x16xf32>
    %1190 = arith.mulf %1185, %1189 : vector<16x16xf32>
    %c72_109 = arith.constant 72 : index
    %1191 = memref.load %arg3[%c72_109] : memref<144xf32, #tpu.memory_space<smem>>
    %1192 = vector.broadcast %1191 : f32 to vector<16x16xf32>
    %1193 = arith.mulf %1192, %786 : vector<16x16xf32>
    %c73_110 = arith.constant 73 : index
    %1194 = memref.load %arg3[%c73_110] : memref<144xf32, #tpu.memory_space<smem>>
    %1195 = vector.broadcast %1194 : f32 to vector<16x16xf32>
    %1196 = arith.mulf %1195, %788 : vector<16x16xf32>
    %c74_111 = arith.constant 74 : index
    %1197 = memref.load %arg3[%c74_111] : memref<144xf32, #tpu.memory_space<smem>>
    %1198 = vector.broadcast %1197 : f32 to vector<16x16xf32>
    %1199 = arith.mulf %1198, %790 : vector<16x16xf32>
    %c75_112 = arith.constant 75 : index
    %1200 = memref.load %arg3[%c75_112] : memref<144xf32, #tpu.memory_space<smem>>
    %1201 = vector.broadcast %1200 : f32 to vector<16x16xf32>
    %1202 = arith.mulf %1201, %792 : vector<16x16xf32>
    %c76_113 = arith.constant 76 : index
    %1203 = memref.load %arg3[%c76_113] : memref<144xf32, #tpu.memory_space<smem>>
    %1204 = vector.broadcast %1203 : f32 to vector<16x16xf32>
    %1205 = arith.mulf %1204, %794 : vector<16x16xf32>
    %c77_114 = arith.constant 77 : index
    %1206 = memref.load %arg3[%c77_114] : memref<144xf32, #tpu.memory_space<smem>>
    %1207 = vector.broadcast %1206 : f32 to vector<16x16xf32>
    %1208 = arith.mulf %1207, %796 : vector<16x16xf32>
    %c78_115 = arith.constant 78 : index
    %1209 = memref.load %arg3[%c78_115] : memref<144xf32, #tpu.memory_space<smem>>
    %1210 = vector.broadcast %1209 : f32 to vector<16x16xf32>
    %1211 = arith.mulf %1210, %798 : vector<16x16xf32>
    %c79_116 = arith.constant 79 : index
    %1212 = memref.load %arg3[%c79_116] : memref<144xf32, #tpu.memory_space<smem>>
    %1213 = vector.broadcast %1212 : f32 to vector<16x16xf32>
    %1214 = arith.mulf %1213, %800 : vector<16x16xf32>
    %c80_117 = arith.constant 80 : index
    %1215 = memref.load %arg3[%c80_117] : memref<144xf32, #tpu.memory_space<smem>>
    %1216 = vector.broadcast %1215 : f32 to vector<16x16xf32>
    %1217 = arith.mulf %1216, %802 : vector<16x16xf32>
    %c81_118 = arith.constant 81 : index
    %1218 = memref.load %arg3[%c81_118] : memref<144xf32, #tpu.memory_space<smem>>
    %1219 = vector.broadcast %1218 : f32 to vector<16x16xf32>
    %1220 = arith.mulf %1219, %804 : vector<16x16xf32>
    %c82_119 = arith.constant 82 : index
    %1221 = memref.load %arg3[%c82_119] : memref<144xf32, #tpu.memory_space<smem>>
    %1222 = vector.broadcast %1221 : f32 to vector<16x16xf32>
    %1223 = arith.mulf %1222, %806 : vector<16x16xf32>
    %c83_120 = arith.constant 83 : index
    %1224 = memref.load %arg3[%c83_120] : memref<144xf32, #tpu.memory_space<smem>>
    %1225 = vector.broadcast %1224 : f32 to vector<16x16xf32>
    %1226 = arith.mulf %1225, %808 : vector<16x16xf32>
    %c84_121 = arith.constant 84 : index
    %1227 = memref.load %arg3[%c84_121] : memref<144xf32, #tpu.memory_space<smem>>
    %1228 = vector.broadcast %1227 : f32 to vector<16x16xf32>
    %1229 = arith.mulf %1228, %810 : vector<16x16xf32>
    %c85_122 = arith.constant 85 : index
    %1230 = memref.load %arg3[%c85_122] : memref<144xf32, #tpu.memory_space<smem>>
    %1231 = vector.broadcast %1230 : f32 to vector<16x16xf32>
    %1232 = arith.mulf %1231, %812 : vector<16x16xf32>
    %c86_123 = arith.constant 86 : index
    %1233 = memref.load %arg3[%c86_123] : memref<144xf32, #tpu.memory_space<smem>>
    %1234 = vector.broadcast %1233 : f32 to vector<16x16xf32>
    %1235 = arith.mulf %1234, %814 : vector<16x16xf32>
    %c87_124 = arith.constant 87 : index
    %1236 = memref.load %arg3[%c87_124] : memref<144xf32, #tpu.memory_space<smem>>
    %1237 = vector.broadcast %1236 : f32 to vector<16x16xf32>
    %1238 = arith.mulf %1237, %816 : vector<16x16xf32>
    %c88_125 = arith.constant 88 : index
    %1239 = memref.load %arg3[%c88_125] : memref<144xf32, #tpu.memory_space<smem>>
    %1240 = vector.broadcast %1239 : f32 to vector<16x16xf32>
    %1241 = arith.mulf %1240, %818 : vector<16x16xf32>
    %c89_126 = arith.constant 89 : index
    %1242 = memref.load %arg3[%c89_126] : memref<144xf32, #tpu.memory_space<smem>>
    %1243 = vector.broadcast %1242 : f32 to vector<16x16xf32>
    %1244 = arith.mulf %1243, %820 : vector<16x16xf32>
    %c90_127 = arith.constant 90 : index
    %1245 = memref.load %arg3[%c90_127] : memref<144xf32, #tpu.memory_space<smem>>
    %1246 = vector.broadcast %1245 : f32 to vector<16x16xf32>
    %1247 = arith.mulf %1246, %822 : vector<16x16xf32>
    %c91_128 = arith.constant 91 : index
    %1248 = memref.load %arg3[%c91_128] : memref<144xf32, #tpu.memory_space<smem>>
    %1249 = vector.broadcast %1248 : f32 to vector<16x16xf32>
    %1250 = arith.mulf %1249, %824 : vector<16x16xf32>
    %c92_129 = arith.constant 92 : index
    %1251 = memref.load %arg3[%c92_129] : memref<144xf32, #tpu.memory_space<smem>>
    %1252 = vector.broadcast %1251 : f32 to vector<16x16xf32>
    %1253 = arith.mulf %1252, %826 : vector<16x16xf32>
    %c93_130 = arith.constant 93 : index
    %1254 = memref.load %arg3[%c93_130] : memref<144xf32, #tpu.memory_space<smem>>
    %1255 = vector.broadcast %1254 : f32 to vector<16x16xf32>
    %1256 = arith.mulf %1255, %828 : vector<16x16xf32>
    %c94_131 = arith.constant 94 : index
    %1257 = memref.load %arg3[%c94_131] : memref<144xf32, #tpu.memory_space<smem>>
    %1258 = vector.broadcast %1257 : f32 to vector<16x16xf32>
    %1259 = arith.mulf %1258, %830 : vector<16x16xf32>
    %c95_132 = arith.constant 95 : index
    %1260 = memref.load %arg3[%c95_132] : memref<144xf32, #tpu.memory_space<smem>>
    %1261 = vector.broadcast %1260 : f32 to vector<16x16xf32>
    %1262 = arith.mulf %1261, %832 : vector<16x16xf32>
    %c96_133 = arith.constant 96 : index
    %1263 = memref.load %arg3[%c96_133] : memref<144xf32, #tpu.memory_space<smem>>
    %1264 = vector.broadcast %1263 : f32 to vector<16x16xf32>
    %1265 = arith.mulf %1264, %834 : vector<16x16xf32>
    %c97_134 = arith.constant 97 : index
    %1266 = memref.load %arg3[%c97_134] : memref<144xf32, #tpu.memory_space<smem>>
    %1267 = vector.broadcast %1266 : f32 to vector<16x16xf32>
    %1268 = arith.mulf %1267, %836 : vector<16x16xf32>
    %c98_135 = arith.constant 98 : index
    %1269 = memref.load %arg3[%c98_135] : memref<144xf32, #tpu.memory_space<smem>>
    %1270 = vector.broadcast %1269 : f32 to vector<16x16xf32>
    %1271 = arith.mulf %1270, %838 : vector<16x16xf32>
    %c99_136 = arith.constant 99 : index
    %1272 = memref.load %arg3[%c99_136] : memref<144xf32, #tpu.memory_space<smem>>
    %1273 = vector.broadcast %1272 : f32 to vector<16x16xf32>
    %1274 = arith.mulf %1273, %840 : vector<16x16xf32>
    %c100_137 = arith.constant 100 : index
    %1275 = memref.load %arg3[%c100_137] : memref<144xf32, #tpu.memory_space<smem>>
    %1276 = vector.broadcast %1275 : f32 to vector<16x16xf32>
    %1277 = arith.mulf %1276, %842 : vector<16x16xf32>
    %c101_138 = arith.constant 101 : index
    %1278 = memref.load %arg3[%c101_138] : memref<144xf32, #tpu.memory_space<smem>>
    %1279 = vector.broadcast %1278 : f32 to vector<16x16xf32>
    %1280 = arith.mulf %1279, %844 : vector<16x16xf32>
    %c102_139 = arith.constant 102 : index
    %1281 = memref.load %arg3[%c102_139] : memref<144xf32, #tpu.memory_space<smem>>
    %1282 = vector.broadcast %1281 : f32 to vector<16x16xf32>
    %1283 = arith.mulf %1282, %846 : vector<16x16xf32>
    %c103_140 = arith.constant 103 : index
    %1284 = memref.load %arg3[%c103_140] : memref<144xf32, #tpu.memory_space<smem>>
    %1285 = vector.broadcast %1284 : f32 to vector<16x16xf32>
    %1286 = arith.mulf %1285, %848 : vector<16x16xf32>
    %c104_141 = arith.constant 104 : index
    %1287 = memref.load %arg3[%c104_141] : memref<144xf32, #tpu.memory_space<smem>>
    %1288 = vector.broadcast %1287 : f32 to vector<16x16xf32>
    %1289 = arith.mulf %1288, %850 : vector<16x16xf32>
    %c105_142 = arith.constant 105 : index
    %1290 = memref.load %arg3[%c105_142] : memref<144xf32, #tpu.memory_space<smem>>
    %1291 = vector.broadcast %1290 : f32 to vector<16x16xf32>
    %1292 = arith.mulf %1291, %852 : vector<16x16xf32>
    %c106_143 = arith.constant 106 : index
    %1293 = memref.load %arg3[%c106_143] : memref<144xf32, #tpu.memory_space<smem>>
    %1294 = vector.broadcast %1293 : f32 to vector<16x16xf32>
    %1295 = arith.mulf %1294, %854 : vector<16x16xf32>
    %c107_144 = arith.constant 107 : index
    %1296 = memref.load %arg3[%c107_144] : memref<144xf32, #tpu.memory_space<smem>>
    %1297 = vector.broadcast %1296 : f32 to vector<16x16xf32>
    %1298 = arith.mulf %1297, %856 : vector<16x16xf32>
    %1299 = arith.addf %1193, %1196 : vector<16x16xf32>
    %1300 = arith.addf %1199, %1202 : vector<16x16xf32>
    %1301 = arith.addf %1205, %1208 : vector<16x16xf32>
    %1302 = arith.addf %1211, %1214 : vector<16x16xf32>
    %1303 = arith.addf %1217, %1220 : vector<16x16xf32>
    %1304 = arith.addf %1223, %1226 : vector<16x16xf32>
    %1305 = arith.addf %1229, %1232 : vector<16x16xf32>
    %1306 = arith.addf %1235, %1238 : vector<16x16xf32>
    %1307 = arith.addf %1241, %1244 : vector<16x16xf32>
    %1308 = arith.addf %1247, %1250 : vector<16x16xf32>
    %1309 = arith.addf %1253, %1256 : vector<16x16xf32>
    %1310 = arith.addf %1259, %1262 : vector<16x16xf32>
    %1311 = arith.addf %1265, %1268 : vector<16x16xf32>
    %1312 = arith.addf %1271, %1274 : vector<16x16xf32>
    %1313 = arith.addf %1277, %1280 : vector<16x16xf32>
    %1314 = arith.addf %1283, %1286 : vector<16x16xf32>
    %1315 = arith.addf %1289, %1292 : vector<16x16xf32>
    %1316 = arith.addf %1295, %1298 : vector<16x16xf32>
    %1317 = arith.addf %1299, %1300 : vector<16x16xf32>
    %1318 = arith.addf %1301, %1302 : vector<16x16xf32>
    %1319 = arith.addf %1303, %1304 : vector<16x16xf32>
    %1320 = arith.addf %1305, %1306 : vector<16x16xf32>
    %1321 = arith.addf %1307, %1308 : vector<16x16xf32>
    %1322 = arith.addf %1309, %1310 : vector<16x16xf32>
    %1323 = arith.addf %1311, %1312 : vector<16x16xf32>
    %1324 = arith.addf %1313, %1314 : vector<16x16xf32>
    %1325 = arith.addf %1315, %1316 : vector<16x16xf32>
    %1326 = arith.addf %1317, %1318 : vector<16x16xf32>
    %1327 = arith.addf %1319, %1320 : vector<16x16xf32>
    %1328 = arith.addf %1321, %1322 : vector<16x16xf32>
    %1329 = arith.addf %1323, %1324 : vector<16x16xf32>
    %1330 = arith.addf %1326, %1327 : vector<16x16xf32>
    %1331 = arith.addf %1328, %1329 : vector<16x16xf32>
    %1332 = arith.addf %1330, %1331 : vector<16x16xf32>
    %1333 = arith.addf %1332, %1325 : vector<16x16xf32>
    %1334 = vector.shape_cast %1333 : vector<16x16xf32> to vector<1x16x16xf32>
    %cst_145 = arith.constant dense<0.000000e+00> : vector<1xf32>
    %1335 = vector.multi_reduction <add>, %1334, %cst_145 [1, 2] : vector<1x16x16xf32> to vector<1xf32>
    %1336 = vector.shape_cast %1335 : vector<1xf32> to vector<1x1x1xf32>
    %1337 = vector.extract %1336[0, 0, 0] : f32 from vector<1x1x1xf32>
    %1338 = vector.broadcast %1337 : f32 to vector<1x1xf32>
    %cst_146 = arith.constant 3.906250e-03 : f32
    %1339 = vector.broadcast %cst_146 : f32 to vector<1x1xf32>
    %1340 = arith.mulf %1338, %1339 : vector<1x1xf32>
    %1341 = arith.mulf %1333, %1333 : vector<16x16xf32>
    %1342 = vector.shape_cast %1341 : vector<16x16xf32> to vector<1x16x16xf32>
    %cst_147 = arith.constant dense<0.000000e+00> : vector<1xf32>
    %1343 = vector.multi_reduction <add>, %1342, %cst_147 [1, 2] : vector<1x16x16xf32> to vector<1xf32>
    %1344 = vector.shape_cast %1343 : vector<1xf32> to vector<1x1x1xf32>
    %1345 = vector.extract %1344[0, 0, 0] : f32 from vector<1x1x1xf32>
    %1346 = vector.broadcast %1345 : f32 to vector<1x1xf32>
    %cst_148 = arith.constant 3.906250e-03 : f32
    %1347 = vector.broadcast %cst_148 : f32 to vector<1x1xf32>
    %1348 = arith.mulf %1346, %1347 : vector<1x1xf32>
    %1349 = arith.mulf %1340, %1340 : vector<1x1xf32>
    %1350 = arith.subf %1348, %1349 : vector<1x1xf32>
    %1351 = vector.broadcast %1340 : vector<1x1xf32> to vector<16x16xf32>
    %1352 = arith.subf %1333, %1351 : vector<16x16xf32>
    %cst_149 = arith.constant 9.99999974E-6 : f32
    %1353 = vector.broadcast %cst_149 : f32 to vector<1x1xf32>
    %1354 = arith.addf %1350, %1353 : vector<1x1xf32>
    %1355 = math.rsqrt %1354 : vector<1x1xf32>
    %1356 = vector.broadcast %1355 : vector<1x1xf32> to vector<16x16xf32>
    %1357 = arith.mulf %1352, %1356 : vector<16x16xf32>
    %c108_150 = arith.constant 108 : index
    %1358 = memref.load %arg3[%c108_150] : memref<144xf32, #tpu.memory_space<smem>>
    %1359 = vector.broadcast %1358 : f32 to vector<16x16xf32>
    %1360 = arith.mulf %1359, %786 : vector<16x16xf32>
    %c109_151 = arith.constant 109 : index
    %1361 = memref.load %arg3[%c109_151] : memref<144xf32, #tpu.memory_space<smem>>
    %1362 = vector.broadcast %1361 : f32 to vector<16x16xf32>
    %1363 = arith.mulf %1362, %788 : vector<16x16xf32>
    %c110_152 = arith.constant 110 : index
    %1364 = memref.load %arg3[%c110_152] : memref<144xf32, #tpu.memory_space<smem>>
    %1365 = vector.broadcast %1364 : f32 to vector<16x16xf32>
    %1366 = arith.mulf %1365, %790 : vector<16x16xf32>
    %c111_153 = arith.constant 111 : index
    %1367 = memref.load %arg3[%c111_153] : memref<144xf32, #tpu.memory_space<smem>>
    %1368 = vector.broadcast %1367 : f32 to vector<16x16xf32>
    %1369 = arith.mulf %1368, %792 : vector<16x16xf32>
    %c112_154 = arith.constant 112 : index
    %1370 = memref.load %arg3[%c112_154] : memref<144xf32, #tpu.memory_space<smem>>
    %1371 = vector.broadcast %1370 : f32 to vector<16x16xf32>
    %1372 = arith.mulf %1371, %794 : vector<16x16xf32>
    %c113_155 = arith.constant 113 : index
    %1373 = memref.load %arg3[%c113_155] : memref<144xf32, #tpu.memory_space<smem>>
    %1374 = vector.broadcast %1373 : f32 to vector<16x16xf32>
    %1375 = arith.mulf %1374, %796 : vector<16x16xf32>
    %c114_156 = arith.constant 114 : index
    %1376 = memref.load %arg3[%c114_156] : memref<144xf32, #tpu.memory_space<smem>>
    %1377 = vector.broadcast %1376 : f32 to vector<16x16xf32>
    %1378 = arith.mulf %1377, %798 : vector<16x16xf32>
    %c115_157 = arith.constant 115 : index
    %1379 = memref.load %arg3[%c115_157] : memref<144xf32, #tpu.memory_space<smem>>
    %1380 = vector.broadcast %1379 : f32 to vector<16x16xf32>
    %1381 = arith.mulf %1380, %800 : vector<16x16xf32>
    %c116_158 = arith.constant 116 : index
    %1382 = memref.load %arg3[%c116_158] : memref<144xf32, #tpu.memory_space<smem>>
    %1383 = vector.broadcast %1382 : f32 to vector<16x16xf32>
    %1384 = arith.mulf %1383, %802 : vector<16x16xf32>
    %c117_159 = arith.constant 117 : index
    %1385 = memref.load %arg3[%c117_159] : memref<144xf32, #tpu.memory_space<smem>>
    %1386 = vector.broadcast %1385 : f32 to vector<16x16xf32>
    %1387 = arith.mulf %1386, %804 : vector<16x16xf32>
    %c118_160 = arith.constant 118 : index
    %1388 = memref.load %arg3[%c118_160] : memref<144xf32, #tpu.memory_space<smem>>
    %1389 = vector.broadcast %1388 : f32 to vector<16x16xf32>
    %1390 = arith.mulf %1389, %806 : vector<16x16xf32>
    %c119_161 = arith.constant 119 : index
    %1391 = memref.load %arg3[%c119_161] : memref<144xf32, #tpu.memory_space<smem>>
    %1392 = vector.broadcast %1391 : f32 to vector<16x16xf32>
    %1393 = arith.mulf %1392, %808 : vector<16x16xf32>
    %c120_162 = arith.constant 120 : index
    %1394 = memref.load %arg3[%c120_162] : memref<144xf32, #tpu.memory_space<smem>>
    %1395 = vector.broadcast %1394 : f32 to vector<16x16xf32>
    %1396 = arith.mulf %1395, %810 : vector<16x16xf32>
    %c121_163 = arith.constant 121 : index
    %1397 = memref.load %arg3[%c121_163] : memref<144xf32, #tpu.memory_space<smem>>
    %1398 = vector.broadcast %1397 : f32 to vector<16x16xf32>
    %1399 = arith.mulf %1398, %812 : vector<16x16xf32>
    %c122_164 = arith.constant 122 : index
    %1400 = memref.load %arg3[%c122_164] : memref<144xf32, #tpu.memory_space<smem>>
    %1401 = vector.broadcast %1400 : f32 to vector<16x16xf32>
    %1402 = arith.mulf %1401, %814 : vector<16x16xf32>
    %c123_165 = arith.constant 123 : index
    %1403 = memref.load %arg3[%c123_165] : memref<144xf32, #tpu.memory_space<smem>>
    %1404 = vector.broadcast %1403 : f32 to vector<16x16xf32>
    %1405 = arith.mulf %1404, %816 : vector<16x16xf32>
    %c124_166 = arith.constant 124 : index
    %1406 = memref.load %arg3[%c124_166] : memref<144xf32, #tpu.memory_space<smem>>
    %1407 = vector.broadcast %1406 : f32 to vector<16x16xf32>
    %1408 = arith.mulf %1407, %818 : vector<16x16xf32>
    %c125_167 = arith.constant 125 : index
    %1409 = memref.load %arg3[%c125_167] : memref<144xf32, #tpu.memory_space<smem>>
    %1410 = vector.broadcast %1409 : f32 to vector<16x16xf32>
    %1411 = arith.mulf %1410, %820 : vector<16x16xf32>
    %c126_168 = arith.constant 126 : index
    %1412 = memref.load %arg3[%c126_168] : memref<144xf32, #tpu.memory_space<smem>>
    %1413 = vector.broadcast %1412 : f32 to vector<16x16xf32>
    %1414 = arith.mulf %1413, %822 : vector<16x16xf32>
    %c127_169 = arith.constant 127 : index
    %1415 = memref.load %arg3[%c127_169] : memref<144xf32, #tpu.memory_space<smem>>
    %1416 = vector.broadcast %1415 : f32 to vector<16x16xf32>
    %1417 = arith.mulf %1416, %824 : vector<16x16xf32>
    %c128_170 = arith.constant 128 : index
    %1418 = memref.load %arg3[%c128_170] : memref<144xf32, #tpu.memory_space<smem>>
    %1419 = vector.broadcast %1418 : f32 to vector<16x16xf32>
    %1420 = arith.mulf %1419, %826 : vector<16x16xf32>
    %c129_171 = arith.constant 129 : index
    %1421 = memref.load %arg3[%c129_171] : memref<144xf32, #tpu.memory_space<smem>>
    %1422 = vector.broadcast %1421 : f32 to vector<16x16xf32>
    %1423 = arith.mulf %1422, %828 : vector<16x16xf32>
    %c130_172 = arith.constant 130 : index
    %1424 = memref.load %arg3[%c130_172] : memref<144xf32, #tpu.memory_space<smem>>
    %1425 = vector.broadcast %1424 : f32 to vector<16x16xf32>
    %1426 = arith.mulf %1425, %830 : vector<16x16xf32>
    %c131_173 = arith.constant 131 : index
    %1427 = memref.load %arg3[%c131_173] : memref<144xf32, #tpu.memory_space<smem>>
    %1428 = vector.broadcast %1427 : f32 to vector<16x16xf32>
    %1429 = arith.mulf %1428, %832 : vector<16x16xf32>
    %c132_174 = arith.constant 132 : index
    %1430 = memref.load %arg3[%c132_174] : memref<144xf32, #tpu.memory_space<smem>>
    %1431 = vector.broadcast %1430 : f32 to vector<16x16xf32>
    %1432 = arith.mulf %1431, %834 : vector<16x16xf32>
    %c133_175 = arith.constant 133 : index
    %1433 = memref.load %arg3[%c133_175] : memref<144xf32, #tpu.memory_space<smem>>
    %1434 = vector.broadcast %1433 : f32 to vector<16x16xf32>
    %1435 = arith.mulf %1434, %836 : vector<16x16xf32>
    %c134_176 = arith.constant 134 : index
    %1436 = memref.load %arg3[%c134_176] : memref<144xf32, #tpu.memory_space<smem>>
    %1437 = vector.broadcast %1436 : f32 to vector<16x16xf32>
    %1438 = arith.mulf %1437, %838 : vector<16x16xf32>
    %c135_177 = arith.constant 135 : index
    %1439 = memref.load %arg3[%c135_177] : memref<144xf32, #tpu.memory_space<smem>>
    %1440 = vector.broadcast %1439 : f32 to vector<16x16xf32>
    %1441 = arith.mulf %1440, %840 : vector<16x16xf32>
    %c136_178 = arith.constant 136 : index
    %1442 = memref.load %arg3[%c136_178] : memref<144xf32, #tpu.memory_space<smem>>
    %1443 = vector.broadcast %1442 : f32 to vector<16x16xf32>
    %1444 = arith.mulf %1443, %842 : vector<16x16xf32>
    %c137_179 = arith.constant 137 : index
    %1445 = memref.load %arg3[%c137_179] : memref<144xf32, #tpu.memory_space<smem>>
    %1446 = vector.broadcast %1445 : f32 to vector<16x16xf32>
    %1447 = arith.mulf %1446, %844 : vector<16x16xf32>
    %c138_180 = arith.constant 138 : index
    %1448 = memref.load %arg3[%c138_180] : memref<144xf32, #tpu.memory_space<smem>>
    %1449 = vector.broadcast %1448 : f32 to vector<16x16xf32>
    %1450 = arith.mulf %1449, %846 : vector<16x16xf32>
    %c139_181 = arith.constant 139 : index
    %1451 = memref.load %arg3[%c139_181] : memref<144xf32, #tpu.memory_space<smem>>
    %1452 = vector.broadcast %1451 : f32 to vector<16x16xf32>
    %1453 = arith.mulf %1452, %848 : vector<16x16xf32>
    %c140_182 = arith.constant 140 : index
    %1454 = memref.load %arg3[%c140_182] : memref<144xf32, #tpu.memory_space<smem>>
    %1455 = vector.broadcast %1454 : f32 to vector<16x16xf32>
    %1456 = arith.mulf %1455, %850 : vector<16x16xf32>
    %c141_183 = arith.constant 141 : index
    %1457 = memref.load %arg3[%c141_183] : memref<144xf32, #tpu.memory_space<smem>>
    %1458 = vector.broadcast %1457 : f32 to vector<16x16xf32>
    %1459 = arith.mulf %1458, %852 : vector<16x16xf32>
    %c142_184 = arith.constant 142 : index
    %1460 = memref.load %arg3[%c142_184] : memref<144xf32, #tpu.memory_space<smem>>
    %1461 = vector.broadcast %1460 : f32 to vector<16x16xf32>
    %1462 = arith.mulf %1461, %854 : vector<16x16xf32>
    %c143_185 = arith.constant 143 : index
    %1463 = memref.load %arg3[%c143_185] : memref<144xf32, #tpu.memory_space<smem>>
    %1464 = vector.broadcast %1463 : f32 to vector<16x16xf32>
    %1465 = arith.mulf %1464, %856 : vector<16x16xf32>
    %1466 = arith.addf %1360, %1363 : vector<16x16xf32>
    %1467 = arith.addf %1366, %1369 : vector<16x16xf32>
    %1468 = arith.addf %1372, %1375 : vector<16x16xf32>
    %1469 = arith.addf %1378, %1381 : vector<16x16xf32>
    %1470 = arith.addf %1384, %1387 : vector<16x16xf32>
    %1471 = arith.addf %1390, %1393 : vector<16x16xf32>
    %1472 = arith.addf %1396, %1399 : vector<16x16xf32>
    %1473 = arith.addf %1402, %1405 : vector<16x16xf32>
    %1474 = arith.addf %1408, %1411 : vector<16x16xf32>
    %1475 = arith.addf %1414, %1417 : vector<16x16xf32>
    %1476 = arith.addf %1420, %1423 : vector<16x16xf32>
    %1477 = arith.addf %1426, %1429 : vector<16x16xf32>
    %1478 = arith.addf %1432, %1435 : vector<16x16xf32>
    %1479 = arith.addf %1438, %1441 : vector<16x16xf32>
    %1480 = arith.addf %1444, %1447 : vector<16x16xf32>
    %1481 = arith.addf %1450, %1453 : vector<16x16xf32>
    %1482 = arith.addf %1456, %1459 : vector<16x16xf32>
    %1483 = arith.addf %1462, %1465 : vector<16x16xf32>
    %1484 = arith.addf %1466, %1467 : vector<16x16xf32>
    %1485 = arith.addf %1468, %1469 : vector<16x16xf32>
    %1486 = arith.addf %1470, %1471 : vector<16x16xf32>
    %1487 = arith.addf %1472, %1473 : vector<16x16xf32>
    %1488 = arith.addf %1474, %1475 : vector<16x16xf32>
    %1489 = arith.addf %1476, %1477 : vector<16x16xf32>
    %1490 = arith.addf %1478, %1479 : vector<16x16xf32>
    %1491 = arith.addf %1480, %1481 : vector<16x16xf32>
    %1492 = arith.addf %1482, %1483 : vector<16x16xf32>
    %1493 = arith.addf %1484, %1485 : vector<16x16xf32>
    %1494 = arith.addf %1486, %1487 : vector<16x16xf32>
    %1495 = arith.addf %1488, %1489 : vector<16x16xf32>
    %1496 = arith.addf %1490, %1491 : vector<16x16xf32>
    %1497 = arith.addf %1493, %1494 : vector<16x16xf32>
    %1498 = arith.addf %1495, %1496 : vector<16x16xf32>
    %1499 = arith.addf %1497, %1498 : vector<16x16xf32>
    %1500 = arith.addf %1499, %1492 : vector<16x16xf32>
    %1501 = vector.shape_cast %1500 : vector<16x16xf32> to vector<1x16x16xf32>
    %cst_186 = arith.constant dense<0.000000e+00> : vector<1xf32>
    %1502 = vector.multi_reduction <add>, %1501, %cst_186 [1, 2] : vector<1x16x16xf32> to vector<1xf32>
    %1503 = vector.shape_cast %1502 : vector<1xf32> to vector<1x1x1xf32>
    %1504 = vector.extract %1503[0, 0, 0] : f32 from vector<1x1x1xf32>
    %1505 = vector.broadcast %1504 : f32 to vector<1x1xf32>
    %cst_187 = arith.constant 3.906250e-03 : f32
    %1506 = vector.broadcast %cst_187 : f32 to vector<1x1xf32>
    %1507 = arith.mulf %1505, %1506 : vector<1x1xf32>
    %1508 = arith.mulf %1500, %1500 : vector<16x16xf32>
    %1509 = vector.shape_cast %1508 : vector<16x16xf32> to vector<1x16x16xf32>
    %cst_188 = arith.constant dense<0.000000e+00> : vector<1xf32>
    %1510 = vector.multi_reduction <add>, %1509, %cst_188 [1, 2] : vector<1x16x16xf32> to vector<1xf32>
    %1511 = vector.shape_cast %1510 : vector<1xf32> to vector<1x1x1xf32>
    %1512 = vector.extract %1511[0, 0, 0] : f32 from vector<1x1x1xf32>
    %1513 = vector.broadcast %1512 : f32 to vector<1x1xf32>
    %cst_189 = arith.constant 3.906250e-03 : f32
    %1514 = vector.broadcast %cst_189 : f32 to vector<1x1xf32>
    %1515 = arith.mulf %1513, %1514 : vector<1x1xf32>
    %1516 = arith.mulf %1507, %1507 : vector<1x1xf32>
    %1517 = arith.subf %1515, %1516 : vector<1x1xf32>
    %1518 = vector.broadcast %1507 : vector<1x1xf32> to vector<16x16xf32>
    %1519 = arith.subf %1500, %1518 : vector<16x16xf32>
    %cst_190 = arith.constant 9.99999974E-6 : f32
    %1520 = vector.broadcast %cst_190 : f32 to vector<1x1xf32>
    %1521 = arith.addf %1517, %1520 : vector<1x1xf32>
    %1522 = math.rsqrt %1521 : vector<1x1xf32>
    %1523 = vector.broadcast %1522 : vector<1x1xf32> to vector<16x16xf32>
    %1524 = arith.mulf %1519, %1523 : vector<16x16xf32>
    %1525 = vector.shape_cast %1023 : vector<16x16xf32> to vector<1x16x16xf32>
    %1526 = vector.shape_cast %1190 : vector<16x16xf32> to vector<1x16x16xf32>
    %1527 = vector.shape_cast %1357 : vector<16x16xf32> to vector<1x16x16xf32>
    %1528 = vector.shape_cast %1524 : vector<16x16xf32> to vector<1x16x16xf32>
    %1529 = tpu.concatenate %1525, %1526, %1527, %1528 in 0 : vector<1x16x16xf32>, vector<1x16x16xf32>, vector<1x16x16xf32>, vector<1x16x16xf32> -> vector<4x16x16xf32>
    %1530 = arith.addf %1, %1529 : vector<4x16x16xf32>
    %c0_191 = arith.constant 0 : index
    %c0_192 = arith.constant 0 : index
    %c0_193 = arith.constant 0 : index
    %c0_194 = arith.constant 0 : index
    %1531 = vector.load %arg4[%c0_191, %c0_192, %c0_193, %c0_194] : memref<1x4x16x16xf32, #tpu.memory_space<vmem>>, vector<1x4x16x16xf32>
    %1532 = vector.shape_cast %1531 : vector<1x4x16x16xf32> to vector<4x16x16xf32>
    %1533 = vector.shape_cast %1530 : vector<4x16x16xf32> to vector<1x4x16x16xf32>
    tpu.vector_store %arg4[%c0_191, %c0_192, %c0_193, %c0_194], %1533 {strides = array<i32>} : memref<1x4x16x16xf32, #tpu.memory_space<vmem>>, vector<1x4x16x16xf32>,
    return
  }
  func.func @transform_0(%arg0: i32) -> (i32, i32, i32, i32) {
    %c0_i32 = arith.constant 0 : i32
    %c0_i32_0 = arith.constant 0 : i32
    %c0_i32_1 = arith.constant 0 : i32
    %c0_i32_2 = arith.constant 0 : i32
    return %arg0, %c0_i32, %c0_i32_0, %c0_i32_1 : i32, i32, i32, i32
  }
  func.func @transform_1(%arg0: i32) -> i32 {
    %c0_i32 = arith.constant 0 : i32
    %c0_i32_0 = arith.constant 0 : i32
    return %c0_i32 : i32
  }
  func.func @transform_2(%arg0: i32) -> i32 {
    %c0_i32 = arith.constant 0 : i32
    %c0_i32_0 = arith.constant 0 : i32
    return %c0_i32 : i32
  }
  func.func @transform_3(%arg0: i32) -> (i32, i32, i32, i32) {
    %c0_i32 = arith.constant 0 : i32
    %c0_i32_0 = arith.constant 0 : i32
    %c0_i32_1 = arith.constant 0 : i32
    %c0_i32_2 = arith.constant 0 : i32
    return %arg0, %c0_i32, %c0_i32_0, %c0_i32_1 : i32, i32, i32, i32
  }
}

</mosaic_0001>

<llo_original>
// kernel: tpu_custom_call.1
$region0: #{tpu_custom_call.1}
  #allocation0 [shape = 'u32[]', space=smem, size = 0x4, offset = 0x4, fixed_abs, tag = 'smem constant byte address 0x4 - core index']
  #allocation1 [shape = 'u32[144,128]{1,0:T(1,128)}', space=vmem, size = 0x12000, scoped, tag = 'internal scratch']
  %s0 = inlined_call_operand.hbm [shape: f32[2,4,16,16], index: 0, kind: input, shape index: {}]
  %s1 = inlined_call_operand.hbm [shape: f32[144], index: 1, kind: input, shape index: {}]
  %s2 = inlined_call_operand.vmem [shape: f32[144], index: 2, kind: input, shape index: {}]
  %s3 = inlined_call_operand.hbm [shape: f32[2,4,16,16], index: 3, kind: output, shape index: {}]
  %s4 = sld [smem:[#allocation0]]
  $region57: #{tpu_custom_call.1} parent=0
    _
  %s6 = ssub.s32 1, %s4
  %s7 = scalar_select 0, %s6, %s4
  $region1: #{tpu_custom_call.1} parent=0
    #allocation2 [shape = 'u8[65536]{0}', space=vmem, size = 0x10000, scoped, tag = 'input window, operand 0']
    #allocation3 [shape = 's32[2]{0}', space=sflag, size = 0x8, scoped, tag = 'scoped memory for tpu_custom_call.1']
    #allocation4 [shape = 's32[2]{0}', space=sflag, size = 0x8, scoped, tag = 'scoped memory for tpu_custom_call.1']
    #allocation5 [shape = 's32[2]{0}', space=sflag, size = 0x8, scoped, tag = 'scoped memory for tpu_custom_call.1']
    #allocation6 [shape = 's32[2]{0}', space=sflag, size = 0x8, scoped, tag = 'scoped memory for tpu_custom_call.1']
    #allocation7 [shape = 'u8[1024]{0}', space=smem, size = 0x400, scoped, tag = 'input window, operand 1, single buffered']
    #allocation8 [shape = 'u8[1024]{0}', space=smem, size = 0x400, scoped, tag = 'input window, operand 2, single buffered']
    #allocation9 [shape = 'u8[65536]{0}', space=vmem, size = 0x10000, scoped, tag = 'output window, operand 0']
    %8 = vsyncpa [#allocation3], 0
    %s9 = scalar_lea.sflag [#allocation3], 1
    %10 = vsyncpa %s9, 0
    %11 = vsyncpa [#allocation5], 0
    %12 = vsyncpa [#allocation6], 0
    %13 = vsyncpa [#allocation4], 0
    %s14 = scalar_lea.sflag [#allocation4], 1
    %15 = vsyncpa %s14, 0
    loop: start=0, step=1, limit=4
    $region2: #{tpu_custom_call.1} parent=1 // loop_pre_header
      _
    $region3: #{tpu_custom_call.1} parent=1 // loop_header
      %s17 = sphi 0, %s21
      %p18 = scmp.ge.s32.totalorder %s17, 4
      %s27 = sphi 0, %s29
      %s30 = sphi 0, %s27
      %s31 = sphi 0, %s30
      %s47 = sphi 0, %s31
      %s51 = sphi 0, %s51
      %s53 = sphi 0, %s51
      %s54 = sphi 0, %s53
      %s68 = sphi 0, %s54
      %s72 = sphi 0, %s72
      %s74 = sphi 0, %s72
      %s75 = sphi 0, %s74
      %s89 = sphi 0, %s75
      %s95 = sphi 0, %s97
      %s98 = sphi 0, %s95
      %s99 = sphi 0, %s98
      %s115 = sphi 0, %s99
    $region4: #{tpu_custom_call.1} parent=1 // loop_header_branch
      %20 = sbr.rel (%p18) target = $region8
    $region5: #{tpu_custom_call.1} parent=1 // loop_body
      %s22 = ssub.s32 %s17, 1
      %s23 = ssub.s32 %s17, 2
      %s24 = sadd.s32 %s17, 1
      %s25 = ssub.s32 %s17, %s24
      %p26 = scmp.eq.s32.totalorder %s25, 0
      %s28 = sadd.s32 %s27, 1
      %s29 = scalar_select %p26, %s27, %s28
      %p32 = pneg %p26
      %p33 = scmp.eq.s32.totalorder %s17, 1
      %p34 = por %p32, %p33
      %p35 = scmp.ne.s32.totalorder %s27, %s30
      %p36 = scmp.eq.s32.totalorder %s17, 0
      %p37 = por %p35, %p36
      %p38 = scmp.ne.s32.totalorder %s27, %s30
      %p39 = scmp.eq.s32.totalorder %s22, 1
      %p40 = por %p38, %p39
      %p41 = scmp.ne.s32.totalorder %s30, %s31
      %p42 = scmp.eq.s32.totalorder %s22, 0
      %p43 = por %p41, %p42
      %p44 = scmp.ne.s32.totalorder %s30, %s31
      %p45 = scmp.eq.s32.totalorder %s23, 1
      %p46 = por %p44, %p45
      %p48 = scmp.ne.s32.totalorder %s31, %s47
      %p49 = scmp.eq.s32.totalorder %s23, 0
      %p50 = por %p48, %p49
      %s52 = sadd.s32 %s51, 1
      %p55 = scmp.eq.s32.totalorder %s17, 1
      %p56 = scmp.ne.s32.totalorder %s51, %s53
      %p57 = scmp.eq.s32.totalorder %s17, 0
      %p58 = por %p56, %p57
      %p59 = scmp.ne.s32.totalorder %s51, %s53
      %p60 = scmp.eq.s32.totalorder %s22, 1
      %p61 = por %p59, %p60
      %p62 = scmp.ne.s32.totalorder %s53, %s54
      %p63 = scmp.eq.s32.totalorder %s22, 0
      %p64 = por %p62, %p63
      %p65 = scmp.ne.s32.totalorder %s53, %s54
      %p66 = scmp.eq.s32.totalorder %s23, 1
      %p67 = por %p65, %p66
      %p69 = scmp.ne.s32.totalorder %s54, %s68
      %p70 = scmp.eq.s32.totalorder %s23, 0
      %p71 = por %p69, %p70
      %s73 = sadd.s32 %s72, 1
      %p76 = scmp.eq.s32.totalorder %s17, 1
      %p77 = scmp.ne.s32.totalorder %s72, %s74
      %p78 = scmp.eq.s32.totalorder %s17, 0
      %p79 = por %p77, %p78
      %p80 = scmp.ne.s32.totalorder %s72, %s74
      %p81 = scmp.eq.s32.totalorder %s22, 1
      %p82 = por %p80, %p81
      %p83 = scmp.ne.s32.totalorder %s74, %s75
      %p84 = scmp.eq.s32.totalorder %s22, 0
      %p85 = por %p83, %p84
      %p86 = scmp.ne.s32.totalorder %s74, %s75
      %p87 = scmp.eq.s32.totalorder %s23, 1
      %p88 = por %p86, %p87
      %p90 = scmp.ne.s32.totalorder %s75, %s89
      %p91 = scmp.eq.s32.totalorder %s23, 0
      %p92 = por %p90, %p91
      %s93 = ssub.s32 %s17, %s24
      %p94 = scmp.eq.s32.totalorder %s93, 0
      %s96 = sadd.s32 %s95, 1
      %s97 = scalar_select %p94, %s95, %s96
      %p100 = pneg %p94
      %p101 = scmp.eq.s32.totalorder %s17, 1
      %p102 = por %p100, %p101
      %p103 = scmp.ne.s32.totalorder %s95, %s98
      %p104 = scmp.eq.s32.totalorder %s17, 0
      %p105 = por %p103, %p104
      %p106 = scmp.ne.s32.totalorder %s95, %s98
      %p107 = scmp.eq.s32.totalorder %s22, 1
      %p108 = por %p106, %p107
      %p109 = scmp.ne.s32.totalorder %s98, %s99
      %p110 = scmp.eq.s32.totalorder %s22, 0
      %p111 = por %p109, %p110
      %p112 = scmp.ne.s32.totalorder %s98, %s99
      %p113 = scmp.eq.s32.totalorder %s23, 1
      %p114 = por %p112, %p113
      %p116 = scmp.ne.s32.totalorder %s99, %s115
      %p117 = scmp.eq.s32.totalorder %s23, 0
      %p118 = por %p116, %p117
      %p119 = scmp.le.s32.totalorder 1, %s17
      %p120 = scmp.lt.s32.totalorder %s17, 3
      %p121 = pnand %p119, %p120
      %p122 = pneg %p121
      // Predicated region
      $region9: #{tpu_custom_call.1} parent=5 // pred_check
        _
      $region10: #{tpu_custom_call.1} parent=5 // pred_check_branch
        %124 = sbr.rel (%p121) target = $region12
      $region11: #{tpu_custom_call.1} parent=5 // pred_region
        %s125 = ssub.s32 %s17, 1
        // Predicated region
        $region13: #{tpu_custom_call.1} parent=11 // pred_check
          %p126 = pneg %p64
        $region14: #{tpu_custom_call.1} parent=11 // pred_check_branch
          %128 = sbr.rel (%p126) target = $region16
        $region15: #{tpu_custom_call.1} parent=11 // pred_region
          %s130 = ssub.s32 32, 32
          %131 = vsyncadd [#allocation5], %s130
          %134 = dma.hbm_to_smem %s1, 32, [#allocation7], [#allocation5]
        $region16: #{tpu_custom_call.1} parent=11 // pred_fallthru
          _
        // Predicated region
        $region17: #{tpu_custom_call.1} parent=11 // pred_check
          %p135 = pneg %p85
        $region18: #{tpu_custom_call.1} parent=11 // pred_check_branch
          %137 = sbr.rel (%p135) target = $region20
        $region19: #{tpu_custom_call.1} parent=11 // pred_region
          %s139 = ssub.s32 32, 32
          %140 = vsyncadd [#allocation6], %s139
          %s142 = sshll.u32 %s2, 4
          %s143 = int_to_ptr.vmem [resolvable:$true] %s142
          %145 = dma.vmem_to_smem %s143, 32, [#allocation8], [#allocation6]
        $region20: #{tpu_custom_call.1} parent=11 // pred_fallthru
          _
      $region12: #{tpu_custom_call.1} parent=5 // pred_fallthru
        _
      %p146 = scmp.lt.s32.totalorder %s17, 2
      // Predicated region
      $region21: #{tpu_custom_call.1} parent=5 // pred_check
        %p147 = pneg %p146
      $region22: #{tpu_custom_call.1} parent=5 // pred_check_branch
        %149 = sbr.rel (%p147) target = $region24
      $region23: #{tpu_custom_call.1} parent=5 // pred_region
        // Predicated region
        $region25: #{tpu_custom_call.1} parent=23 // pred_check
          %p150 = pneg %p37
        $region26: #{tpu_custom_call.1} parent=23 // pred_check_branch
          %152 = sbr.rel (%p150) target = $region28
        $region27: #{tpu_custom_call.1} parent=23 // pred_region
          %s153 = sand.u32 %s27, 1
          %s154 = scalar_lea.sflag [#allocation3], %s153
          %s155 = sand.u32 %s27, 1
          %s156 = smul.addr %s155, 64
          %s157 = scalar_lea.vmem [#allocation2], %s156
          %s159 = ssub.s32 1024, 1024
          %160 = vsyncadd %s154, %s159
          %s161 = smul.addr %s17, 8
          %s162 = smul.addr %s161, 128
          %s163 = scalar_lea.hbm %s0, %s162
          %s164 = sshll.u32 %s157, 4
          %s165 = int_to_ptr.vmem [resolvable:$true] %s164
          %170 = dma.hbm_to_vmem [thread:$0]  %s163, 1024, %s165, %s154, 128, 128, 8
        $region28: #{tpu_custom_call.1} parent=23 // pred_fallthru
          _
      $region24: #{tpu_custom_call.1} parent=5 // pred_fallthru
        _
      %p171 = scmp.le.s32.totalorder 1, %s17
      %p172 = scmp.lt.s32.totalorder %s17, 3
      %p173 = pnand %p171, %p172
      %p174 = pneg %p173
      // Predicated region
      $region29: #{tpu_custom_call.1} parent=5 // pred_check
        _
      $region30: #{tpu_custom_call.1} parent=5 // pred_check_branch
        %176 = sbr.rel (%p173) target = $region32
      $region31: #{tpu_custom_call.1} parent=5 // pred_region
        %s177 = ssub.s32 %s17, 1
        %s178 = sand.u32 %s30, 1
        %s179 = scalar_lea.sflag [#allocation3], %s178
        %s180 = sand.u32 %s30, 1
        %s181 = smul.addr %s180, 64
        %s182 = scalar_lea.vmem [#allocation2], %s181
        // Predicated region
        $region33: #{tpu_custom_call.1} parent=31 // pred_check
          %p183 = pneg %p43
        $region34: #{tpu_custom_call.1} parent=31 // pred_check_branch
          %185 = sbr.rel (%p183) target = $region36
        $region35: #{tpu_custom_call.1} parent=31 // pred_region
          %186 = dma.done %s179, 1024
        $region36: #{tpu_custom_call.1} parent=31 // pred_fallthru
          _
        // Predicated region
        $region37: #{tpu_custom_call.1} parent=31 // pred_check
          %p187 = pneg %p64
        $region38: #{tpu_custom_call.1} parent=31 // pred_check_branch
          %189 = sbr.rel (%p187) target = $region40
        $region39: #{tpu_custom_call.1} parent=31 // pred_region
          %190 = dma.done [#allocation5], 32
        $region40: #{tpu_custom_call.1} parent=31 // pred_fallthru
          _
        // Predicated region
        $region41: #{tpu_custom_call.1} parent=31 // pred_check
          %p191 = pneg %p85
        $region42: #{tpu_custom_call.1} parent=31 // pred_check_branch
          %193 = sbr.rel (%p191) target = $region44
        $region43: #{tpu_custom_call.1} parent=31 // pred_region
          %194 = dma.done [#allocation6], 32
        $region44: #{tpu_custom_call.1} parent=31 // pred_fallthru
          _
        %195 = sfence
        %s196 = sand.u32 %s30, 1
        %s197 = scalar_lea.sflag [#allocation3], %s196
        %s198 = sand.u32 %s30, 1
        %s199 = smul.addr %s198, 64
        %s200 = scalar_lea.vmem [#allocation2], %s199
        %p201 = pneg %p43
        %p202 = pneg %p40
        %p203 = pneg %p64
        %p204 = pneg %p61
        %p205 = pneg %p85
        %p206 = pneg %p82
        %p207 = pneg %p111
        %p208 = pneg %p108
        %s209 = sand.u32 %s98, 1
        %s210 = scalar_lea.sflag [#allocation4], %s209
        %s211 = sand.u32 %s98, 1
        %s212 = smul.addr %s211, 64
        %s213 = scalar_lea.vmem [#allocation9], %s212
        %v214 = vld [vmem:[%s182] sm:$0xff]
        %v215 = vld [vmem:[%s182 + $0x8] sm:$0xff]
        %v216 = vld [vmem:[%s182 + $0x10] sm:$0xff]
        %v217 = vld [vmem:[%s182 + $0x18] sm:$0xff]
        %v218 = vld [vmem:[%s182 + $0x20] sm:$0xff]
        %v219 = vld [vmem:[%s182 + $0x28] sm:$0xff]
        %v220 = vld [vmem:[%s182 + $0x30] sm:$0xff]
        %v221 = vld [vmem:[%s182 + $0x38] sm:$0xff]
        %v226 = vrot.slane %v214, 1
        %v227 = vrot.slane %v216, 1
        %v228 = vrot.slane %v218, 1
        %v229 = vrot.slane %v220, 1
        %vm238 = vcmask 1040384
        %v239 = vrot.slane %v214, 7
        %v240 = vrot.slane %v215, 7
        %v241 = vsel %vm238, %v239, %v240
        %v242 = vrot.slane %v216, 7
        %v243 = vrot.slane %v217, 7
        %v244 = vsel %vm238, %v242, %v243
        %v245 = vrot.slane %v218, 7
        %v246 = vrot.slane %v219, 7
        %v247 = vsel %vm238, %v245, %v246
        %v248 = vrot.slane %v220, 7
        %v249 = vrot.slane %v221, 7
        %v250 = vsel %vm238, %v248, %v249
        %v259 = vrot.slane %v215, 5
        %v260 = vrot.slane %v217, 5
        %v261 = vrot.slane %v219, 5
        %v262 = vrot.slane %v221, 5
        %v267 = vsel %vm238, %v226, %v239
        %v268 = vsel %vm238, %v227, %v242
        %v269 = vsel %vm238, %v228, %v245
        %v270 = vsel %vm238, %v229, %v248
        %v271 = vsel %vm238, %v240, %v259
        %v272 = vsel %vm238, %v243, %v260
        %v273 = vsel %vm238, %v246, %v261
        %v274 = vsel %vm238, %v249, %v262
        %283 = vrot.lane.b32.xlu0 %v267, 127
        %v284 = vpop.permute.xlu0 %283
        %285 = vrot.lane.b32.xlu0 %v241, 127
        %v286 = vpop.permute.xlu0 %285
        %287 = vrot.lane.b32.xlu0 %v271, 127
        %v288 = vpop.permute.xlu0 %287
        %289 = vrot.lane.b32.xlu0 %v268, 127
        %v290 = vpop.permute.xlu0 %289
        %291 = vrot.lane.b32.xlu0 %v244, 127
        %v292 = vpop.permute.xlu0 %291
        %293 = vrot.lane.b32.xlu0 %v272, 127
        %v294 = vpop.permute.xlu0 %293
        %295 = vrot.lane.b32.xlu0 %v269, 127
        %v296 = vpop.permute.xlu0 %295
        %297 = vrot.lane.b32.xlu0 %v247, 127
        %v298 = vpop.permute.xlu0 %297
        %299 = vrot.lane.b32.xlu0 %v273, 127
        %v300 = vpop.permute.xlu0 %299
        %301 = vrot.lane.b32.xlu0 %v270, 127
        %v302 = vpop.permute.xlu0 %301
        %303 = vrot.lane.b32.xlu0 %v250, 127
        %v304 = vpop.permute.xlu0 %303
        %305 = vrot.lane.b32.xlu0 %v274, 127
        %v306 = vpop.permute.xlu0 %305
        %319 = vrot.lane.b32.xlu0 %v267, 1
        %v320 = vpop.permute.xlu0 %319
        %321 = vrot.lane.b32.xlu0 %v241, 1
        %v322 = vpop.permute.xlu0 %321
        %323 = vrot.lane.b32.xlu0 %v271, 1
        %v324 = vpop.permute.xlu0 %323
        %325 = vrot.lane.b32.xlu0 %v268, 1
        %v326 = vpop.permute.xlu0 %325
        %327 = vrot.lane.b32.xlu0 %v244, 1
        %v328 = vpop.permute.xlu0 %327
        %329 = vrot.lane.b32.xlu0 %v272, 1
        %v330 = vpop.permute.xlu0 %329
        %331 = vrot.lane.b32.xlu0 %v269, 1
        %v332 = vpop.permute.xlu0 %331
        %333 = vrot.lane.b32.xlu0 %v247, 1
        %v334 = vpop.permute.xlu0 %333
        %335 = vrot.lane.b32.xlu0 %v273, 1
        %v336 = vpop.permute.xlu0 %335
        %337 = vrot.lane.b32.xlu0 %v270, 1
        %v338 = vpop.permute.xlu0 %337
        %339 = vrot.lane.b32.xlu0 %v250, 1
        %v340 = vpop.permute.xlu0 %339
        %341 = vrot.lane.b32.xlu0 %v274, 1
        %v342 = vpop.permute.xlu0 %341
        %355 = vrot.lane.b32.xlu0 %v267, 3
        %v356 = vpop.permute.xlu0 %355
        %357 = vrot.lane.b32.xlu0 %v241, 3
        %v358 = vpop.permute.xlu0 %357
        %359 = vrot.lane.b32.xlu0 %v271, 3
        %v360 = vpop.permute.xlu0 %359
        %361 = vrot.lane.b32.xlu0 %v268, 3
        %v362 = vpop.permute.xlu0 %361
        %363 = vrot.lane.b32.xlu0 %v244, 3
        %v364 = vpop.permute.xlu0 %363
        %365 = vrot.lane.b32.xlu0 %v272, 3
        %v366 = vpop.permute.xlu0 %365
        %367 = vrot.lane.b32.xlu0 %v269, 3
        %v368 = vpop.permute.xlu0 %367
        %369 = vrot.lane.b32.xlu0 %v247, 3
        %v370 = vpop.permute.xlu0 %369
        %371 = vrot.lane.b32.xlu0 %v273, 3
        %v372 = vpop.permute.xlu0 %371
        %373 = vrot.lane.b32.xlu0 %v270, 3
        %v374 = vpop.permute.xlu0 %373
        %375 = vrot.lane.b32.xlu0 %v250, 3
        %v376 = vpop.permute.xlu0 %375
        %377 = vrot.lane.b32.xlu0 %v274, 3
        %v378 = vpop.permute.xlu0 %377
        %vm391 = vcmask 7168
        %v392 = vsel %vm391, %v284, %v320
        %v393 = vsel %vm391, %v286, %v322
        %v394 = vsel %vm391, %v288, %v324
        %v395 = vsel %vm391, %v290, %v326
        %v396 = vsel %vm391, %v292, %v328
        %v397 = vsel %vm391, %v294, %v330
        %v398 = vsel %vm391, %v296, %v332
        %v399 = vsel %vm391, %v298, %v334
        %v400 = vsel %vm391, %v300, %v336
        %v401 = vsel %vm391, %v302, %v338
        %v402 = vsel %vm391, %v304, %v340
        %v403 = vsel %vm391, %v306, %v342
        %vm404 = vcmask 138240
        %v405 = vsel %vm404, %v392, %v356
        %v406 = vsel %vm404, %v393, %v358
        %v407 = vsel %vm404, %v394, %v360
        %v408 = vsel %vm404, %v395, %v362
        %v409 = vsel %vm404, %v396, %v364
        %v410 = vsel %vm404, %v397, %v366
        %v411 = vsel %vm404, %v398, %v368
        %v412 = vsel %vm404, %v399, %v370
        %v413 = vsel %vm404, %v400, %v372
        %v414 = vsel %vm404, %v401, %v374
        %v415 = vsel %vm404, %v402, %v376
        %v416 = vsel %vm404, %v403, %v378
        %s417 = sld [smem:[#allocation7]]
        %v418 = vstv %s417
        %v419 = vmul.f32 %v418, %v405
        %v420 = vmul.f32 %v418, %v406
        %s421 = sld [smem:[#allocation7 + $0x1]]
        %v422 = vstv %s421
        %v423 = vmul.f32 %v422, %v405
        %v424 = vmul.f32 %v422, %v406
        %s425 = sld [smem:[#allocation7 + $0x2]]
        %v426 = vstv %s425
        %v427 = vmul.f32 %v426, %v405
        %v428 = vmul.f32 %v426, %v406
        %s429 = sld [smem:[#allocation7 + $0x3]]
        %v430 = vstv %s429
        %v431 = vmul.f32 %v430, %v405
        %v432 = vmul.f32 %v430, %v406
        %v433 = vmul.f32 %v430, %v407
        %s434 = sld [smem:[#allocation7 + $0x4]]
        %v435 = vstv %s434
        %v436 = vmul.f32 %v435, %v405
        %v437 = vmul.f32 %v435, %v406
        %v438 = vmul.f32 %v435, %v407
        %s439 = sld [smem:[#allocation7 + $0x5]]
        %v440 = vstv %s439
        %v441 = vmul.f32 %v440, %v405
        %v442 = vmul.f32 %v440, %v406
        %v443 = vmul.f32 %v440, %v407
        %s444 = sld [smem:[#allocation7 + $0x6]]
        %v445 = vstv %s444
        %v446 = vmul.f32 %v445, %v405
        %v447 = vmul.f32 %v445, %v406
        %v448 = vmul.f32 %v445, %v407
        %s449 = sld [smem:[#allocation7 + $0x7]]
        %v450 = vstv %s449
        %v451 = vmul.f32 %v450, %v405
        %v452 = vmul.f32 %v450, %v406
        %v453 = vmul.f32 %v450, %v407
        %s454 = sld [smem:[#allocation7 + $0x8]]
        %v455 = vstv %s454
        %v456 = vmul.f32 %v455, %v405
        %v457 = vmul.f32 %v455, %v406
        %v458 = vmul.f32 %v455, %v407
        %s459 = sld [smem:[#allocation7 + $0x9]]
        %v460 = vstv %s459
        %v461 = vmul.f32 %v460, %v408
        %v462 = vmul.f32 %v460, %v409
        %s463 = sld [smem:[#allocation7 + $0xa]]
        %v464 = vstv %s463
        %v465 = vmul.f32 %v464, %v408
        %v466 = vmul.f32 %v464, %v409
        %s467 = sld [smem:[#allocation7 + $0xb]]
        %v468 = vstv %s467
        %v469 = vmul.f32 %v468, %v408
        %v470 = vmul.f32 %v468, %v409
        %s471 = sld [smem:[#allocation7 + $0xc]]
        %v472 = vstv %s471
        %v473 = vmul.f32 %v472, %v408
        %v474 = vmul.f32 %v472, %v409
        %v475 = vmul.f32 %v472, %v410
        %s476 = sld [smem:[#allocation7 + $0xd]]
        %v477 = vstv %s476
        %v478 = vmul.f32 %v477, %v408
        %v479 = vmul.f32 %v477, %v409
        %v480 = vmul.f32 %v477, %v410
        %s481 = sld [smem:[#allocation7 + $0xe]]
        %v482 = vstv %s481
        %v483 = vmul.f32 %v482, %v408
        %v484 = vmul.f32 %v482, %v409
        %v485 = vmul.f32 %v482, %v410
        %s486 = sld [smem:[#allocation7 + $0xf]]
        %v487 = vstv %s486
        %v488 = vmul.f32 %v487, %v408
        %v489 = vmul.f32 %v487, %v409
        %v490 = vmul.f32 %v487, %v410
        %s491 = sld [smem:[#allocation7 + $0x10]]
        %v492 = vstv %s491
        %v493 = vmul.f32 %v492, %v408
        %v494 = vmul.f32 %v492, %v409
        %v495 = vmul.f32 %v492, %v410
        %s496 = sld [smem:[#allocation7 + $0x11]]
        %v497 = vstv %s496
        %v498 = vmul.f32 %v497, %v408
        %v499 = vmul.f32 %v497, %v409
        %v500 = vmul.f32 %v497, %v410
        %s501 = sld [smem:[#allocation7 + $0x12]]
        %v502 = vstv %s501
        %v503 = vmul.f32 %v502, %v411
        %v504 = vmul.f32 %v502, %v412
        %s505 = sld [smem:[#allocation7 + $0x13]]
        %v506 = vstv %s505
        %v507 = vmul.f32 %v506, %v411
        %v508 = vmul.f32 %v506, %v412
        %s509 = sld [smem:[#allocation7 + $0x14]]
        %v510 = vstv %s509
        %v511 = vmul.f32 %v510, %v411
        %v512 = vmul.f32 %v510, %v412
        %s513 = sld [smem:[#allocation7 + $0x15]]
        %v514 = vstv %s513
        %v515 = vmul.f32 %v514, %v411
        %v516 = vmul.f32 %v514, %v412
        %v517 = vmul.f32 %v514, %v413
        %s518 = sld [smem:[#allocation7 + $0x16]]
        %v519 = vstv %s518
        %v520 = vmul.f32 %v519, %v411
        %v521 = vmul.f32 %v519, %v412
        %v522 = vmul.f32 %v519, %v413
        %s523 = sld [smem:[#allocation7 + $0x17]]
        %v524 = vstv %s523
        %v525 = vmul.f32 %v524, %v411
        %v526 = vmul.f32 %v524, %v412
        %v527 = vmul.f32 %v524, %v413
        %s528 = sld [smem:[#allocation7 + $0x18]]
        %v529 = vstv %s528
        %v530 = vmul.f32 %v529, %v411
        %v531 = vmul.f32 %v529, %v412
        %v532 = vmul.f32 %v529, %v413
        %s533 = sld [smem:[#allocation7 + $0x19]]
        %v534 = vstv %s533
        %v535 = vmul.f32 %v534, %v411
        %v536 = vmul.f32 %v534, %v412
        %v537 = vmul.f32 %v534, %v413
        %s538 = sld [smem:[#allocation7 + $0x1a]]
        %v539 = vstv %s538
        %v540 = vmul.f32 %v539, %v411
        %v541 = vmul.f32 %v539, %v412
        %v542 = vmul.f32 %v539, %v413
        %s543 = sld [smem:[#allocation7 + $0x1b]]
        %v544 = vstv %s543
        %v545 = vmul.f32 %v544, %v414
        %v546 = vmul.f32 %v544, %v415
        %s547 = sld [smem:[#allocation7 + $0x1c]]
        %v548 = vstv %s547
        %v549 = vmul.f32 %v548, %v414
        %v550 = vmul.f32 %v548, %v415
        %s551 = sld [smem:[#allocation7 + $0x1d]]
        %v552 = vstv %s551
        %v553 = vmul.f32 %v552, %v414
        %v554 = vmul.f32 %v552, %v415
        %s555 = sld [smem:[#allocation7 + $0x1e]]
        %v556 = vstv %s555
        %v557 = vmul.f32 %v556, %v414
        %v558 = vmul.f32 %v556, %v415
        %v559 = vmul.f32 %v556, %v416
        %s560 = sld [smem:[#allocation7 + $0x1f]]
        %v561 = vstv %s560
        %v562 = vmul.f32 %v561, %v414
        %v563 = vmul.f32 %v561, %v415
        %v564 = vmul.f32 %v561, %v416
        %s565 = sld [smem:[#allocation7 + $0x20]]
        %v566 = vstv %s565
        %v567 = vmul.f32 %v566, %v414
        %v568 = vmul.f32 %v566, %v415
        %v569 = vmul.f32 %v566, %v416
        %s570 = sld [smem:[#allocation7 + $0x21]]
        %v571 = vstv %s570
        %v572 = vmul.f32 %v571, %v414
        %v573 = vmul.f32 %v571, %v415
        %v574 = vmul.f32 %v571, %v416
        %s575 = sld [smem:[#allocation7 + $0x22]]
        %v576 = vstv %s575
        %v577 = vmul.f32 %v576, %v414
        %v578 = vmul.f32 %v576, %v415
        %v579 = vmul.f32 %v576, %v416
        %s580 = sld [smem:[#allocation7 + $0x23]]
        %v581 = vstv %s580
        %v582 = vmul.f32 %v581, %v414
        %v583 = vmul.f32 %v581, %v415
        %v584 = vmul.f32 %v581, %v416
        %587 = vrot.lane.b32.xlu0 %v423, 127
        %v588 = vpop.permute.xlu0 %587
        %589 = vrot.lane.b32.xlu0 %v424, 127
        %v590 = vpop.permute.xlu0 %589
        %v593 = vadd.f32 %v419, %v588
        %v594 = vadd.f32 %v420, %v590
        %vm598 = vcmask 1046528
        %v599 = vrot.slane %v431, 1
        %v600 = vrot.slane %v432, 1
        %v601 = vsel %vm598, %v599, %v600
        %v602 = vrot.slane %v433, 1
        %v603 = vsel %vm598, %v600, %v602
        %604 = vrot.lane.b32.xlu0 %v601, 2
        %v605 = vpop.permute.xlu0 %604
        %606 = vrot.lane.b32.xlu0 %v603, 2
        %v607 = vpop.permute.xlu0 %606
        %v610 = vadd.f32 %v427, %v605
        %v611 = vadd.f32 %v428, %v607
        %615 = vrot.lane.b32.xlu0 %v441, 127
        %v616 = vpop.permute.xlu0 %615
        %617 = vrot.lane.b32.xlu0 %v442, 127
        %v618 = vpop.permute.xlu0 %617
        %619 = vrot.lane.b32.xlu0 %v443, 127
        %v620 = vpop.permute.xlu0 %619
        %v624 = vadd.f32 %v436, %v616
        %v625 = vadd.f32 %v437, %v618
        %v626 = vadd.f32 %v438, %v620
        %630 = vrot.lane.b32.xlu0 %v451, 127
        %v631 = vpop.permute.xlu0 %630
        %632 = vrot.lane.b32.xlu0 %v452, 127
        %v633 = vpop.permute.xlu0 %632
        %634 = vrot.lane.b32.xlu0 %v453, 127
        %v635 = vpop.permute.xlu0 %634
        %v639 = vadd.f32 %v446, %v631
        %v640 = vadd.f32 %v447, %v633
        %v641 = vadd.f32 %v448, %v635
        %vm644 = vcmask 1041408
        %v645 = vrot.slane %v461, 6
        %v646 = vrot.slane %v462, 6
        %v647 = vsel %vm644, %v645, %v646
        %648 = vrot.lane.b32.xlu0 %v645, 2
        %v649 = vpop.permute.xlu0 %648
        %650 = vrot.lane.b32.xlu0 %v647, 2
        %v651 = vpop.permute.xlu0 %650
        %652 = vrot.lane.b32.xlu0 %v646, 2
        %v653 = vpop.permute.xlu0 %652
        %v657 = vadd.f32 %v456, %v649
        %v658 = vadd.f32 %v457, %v651
        %v659 = vadd.f32 %v458, %v653
        %662 = vrot.lane.b32.xlu0 %v469, 127
        %v663 = vpop.permute.xlu0 %662
        %664 = vrot.lane.b32.xlu0 %v470, 127
        %v665 = vpop.permute.xlu0 %664
        %v668 = vadd.f32 %v465, %v663
        %v669 = vadd.f32 %v466, %v665
        %673 = vrot.lane.b32.xlu0 %v478, 127
        %v674 = vpop.permute.xlu0 %673
        %675 = vrot.lane.b32.xlu0 %v479, 127
        %v676 = vpop.permute.xlu0 %675
        %677 = vrot.lane.b32.xlu0 %v480, 127
        %v678 = vpop.permute.xlu0 %677
        %v682 = vadd.f32 %v473, %v674
        %v683 = vadd.f32 %v474, %v676
        %v684 = vadd.f32 %v475, %v678
        %v688 = vrot.slane %v488, 1
        %v689 = vrot.slane %v489, 1
        %v690 = vsel %vm598, %v688, %v689
        %v691 = vrot.slane %v490, 1
        %v692 = vsel %vm598, %v689, %v691
        %693 = vrot.lane.b32.xlu0 %v690, 2
        %v694 = vpop.permute.xlu0 %693
        %695 = vrot.lane.b32.xlu0 %v692, 2
        %v696 = vpop.permute.xlu0 %695
        %697 = vrot.lane.b32.xlu0 %v691, 2
        %v698 = vpop.permute.xlu0 %697
        %v702 = vadd.f32 %v483, %v694
        %v703 = vadd.f32 %v484, %v696
        %v704 = vadd.f32 %v485, %v698
        %708 = vrot.lane.b32.xlu0 %v498, 127
        %v709 = vpop.permute.xlu0 %708
        %710 = vrot.lane.b32.xlu0 %v499, 127
        %v711 = vpop.permute.xlu0 %710
        %712 = vrot.lane.b32.xlu0 %v500, 127
        %v713 = vpop.permute.xlu0 %712
        %v717 = vadd.f32 %v493, %v709
        %v718 = vadd.f32 %v494, %v711
        %v719 = vadd.f32 %v495, %v713
        %722 = vrot.lane.b32.xlu0 %v507, 127
        %v723 = vpop.permute.xlu0 %722
        %724 = vrot.lane.b32.xlu0 %v508, 127
        %v725 = vpop.permute.xlu0 %724
        %v728 = vadd.f32 %v503, %v723
        %v729 = vadd.f32 %v504, %v725
        %v733 = vrot.slane %v515, 1
        %v734 = vrot.slane %v516, 1
        %v735 = vsel %vm598, %v733, %v734
        %v736 = vrot.slane %v517, 1
        %v737 = vsel %vm598, %v734, %v736
        %738 = vrot.lane.b32.xlu0 %v735, 2
        %v739 = vpop.permute.xlu0 %738
        %740 = vrot.lane.b32.xlu0 %v737, 2
        %v741 = vpop.permute.xlu0 %740
        %v744 = vadd.f32 %v511, %v739
        %v745 = vadd.f32 %v512, %v741
        %749 = vrot.lane.b32.xlu0 %v525, 127
        %v750 = vpop.permute.xlu0 %749
        %751 = vrot.lane.b32.xlu0 %v526, 127
        %v752 = vpop.permute.xlu0 %751
        %753 = vrot.lane.b32.xlu0 %v527, 127
        %v754 = vpop.permute.xlu0 %753
        %v758 = vadd.f32 %v520, %v750
        %v759 = vadd.f32 %v521, %v752
        %v760 = vadd.f32 %v522, %v754
        %764 = vrot.lane.b32.xlu0 %v535, 127
        %v765 = vpop.permute.xlu0 %764
        %766 = vrot.lane.b32.xlu0 %v536, 127
        %v767 = vpop.permute.xlu0 %766
        %768 = vrot.lane.b32.xlu0 %v537, 127
        %v769 = vpop.permute.xlu0 %768
        %v773 = vadd.f32 %v530, %v765
        %v774 = vadd.f32 %v531, %v767
        %v775 = vadd.f32 %v532, %v769
        %v778 = vrot.slane %v545, 6
        %v779 = vrot.slane %v546, 6
        %v780 = vsel %vm644, %v778, %v779
        %781 = vrot.lane.b32.xlu0 %v778, 2
        %v782 = vpop.permute.xlu0 %781
        %783 = vrot.lane.b32.xlu0 %v780, 2
        %v784 = vpop.permute.xlu0 %783
        %785 = vrot.lane.b32.xlu0 %v779, 2
        %v786 = vpop.permute.xlu0 %785
        %v790 = vadd.f32 %v540, %v782
        %v791 = vadd.f32 %v541, %v784
        %v792 = vadd.f32 %v542, %v786
        %795 = vrot.lane.b32.xlu0 %v553, 127
        %v796 = vpop.permute.xlu0 %795
        %797 = vrot.lane.b32.xlu0 %v554, 127
        %v798 = vpop.permute.xlu0 %797
        %v801 = vadd.f32 %v549, %v796
        %v802 = vadd.f32 %v550, %v798
        %806 = vrot.lane.b32.xlu0 %v562, 127
        %v807 = vpop.permute.xlu0 %806
        %808 = vrot.lane.b32.xlu0 %v563, 127
        %v809 = vpop.permute.xlu0 %808
        %810 = vrot.lane.b32.xlu0 %v564, 127
        %v811 = vpop.permute.xlu0 %810
        %v815 = vadd.f32 %v557, %v807
        %v816 = vadd.f32 %v558, %v809
        %v817 = vadd.f32 %v559, %v811
        %v821 = vrot.slane %v572, 1
        %v822 = vrot.slane %v573, 1
        %v823 = vsel %vm598, %v821, %v822
        %v824 = vrot.slane %v574, 1
        %v825 = vsel %vm598, %v822, %v824
        %826 = vrot.lane.b32.xlu0 %v823, 2
        %v827 = vpop.permute.xlu0 %826
        %828 = vrot.lane.b32.xlu0 %v825, 2
        %v829 = vpop.permute.xlu0 %828
        %830 = vrot.lane.b32.xlu0 %v824, 2
        %v831 = vpop.permute.xlu0 %830
        %v835 = vadd.f32 %v567, %v827
        %v836 = vadd.f32 %v568, %v829
        %v837 = vadd.f32 %v569, %v831
        %841 = vrot.lane.b32.xlu0 %v582, 127
        %v842 = vpop.permute.xlu0 %841
        %843 = vrot.lane.b32.xlu0 %v583, 127
        %v844 = vpop.permute.xlu0 %843
        %845 = vrot.lane.b32.xlu0 %v584, 127
        %v846 = vpop.permute.xlu0 %845
        %v850 = vadd.f32 %v577, %v842
        %v851 = vadd.f32 %v578, %v844
        %v852 = vadd.f32 %v579, %v846
        %855 = vrot.lane.b32.xlu0 %v610, 126
        %v856 = vpop.permute.xlu0 %855
        %857 = vrot.lane.b32.xlu0 %v611, 126
        %v858 = vpop.permute.xlu0 %857
        %v861 = vadd.f32 %v593, %v856
        %v862 = vadd.f32 %v594, %v858
        %v866 = vrot.slane %v639, 1
        %v867 = vrot.slane %v640, 1
        %v868 = vsel %vm598, %v866, %v867
        %v869 = vrot.slane %v641, 1
        %v870 = vsel %vm598, %v867, %v869
        %871 = vrot.lane.b32.xlu0 %v868, 1
        %v872 = vpop.permute.xlu0 %871
        %873 = vrot.lane.b32.xlu0 %v870, 1
        %v874 = vpop.permute.xlu0 %873
        %875 = vrot.lane.b32.xlu0 %v869, 1
        %v876 = vpop.permute.xlu0 %875
        %v880 = vadd.f32 %v624, %v872
        %v881 = vadd.f32 %v625, %v874
        %v882 = vadd.f32 %v626, %v876
        %v885 = vrot.slane %v668, 6
        %v886 = vrot.slane %v669, 6
        %v887 = vsel %vm644, %v885, %v886
        %888 = vrot.lane.b32.xlu0 %v885, 1
        %v889 = vpop.permute.xlu0 %888
        %890 = vrot.lane.b32.xlu0 %v887, 1
        %v891 = vpop.permute.xlu0 %890
        %892 = vrot.lane.b32.xlu0 %v886, 1
        %v893 = vpop.permute.xlu0 %892
        %v897 = vadd.f32 %v657, %v889
        %v898 = vadd.f32 %v658, %v891
        %v899 = vadd.f32 %v659, %v893
        %903 = vrot.lane.b32.xlu0 %v702, 126
        %v904 = vpop.permute.xlu0 %903
        %905 = vrot.lane.b32.xlu0 %v703, 126
        %v906 = vpop.permute.xlu0 %905
        %907 = vrot.lane.b32.xlu0 %v704, 126
        %v908 = vpop.permute.xlu0 %907
        %v912 = vadd.f32 %v682, %v904
        %v913 = vadd.f32 %v683, %v906
        %v914 = vadd.f32 %v684, %v908
        %v917 = vrot.slane %v728, 6
        %v918 = vrot.slane %v729, 6
        %v919 = vsel %vm644, %v917, %v918
        %920 = vrot.lane.b32.xlu0 %v917, 1
        %v921 = vpop.permute.xlu0 %920
        %922 = vrot.lane.b32.xlu0 %v919, 1
        %v923 = vpop.permute.xlu0 %922
        %924 = vrot.lane.b32.xlu0 %v918, 1
        %v925 = vpop.permute.xlu0 %924
        %v929 = vadd.f32 %v717, %v921
        %v930 = vadd.f32 %v718, %v923
        %v931 = vadd.f32 %v719, %v925
        %v935 = vrot.slane %v758, 1
        %v936 = vrot.slane %v759, 1
        %v937 = vsel %vm598, %v935, %v936
        %v938 = vrot.slane %v760, 1
        %v939 = vsel %vm598, %v936, %v938
        %940 = vrot.lane.b32.xlu0 %v937, 1
        %v941 = vpop.permute.xlu0 %940
        %942 = vrot.lane.b32.xlu0 %v939, 1
        %v943 = vpop.permute.xlu0 %942
        %v946 = vadd.f32 %v744, %v941
        %v947 = vadd.f32 %v745, %v943
        %951 = vrot.lane.b32.xlu0 %v790, 126
        %v952 = vpop.permute.xlu0 %951
        %953 = vrot.lane.b32.xlu0 %v791, 126
        %v954 = vpop.permute.xlu0 %953
        %955 = vrot.lane.b32.xlu0 %v792, 126
        %v956 = vpop.permute.xlu0 %955
        %v960 = vadd.f32 %v773, %v952
        %v961 = vadd.f32 %v774, %v954
        %v962 = vadd.f32 %v775, %v956
        %v966 = vrot.slane %v815, 1
        %v967 = vrot.slane %v816, 1
        %v968 = vsel %vm598, %v966, %v967
        %v969 = vrot.slane %v817, 1
        %v970 = vsel %vm598, %v967, %v969
        %971 = vrot.lane.b32.xlu0 %v968, 1
        %v972 = vpop.permute.xlu0 %971
        %973 = vrot.lane.b32.xlu0 %v970, 1
        %v974 = vpop.permute.xlu0 %973
        %v977 = vadd.f32 %v801, %v972
        %v978 = vadd.f32 %v802, %v974
        %v982 = vrot.slane %v850, 1
        %v983 = vrot.slane %v851, 1
        %v984 = vsel %vm598, %v982, %v983
        %v985 = vrot.slane %v852, 1
        %v986 = vsel %vm598, %v983, %v985
        %987 = vrot.lane.b32.xlu0 %v984, 1
        %v988 = vpop.permute.xlu0 %987
        %989 = vrot.lane.b32.xlu0 %v986, 1
        %v990 = vpop.permute.xlu0 %989
        %991 = vrot.lane.b32.xlu0 %v985, 1
        %v992 = vpop.permute.xlu0 %991
        %v996 = vadd.f32 %v835, %v988
        %v997 = vadd.f32 %v836, %v990
        %v998 = vadd.f32 %v837, %v992
        %v1002 = vrot.slane %v880, 1
        %v1003 = vrot.slane %v881, 1
        %v1004 = vsel %vm598, %v1002, %v1003
        %v1005 = vrot.slane %v882, 1
        %v1006 = vsel %vm598, %v1003, %v1005
        %1007 = vrot.lane.b32.xlu0 %v1004, 127
        %v1008 = vpop.permute.xlu0 %1007
        %1009 = vrot.lane.b32.xlu0 %v1006, 127
        %v1010 = vpop.permute.xlu0 %1009
        %v1013 = vadd.f32 %v861, %v1008
        %v1014 = vadd.f32 %v862, %v1010
        %v1018 = vrot.slane %v912, 7
        %v1019 = vrot.slane %v913, 7
        %v1020 = vsel %vm238, %v1018, %v1019
        %v1021 = vrot.slane %v914, 7
        %v1022 = vsel %vm238, %v1019, %v1021
        %1023 = vrot.lane.b32.xlu0 %v1018, 2
        %v1024 = vpop.permute.xlu0 %1023
        %1025 = vrot.lane.b32.xlu0 %v1020, 2
        %v1026 = vpop.permute.xlu0 %1025
        %1027 = vrot.lane.b32.xlu0 %v1022, 2
        %v1028 = vpop.permute.xlu0 %1027
        %v1032 = vadd.f32 %v897, %v1024
        %v1033 = vadd.f32 %v898, %v1026
        %v1034 = vadd.f32 %v899, %v1028
        %v1037 = vrot.slane %v946, 6
        %v1038 = vrot.slane %v947, 6
        %v1039 = vsel %vm644, %v1037, %v1038
        %1040 = vrot.lane.b32.xlu0 %v1037, 127
        %v1041 = vpop.permute.xlu0 %1040
        %1042 = vrot.lane.b32.xlu0 %v1039, 127
        %v1043 = vpop.permute.xlu0 %1042
        %1044 = vrot.lane.b32.xlu0 %v1038, 127
        %v1045 = vpop.permute.xlu0 %1044
        %v1049 = vadd.f32 %v929, %v1041
        %v1050 = vadd.f32 %v930, %v1043
        %v1051 = vadd.f32 %v931, %v1045
        %v1054 = vrot.slane %v977, 6
        %v1055 = vrot.slane %v978, 6
        %v1056 = vsel %vm644, %v1054, %v1055
        %1057 = vrot.lane.b32.xlu0 %v1054, 127
        %v1058 = vpop.permute.xlu0 %1057
        %1059 = vrot.lane.b32.xlu0 %v1056, 127
        %v1060 = vpop.permute.xlu0 %1059
        %1061 = vrot.lane.b32.xlu0 %v1055, 127
        %v1062 = vpop.permute.xlu0 %1061
        %v1066 = vadd.f32 %v960, %v1058
        %v1067 = vadd.f32 %v961, %v1060
        %v1068 = vadd.f32 %v962, %v1062
        %vm1072 = vcmask 1045504
        %v1073 = vrot.slane %v1032, 2
        %v1074 = vrot.slane %v1033, 2
        %v1075 = vsel %vm1072, %v1073, %v1074
        %v1076 = vrot.slane %v1034, 2
        %v1077 = vsel %vm1072, %v1074, %v1076
        %1078 = vrot.lane.b32.xlu0 %v1075, 126
        %v1079 = vpop.permute.xlu0 %1078
        %1080 = vrot.lane.b32.xlu0 %v1077, 126
        %v1081 = vpop.permute.xlu0 %1080
        %v1084 = vadd.f32 %v1013, %v1079
        %v1085 = vadd.f32 %v1014, %v1081
        %1089 = vrot.lane.b32.xlu0 %v1066, 1
        %v1090 = vpop.permute.xlu0 %1089
        %1091 = vrot.lane.b32.xlu0 %v1067, 1
        %v1092 = vpop.permute.xlu0 %1091
        %1093 = vrot.lane.b32.xlu0 %v1068, 1
        %v1094 = vpop.permute.xlu0 %1093
        %v1098 = vadd.f32 %v1049, %v1090
        %v1099 = vadd.f32 %v1050, %v1092
        %v1100 = vadd.f32 %v1051, %v1094
        %v1104 = vrot.slane %v1098, 2
        %v1105 = vrot.slane %v1099, 2
        %v1106 = vsel %vm1072, %v1104, %v1105
        %v1107 = vrot.slane %v1100, 2
        %v1108 = vsel %vm1072, %v1105, %v1107
        %1109 = vrot.lane.b32.xlu0 %v1106, 127
        %v1110 = vpop.permute.xlu0 %1109
        %1111 = vrot.lane.b32.xlu0 %v1108, 127
        %v1112 = vpop.permute.xlu0 %1111
        %v1115 = vadd.f32 %v1084, %v1110
        %v1116 = vadd.f32 %v1085, %v1112
        %v1120 = vrot.slane %v996, 1
        %v1121 = vrot.slane %v997, 1
        %v1122 = vsel %vm598, %v1120, %v1121
        %v1123 = vrot.slane %v998, 1
        %v1124 = vsel %vm598, %v1121, %v1123
        %1125 = vrot.lane.b32.xlu0 %v1122, 126
        %v1126 = vpop.permute.xlu0 %1125
        %1127 = vrot.lane.b32.xlu0 %v1124, 126
        %v1128 = vpop.permute.xlu0 %1127
        %v1131 = vadd.f32 %v1115, %v1126
        %v1132 = vadd.f32 %v1116, %v1128
        %vm1133 = vcmask 130048
        %v1134 = vsel %vm1133, %v1131, 0.0
        %v1135 = vsel %vm1133, %v1132, 0.0
        %v1136 = vadd.f32 %v1134, %v1135
        %1137 = vadd.xlane.f32.xlu0 %v1136
        %v1138 = vpop.xlane.xlu0 %1137
        %v1139 = vrot.slane %v1138, 4
        %v1140 = vadd.f32 %v1138, %v1139
        %v1141 = vrot.slane %v1140, 2
        %v1142 = vadd.f32 %v1140, %v1141
        %v1143 = vrot.slane %v1142, 1
        %v1144 = vadd.f32 %v1142, %v1143
        %s1145 = vtos %v1144
        %v1146 = vstv %s1145
        %v1147 = vmul.f32 %v1146, 0.00390625
        %v1148 = vmul.f32 %v1131, %v1131
        %v1149 = vmul.f32 %v1132, %v1132
        %v1150 = vsel %vm1133, %v1148, 0.0
        %v1151 = vsel %vm1133, %v1149, 0.0
        %v1152 = vadd.f32 %v1150, %v1151
        %1153 = vadd.xlane.f32.xlu0 %v1152
        %v1154 = vpop.xlane.xlu0 %1153
        %v1155 = vrot.slane %v1154, 4
        %v1156 = vadd.f32 %v1154, %v1155
        %v1157 = vrot.slane %v1156, 2
        %v1158 = vadd.f32 %v1156, %v1157
        %v1159 = vrot.slane %v1158, 1
        %v1160 = vadd.f32 %v1158, %v1159
        %s1161 = vtos %v1160
        %v1162 = vstv %s1161
        %v1163 = vmul.f32 %v1162, 0.00390625
        %v1164 = vmul.f32 %v1147, %v1147
        %v1165 = vsub.f32 %v1163, %v1164
        %v1166 = vsub.f32 %v1131, %v1147
        %v1167 = vsub.f32 %v1132, %v1147
        %v1168 = vadd.f32 %v1165, 1e-05
        %v1169 = vrsqrt.pop %v1168
        %v1170 = vmul.f32 %v1166, %v1169
        %v1171 = vmul.f32 %v1167, %v1169
        %v1172 = vmax.f32 %v1170, 0.0
        %v1173 = vmax.f32 %v1171, 0.0
        %s1174 = sld [smem:[#allocation7 + $0x24]]
        %v1175 = vstv %s1174
        %v1176 = vmul.f32 %v1175, %v405
        %v1177 = vmul.f32 %v1175, %v406
        %s1178 = sld [smem:[#allocation7 + $0x25]]
        %v1179 = vstv %s1178
        %v1180 = vmul.f32 %v1179, %v405
        %v1181 = vmul.f32 %v1179, %v406
        %s1182 = sld [smem:[#allocation7 + $0x26]]
        %v1183 = vstv %s1182
        %v1184 = vmul.f32 %v1183, %v405
        %v1185 = vmul.f32 %v1183, %v406
        %s1186 = sld [smem:[#allocation7 + $0x27]]
        %v1187 = vstv %s1186
        %v1188 = vmul.f32 %v1187, %v405
        %v1189 = vmul.f32 %v1187, %v406
        %v1190 = vmul.f32 %v1187, %v407
        %s1191 = sld [smem:[#allocation7 + $0x28]]
        %v1192 = vstv %s1191
        %v1193 = vmul.f32 %v1192, %v405
        %v1194 = vmul.f32 %v1192, %v406
        %v1195 = vmul.f32 %v1192, %v407
        %s1196 = sld [smem:[#allocation7 + $0x29]]
        %v1197 = vstv %s1196
        %v1198 = vmul.f32 %v1197, %v405
        %v1199 = vmul.f32 %v1197, %v406
        %v1200 = vmul.f32 %v1197, %v407
        %s1201 = sld [smem:[#allocation7 + $0x2a]]
        %v1202 = vstv %s1201
        %v1203 = vmul.f32 %v1202, %v405
        %v1204 = vmul.f32 %v1202, %v406
        %v1205 = vmul.f32 %v1202, %v407
        %s1206 = sld [smem:[#allocation7 + $0x2b]]
        %v1207 = vstv %s1206
        %v1208 = vmul.f32 %v1207, %v405
        %v1209 = vmul.f32 %v1207, %v406
        %v1210 = vmul.f32 %v1207, %v407
        %s1211 = sld [smem:[#allocation7 + $0x2c]]
        %v1212 = vstv %s1211
        %v1213 = vmul.f32 %v1212, %v405
        %v1214 = vmul.f32 %v1212, %v406
        %v1215 = vmul.f32 %v1212, %v407
        %s1216 = sld [smem:[#allocation7 + $0x2d]]
        %v1217 = vstv %s1216
        %v1218 = vmul.f32 %v1217, %v408
        %v1219 = vmul.f32 %v1217, %v409
        %s1220 = sld [smem:[#allocation7 + $0x2e]]
        %v1221 = vstv %s1220
        %v1222 = vmul.f32 %v1221, %v408
        %v1223 = vmul.f32 %v1221, %v409
        %s1224 = sld [smem:[#allocation7 + $0x2f]]
        %v1225 = vstv %s1224
        %v1226 = vmul.f32 %v1225, %v408
        %v1227 = vmul.f32 %v1225, %v409
        %s1228 = sld [smem:[#allocation7 + $0x30]]
        %v1229 = vstv %s1228
        %v1230 = vmul.f32 %v1229, %v408
        %v1231 = vmul.f32 %v1229, %v409
        %v1232 = vmul.f32 %v1229, %v410
        %s1233 = sld [smem:[#allocation7 + $0x31]]
        %v1234 = vstv %s1233
        %v1235 = vmul.f32 %v1234, %v408
        %v1236 = vmul.f32 %v1234, %v409
        %v1237 = vmul.f32 %v1234, %v410
        %s1238 = sld [smem:[#allocation7 + $0x32]]
        %v1239 = vstv %s1238
        %v1240 = vmul.f32 %v1239, %v408
        %v1241 = vmul.f32 %v1239, %v409
        %v1242 = vmul.f32 %v1239, %v410
        %s1243 = sld [smem:[#allocation7 + $0x33]]
        %v1244 = vstv %s1243
        %v1245 = vmul.f32 %v1244, %v408
        %v1246 = vmul.f32 %v1244, %v409
        %v1247 = vmul.f32 %v1244, %v410
        %s1248 = sld [smem:[#allocation7 + $0x34]]
        %v1249 = vstv %s1248
        %v1250 = vmul.f32 %v1249, %v408
        %v1251 = vmul.f32 %v1249, %v409
        %v1252 = vmul.f32 %v1249, %v410
        %s1253 = sld [smem:[#allocation7 + $0x35]]
        %v1254 = vstv %s1253
        %v1255 = vmul.f32 %v1254, %v408
        %v1256 = vmul.f32 %v1254, %v409
        %v1257 = vmul.f32 %v1254, %v410
        %s1258 = sld [smem:[#allocation7 + $0x36]]
        %v1259 = vstv %s1258
        %v1260 = vmul.f32 %v1259, %v411
        %v1261 = vmul.f32 %v1259, %v412
        %s1262 = sld [smem:[#allocation7 + $0x37]]
        %v1263 = vstv %s1262
        %v1264 = vmul.f32 %v1263, %v411
        %v1265 = vmul.f32 %v1263, %v412
        %s1266 = sld [smem:[#allocation7 + $0x38]]
        %v1267 = vstv %s1266
        %v1268 = vmul.f32 %v1267, %v411
        %v1269 = vmul.f32 %v1267, %v412
        %s1270 = sld [smem:[#allocation7 + $0x39]]
        %v1271 = vstv %s1270
        %v1272 = vmul.f32 %v1271, %v411
        %v1273 = vmul.f32 %v1271, %v412
        %v1274 = vmul.f32 %v1271, %v413
        %s1275 = sld [smem:[#allocation7 + $0x3a]]
        %v1276 = vstv %s1275
        %v1277 = vmul.f32 %v1276, %v411
        %v1278 = vmul.f32 %v1276, %v412
        %v1279 = vmul.f32 %v1276, %v413
        %s1280 = sld [smem:[#allocation7 + $0x3b]]
        %v1281 = vstv %s1280
        %v1282 = vmul.f32 %v1281, %v411
        %v1283 = vmul.f32 %v1281, %v412
        %v1284 = vmul.f32 %v1281, %v413
        %s1285 = sld [smem:[#allocation7 + $0x3c]]
        %v1286 = vstv %s1285
        %v1287 = vmul.f32 %v1286, %v411
        %v1288 = vmul.f32 %v1286, %v412
        %v1289 = vmul.f32 %v1286, %v413
        %s1290 = sld [smem:[#allocation7 + $0x3d]]
        %v1291 = vstv %s1290
        %v1292 = vmul.f32 %v1291, %v411
        %v1293 = vmul.f32 %v1291, %v412
        %v1294 = vmul.f32 %v1291, %v413
        %s1295 = sld [smem:[#allocation7 + $0x3e]]
        %v1296 = vstv %s1295
        %v1297 = vmul.f32 %v1296, %v411
        %v1298 = vmul.f32 %v1296, %v412
        %v1299 = vmul.f32 %v1296, %v413
        %s1300 = sld [smem:[#allocation7 + $0x3f]]
        %v1301 = vstv %s1300
        %v1302 = vmul.f32 %v1301, %v414
        %v1303 = vmul.f32 %v1301, %v415
        %s1304 = sld [smem:[#allocation7 + $0x40]]
        %v1305 = vstv %s1304
        %v1306 = vmul.f32 %v1305, %v414
        %v1307 = vmul.f32 %v1305, %v415
        %s1308 = sld [smem:[#allocation7 + $0x41]]
        %v1309 = vstv %s1308
        %v1310 = vmul.f32 %v1309, %v414
        %v1311 = vmul.f32 %v1309, %v415
        %s1312 = sld [smem:[#allocation7 + $0x42]]
        %v1313 = vstv %s1312
        %v1314 = vmul.f32 %v1313, %v414
        %v1315 = vmul.f32 %v1313, %v415
        %v1316 = vmul.f32 %v1313, %v416
        %s1317 = sld [smem:[#allocation7 + $0x43]]
        %v1318 = vstv %s1317
        %v1319 = vmul.f32 %v1318, %v414
        %v1320 = vmul.f32 %v1318, %v415
        %v1321 = vmul.f32 %v1318, %v416
        %s1322 = sld [smem:[#allocation7 + $0x44]]
        %v1323 = vstv %s1322
        %v1324 = vmul.f32 %v1323, %v414
        %v1325 = vmul.f32 %v1323, %v415
        %v1326 = vmul.f32 %v1323, %v416
        %s1327 = sld [smem:[#allocation7 + $0x45]]
        %v1328 = vstv %s1327
        %v1329 = vmul.f32 %v1328, %v414
        %v1330 = vmul.f32 %v1328, %v415
        %v1331 = vmul.f32 %v1328, %v416
        %s1332 = sld [smem:[#allocation7 + $0x46]]
        %v1333 = vstv %s1332
        %v1334 = vmul.f32 %v1333, %v414
        %v1335 = vmul.f32 %v1333, %v415
        %v1336 = vmul.f32 %v1333, %v416
        %s1337 = sld [smem:[#allocation7 + $0x47]]
        %v1338 = vstv %s1337
        %v1339 = vmul.f32 %v1338, %v414
        %v1340 = vmul.f32 %v1338, %v415
        %v1341 = vmul.f32 %v1338, %v416
        %1344 = vrot.lane.b32.xlu0 %v1180, 127
        %v1345 = vpop.permute.xlu0 %1344
        %1346 = vrot.lane.b32.xlu0 %v1181, 127
        %v1347 = vpop.permute.xlu0 %1346
        %v1350 = vadd.f32 %v1176, %v1345
        %v1351 = vadd.f32 %v1177, %v1347
        %v1355 = vrot.slane %v1188, 1
        %v1356 = vrot.slane %v1189, 1
        %v1357 = vsel %vm598, %v1355, %v1356
        %v1358 = vrot.slane %v1190, 1
        %v1359 = vsel %vm598, %v1356, %v1358
        %1360 = vrot.lane.b32.xlu0 %v1357, 2
        %v1361 = vpop.permute.xlu0 %1360
        %1362 = vrot.lane.b32.xlu0 %v1359, 2
        %v1363 = vpop.permute.xlu0 %1362
        %v1366 = vadd.f32 %v1184, %v1361
        %v1367 = vadd.f32 %v1185, %v1363
        %1371 = vrot.lane.b32.xlu0 %v1198, 127
        %v1372 = vpop.permute.xlu0 %1371
        %1373 = vrot.lane.b32.xlu0 %v1199, 127
        %v1374 = vpop.permute.xlu0 %1373
        %1375 = vrot.lane.b32.xlu0 %v1200, 127
        %v1376 = vpop.permute.xlu0 %1375
        %v1380 = vadd.f32 %v1193, %v1372
        %v1381 = vadd.f32 %v1194, %v1374
        %v1382 = vadd.f32 %v1195, %v1376
        %1386 = vrot.lane.b32.xlu0 %v1208, 127
        %v1387 = vpop.permute.xlu0 %1386
        %1388 = vrot.lane.b32.xlu0 %v1209, 127
        %v1389 = vpop.permute.xlu0 %1388
        %1390 = vrot.lane.b32.xlu0 %v1210, 127
        %v1391 = vpop.permute.xlu0 %1390
        %v1395 = vadd.f32 %v1203, %v1387
        %v1396 = vadd.f32 %v1204, %v1389
        %v1397 = vadd.f32 %v1205, %v1391
        %v1400 = vrot.slane %v1218, 6
        %v1401 = vrot.slane %v1219, 6
        %v1402 = vsel %vm644, %v1400, %v1401
        %1403 = vrot.lane.b32.xlu0 %v1400, 2
        %v1404 = vpop.permute.xlu0 %1403
        %1405 = vrot.lane.b32.xlu0 %v1402, 2
        %v1406 = vpop.permute.xlu0 %1405
        %1407 = vrot.lane.b32.xlu0 %v1401, 2
        %v1408 = vpop.permute.xlu0 %1407
        %v1412 = vadd.f32 %v1213, %v1404
        %v1413 = vadd.f32 %v1214, %v1406
        %v1414 = vadd.f32 %v1215, %v1408
        %1417 = vrot.lane.b32.xlu0 %v1226, 127
        %v1418 = vpop.permute.xlu0 %1417
        %1419 = vrot.lane.b32.xlu0 %v1227, 127
        %v1420 = vpop.permute.xlu0 %1419
        %v1423 = vadd.f32 %v1222, %v1418
        %v1424 = vadd.f32 %v1223, %v1420
        %1428 = vrot.lane.b32.xlu0 %v1235, 127
        %v1429 = vpop.permute.xlu0 %1428
        %1430 = vrot.lane.b32.xlu0 %v1236, 127
        %v1431 = vpop.permute.xlu0 %1430
        %1432 = vrot.lane.b32.xlu0 %v1237, 127
        %v1433 = vpop.permute.xlu0 %1432
        %v1437 = vadd.f32 %v1230, %v1429
        %v1438 = vadd.f32 %v1231, %v1431
        %v1439 = vadd.f32 %v1232, %v1433
        %v1443 = vrot.slane %v1245, 1
        %v1444 = vrot.slane %v1246, 1
        %v1445 = vsel %vm598, %v1443, %v1444
        %v1446 = vrot.slane %v1247, 1
        %v1447 = vsel %vm598, %v1444, %v1446
        %1448 = vrot.lane.b32.xlu0 %v1445, 2
        %v1449 = vpop.permute.xlu0 %1448
        %1450 = vrot.lane.b32.xlu0 %v1447, 2
        %v1451 = vpop.permute.xlu0 %1450
        %1452 = vrot.lane.b32.xlu0 %v1446, 2
        %v1453 = vpop.permute.xlu0 %1452
        %v1457 = vadd.f32 %v1240, %v1449
        %v1458 = vadd.f32 %v1241, %v1451
        %v1459 = vadd.f32 %v1242, %v1453
        %1463 = vrot.lane.b32.xlu0 %v1255, 127
        %v1464 = vpop.permute.xlu0 %1463
        %1465 = vrot.lane.b32.xlu0 %v1256, 127
        %v1466 = vpop.permute.xlu0 %1465
        %1467 = vrot.lane.b32.xlu0 %v1257, 127
        %v1468 = vpop.permute.xlu0 %1467
        %v1472 = vadd.f32 %v1250, %v1464
        %v1473 = vadd.f32 %v1251, %v1466
        %v1474 = vadd.f32 %v1252, %v1468
        %1477 = vrot.lane.b32.xlu0 %v1264, 127
        %v1478 = vpop.permute.xlu0 %1477
        %1479 = vrot.lane.b32.xlu0 %v1265, 127
        %v1480 = vpop.permute.xlu0 %1479
        %v1483 = vadd.f32 %v1260, %v1478
        %v1484 = vadd.f32 %v1261, %v1480
        %v1488 = vrot.slane %v1272, 1
        %v1489 = vrot.slane %v1273, 1
        %v1490 = vsel %vm598, %v1488, %v1489
        %v1491 = vrot.slane %v1274, 1
        %v1492 = vsel %vm598, %v1489, %v1491
        %1493 = vrot.lane.b32.xlu0 %v1490, 2
        %v1494 = vpop.permute.xlu0 %1493
        %1495 = vrot.lane.b32.xlu0 %v1492, 2
        %v1496 = vpop.permute.xlu0 %1495
        %v1499 = vadd.f32 %v1268, %v1494
        %v1500 = vadd.f32 %v1269, %v1496
        %1504 = vrot.lane.b32.xlu0 %v1282, 127
        %v1505 = vpop.permute.xlu0 %1504
        %1506 = vrot.lane.b32.xlu0 %v1283, 127
        %v1507 = vpop.permute.xlu0 %1506
        %1508 = vrot.lane.b32.xlu0 %v1284, 127
        %v1509 = vpop.permute.xlu0 %1508
        %v1513 = vadd.f32 %v1277, %v1505
        %v1514 = vadd.f32 %v1278, %v1507
        %v1515 = vadd.f32 %v1279, %v1509
        %1519 = vrot.lane.b32.xlu0 %v1292, 127
        %v1520 = vpop.permute.xlu0 %1519
        %1521 = vrot.lane.b32.xlu0 %v1293, 127
        %v1522 = vpop.permute.xlu0 %1521
        %1523 = vrot.lane.b32.xlu0 %v1294, 127
        %v1524 = vpop.permute.xlu0 %1523
        %v1528 = vadd.f32 %v1287, %v1520
        %v1529 = vadd.f32 %v1288, %v1522
        %v1530 = vadd.f32 %v1289, %v1524
        %v1533 = vrot.slane %v1302, 6
        %v1534 = vrot.slane %v1303, 6
        %v1535 = vsel %vm644, %v1533, %v1534
        %1536 = vrot.lane.b32.xlu0 %v1533, 2
        %v1537 = vpop.permute.xlu0 %1536
        %1538 = vrot.lane.b32.xlu0 %v1535, 2
        %v1539 = vpop.permute.xlu0 %1538
        %1540 = vrot.lane.b32.xlu0 %v1534, 2
        %v1541 = vpop.permute.xlu0 %1540
        %v1545 = vadd.f32 %v1297, %v1537
        %v1546 = vadd.f32 %v1298, %v1539
        %v1547 = vadd.f32 %v1299, %v1541
        %1550 = vrot.lane.b32.xlu0 %v1310, 127
        %v1551 = vpop.permute.xlu0 %1550
        %1552 = vrot.lane.b32.xlu0 %v1311, 127
        %v1553 = vpop.permute.xlu0 %1552
        %v1556 = vadd.f32 %v1306, %v1551
        %v1557 = vadd.f32 %v1307, %v1553
        %1561 = vrot.lane.b32.xlu0 %v1319, 127
        %v1562 = vpop.permute.xlu0 %1561
        %1563 = vrot.lane.b32.xlu0 %v1320, 127
        %v1564 = vpop.permute.xlu0 %1563
        %1565 = vrot.lane.b32.xlu0 %v1321, 127
        %v1566 = vpop.permute.xlu0 %1565
        %v1570 = vadd.f32 %v1314, %v1562
        %v1571 = vadd.f32 %v1315, %v1564
        %v1572 = vadd.f32 %v1316, %v1566
        %v1576 = vrot.slane %v1329, 1
        %v1577 = vrot.slane %v1330, 1
        %v1578 = vsel %vm598, %v1576, %v1577
        %v1579 = vrot.slane %v1331, 1
        %v1580 = vsel %vm598, %v1577, %v1579
        %1581 = vrot.lane.b32.xlu0 %v1578, 2
        %v1582 = vpop.permute.xlu0 %1581
        %1583 = vrot.lane.b32.xlu0 %v1580, 2
        %v1584 = vpop.permute.xlu0 %1583
        %1585 = vrot.lane.b32.xlu0 %v1579, 2
        %v1586 = vpop.permute.xlu0 %1585
        %v1590 = vadd.f32 %v1324, %v1582
        %v1591 = vadd.f32 %v1325, %v1584
        %v1592 = vadd.f32 %v1326, %v1586
        %1596 = vrot.lane.b32.xlu0 %v1339, 127
        %v1597 = vpop.permute.xlu0 %1596
        %1598 = vrot.lane.b32.xlu0 %v1340, 127
        %v1599 = vpop.permute.xlu0 %1598
        %1600 = vrot.lane.b32.xlu0 %v1341, 127
        %v1601 = vpop.permute.xlu0 %1600
        %v1605 = vadd.f32 %v1334, %v1597
        %v1606 = vadd.f32 %v1335, %v1599
        %v1607 = vadd.f32 %v1336, %v1601
        %1610 = vrot.lane.b32.xlu0 %v1366, 126
        %v1611 = vpop.permute.xlu0 %1610
        %1612 = vrot.lane.b32.xlu0 %v1367, 126
        %v1613 = vpop.permute.xlu0 %1612
        %v1616 = vadd.f32 %v1350, %v1611
        %v1617 = vadd.f32 %v1351, %v1613
        %v1621 = vrot.slane %v1395, 1
        %v1622 = vrot.slane %v1396, 1
        %v1623 = vsel %vm598, %v1621, %v1622
        %v1624 = vrot.slane %v1397, 1
        %v1625 = vsel %vm598, %v1622, %v1624
        %1626 = vrot.lane.b32.xlu0 %v1623, 1
        %v1627 = vpop.permute.xlu0 %1626
        %1628 = vrot.lane.b32.xlu0 %v1625, 1
        %v1629 = vpop.permute.xlu0 %1628
        %1630 = vrot.lane.b32.xlu0 %v1624, 1
        %v1631 = vpop.permute.xlu0 %1630
        %v1635 = vadd.f32 %v1380, %v1627
        %v1636 = vadd.f32 %v1381, %v1629
        %v1637 = vadd.f32 %v1382, %v1631
        %v1640 = vrot.slane %v1423, 6
        %v1641 = vrot.slane %v1424, 6
        %v1642 = vsel %vm644, %v1640, %v1641
        %1643 = vrot.lane.b32.xlu0 %v1640, 1
        %v1644 = vpop.permute.xlu0 %1643
        %1645 = vrot.lane.b32.xlu0 %v1642, 1
        %v1646 = vpop.permute.xlu0 %1645
        %1647 = vrot.lane.b32.xlu0 %v1641, 1
        %v1648 = vpop.permute.xlu0 %1647
        %v1652 = vadd.f32 %v1412, %v1644
        %v1653 = vadd.f32 %v1413, %v1646
        %v1654 = vadd.f32 %v1414, %v1648
        %1658 = vrot.lane.b32.xlu0 %v1457, 126
        %v1659 = vpop.permute.xlu0 %1658
        %1660 = vrot.lane.b32.xlu0 %v1458, 126
        %v1661 = vpop.permute.xlu0 %1660
        %1662 = vrot.lane.b32.xlu0 %v1459, 126
        %v1663 = vpop.permute.xlu0 %1662
        %v1667 = vadd.f32 %v1437, %v1659
        %v1668 = vadd.f32 %v1438, %v1661
        %v1669 = vadd.f32 %v1439, %v1663
        %v1672 = vrot.slane %v1483, 6
        %v1673 = vrot.slane %v1484, 6
        %v1674 = vsel %vm644, %v1672, %v1673
        %1675 = vrot.lane.b32.xlu0 %v1672, 1
        %v1676 = vpop.permute.xlu0 %1675
        %1677 = vrot.lane.b32.xlu0 %v1674, 1
        %v1678 = vpop.permute.xlu0 %1677
        %1679 = vrot.lane.b32.xlu0 %v1673, 1
        %v1680 = vpop.permute.xlu0 %1679
        %v1684 = vadd.f32 %v1472, %v1676
        %v1685 = vadd.f32 %v1473, %v1678
        %v1686 = vadd.f32 %v1474, %v1680
        %v1690 = vrot.slane %v1513, 1
        %v1691 = vrot.slane %v1514, 1
        %v1692 = vsel %vm598, %v1690, %v1691
        %v1693 = vrot.slane %v1515, 1
        %v1694 = vsel %vm598, %v1691, %v1693
        %1695 = vrot.lane.b32.xlu0 %v1692, 1
        %v1696 = vpop.permute.xlu0 %1695
        %1697 = vrot.lane.b32.xlu0 %v1694, 1
        %v1698 = vpop.permute.xlu0 %1697
        %v1701 = vadd.f32 %v1499, %v1696
        %v1702 = vadd.f32 %v1500, %v1698
        %1706 = vrot.lane.b32.xlu0 %v1545, 126
        %v1707 = vpop.permute.xlu0 %1706
        %1708 = vrot.lane.b32.xlu0 %v1546, 126
        %v1709 = vpop.permute.xlu0 %1708
        %1710 = vrot.lane.b32.xlu0 %v1547, 126
        %v1711 = vpop.permute.xlu0 %1710
        %v1715 = vadd.f32 %v1528, %v1707
        %v1716 = vadd.f32 %v1529, %v1709
        %v1717 = vadd.f32 %v1530, %v1711
        %v1721 = vrot.slane %v1570, 1
        %v1722 = vrot.slane %v1571, 1
        %v1723 = vsel %vm598, %v1721, %v1722
        %v1724 = vrot.slane %v1572, 1
        %v1725 = vsel %vm598, %v1722, %v1724
        %1726 = vrot.lane.b32.xlu0 %v1723, 1
        %v1727 = vpop.permute.xlu0 %1726
        %1728 = vrot.lane.b32.xlu0 %v1725, 1
        %v1729 = vpop.permute.xlu0 %1728
        %v1732 = vadd.f32 %v1556, %v1727
        %v1733 = vadd.f32 %v1557, %v1729
        %v1737 = vrot.slane %v1605, 1
        %v1738 = vrot.slane %v1606, 1
        %v1739 = vsel %vm598, %v1737, %v1738
        %v1740 = vrot.slane %v1607, 1
        %v1741 = vsel %vm598, %v1738, %v1740
        %1742 = vrot.lane.b32.xlu0 %v1739, 1
        %v1743 = vpop.permute.xlu0 %1742
        %1744 = vrot.lane.b32.xlu0 %v1741, 1
        %v1745 = vpop.permute.xlu0 %1744
        %1746 = vrot.lane.b32.xlu0 %v1740, 1
        %v1747 = vpop.permute.xlu0 %1746
        %v1751 = vadd.f32 %v1590, %v1743
        %v1752 = vadd.f32 %v1591, %v1745
        %v1753 = vadd.f32 %v1592, %v1747
        %v1757 = vrot.slane %v1635, 1
        %v1758 = vrot.slane %v1636, 1
        %v1759 = vsel %vm598, %v1757, %v1758
        %v1760 = vrot.slane %v1637, 1
        %v1761 = vsel %vm598, %v1758, %v1760
        %1762 = vrot.lane.b32.xlu0 %v1759, 127
        %v1763 = vpop.permute.xlu0 %1762
        %1764 = vrot.lane.b32.xlu0 %v1761, 127
        %v1765 = vpop.permute.xlu0 %1764
        %v1768 = vadd.f32 %v1616, %v1763
        %v1769 = vadd.f32 %v1617, %v1765
        %v1773 = vrot.slane %v1667, 7
        %v1774 = vrot.slane %v1668, 7
        %v1775 = vsel %vm238, %v1773, %v1774
        %v1776 = vrot.slane %v1669, 7
        %v1777 = vsel %vm238, %v1774, %v1776
        %1778 = vrot.lane.b32.xlu0 %v1773, 2
        %v1779 = vpop.permute.xlu0 %1778
        %1780 = vrot.lane.b32.xlu0 %v1775, 2
        %v1781 = vpop.permute.xlu0 %1780
        %1782 = vrot.lane.b32.xlu0 %v1777, 2
        %v1783 = vpop.permute.xlu0 %1782
        %v1787 = vadd.f32 %v1652, %v1779
        %v1788 = vadd.f32 %v1653, %v1781
        %v1789 = vadd.f32 %v1654, %v1783
        %v1792 = vrot.slane %v1701, 6
        %v1793 = vrot.slane %v1702, 6
        %v1794 = vsel %vm644, %v1792, %v1793
        %1795 = vrot.lane.b32.xlu0 %v1792, 127
        %v1796 = vpop.permute.xlu0 %1795
        %1797 = vrot.lane.b32.xlu0 %v1794, 127
        %v1798 = vpop.permute.xlu0 %1797
        %1799 = vrot.lane.b32.xlu0 %v1793, 127
        %v1800 = vpop.permute.xlu0 %1799
        %v1804 = vadd.f32 %v1684, %v1796
        %v1805 = vadd.f32 %v1685, %v1798
        %v1806 = vadd.f32 %v1686, %v1800
        %v1809 = vrot.slane %v1732, 6
        %v1810 = vrot.slane %v1733, 6
        %v1811 = vsel %vm644, %v1809, %v1810
        %1812 = vrot.lane.b32.xlu0 %v1809, 127
        %v1813 = vpop.permute.xlu0 %1812
        %1814 = vrot.lane.b32.xlu0 %v1811, 127
        %v1815 = vpop.permute.xlu0 %1814
        %1816 = vrot.lane.b32.xlu0 %v1810, 127
        %v1817 = vpop.permute.xlu0 %1816
        %v1821 = vadd.f32 %v1715, %v1813
        %v1822 = vadd.f32 %v1716, %v1815
        %v1823 = vadd.f32 %v1717, %v1817
        %v1827 = vrot.slane %v1787, 2
        %v1828 = vrot.slane %v1788, 2
        %v1829 = vsel %vm1072, %v1827, %v1828
        %v1830 = vrot.slane %v1789, 2
        %v1831 = vsel %vm1072, %v1828, %v1830
        %1832 = vrot.lane.b32.xlu0 %v1829, 126
        %v1833 = vpop.permute.xlu0 %1832
        %1834 = vrot.lane.b32.xlu0 %v1831, 126
        %v1835 = vpop.permute.xlu0 %1834
        %v1838 = vadd.f32 %v1768, %v1833
        %v1839 = vadd.f32 %v1769, %v1835
        %1843 = vrot.lane.b32.xlu0 %v1821, 1
        %v1844 = vpop.permute.xlu0 %1843
        %1845 = vrot.lane.b32.xlu0 %v1822, 1
        %v1846 = vpop.permute.xlu0 %1845
        %1847 = vrot.lane.b32.xlu0 %v1823, 1
        %v1848 = vpop.permute.xlu0 %1847
        %v1852 = vadd.f32 %v1804, %v1844
        %v1853 = vadd.f32 %v1805, %v1846
        %v1854 = vadd.f32 %v1806, %v1848
        %v1858 = vrot.slane %v1852, 2
        %v1859 = vrot.slane %v1853, 2
        %v1860 = vsel %vm1072, %v1858, %v1859
        %v1861 = vrot.slane %v1854, 2
        %v1862 = vsel %vm1072, %v1859, %v1861
        %1863 = vrot.lane.b32.xlu0 %v1860, 127
        %v1864 = vpop.permute.xlu0 %1863
        %1865 = vrot.lane.b32.xlu0 %v1862, 127
        %v1866 = vpop.permute.xlu0 %1865
        %v1869 = vadd.f32 %v1838, %v1864
        %v1870 = vadd.f32 %v1839, %v1866
        %v1874 = vrot.slane %v1751, 1
        %v1875 = vrot.slane %v1752, 1
        %v1876 = vsel %vm598, %v1874, %v1875
        %v1877 = vrot.slane %v1753, 1
        %v1878 = vsel %vm598, %v1875, %v1877
        %1879 = vrot.lane.b32.xlu0 %v1876, 126
        %v1880 = vpop.permute.xlu0 %1879
        %1881 = vrot.lane.b32.xlu0 %v1878, 126
        %v1882 = vpop.permute.xlu0 %1881
        %v1885 = vadd.f32 %v1869, %v1880
        %v1886 = vadd.f32 %v1870, %v1882
        %v1887 = vsel %vm1133, %v1885, 0.0
        %v1888 = vsel %vm1133, %v1886, 0.0
        %v1889 = vadd.f32 %v1887, %v1888
        %1890 = vadd.xlane.f32.xlu0 %v1889
        %v1891 = vpop.xlane.xlu0 %1890
        %v1892 = vrot.slane %v1891, 4
        %v1893 = vadd.f32 %v1891, %v1892
        %v1894 = vrot.slane %v1893, 2
        %v1895 = vadd.f32 %v1893, %v1894
        %v1896 = vrot.slane %v1895, 1
        %v1897 = vadd.f32 %v1895, %v1896
        %s1898 = vtos %v1897
        %v1899 = vstv %s1898
        %v1900 = vmul.f32 %v1899, 0.00390625
        %v1901 = vmul.f32 %v1885, %v1885
        %v1902 = vmul.f32 %v1886, %v1886
        %v1903 = vsel %vm1133, %v1901, 0.0
        %v1904 = vsel %vm1133, %v1902, 0.0
        %v1905 = vadd.f32 %v1903, %v1904
        %1906 = vadd.xlane.f32.xlu0 %v1905
        %v1907 = vpop.xlane.xlu0 %1906
        %v1908 = vrot.slane %v1907, 4
        %v1909 = vadd.f32 %v1907, %v1908
        %v1910 = vrot.slane %v1909, 2
        %v1911 = vadd.f32 %v1909, %v1910
        %v1912 = vrot.slane %v1911, 1
        %v1913 = vadd.f32 %v1911, %v1912
        %s1914 = vtos %v1913
        %v1915 = vstv %s1914
        %v1916 = vmul.f32 %v1915, 0.00390625
        %v1917 = vmul.f32 %v1900, %v1900
        %v1918 = vsub.f32 %v1916, %v1917
        %v1919 = vsub.f32 %v1885, %v1900
        %v1920 = vsub.f32 %v1886, %v1900
        %v1921 = vadd.f32 %v1918, 1e-05
        %v1922 = vrsqrt.pop %v1921
        %v1923 = vmul.f32 %v1919, %v1922
        %v1924 = vmul.f32 %v1920, %v1922
        %v1925 = vmax.f32 %v1923, 0.0
        %v1926 = vmax.f32 %v1924, 0.0
        %s1927 = sld [smem:[#allocation7 + $0x48]]
        %v1928 = vstv %s1927
        %v1929 = vmul.f32 %v1928, %v405
        %v1930 = vmul.f32 %v1928, %v406
        %s1931 = sld [smem:[#allocation7 + $0x49]]
        %v1932 = vstv %s1931
        %v1933 = vmul.f32 %v1932, %v405
        %v1934 = vmul.f32 %v1932, %v406
        %s1935 = sld [smem:[#allocation7 + $0x4a]]
        %v1936 = vstv %s1935
        %v1937 = vmul.f32 %v1936, %v405
        %v1938 = vmul.f32 %v1936, %v406
        %s1939 = sld [smem:[#allocation7 + $0x4b]]
        %v1940 = vstv %s1939
        %v1941 = vmul.f32 %v1940, %v405
        %v1942 = vmul.f32 %v1940, %v406
        %v1943 = vmul.f32 %v1940, %v407
        %s1944 = sld [smem:[#allocation7 + $0x4c]]
        %v1945 = vstv %s1944
        %v1946 = vmul.f32 %v1945, %v405
        %v1947 = vmul.f32 %v1945, %v406
        %v1948 = vmul.f32 %v1945, %v407
        %s1949 = sld [smem:[#allocation7 + $0x4d]]
        %v1950 = vstv %s1949
        %v1951 = vmul.f32 %v1950, %v405
        %v1952 = vmul.f32 %v1950, %v406
        %v1953 = vmul.f32 %v1950, %v407
        %s1954 = sld [smem:[#allocation7 + $0x4e]]
        %v1955 = vstv %s1954
        %v1956 = vmul.f32 %v1955, %v405
        %v1957 = vmul.f32 %v1955, %v406
        %v1958 = vmul.f32 %v1955, %v407
        %s1959 = sld [smem:[#allocation7 + $0x4f]]
        %v1960 = vstv %s1959
        %v1961 = vmul.f32 %v1960, %v405
        %v1962 = vmul.f32 %v1960, %v406
        %v1963 = vmul.f32 %v1960, %v407
        %s1964 = sld [smem:[#allocation7 + $0x50]]
        %v1965 = vstv %s1964
        %v1966 = vmul.f32 %v1965, %v405
        %v1967 = vmul.f32 %v1965, %v406
        %v1968 = vmul.f32 %v1965, %v407
        %s1969 = sld [smem:[#allocation7 + $0x51]]
        %v1970 = vstv %s1969
        %v1971 = vmul.f32 %v1970, %v408
        %v1972 = vmul.f32 %v1970, %v409
        %s1973 = sld [smem:[#allocation7 + $0x52]]
        %v1974 = vstv %s1973
        %v1975 = vmul.f32 %v1974, %v408
        %v1976 = vmul.f32 %v1974, %v409
        %s1977 = sld [smem:[#allocation7 + $0x53]]
        %v1978 = vstv %s1977
        %v1979 = vmul.f32 %v1978, %v408
        %v1980 = vmul.f32 %v1978, %v409
        %s1981 = sld [smem:[#allocation7 + $0x54]]
        %v1982 = vstv %s1981
        %v1983 = vmul.f32 %v1982, %v408
        %v1984 = vmul.f32 %v1982, %v409
        %v1985 = vmul.f32 %v1982, %v410
        %s1986 = sld [smem:[#allocation7 + $0x55]]
        %v1987 = vstv %s1986
        %v1988 = vmul.f32 %v1987, %v408
        %v1989 = vmul.f32 %v1987, %v409
        %v1990 = vmul.f32 %v1987, %v410
        %s1991 = sld [smem:[#allocation7 + $0x56]]
        %v1992 = vstv %s1991
        %v1993 = vmul.f32 %v1992, %v408
        %v1994 = vmul.f32 %v1992, %v409
        %v1995 = vmul.f32 %v1992, %v410
        %s1996 = sld [smem:[#allocation7 + $0x57]]
        %v1997 = vstv %s1996
        %v1998 = vmul.f32 %v1997, %v408
        %v1999 = vmul.f32 %v1997, %v409
        %v2000 = vmul.f32 %v1997, %v410
        %s2001 = sld [smem:[#allocation7 + $0x58]]
        %v2002 = vstv %s2001
        %v2003 = vmul.f32 %v2002, %v408
        %v2004 = vmul.f32 %v2002, %v409
        %v2005 = vmul.f32 %v2002, %v410
        %s2006 = sld [smem:[#allocation7 + $0x59]]
        %v2007 = vstv %s2006
        %v2008 = vmul.f32 %v2007, %v408
        %v2009 = vmul.f32 %v2007, %v409
        %v2010 = vmul.f32 %v2007, %v410
        %s2011 = sld [smem:[#allocation7 + $0x5a]]
        %v2012 = vstv %s2011
        %v2013 = vmul.f32 %v2012, %v411
        %v2014 = vmul.f32 %v2012, %v412
        %s2015 = sld [smem:[#allocation7 + $0x5b]]
        %v2016 = vstv %s2015
        %v2017 = vmul.f32 %v2016, %v411
        %v2018 = vmul.f32 %v2016, %v412
        %s2019 = sld [smem:[#allocation7 + $0x5c]]
        %v2020 = vstv %s2019
        %v2021 = vmul.f32 %v2020, %v411
        %v2022 = vmul.f32 %v2020, %v412
        %s2023 = sld [smem:[#allocation7 + $0x5d]]
        %v2024 = vstv %s2023
        %v2025 = vmul.f32 %v2024, %v411
        %v2026 = vmul.f32 %v2024, %v412
        %v2027 = vmul.f32 %v2024, %v413
        %s2028 = sld [smem:[#allocation7 + $0x5e]]
        %v2029 = vstv %s2028
        %v2030 = vmul.f32 %v2029, %v411
        %v2031 = vmul.f32 %v2029, %v412
        %v2032 = vmul.f32 %v2029, %v413
        %s2033 = sld [smem:[#allocation7 + $0x5f]]
        %v2034 = vstv %s2033
        %v2035 = vmul.f32 %v2034, %v411
        %v2036 = vmul.f32 %v2034, %v412
        %v2037 = vmul.f32 %v2034, %v413
        %s2038 = sld [smem:[#allocation7 + $0x60]]
        %v2039 = vstv %s2038
        %v2040 = vmul.f32 %v2039, %v411
        %v2041 = vmul.f32 %v2039, %v412
        %v2042 = vmul.f32 %v2039, %v413
        %s2043 = sld [smem:[#allocation7 + $0x61]]
        %v2044 = vstv %s2043
        %v2045 = vmul.f32 %v2044, %v411
        %v2046 = vmul.f32 %v2044, %v412
        %v2047 = vmul.f32 %v2044, %v413
        %s2048 = sld [smem:[#allocation7 + $0x62]]
        %v2049 = vstv %s2048
        %v2050 = vmul.f32 %v2049, %v411
        %v2051 = vmul.f32 %v2049, %v412
        %v2052 = vmul.f32 %v2049, %v413
        %s2053 = sld [smem:[#allocation7 + $0x63]]
        %v2054 = vstv %s2053
        %v2055 = vmul.f32 %v2054, %v414
        %v2056 = vmul.f32 %v2054, %v415
        %s2057 = sld [smem:[#allocation7 + $0x64]]
        %v2058 = vstv %s2057
        %v2059 = vmul.f32 %v2058, %v414
        %v2060 = vmul.f32 %v2058, %v415
        %s2061 = sld [smem:[#allocation7 + $0x65]]
        %v2062 = vstv %s2061
        %v2063 = vmul.f32 %v2062, %v414
        %v2064 = vmul.f32 %v2062, %v415
        %s2065 = sld [smem:[#allocation7 + $0x66]]
        %v2066 = vstv %s2065
        %v2067 = vmul.f32 %v2066, %v414
        %v2068 = vmul.f32 %v2066, %v415
        %v2069 = vmul.f32 %v2066, %v416
        %s2070 = sld [smem:[#allocation7 + $0x67]]
        %v2071 = vstv %s2070
        %v2072 = vmul.f32 %v2071, %v414
        %v2073 = vmul.f32 %v2071, %v415
        %v2074 = vmul.f32 %v2071, %v416
        %s2075 = sld [smem:[#allocation7 + $0x68]]
        %v2076 = vstv %s2075
        %v2077 = vmul.f32 %v2076, %v414
        %v2078 = vmul.f32 %v2076, %v415
        %v2079 = vmul.f32 %v2076, %v416
        %s2080 = sld [smem:[#allocation7 + $0x69]]
        %v2081 = vstv %s2080
        %v2082 = vmul.f32 %v2081, %v414
        %v2083 = vmul.f32 %v2081, %v415
        %v2084 = vmul.f32 %v2081, %v416
        %s2085 = sld [smem:[#allocation7 + $0x6a]]
        %v2086 = vstv %s2085
        %v2087 = vmul.f32 %v2086, %v414
        %v2088 = vmul.f32 %v2086, %v415
        %v2089 = vmul.f32 %v2086, %v416
        %s2090 = sld [smem:[#allocation7 + $0x6b]]
        %v2091 = vstv %s2090
        %v2092 = vmul.f32 %v2091, %v414
        %v2093 = vmul.f32 %v2091, %v415
        %v2094 = vmul.f32 %v2091, %v416
        %2097 = vrot.lane.b32.xlu0 %v1933, 127
        %v2098 = vpop.permute.xlu0 %2097
        %2099 = vrot.lane.b32.xlu0 %v1934, 127
        %v2100 = vpop.permute.xlu0 %2099
        %v2103 = vadd.f32 %v1929, %v2098
        %v2104 = vadd.f32 %v1930, %v2100
        %v2108 = vrot.slane %v1941, 1
        %v2109 = vrot.slane %v1942, 1
        %v2110 = vsel %vm598, %v2108, %v2109
        %v2111 = vrot.slane %v1943, 1
        %v2112 = vsel %vm598, %v2109, %v2111
        %2113 = vrot.lane.b32.xlu0 %v2110, 2
        %v2114 = vpop.permute.xlu0 %2113
        %2115 = vrot.lane.b32.xlu0 %v2112, 2
        %v2116 = vpop.permute.xlu0 %2115
        %v2119 = vadd.f32 %v1937, %v2114
        %v2120 = vadd.f32 %v1938, %v2116
        %2124 = vrot.lane.b32.xlu0 %v1951, 127
        %v2125 = vpop.permute.xlu0 %2124
        %2126 = vrot.lane.b32.xlu0 %v1952, 127
        %v2127 = vpop.permute.xlu0 %2126
        %2128 = vrot.lane.b32.xlu0 %v1953, 127
        %v2129 = vpop.permute.xlu0 %2128
        %v2133 = vadd.f32 %v1946, %v2125
        %v2134 = vadd.f32 %v1947, %v2127
        %v2135 = vadd.f32 %v1948, %v2129
        %2139 = vrot.lane.b32.xlu0 %v1961, 127
        %v2140 = vpop.permute.xlu0 %2139
        %2141 = vrot.lane.b32.xlu0 %v1962, 127
        %v2142 = vpop.permute.xlu0 %2141
        %2143 = vrot.lane.b32.xlu0 %v1963, 127
        %v2144 = vpop.permute.xlu0 %2143
        %v2148 = vadd.f32 %v1956, %v2140
        %v2149 = vadd.f32 %v1957, %v2142
        %v2150 = vadd.f32 %v1958, %v2144
        %v2153 = vrot.slane %v1971, 6
        %v2154 = vrot.slane %v1972, 6
        %v2155 = vsel %vm644, %v2153, %v2154
        %2156 = vrot.lane.b32.xlu0 %v2153, 2
        %v2157 = vpop.permute.xlu0 %2156
        %2158 = vrot.lane.b32.xlu0 %v2155, 2
        %v2159 = vpop.permute.xlu0 %2158
        %2160 = vrot.lane.b32.xlu0 %v2154, 2
        %v2161 = vpop.permute.xlu0 %2160
        %v2165 = vadd.f32 %v1966, %v2157
        %v2166 = vadd.f32 %v1967, %v2159
        %v2167 = vadd.f32 %v1968, %v2161
        %2170 = vrot.lane.b32.xlu0 %v1979, 127
        %v2171 = vpop.permute.xlu0 %2170
        %2172 = vrot.lane.b32.xlu0 %v1980, 127
        %v2173 = vpop.permute.xlu0 %2172
        %v2176 = vadd.f32 %v1975, %v2171
        %v2177 = vadd.f32 %v1976, %v2173
        %2181 = vrot.lane.b32.xlu0 %v1988, 127
        %v2182 = vpop.permute.xlu0 %2181
        %2183 = vrot.lane.b32.xlu0 %v1989, 127
        %v2184 = vpop.permute.xlu0 %2183
        %2185 = vrot.lane.b32.xlu0 %v1990, 127
        %v2186 = vpop.permute.xlu0 %2185
        %v2190 = vadd.f32 %v1983, %v2182
        %v2191 = vadd.f32 %v1984, %v2184
        %v2192 = vadd.f32 %v1985, %v2186
        %v2196 = vrot.slane %v1998, 1
        %v2197 = vrot.slane %v1999, 1
        %v2198 = vsel %vm598, %v2196, %v2197
        %v2199 = vrot.slane %v2000, 1
        %v2200 = vsel %vm598, %v2197, %v2199
        %2201 = vrot.lane.b32.xlu0 %v2198, 2
        %v2202 = vpop.permute.xlu0 %2201
        %2203 = vrot.lane.b32.xlu0 %v2200, 2
        %v2204 = vpop.permute.xlu0 %2203
        %2205 = vrot.lane.b32.xlu0 %v2199, 2
        %v2206 = vpop.permute.xlu0 %2205
        %v2210 = vadd.f32 %v1993, %v2202
        %v2211 = vadd.f32 %v1994, %v2204
        %v2212 = vadd.f32 %v1995, %v2206
        %2216 = vrot.lane.b32.xlu0 %v2008, 127
        %v2217 = vpop.permute.xlu0 %2216
        %2218 = vrot.lane.b32.xlu0 %v2009, 127
        %v2219 = vpop.permute.xlu0 %2218
        %2220 = vrot.lane.b32.xlu0 %v2010, 127
        %v2221 = vpop.permute.xlu0 %2220
        %v2225 = vadd.f32 %v2003, %v2217
        %v2226 = vadd.f32 %v2004, %v2219
        %v2227 = vadd.f32 %v2005, %v2221
        %2230 = vrot.lane.b32.xlu0 %v2017, 127
        %v2231 = vpop.permute.xlu0 %2230
        %2232 = vrot.lane.b32.xlu0 %v2018, 127
        %v2233 = vpop.permute.xlu0 %2232
        %v2236 = vadd.f32 %v2013, %v2231
        %v2237 = vadd.f32 %v2014, %v2233
        %v2241 = vrot.slane %v2025, 1
        %v2242 = vrot.slane %v2026, 1
        %v2243 = vsel %vm598, %v2241, %v2242
        %v2244 = vrot.slane %v2027, 1
        %v2245 = vsel %vm598, %v2242, %v2244
        %2246 = vrot.lane.b32.xlu0 %v2243, 2
        %v2247 = vpop.permute.xlu0 %2246
        %2248 = vrot.lane.b32.xlu0 %v2245, 2
        %v2249 = vpop.permute.xlu0 %2248
        %v2252 = vadd.f32 %v2021, %v2247
        %v2253 = vadd.f32 %v2022, %v2249
        %2257 = vrot.lane.b32.xlu0 %v2035, 127
        %v2258 = vpop.permute.xlu0 %2257
        %2259 = vrot.lane.b32.xlu0 %v2036, 127
        %v2260 = vpop.permute.xlu0 %2259
        %2261 = vrot.lane.b32.xlu0 %v2037, 127
        %v2262 = vpop.permute.xlu0 %2261
        %v2266 = vadd.f32 %v2030, %v2258
        %v2267 = vadd.f32 %v2031, %v2260
        %v2268 = vadd.f32 %v2032, %v2262
        %2272 = vrot.lane.b32.xlu0 %v2045, 127
        %v2273 = vpop.permute.xlu0 %2272
        %2274 = vrot.lane.b32.xlu0 %v2046, 127
        %v2275 = vpop.permute.xlu0 %2274
        %2276 = vrot.lane.b32.xlu0 %v2047, 127
        %v2277 = vpop.permute.xlu0 %2276
        %v2281 = vadd.f32 %v2040, %v2273
        %v2282 = vadd.f32 %v2041, %v2275
        %v2283 = vadd.f32 %v2042, %v2277
        %v2286 = vrot.slane %v2055, 6
        %v2287 = vrot.slane %v2056, 6
        %v2288 = vsel %vm644, %v2286, %v2287
        %2289 = vrot.lane.b32.xlu0 %v2286, 2
        %v2290 = vpop.permute.xlu0 %2289
        %2291 = vrot.lane.b32.xlu0 %v2288, 2
        %v2292 = vpop.permute.xlu0 %2291
        %2293 = vrot.lane.b32.xlu0 %v2287, 2
        %v2294 = vpop.permute.xlu0 %2293
        %v2298 = vadd.f32 %v2050, %v2290
        %v2299 = vadd.f32 %v2051, %v2292
        %v2300 = vadd.f32 %v2052, %v2294
        %2303 = vrot.lane.b32.xlu0 %v2063, 127
        %v2304 = vpop.permute.xlu0 %2303
        %2305 = vrot.lane.b32.xlu0 %v2064, 127
        %v2306 = vpop.permute.xlu0 %2305
        %v2309 = vadd.f32 %v2059, %v2304
        %v2310 = vadd.f32 %v2060, %v2306
        %2314 = vrot.lane.b32.xlu0 %v2072, 127
        %v2315 = vpop.permute.xlu0 %2314
        %2316 = vrot.lane.b32.xlu0 %v2073, 127
        %v2317 = vpop.permute.xlu0 %2316
        %2318 = vrot.lane.b32.xlu0 %v2074, 127
        %v2319 = vpop.permute.xlu0 %2318
        %v2323 = vadd.f32 %v2067, %v2315
        %v2324 = vadd.f32 %v2068, %v2317
        %v2325 = vadd.f32 %v2069, %v2319
        %v2329 = vrot.slane %v2082, 1
        %v2330 = vrot.slane %v2083, 1
        %v2331 = vsel %vm598, %v2329, %v2330
        %v2332 = vrot.slane %v2084, 1
        %v2333 = vsel %vm598, %v2330, %v2332
        %2334 = vrot.lane.b32.xlu0 %v2331, 2
        %v2335 = vpop.permute.xlu0 %2334
        %2336 = vrot.lane.b32.xlu0 %v2333, 2
        %v2337 = vpop.permute.xlu0 %2336
        %2338 = vrot.lane.b32.xlu0 %v2332, 2
        %v2339 = vpop.permute.xlu0 %2338
        %v2343 = vadd.f32 %v2077, %v2335
        %v2344 = vadd.f32 %v2078, %v2337
        %v2345 = vadd.f32 %v2079, %v2339
        %2349 = vrot.lane.b32.xlu0 %v2092, 127
        %v2350 = vpop.permute.xlu0 %2349
        %2351 = vrot.lane.b32.xlu0 %v2093, 127
        %v2352 = vpop.permute.xlu0 %2351
        %2353 = vrot.lane.b32.xlu0 %v2094, 127
        %v2354 = vpop.permute.xlu0 %2353
        %v2358 = vadd.f32 %v2087, %v2350
        %v2359 = vadd.f32 %v2088, %v2352
        %v2360 = vadd.f32 %v2089, %v2354
        %2363 = vrot.lane.b32.xlu0 %v2119, 126
        %v2364 = vpop.permute.xlu0 %2363
        %2365 = vrot.lane.b32.xlu0 %v2120, 126
        %v2366 = vpop.permute.xlu0 %2365
        %v2369 = vadd.f32 %v2103, %v2364
        %v2370 = vadd.f32 %v2104, %v2366
        %v2374 = vrot.slane %v2148, 1
        %v2375 = vrot.slane %v2149, 1
        %v2376 = vsel %vm598, %v2374, %v2375
        %v2377 = vrot.slane %v2150, 1
        %v2378 = vsel %vm598, %v2375, %v2377
        %2379 = vrot.lane.b32.xlu0 %v2376, 1
        %v2380 = vpop.permute.xlu0 %2379
        %2381 = vrot.lane.b32.xlu0 %v2378, 1
        %v2382 = vpop.permute.xlu0 %2381
        %2383 = vrot.lane.b32.xlu0 %v2377, 1
        %v2384 = vpop.permute.xlu0 %2383
        %v2388 = vadd.f32 %v2133, %v2380
        %v2389 = vadd.f32 %v2134, %v2382
        %v2390 = vadd.f32 %v2135, %v2384
        %v2393 = vrot.slane %v2176, 6
        %v2394 = vrot.slane %v2177, 6
        %v2395 = vsel %vm644, %v2393, %v2394
        %2396 = vrot.lane.b32.xlu0 %v2393, 1
        %v2397 = vpop.permute.xlu0 %2396
        %2398 = vrot.lane.b32.xlu0 %v2395, 1
        %v2399 = vpop.permute.xlu0 %2398
        %2400 = vrot.lane.b32.xlu0 %v2394, 1
        %v2401 = vpop.permute.xlu0 %2400
        %v2405 = vadd.f32 %v2165, %v2397
        %v2406 = vadd.f32 %v2166, %v2399
        %v2407 = vadd.f32 %v2167, %v2401
        %2411 = vrot.lane.b32.xlu0 %v2210, 126
        %v2412 = vpop.permute.xlu0 %2411
        %2413 = vrot.lane.b32.xlu0 %v2211, 126
        %v2414 = vpop.permute.xlu0 %2413
        %2415 = vrot.lane.b32.xlu0 %v2212, 126
        %v2416 = vpop.permute.xlu0 %2415
        %v2420 = vadd.f32 %v2190, %v2412
        %v2421 = vadd.f32 %v2191, %v2414
        %v2422 = vadd.f32 %v2192, %v2416
        %v2425 = vrot.slane %v2236, 6
        %v2426 = vrot.slane %v2237, 6
        %v2427 = vsel %vm644, %v2425, %v2426
        %2428 = vrot.lane.b32.xlu0 %v2425, 1
        %v2429 = vpop.permute.xlu0 %2428
        %2430 = vrot.lane.b32.xlu0 %v2427, 1
        %v2431 = vpop.permute.xlu0 %2430
        %2432 = vrot.lane.b32.xlu0 %v2426, 1
        %v2433 = vpop.permute.xlu0 %2432
        %v2437 = vadd.f32 %v2225, %v2429
        %v2438 = vadd.f32 %v2226, %v2431
        %v2439 = vadd.f32 %v2227, %v2433
        %v2443 = vrot.slane %v2266, 1
        %v2444 = vrot.slane %v2267, 1
        %v2445 = vsel %vm598, %v2443, %v2444
        %v2446 = vrot.slane %v2268, 1
        %v2447 = vsel %vm598, %v2444, %v2446
        %2448 = vrot.lane.b32.xlu0 %v2445, 1
        %v2449 = vpop.permute.xlu0 %2448
        %2450 = vrot.lane.b32.xlu0 %v2447, 1
        %v2451 = vpop.permute.xlu0 %2450
        %v2454 = vadd.f32 %v2252, %v2449
        %v2455 = vadd.f32 %v2253, %v2451
        %2459 = vrot.lane.b32.xlu0 %v2298, 126
        %v2460 = vpop.permute.xlu0 %2459
        %2461 = vrot.lane.b32.xlu0 %v2299, 126
        %v2462 = vpop.permute.xlu0 %2461
        %2463 = vrot.lane.b32.xlu0 %v2300, 126
        %v2464 = vpop.permute.xlu0 %2463
        %v2468 = vadd.f32 %v2281, %v2460
        %v2469 = vadd.f32 %v2282, %v2462
        %v2470 = vadd.f32 %v2283, %v2464
        %v2474 = vrot.slane %v2323, 1
        %v2475 = vrot.slane %v2324, 1
        %v2476 = vsel %vm598, %v2474, %v2475
        %v2477 = vrot.slane %v2325, 1
        %v2478 = vsel %vm598, %v2475, %v2477
        %2479 = vrot.lane.b32.xlu0 %v2476, 1
        %v2480 = vpop.permute.xlu0 %2479
        %2481 = vrot.lane.b32.xlu0 %v2478, 1
        %v2482 = vpop.permute.xlu0 %2481
        %v2485 = vadd.f32 %v2309, %v2480
        %v2486 = vadd.f32 %v2310, %v2482
        %v2490 = vrot.slane %v2358, 1
        %v2491 = vrot.slane %v2359, 1
        %v2492 = vsel %vm598, %v2490, %v2491
        %v2493 = vrot.slane %v2360, 1
        %v2494 = vsel %vm598, %v2491, %v2493
        %2495 = vrot.lane.b32.xlu0 %v2492, 1
        %v2496 = vpop.permute.xlu0 %2495
        %2497 = vrot.lane.b32.xlu0 %v2494, 1
        %v2498 = vpop.permute.xlu0 %2497
        %2499 = vrot.lane.b32.xlu0 %v2493, 1
        %v2500 = vpop.permute.xlu0 %2499
        %v2504 = vadd.f32 %v2343, %v2496
        %v2505 = vadd.f32 %v2344, %v2498
        %v2506 = vadd.f32 %v2345, %v2500
        %v2510 = vrot.slane %v2388, 1
        %v2511 = vrot.slane %v2389, 1
        %v2512 = vsel %vm598, %v2510, %v2511
        %v2513 = vrot.slane %v2390, 1
        %v2514 = vsel %vm598, %v2511, %v2513
        %2515 = vrot.lane.b32.xlu0 %v2512, 127
        %v2516 = vpop.permute.xlu0 %2515
        %2517 = vrot.lane.b32.xlu0 %v2514, 127
        %v2518 = vpop.permute.xlu0 %2517
        %v2521 = vadd.f32 %v2369, %v2516
        %v2522 = vadd.f32 %v2370, %v2518
        %v2526 = vrot.slane %v2420, 7
        %v2527 = vrot.slane %v2421, 7
        %v2528 = vsel %vm238, %v2526, %v2527
        %v2529 = vrot.slane %v2422, 7
        %v2530 = vsel %vm238, %v2527, %v2529
        %2531 = vrot.lane.b32.xlu0 %v2526, 2
        %v2532 = vpop.permute.xlu0 %2531
        %2533 = vrot.lane.b32.xlu0 %v2528, 2
        %v2534 = vpop.permute.xlu0 %2533
        %2535 = vrot.lane.b32.xlu0 %v2530, 2
        %v2536 = vpop.permute.xlu0 %2535
        %v2540 = vadd.f32 %v2405, %v2532
        %v2541 = vadd.f32 %v2406, %v2534
        %v2542 = vadd.f32 %v2407, %v2536
        %v2545 = vrot.slane %v2454, 6
        %v2546 = vrot.slane %v2455, 6
        %v2547 = vsel %vm644, %v2545, %v2546
        %2548 = vrot.lane.b32.xlu0 %v2545, 127
        %v2549 = vpop.permute.xlu0 %2548
        %2550 = vrot.lane.b32.xlu0 %v2547, 127
        %v2551 = vpop.permute.xlu0 %2550
        %2552 = vrot.lane.b32.xlu0 %v2546, 127
        %v2553 = vpop.permute.xlu0 %2552
        %v2557 = vadd.f32 %v2437, %v2549
        %v2558 = vadd.f32 %v2438, %v2551
        %v2559 = vadd.f32 %v2439, %v2553
        %v2562 = vrot.slane %v2485, 6
        %v2563 = vrot.slane %v2486, 6
        %v2564 = vsel %vm644, %v2562, %v2563
        %2565 = vrot.lane.b32.xlu0 %v2562, 127
        %v2566 = vpop.permute.xlu0 %2565
        %2567 = vrot.lane.b32.xlu0 %v2564, 127
        %v2568 = vpop.permute.xlu0 %2567
        %2569 = vrot.lane.b32.xlu0 %v2563, 127
        %v2570 = vpop.permute.xlu0 %2569
        %v2574 = vadd.f32 %v2468, %v2566
        %v2575 = vadd.f32 %v2469, %v2568
        %v2576 = vadd.f32 %v2470, %v2570
        %v2580 = vrot.slane %v2540, 2
        %v2581 = vrot.slane %v2541, 2
        %v2582 = vsel %vm1072, %v2580, %v2581
        %v2583 = vrot.slane %v2542, 2
        %v2584 = vsel %vm1072, %v2581, %v2583
        %2585 = vrot.lane.b32.xlu0 %v2582, 126
        %v2586 = vpop.permute.xlu0 %2585
        %2587 = vrot.lane.b32.xlu0 %v2584, 126
        %v2588 = vpop.permute.xlu0 %2587
        %v2591 = vadd.f32 %v2521, %v2586
        %v2592 = vadd.f32 %v2522, %v2588
        %2596 = vrot.lane.b32.xlu0 %v2574, 1
        %v2597 = vpop.permute.xlu0 %2596
        %2598 = vrot.lane.b32.xlu0 %v2575, 1
        %v2599 = vpop.permute.xlu0 %2598
        %2600 = vrot.lane.b32.xlu0 %v2576, 1
        %v2601 = vpop.permute.xlu0 %2600
        %v2605 = vadd.f32 %v2557, %v2597
        %v2606 = vadd.f32 %v2558, %v2599
        %v2607 = vadd.f32 %v2559, %v2601
        %v2611 = vrot.slane %v2605, 2
        %v2612 = vrot.slane %v2606, 2
        %v2613 = vsel %vm1072, %v2611, %v2612
        %v2614 = vrot.slane %v2607, 2
        %v2615 = vsel %vm1072, %v2612, %v2614
        %2616 = vrot.lane.b32.xlu0 %v2613, 127
        %v2617 = vpop.permute.xlu0 %2616
        %2618 = vrot.lane.b32.xlu0 %v2615, 127
        %v2619 = vpop.permute.xlu0 %2618
        %v2622 = vadd.f32 %v2591, %v2617
        %v2623 = vadd.f32 %v2592, %v2619
        %v2627 = vrot.slane %v2504, 1
        %v2628 = vrot.slane %v2505, 1
        %v2629 = vsel %vm598, %v2627, %v2628
        %v2630 = vrot.slane %v2506, 1
        %v2631 = vsel %vm598, %v2628, %v2630
        %2632 = vrot.lane.b32.xlu0 %v2629, 126
        %v2633 = vpop.permute.xlu0 %2632
        %2634 = vrot.lane.b32.xlu0 %v2631, 126
        %v2635 = vpop.permute.xlu0 %2634
        %v2638 = vadd.f32 %v2622, %v2633
        %v2639 = vadd.f32 %v2623, %v2635
        %v2640 = vsel %vm1133, %v2638, 0.0
        %v2641 = vsel %vm1133, %v2639, 0.0
        %v2642 = vadd.f32 %v2640, %v2641
        %2643 = vadd.xlane.f32.xlu0 %v2642
        %v2644 = vpop.xlane.xlu0 %2643
        %v2645 = vrot.slane %v2644, 4
        %v2646 = vadd.f32 %v2644, %v2645
        %v2647 = vrot.slane %v2646, 2
        %v2648 = vadd.f32 %v2646, %v2647
        %v2649 = vrot.slane %v2648, 1
        %v2650 = vadd.f32 %v2648, %v2649
        %s2651 = vtos %v2650
        %v2652 = vstv %s2651
        %v2653 = vmul.f32 %v2652, 0.00390625
        %v2654 = vmul.f32 %v2638, %v2638
        %v2655 = vmul.f32 %v2639, %v2639
        %v2656 = vsel %vm1133, %v2654, 0.0
        %v2657 = vsel %vm1133, %v2655, 0.0
        %v2658 = vadd.f32 %v2656, %v2657
        %2659 = vadd.xlane.f32.xlu0 %v2658
        %v2660 = vpop.xlane.xlu0 %2659
        %v2661 = vrot.slane %v2660, 4
        %v2662 = vadd.f32 %v2660, %v2661
        %v2663 = vrot.slane %v2662, 2
        %v2664 = vadd.f32 %v2662, %v2663
        %v2665 = vrot.slane %v2664, 1
        %v2666 = vadd.f32 %v2664, %v2665
        %s2667 = vtos %v2666
        %v2668 = vstv %s2667
        %v2669 = vmul.f32 %v2668, 0.00390625
        %v2670 = vmul.f32 %v2653, %v2653
        %v2671 = vsub.f32 %v2669, %v2670
        %v2672 = vsub.f32 %v2638, %v2653
        %v2673 = vsub.f32 %v2639, %v2653
        %v2674 = vadd.f32 %v2671, 1e-05
        %v2675 = vrsqrt.pop %v2674
        %v2676 = vmul.f32 %v2672, %v2675
        %v2677 = vmul.f32 %v2673, %v2675
        %v2678 = vmax.f32 %v2676, 0.0
        %v2679 = vmax.f32 %v2677, 0.0
        %s2680 = sld [smem:[#allocation7 + $0x6c]]
        %v2681 = vstv %s2680
        %v2682 = vmul.f32 %v2681, %v405
        %v2683 = vmul.f32 %v2681, %v406
        %s2684 = sld [smem:[#allocation7 + $0x6d]]
        %v2685 = vstv %s2684
        %v2686 = vmul.f32 %v2685, %v405
        %v2687 = vmul.f32 %v2685, %v406
        %s2688 = sld [smem:[#allocation7 + $0x6e]]
        %v2689 = vstv %s2688
        %v2690 = vmul.f32 %v2689, %v405
        %v2691 = vmul.f32 %v2689, %v406
        %s2692 = sld [smem:[#allocation7 + $0x6f]]
        %v2693 = vstv %s2692
        %v2694 = vmul.f32 %v2693, %v405
        %v2695 = vmul.f32 %v2693, %v406
        %v2696 = vmul.f32 %v2693, %v407
        %s2697 = sld [smem:[#allocation7 + $0x70]]
        %v2698 = vstv %s2697
        %v2699 = vmul.f32 %v2698, %v405
        %v2700 = vmul.f32 %v2698, %v406
        %v2701 = vmul.f32 %v2698, %v407
        %s2702 = sld [smem:[#allocation7 + $0x71]]
        %v2703 = vstv %s2702
        %v2704 = vmul.f32 %v2703, %v405
        %v2705 = vmul.f32 %v2703, %v406
        %v2706 = vmul.f32 %v2703, %v407
        %s2707 = sld [smem:[#allocation7 + $0x72]]
        %v2708 = vstv %s2707
        %v2709 = vmul.f32 %v2708, %v405
        %v2710 = vmul.f32 %v2708, %v406
        %v2711 = vmul.f32 %v2708, %v407
        %s2712 = sld [smem:[#allocation7 + $0x73]]
        %v2713 = vstv %s2712
        %v2714 = vmul.f32 %v2713, %v405
        %v2715 = vmul.f32 %v2713, %v406
        %v2716 = vmul.f32 %v2713, %v407
        %s2717 = sld [smem:[#allocation7 + $0x74]]
        %v2718 = vstv %s2717
        %v2719 = vmul.f32 %v2718, %v405
        %v2720 = vmul.f32 %v2718, %v406
        %v2721 = vmul.f32 %v2718, %v407
        %s2722 = sld [smem:[#allocation7 + $0x75]]
        %v2723 = vstv %s2722
        %v2724 = vmul.f32 %v2723, %v408
        %v2725 = vmul.f32 %v2723, %v409
        %s2726 = sld [smem:[#allocation7 + $0x76]]
        %v2727 = vstv %s2726
        %v2728 = vmul.f32 %v2727, %v408
        %v2729 = vmul.f32 %v2727, %v409
        %s2730 = sld [smem:[#allocation7 + $0x77]]
        %v2731 = vstv %s2730
        %v2732 = vmul.f32 %v2731, %v408
        %v2733 = vmul.f32 %v2731, %v409
        %s2734 = sld [smem:[#allocation7 + $0x78]]
        %v2735 = vstv %s2734
        %v2736 = vmul.f32 %v2735, %v408
        %v2737 = vmul.f32 %v2735, %v409
        %v2738 = vmul.f32 %v2735, %v410
        %s2739 = sld [smem:[#allocation7 + $0x79]]
        %v2740 = vstv %s2739
        %v2741 = vmul.f32 %v2740, %v408
        %v2742 = vmul.f32 %v2740, %v409
        %v2743 = vmul.f32 %v2740, %v410
        %s2744 = sld [smem:[#allocation7 + $0x7a]]
        %v2745 = vstv %s2744
        %v2746 = vmul.f32 %v2745, %v408
        %v2747 = vmul.f32 %v2745, %v409
        %v2748 = vmul.f32 %v2745, %v410
        %s2749 = sld [smem:[#allocation7 + $0x7b]]
        %v2750 = vstv %s2749
        %v2751 = vmul.f32 %v2750, %v408
        %v2752 = vmul.f32 %v2750, %v409
        %v2753 = vmul.f32 %v2750, %v410
        %s2754 = sld [smem:[#allocation7 + $0x7c]]
        %v2755 = vstv %s2754
        %v2756 = vmul.f32 %v2755, %v408
        %v2757 = vmul.f32 %v2755, %v409
        %v2758 = vmul.f32 %v2755, %v410
        %s2759 = sld [smem:[#allocation7 + $0x7d]]
        %v2760 = vstv %s2759
        %v2761 = vmul.f32 %v2760, %v408
        %v2762 = vmul.f32 %v2760, %v409
        %v2763 = vmul.f32 %v2760, %v410
        %s2764 = sld [smem:[#allocation7 + $0x7e]]
        %v2765 = vstv %s2764
        %v2766 = vmul.f32 %v2765, %v411
        %v2767 = vmul.f32 %v2765, %v412
        %s2768 = sld [smem:[#allocation7 + $0x7f]]
        %v2769 = vstv %s2768
        %v2770 = vmul.f32 %v2769, %v411
        %v2771 = vmul.f32 %v2769, %v412
        %s2772 = sld [smem:[#allocation7 + $0x80]]
        %v2773 = vstv %s2772
        %v2774 = vmul.f32 %v2773, %v411
        %v2775 = vmul.f32 %v2773, %v412
        %s2776 = sld [smem:[#allocation7 + $0x81]]
        %v2777 = vstv %s2776
        %v2778 = vmul.f32 %v2777, %v411
        %v2779 = vmul.f32 %v2777, %v412
        %v2780 = vmul.f32 %v2777, %v413
        %s2781 = sld [smem:[#allocation7 + $0x82]]
        %v2782 = vstv %s2781
        %v2783 = vmul.f32 %v2782, %v411
        %v2784 = vmul.f32 %v2782, %v412
        %v2785 = vmul.f32 %v2782, %v413
        %s2786 = sld [smem:[#allocation7 + $0x83]]
        %v2787 = vstv %s2786
        %v2788 = vmul.f32 %v2787, %v411
        %v2789 = vmul.f32 %v2787, %v412
        %v2790 = vmul.f32 %v2787, %v413
        %s2791 = sld [smem:[#allocation7 + $0x84]]
        %v2792 = vstv %s2791
        %v2793 = vmul.f32 %v2792, %v411
        %v2794 = vmul.f32 %v2792, %v412
        %v2795 = vmul.f32 %v2792, %v413
        %s2796 = sld [smem:[#allocation7 + $0x85]]
        %v2797 = vstv %s2796
        %v2798 = vmul.f32 %v2797, %v411
        %v2799 = vmul.f32 %v2797, %v412
        %v2800 = vmul.f32 %v2797, %v413
        %s2801 = sld [smem:[#allocation7 + $0x86]]
        %v2802 = vstv %s2801
        %v2803 = vmul.f32 %v2802, %v411
        %v2804 = vmul.f32 %v2802, %v412
        %v2805 = vmul.f32 %v2802, %v413
        %s2806 = sld [smem:[#allocation7 + $0x87]]
        %v2807 = vstv %s2806
        %v2808 = vmul.f32 %v2807, %v414
        %v2809 = vmul.f32 %v2807, %v415
        %s2810 = sld [smem:[#allocation7 + $0x88]]
        %v2811 = vstv %s2810
        %v2812 = vmul.f32 %v2811, %v414
        %v2813 = vmul.f32 %v2811, %v415
        %s2814 = sld [smem:[#allocation7 + $0x89]]
        %v2815 = vstv %s2814
        %v2816 = vmul.f32 %v2815, %v414
        %v2817 = vmul.f32 %v2815, %v415
        %s2818 = sld [smem:[#allocation7 + $0x8a]]
        %v2819 = vstv %s2818
        %v2820 = vmul.f32 %v2819, %v414
        %v2821 = vmul.f32 %v2819, %v415
        %v2822 = vmul.f32 %v2819, %v416
        %s2823 = sld [smem:[#allocation7 + $0x8b]]
        %v2824 = vstv %s2823
        %v2825 = vmul.f32 %v2824, %v414
        %v2826 = vmul.f32 %v2824, %v415
        %v2827 = vmul.f32 %v2824, %v416
        %s2828 = sld [smem:[#allocation7 + $0x8c]]
        %v2829 = vstv %s2828
        %v2830 = vmul.f32 %v2829, %v414
        %v2831 = vmul.f32 %v2829, %v415
        %v2832 = vmul.f32 %v2829, %v416
        %s2833 = sld [smem:[#allocation7 + $0x8d]]
        %v2834 = vstv %s2833
        %v2835 = vmul.f32 %v2834, %v414
        %v2836 = vmul.f32 %v2834, %v415
        %v2837 = vmul.f32 %v2834, %v416
        %s2838 = sld [smem:[#allocation7 + $0x8e]]
        %v2839 = vstv %s2838
        %v2840 = vmul.f32 %v2839, %v414
        %v2841 = vmul.f32 %v2839, %v415
        %v2842 = vmul.f32 %v2839, %v416
        %s2843 = sld [smem:[#allocation7 + $0x8f]]
        %v2844 = vstv %s2843
        %v2845 = vmul.f32 %v2844, %v414
        %v2846 = vmul.f32 %v2844, %v415
        %v2847 = vmul.f32 %v2844, %v416
        %2850 = vrot.lane.b32.xlu0 %v2686, 127
        %v2851 = vpop.permute.xlu0 %2850
        %2852 = vrot.lane.b32.xlu0 %v2687, 127
        %v2853 = vpop.permute.xlu0 %2852
        %v2856 = vadd.f32 %v2682, %v2851
        %v2857 = vadd.f32 %v2683, %v2853
        %v2861 = vrot.slane %v2694, 1
        %v2862 = vrot.slane %v2695, 1
        %v2863 = vsel %vm598, %v2861, %v2862
        %v2864 = vrot.slane %v2696, 1
        %v2865 = vsel %vm598, %v2862, %v2864
        %2866 = vrot.lane.b32.xlu0 %v2863, 2
        %v2867 = vpop.permute.xlu0 %2866
        %2868 = vrot.lane.b32.xlu0 %v2865, 2
        %v2869 = vpop.permute.xlu0 %2868
        %v2872 = vadd.f32 %v2690, %v2867
        %v2873 = vadd.f32 %v2691, %v2869
        %2877 = vrot.lane.b32.xlu0 %v2704, 127
        %v2878 = vpop.permute.xlu0 %2877
        %2879 = vrot.lane.b32.xlu0 %v2705, 127
        %v2880 = vpop.permute.xlu0 %2879
        %2881 = vrot.lane.b32.xlu0 %v2706, 127
        %v2882 = vpop.permute.xlu0 %2881
        %v2886 = vadd.f32 %v2699, %v2878
        %v2887 = vadd.f32 %v2700, %v2880
        %v2888 = vadd.f32 %v2701, %v2882
        %2892 = vrot.lane.b32.xlu0 %v2714, 127
        %v2893 = vpop.permute.xlu0 %2892
        %2894 = vrot.lane.b32.xlu0 %v2715, 127
        %v2895 = vpop.permute.xlu0 %2894
        %2896 = vrot.lane.b32.xlu0 %v2716, 127
        %v2897 = vpop.permute.xlu0 %2896
        %v2901 = vadd.f32 %v2709, %v2893
        %v2902 = vadd.f32 %v2710, %v2895
        %v2903 = vadd.f32 %v2711, %v2897
        %v2906 = vrot.slane %v2724, 6
        %v2907 = vrot.slane %v2725, 6
        %v2908 = vsel %vm644, %v2906, %v2907
        %2909 = vrot.lane.b32.xlu0 %v2906, 2
        %v2910 = vpop.permute.xlu0 %2909
        %2911 = vrot.lane.b32.xlu0 %v2908, 2
        %v2912 = vpop.permute.xlu0 %2911
        %2913 = vrot.lane.b32.xlu0 %v2907, 2
        %v2914 = vpop.permute.xlu0 %2913
        %v2918 = vadd.f32 %v2719, %v2910
        %v2919 = vadd.f32 %v2720, %v2912
        %v2920 = vadd.f32 %v2721, %v2914
        %2923 = vrot.lane.b32.xlu0 %v2732, 127
        %v2924 = vpop.permute.xlu0 %2923
        %2925 = vrot.lane.b32.xlu0 %v2733, 127
        %v2926 = vpop.permute.xlu0 %2925
        %v2929 = vadd.f32 %v2728, %v2924
        %v2930 = vadd.f32 %v2729, %v2926
        %2934 = vrot.lane.b32.xlu0 %v2741, 127
        %v2935 = vpop.permute.xlu0 %2934
        %2936 = vrot.lane.b32.xlu0 %v2742, 127
        %v2937 = vpop.permute.xlu0 %2936
        %2938 = vrot.lane.b32.xlu0 %v2743, 127
        %v2939 = vpop.permute.xlu0 %2938
        %v2943 = vadd.f32 %v2736, %v2935
        %v2944 = vadd.f32 %v2737, %v2937
        %v2945 = vadd.f32 %v2738, %v2939
        %v2949 = vrot.slane %v2751, 1
        %v2950 = vrot.slane %v2752, 1
        %v2951 = vsel %vm598, %v2949, %v2950
        %v2952 = vrot.slane %v2753, 1
        %v2953 = vsel %vm598, %v2950, %v2952
        %2954 = vrot.lane.b32.xlu0 %v2951, 2
        %v2955 = vpop.permute.xlu0 %2954
        %2956 = vrot.lane.b32.xlu0 %v2953, 2
        %v2957 = vpop.permute.xlu0 %2956
        %2958 = vrot.lane.b32.xlu0 %v2952, 2
        %v2959 = vpop.permute.xlu0 %2958
        %v2963 = vadd.f32 %v2746, %v2955
        %v2964 = vadd.f32 %v2747, %v2957
        %v2965 = vadd.f32 %v2748, %v2959
        %2969 = vrot.lane.b32.xlu0 %v2761, 127
        %v2970 = vpop.permute.xlu0 %2969
        %2971 = vrot.lane.b32.xlu0 %v2762, 127
        %v2972 = vpop.permute.xlu0 %2971
        %2973 = vrot.lane.b32.xlu0 %v2763, 127
        %v2974 = vpop.permute.xlu0 %2973
        %v2978 = vadd.f32 %v2756, %v2970
        %v2979 = vadd.f32 %v2757, %v2972
        %v2980 = vadd.f32 %v2758, %v2974
        %2983 = vrot.lane.b32.xlu0 %v2770, 127
        %v2984 = vpop.permute.xlu0 %2983
        %2985 = vrot.lane.b32.xlu0 %v2771, 127
        %v2986 = vpop.permute.xlu0 %2985
        %v2989 = vadd.f32 %v2766, %v2984
        %v2990 = vadd.f32 %v2767, %v2986
        %v2994 = vrot.slane %v2778, 1
        %v2995 = vrot.slane %v2779, 1
        %v2996 = vsel %vm598, %v2994, %v2995
        %v2997 = vrot.slane %v2780, 1
        %v2998 = vsel %vm598, %v2995, %v2997
        %2999 = vrot.lane.b32.xlu0 %v2996, 2
        %v3000 = vpop.permute.xlu0 %2999
        %3001 = vrot.lane.b32.xlu0 %v2998, 2
        %v3002 = vpop.permute.xlu0 %3001
        %v3005 = vadd.f32 %v2774, %v3000
        %v3006 = vadd.f32 %v2775, %v3002
        %3010 = vrot.lane.b32.xlu0 %v2788, 127
        %v3011 = vpop.permute.xlu0 %3010
        %3012 = vrot.lane.b32.xlu0 %v2789, 127
        %v3013 = vpop.permute.xlu0 %3012
        %3014 = vrot.lane.b32.xlu0 %v2790, 127
        %v3015 = vpop.permute.xlu0 %3014
        %v3019 = vadd.f32 %v2783, %v3011
        %v3020 = vadd.f32 %v2784, %v3013
        %v3021 = vadd.f32 %v2785, %v3015
        %3025 = vrot.lane.b32.xlu0 %v2798, 127
        %v3026 = vpop.permute.xlu0 %3025
        %3027 = vrot.lane.b32.xlu0 %v2799, 127
        %v3028 = vpop.permute.xlu0 %3027
        %3029 = vrot.lane.b32.xlu0 %v2800, 127
        %v3030 = vpop.permute.xlu0 %3029
        %v3034 = vadd.f32 %v2793, %v3026
        %v3035 = vadd.f32 %v2794, %v3028
        %v3036 = vadd.f32 %v2795, %v3030
        %v3039 = vrot.slane %v2808, 6
        %v3040 = vrot.slane %v2809, 6
        %v3041 = vsel %vm644, %v3039, %v3040
        %3042 = vrot.lane.b32.xlu0 %v3039, 2
        %v3043 = vpop.permute.xlu0 %3042
        %3044 = vrot.lane.b32.xlu0 %v3041, 2
        %v3045 = vpop.permute.xlu0 %3044
        %3046 = vrot.lane.b32.xlu0 %v3040, 2
        %v3047 = vpop.permute.xlu0 %3046
        %v3051 = vadd.f32 %v2803, %v3043
        %v3052 = vadd.f32 %v2804, %v3045
        %v3053 = vadd.f32 %v2805, %v3047
        %3056 = vrot.lane.b32.xlu0 %v2816, 127
        %v3057 = vpop.permute.xlu0 %3056
        %3058 = vrot.lane.b32.xlu0 %v2817, 127
        %v3059 = vpop.permute.xlu0 %3058
        %v3062 = vadd.f32 %v2812, %v3057
        %v3063 = vadd.f32 %v2813, %v3059
        %3067 = vrot.lane.b32.xlu0 %v2825, 127
        %v3068 = vpop.permute.xlu0 %3067
        %3069 = vrot.lane.b32.xlu0 %v2826, 127
        %v3070 = vpop.permute.xlu0 %3069
        %3071 = vrot.lane.b32.xlu0 %v2827, 127
        %v3072 = vpop.permute.xlu0 %3071
        %v3076 = vadd.f32 %v2820, %v3068
        %v3077 = vadd.f32 %v2821, %v3070
        %v3078 = vadd.f32 %v2822, %v3072
        %v3082 = vrot.slane %v2835, 1
        %v3083 = vrot.slane %v2836, 1
        %v3084 = vsel %vm598, %v3082, %v3083
        %v3085 = vrot.slane %v2837, 1
        %v3086 = vsel %vm598, %v3083, %v3085
        %3087 = vrot.lane.b32.xlu0 %v3084, 2
        %v3088 = vpop.permute.xlu0 %3087
        %3089 = vrot.lane.b32.xlu0 %v3086, 2
        %v3090 = vpop.permute.xlu0 %3089
        %3091 = vrot.lane.b32.xlu0 %v3085, 2
        %v3092 = vpop.permute.xlu0 %3091
        %v3096 = vadd.f32 %v2830, %v3088
        %v3097 = vadd.f32 %v2831, %v3090
        %v3098 = vadd.f32 %v2832, %v3092
        %3102 = vrot.lane.b32.xlu0 %v2845, 127
        %v3103 = vpop.permute.xlu0 %3102
        %3104 = vrot.lane.b32.xlu0 %v2846, 127
        %v3105 = vpop.permute.xlu0 %3104
        %3106 = vrot.lane.b32.xlu0 %v2847, 127
        %v3107 = vpop.permute.xlu0 %3106
        %v3111 = vadd.f32 %v2840, %v3103
        %v3112 = vadd.f32 %v2841, %v3105
        %v3113 = vadd.f32 %v2842, %v3107
        %3116 = vrot.lane.b32.xlu0 %v2872, 126
        %v3117 = vpop.permute.xlu0 %3116
        %3118 = vrot.lane.b32.xlu0 %v2873, 126
        %v3119 = vpop.permute.xlu0 %3118
        %v3122 = vadd.f32 %v2856, %v3117
        %v3123 = vadd.f32 %v2857, %v3119
        %v3127 = vrot.slane %v2901, 1
        %v3128 = vrot.slane %v2902, 1
        %v3129 = vsel %vm598, %v3127, %v3128
        %v3130 = vrot.slane %v2903, 1
        %v3131 = vsel %vm598, %v3128, %v3130
        %3132 = vrot.lane.b32.xlu0 %v3129, 1
        %v3133 = vpop.permute.xlu0 %3132
        %3134 = vrot.lane.b32.xlu0 %v3131, 1
        %v3135 = vpop.permute.xlu0 %3134
        %3136 = vrot.lane.b32.xlu0 %v3130, 1
        %v3137 = vpop.permute.xlu0 %3136
        %v3141 = vadd.f32 %v2886, %v3133
        %v3142 = vadd.f32 %v2887, %v3135
        %v3143 = vadd.f32 %v2888, %v3137
        %v3146 = vrot.slane %v2929, 6
        %v3147 = vrot.slane %v2930, 6
        %v3148 = vsel %vm644, %v3146, %v3147
        %3149 = vrot.lane.b32.xlu0 %v3146, 1
        %v3150 = vpop.permute.xlu0 %3149
        %3151 = vrot.lane.b32.xlu0 %v3148, 1
        %v3152 = vpop.permute.xlu0 %3151
        %3153 = vrot.lane.b32.xlu0 %v3147, 1
        %v3154 = vpop.permute.xlu0 %3153
        %v3158 = vadd.f32 %v2918, %v3150
        %v3159 = vadd.f32 %v2919, %v3152
        %v3160 = vadd.f32 %v2920, %v3154
        %3164 = vrot.lane.b32.xlu0 %v2963, 126
        %v3165 = vpop.permute.xlu0 %3164
        %3166 = vrot.lane.b32.xlu0 %v2964, 126
        %v3167 = vpop.permute.xlu0 %3166
        %3168 = vrot.lane.b32.xlu0 %v2965, 126
        %v3169 = vpop.permute.xlu0 %3168
        %v3173 = vadd.f32 %v2943, %v3165
        %v3174 = vadd.f32 %v2944, %v3167
        %v3175 = vadd.f32 %v2945, %v3169
        %v3178 = vrot.slane %v2989, 6
        %v3179 = vrot.slane %v2990, 6
        %v3180 = vsel %vm644, %v3178, %v3179
        %3181 = vrot.lane.b32.xlu0 %v3178, 1
        %v3182 = vpop.permute.xlu0 %3181
        %3183 = vrot.lane.b32.xlu0 %v3180, 1
        %v3184 = vpop.permute.xlu0 %3183
        %3185 = vrot.lane.b32.xlu0 %v3179, 1
        %v3186 = vpop.permute.xlu0 %3185
        %v3190 = vadd.f32 %v2978, %v3182
        %v3191 = vadd.f32 %v2979, %v3184
        %v3192 = vadd.f32 %v2980, %v3186
        %v3196 = vrot.slane %v3019, 1
        %v3197 = vrot.slane %v3020, 1
        %v3198 = vsel %vm598, %v3196, %v3197
        %v3199 = vrot.slane %v3021, 1
        %v3200 = vsel %vm598, %v3197, %v3199
        %3201 = vrot.lane.b32.xlu0 %v3198, 1
        %v3202 = vpop.permute.xlu0 %3201
        %3203 = vrot.lane.b32.xlu0 %v3200, 1
        %v3204 = vpop.permute.xlu0 %3203
        %v3207 = vadd.f32 %v3005, %v3202
        %v3208 = vadd.f32 %v3006, %v3204
        %3212 = vrot.lane.b32.xlu0 %v3051, 126
        %v3213 = vpop.permute.xlu0 %3212
        %3214 = vrot.lane.b32.xlu0 %v3052, 126
        %v3215 = vpop.permute.xlu0 %3214
        %3216 = vrot.lane.b32.xlu0 %v3053, 126
        %v3217 = vpop.permute.xlu0 %3216
        %v3221 = vadd.f32 %v3034, %v3213
        %v3222 = vadd.f32 %v3035, %v3215
        %v3223 = vadd.f32 %v3036, %v3217
        %v3227 = vrot.slane %v3076, 1
        %v3228 = vrot.slane %v3077, 1
        %v3229 = vsel %vm598, %v3227, %v3228
        %v3230 = vrot.slane %v3078, 1
        %v3231 = vsel %vm598, %v3228, %v3230
        %3232 = vrot.lane.b32.xlu0 %v3229, 1
        %v3233 = vpop.permute.xlu0 %3232
        %3234 = vrot.lane.b32.xlu0 %v3231, 1
        %v3235 = vpop.permute.xlu0 %3234
        %v3238 = vadd.f32 %v3062, %v3233
        %v3239 = vadd.f32 %v3063, %v3235
        %v3243 = vrot.slane %v3111, 1
        %v3244 = vrot.slane %v3112, 1
        %v3245 = vsel %vm598, %v3243, %v3244
        %v3246 = vrot.slane %v3113, 1
        %v3247 = vsel %vm598, %v3244, %v3246
        %3248 = vrot.lane.b32.xlu0 %v3245, 1
        %v3249 = vpop.permute.xlu0 %3248
        %3250 = vrot.lane.b32.xlu0 %v3247, 1
        %v3251 = vpop.permute.xlu0 %3250
        %3252 = vrot.lane.b32.xlu0 %v3246, 1
        %v3253 = vpop.permute.xlu0 %3252
        %v3257 = vadd.f32 %v3096, %v3249
        %v3258 = vadd.f32 %v3097, %v3251
        %v3259 = vadd.f32 %v3098, %v3253
        %v3263 = vrot.slane %v3141, 1
        %v3264 = vrot.slane %v3142, 1
        %v3265 = vsel %vm598, %v3263, %v3264
        %v3266 = vrot.slane %v3143, 1
        %v3267 = vsel %vm598, %v3264, %v3266
        %3268 = vrot.lane.b32.xlu0 %v3265, 127
        %v3269 = vpop.permute.xlu0 %3268
        %3270 = vrot.lane.b32.xlu0 %v3267, 127
        %v3271 = vpop.permute.xlu0 %3270
        %v3274 = vadd.f32 %v3122, %v3269
        %v3275 = vadd.f32 %v3123, %v3271
        %v3279 = vrot.slane %v3173, 7
        %v3280 = vrot.slane %v3174, 7
        %v3281 = vsel %vm238, %v3279, %v3280
        %v3282 = vrot.slane %v3175, 7
        %v3283 = vsel %vm238, %v3280, %v3282
        %3284 = vrot.lane.b32.xlu0 %v3279, 2
        %v3285 = vpop.permute.xlu0 %3284
        %3286 = vrot.lane.b32.xlu0 %v3281, 2
        %v3287 = vpop.permute.xlu0 %3286
        %3288 = vrot.lane.b32.xlu0 %v3283, 2
        %v3289 = vpop.permute.xlu0 %3288
        %v3293 = vadd.f32 %v3158, %v3285
        %v3294 = vadd.f32 %v3159, %v3287
        %v3295 = vadd.f32 %v3160, %v3289
        %v3298 = vrot.slane %v3207, 6
        %v3299 = vrot.slane %v3208, 6
        %v3300 = vsel %vm644, %v3298, %v3299
        %3301 = vrot.lane.b32.xlu0 %v3298, 127
        %v3302 = vpop.permute.xlu0 %3301
        %3303 = vrot.lane.b32.xlu0 %v3300, 127
        %v3304 = vpop.permute.xlu0 %3303
        %3305 = vrot.lane.b32.xlu0 %v3299, 127
        %v3306 = vpop.permute.xlu0 %3305
        %v3310 = vadd.f32 %v3190, %v3302
        %v3311 = vadd.f32 %v3191, %v3304
        %v3312 = vadd.f32 %v3192, %v3306
        %v3315 = vrot.slane %v3238, 6
        %v3316 = vrot.slane %v3239, 6
        %v3317 = vsel %vm644, %v3315, %v3316
        %3318 = vrot.lane.b32.xlu0 %v3315, 127
        %v3319 = vpop.permute.xlu0 %3318
        %3320 = vrot.lane.b32.xlu0 %v3317, 127
        %v3321 = vpop.permute.xlu0 %3320
        %3322 = vrot.lane.b32.xlu0 %v3316, 127
        %v3323 = vpop.permute.xlu0 %3322
        %v3327 = vadd.f32 %v3221, %v3319
        %v3328 = vadd.f32 %v3222, %v3321
        %v3329 = vadd.f32 %v3223, %v3323
        %v3333 = vrot.slane %v3293, 2
        %v3334 = vrot.slane %v3294, 2
        %v3335 = vsel %vm1072, %v3333, %v3334
        %v3336 = vrot.slane %v3295, 2
        %v3337 = vsel %vm1072, %v3334, %v3336
        %3338 = vrot.lane.b32.xlu0 %v3335, 126
        %v3339 = vpop.permute.xlu0 %3338
        %3340 = vrot.lane.b32.xlu0 %v3337, 126
        %v3341 = vpop.permute.xlu0 %3340
        %v3344 = vadd.f32 %v3274, %v3339
        %v3345 = vadd.f32 %v3275, %v3341
        %3349 = vrot.lane.b32.xlu0 %v3327, 1
        %v3350 = vpop.permute.xlu0 %3349
        %3351 = vrot.lane.b32.xlu0 %v3328, 1
        %v3352 = vpop.permute.xlu0 %3351
        %3353 = vrot.lane.b32.xlu0 %v3329, 1
        %v3354 = vpop.permute.xlu0 %3353
        %v3358 = vadd.f32 %v3310, %v3350
        %v3359 = vadd.f32 %v3311, %v3352
        %v3360 = vadd.f32 %v3312, %v3354
        %v3364 = vrot.slane %v3358, 2
        %v3365 = vrot.slane %v3359, 2
        %v3366 = vsel %vm1072, %v3364, %v3365
        %v3367 = vrot.slane %v3360, 2
        %v3368 = vsel %vm1072, %v3365, %v3367
        %3369 = vrot.lane.b32.xlu0 %v3366, 127
        %v3370 = vpop.permute.xlu0 %3369
        %3371 = vrot.lane.b32.xlu0 %v3368, 127
        %v3372 = vpop.permute.xlu0 %3371
        %v3375 = vadd.f32 %v3344, %v3370
        %v3376 = vadd.f32 %v3345, %v3372
        %v3380 = vrot.slane %v3257, 1
        %v3381 = vrot.slane %v3258, 1
        %v3382 = vsel %vm598, %v3380, %v3381
        %v3383 = vrot.slane %v3259, 1
        %v3384 = vsel %vm598, %v3381, %v3383
        %3385 = vrot.lane.b32.xlu0 %v3382, 126
        %v3386 = vpop.permute.xlu0 %3385
        %3387 = vrot.lane.b32.xlu0 %v3384, 126
        %v3388 = vpop.permute.xlu0 %3387
        %v3391 = vadd.f32 %v3375, %v3386
        %v3392 = vadd.f32 %v3376, %v3388
        %v3393 = vsel %vm1133, %v3391, 0.0
        %v3394 = vsel %vm1133, %v3392, 0.0
        %v3395 = vadd.f32 %v3393, %v3394
        %3396 = vadd.xlane.f32.xlu0 %v3395
        %v3397 = vpop.xlane.xlu0 %3396
        %v3398 = vrot.slane %v3397, 4
        %v3399 = vadd.f32 %v3397, %v3398
        %v3400 = vrot.slane %v3399, 2
        %v3401 = vadd.f32 %v3399, %v3400
        %v3402 = vrot.slane %v3401, 1
        %v3403 = vadd.f32 %v3401, %v3402
        %s3404 = vtos %v3403
        %v3405 = vstv %s3404
        %v3406 = vmul.f32 %v3405, 0.00390625
        %v3407 = vmul.f32 %v3391, %v3391
        %v3408 = vmul.f32 %v3392, %v3392
        %v3409 = vsel %vm1133, %v3407, 0.0
        %v3410 = vsel %vm1133, %v3408, 0.0
        %v3411 = vadd.f32 %v3409, %v3410
        %3412 = vadd.xlane.f32.xlu0 %v3411
        %v3413 = vpop.xlane.xlu0 %3412
        %v3414 = vrot.slane %v3413, 4
        %v3415 = vadd.f32 %v3413, %v3414
        %v3416 = vrot.slane %v3415, 2
        %v3417 = vadd.f32 %v3415, %v3416
        %v3418 = vrot.slane %v3417, 1
        %v3419 = vadd.f32 %v3417, %v3418
        %s3420 = vtos %v3419
        %v3421 = vstv %s3420
        %v3422 = vmul.f32 %v3421, 0.00390625
        %v3423 = vmul.f32 %v3406, %v3406
        %v3424 = vsub.f32 %v3422, %v3423
        %v3425 = vsub.f32 %v3391, %v3406
        %v3426 = vsub.f32 %v3392, %v3406
        %v3427 = vadd.f32 %v3424, 1e-05
        %v3428 = vrsqrt.pop %v3427
        %v3429 = vmul.f32 %v3425, %v3428
        %v3430 = vmul.f32 %v3426, %v3428
        %v3431 = vmax.f32 %v3429, 0.0
        %v3432 = vmax.f32 %v3430, 0.0
        %v3437 = vrot.slane %v1172, 1
        %v3438 = vrot.slane %v1925, 1
        %v3439 = vrot.slane %v2678, 1
        %v3440 = vrot.slane %v3431, 1
        %v3449 = vrot.slane %v1172, 7
        %v3450 = vrot.slane %v1173, 7
        %v3451 = vsel %vm238, %v3449, %v3450
        %v3452 = vrot.slane %v1925, 7
        %v3453 = vrot.slane %v1926, 7
        %v3454 = vsel %vm238, %v3452, %v3453
        %v3455 = vrot.slane %v2678, 7
        %v3456 = vrot.slane %v2679, 7
        %v3457 = vsel %vm238, %v3455, %v3456
        %v3458 = vrot.slane %v3431, 7
        %v3459 = vrot.slane %v3432, 7
        %v3460 = vsel %vm238, %v3458, %v3459
        %v3469 = vrot.slane %v1173, 5
        %v3470 = vrot.slane %v1926, 5
        %v3471 = vrot.slane %v2679, 5
        %v3472 = vrot.slane %v3432, 5
        %v3477 = vsel %vm238, %v3437, %v3449
        %v3478 = vsel %vm238, %v3438, %v3452
        %v3479 = vsel %vm238, %v3439, %v3455
        %v3480 = vsel %vm238, %v3440, %v3458
        %v3481 = vsel %vm238, %v3450, %v3469
        %v3482 = vsel %vm238, %v3453, %v3470
        %v3483 = vsel %vm238, %v3456, %v3471
        %v3484 = vsel %vm238, %v3459, %v3472
        %3493 = vrot.lane.b32.xlu0 %v3477, 127
        %v3494 = vpop.permute.xlu0 %3493
        %3495 = vrot.lane.b32.xlu0 %v3451, 127
        %v3496 = vpop.permute.xlu0 %3495
        %3497 = vrot.lane.b32.xlu0 %v3481, 127
        %v3498 = vpop.permute.xlu0 %3497
        %3499 = vrot.lane.b32.xlu0 %v3478, 127
        %v3500 = vpop.permute.xlu0 %3499
        %3501 = vrot.lane.b32.xlu0 %v3454, 127
        %v3502 = vpop.permute.xlu0 %3501
        %3503 = vrot.lane.b32.xlu0 %v3482, 127
        %v3504 = vpop.permute.xlu0 %3503
        %3505 = vrot.lane.b32.xlu0 %v3479, 127
        %v3506 = vpop.permute.xlu0 %3505
        %3507 = vrot.lane.b32.xlu0 %v3457, 127
        %v3508 = vpop.permute.xlu0 %3507
        %3509 = vrot.lane.b32.xlu0 %v3483, 127
        %v3510 = vpop.permute.xlu0 %3509
        %3511 = vrot.lane.b32.xlu0 %v3480, 127
        %v3512 = vpop.permute.xlu0 %3511
        %3513 = vrot.lane.b32.xlu0 %v3460, 127
        %v3514 = vpop.permute.xlu0 %3513
        %3515 = vrot.lane.b32.xlu0 %v3484, 127
        %v3516 = vpop.permute.xlu0 %3515
        %3529 = vrot.lane.b32.xlu0 %v3477, 1
        %v3530 = vpop.permute.xlu0 %3529
        %3531 = vrot.lane.b32.xlu0 %v3451, 1
        %v3532 = vpop.permute.xlu0 %3531
        %3533 = vrot.lane.b32.xlu0 %v3481, 1
        %v3534 = vpop.permute.xlu0 %3533
        %3535 = vrot.lane.b32.xlu0 %v3478, 1
        %v3536 = vpop.permute.xlu0 %3535
        %3537 = vrot.lane.b32.xlu0 %v3454, 1
        %v3538 = vpop.permute.xlu0 %3537
        %3539 = vrot.lane.b32.xlu0 %v3482, 1
        %v3540 = vpop.permute.xlu0 %3539
        %3541 = vrot.lane.b32.xlu0 %v3479, 1
        %v3542 = vpop.permute.xlu0 %3541
        %3543 = vrot.lane.b32.xlu0 %v3457, 1
        %v3544 = vpop.permute.xlu0 %3543
        %3545 = vrot.lane.b32.xlu0 %v3483, 1
        %v3546 = vpop.permute.xlu0 %3545
        %3547 = vrot.lane.b32.xlu0 %v3480, 1
        %v3548 = vpop.permute.xlu0 %3547
        %3549 = vrot.lane.b32.xlu0 %v3460, 1
        %v3550 = vpop.permute.xlu0 %3549
        %3551 = vrot.lane.b32.xlu0 %v3484, 1
        %v3552 = vpop.permute.xlu0 %3551
        %3565 = vrot.lane.b32.xlu0 %v3477, 3
        %v3566 = vpop.permute.xlu0 %3565
        %3567 = vrot.lane.b32.xlu0 %v3451, 3
        %v3568 = vpop.permute.xlu0 %3567
        %3569 = vrot.lane.b32.xlu0 %v3481, 3
        %v3570 = vpop.permute.xlu0 %3569
        %3571 = vrot.lane.b32.xlu0 %v3478, 3
        %v3572 = vpop.permute.xlu0 %3571
        %3573 = vrot.lane.b32.xlu0 %v3454, 3
        %v3574 = vpop.permute.xlu0 %3573
        %3575 = vrot.lane.b32.xlu0 %v3482, 3
        %v3576 = vpop.permute.xlu0 %3575
        %3577 = vrot.lane.b32.xlu0 %v3479, 3
        %v3578 = vpop.permute.xlu0 %3577
        %3579 = vrot.lane.b32.xlu0 %v3457, 3
        %v3580 = vpop.permute.xlu0 %3579
        %3581 = vrot.lane.b32.xlu0 %v3483, 3
        %v3582 = vpop.permute.xlu0 %3581
        %3583 = vrot.lane.b32.xlu0 %v3480, 3
        %v3584 = vpop.permute.xlu0 %3583
        %3585 = vrot.lane.b32.xlu0 %v3460, 3
        %v3586 = vpop.permute.xlu0 %3585
        %3587 = vrot.lane.b32.xlu0 %v3484, 3
        %v3588 = vpop.permute.xlu0 %3587
        %v3601 = vsel %vm391, %v3494, %v3530
        %v3602 = vsel %vm391, %v3496, %v3532
        %v3603 = vsel %vm391, %v3498, %v3534
        %v3604 = vsel %vm391, %v3500, %v3536
        %v3605 = vsel %vm391, %v3502, %v3538
        %v3606 = vsel %vm391, %v3504, %v3540
        %v3607 = vsel %vm391, %v3506, %v3542
        %v3608 = vsel %vm391, %v3508, %v3544
        %v3609 = vsel %vm391, %v3510, %v3546
        %v3610 = vsel %vm391, %v3512, %v3548
        %v3611 = vsel %vm391, %v3514, %v3550
        %v3612 = vsel %vm391, %v3516, %v3552
        %v3613 = vsel %vm404, %v3601, %v3566
        %v3614 = vsel %vm404, %v3602, %v3568
        %v3615 = vsel %vm404, %v3603, %v3570
        %v3616 = vsel %vm404, %v3604, %v3572
        %v3617 = vsel %vm404, %v3605, %v3574
        %v3618 = vsel %vm404, %v3606, %v3576
        %v3619 = vsel %vm404, %v3607, %v3578
        %v3620 = vsel %vm404, %v3608, %v3580
        %v3621 = vsel %vm404, %v3609, %v3582
        %v3622 = vsel %vm404, %v3610, %v3584
        %v3623 = vsel %vm404, %v3611, %v3586
        %v3624 = vsel %vm404, %v3612, %v3588
        %s3625 = sld [smem:[#allocation8]]
        %v3626 = vstv %s3625
        %v3627 = vmul.f32 %v3626, %v3613
        %v3628 = vmul.f32 %v3626, %v3614
        %s3629 = sld [smem:[#allocation8 + $0x1]]
        %v3630 = vstv %s3629
        %v3631 = vmul.f32 %v3630, %v3613
        %v3632 = vmul.f32 %v3630, %v3614
        %s3633 = sld [smem:[#allocation8 + $0x2]]
        %v3634 = vstv %s3633
        %v3635 = vmul.f32 %v3634, %v3613
        %v3636 = vmul.f32 %v3634, %v3614
        %s3637 = sld [smem:[#allocation8 + $0x3]]
        %v3638 = vstv %s3637
        %v3639 = vmul.f32 %v3638, %v3613
        %v3640 = vmul.f32 %v3638, %v3614
        %v3641 = vmul.f32 %v3638, %v3615
        %s3642 = sld [smem:[#allocation8 + $0x4]]
        %v3643 = vstv %s3642
        %v3644 = vmul.f32 %v3643, %v3613
        %v3645 = vmul.f32 %v3643, %v3614
        %v3646 = vmul.f32 %v3643, %v3615
        %s3647 = sld [smem:[#allocation8 + $0x5]]
        %v3648 = vstv %s3647
        %v3649 = vmul.f32 %v3648, %v3613
        %v3650 = vmul.f32 %v3648, %v3614
        %v3651 = vmul.f32 %v3648, %v3615
        %s3652 = sld [smem:[#allocation8 + $0x6]]
        %v3653 = vstv %s3652
        %v3654 = vmul.f32 %v3653, %v3613
        %v3655 = vmul.f32 %v3653, %v3614
        %v3656 = vmul.f32 %v3653, %v3615
        %s3657 = sld [smem:[#allocation8 + $0x7]]
        %v3658 = vstv %s3657
        %v3659 = vmul.f32 %v3658, %v3613
        %v3660 = vmul.f32 %v3658, %v3614
        %v3661 = vmul.f32 %v3658, %v3615
        %s3662 = sld [smem:[#allocation8 + $0x8]]
        %v3663 = vstv %s3662
        %v3664 = vmul.f32 %v3663, %v3613
        %v3665 = vmul.f32 %v3663, %v3614
        %v3666 = vmul.f32 %v3663, %v3615
        %s3667 = sld [smem:[#allocation8 + $0x9]]
        %v3668 = vstv %s3667
        %v3669 = vmul.f32 %v3668, %v3616
        %v3670 = vmul.f32 %v3668, %v3617
        %s3671 = sld [smem:[#allocation8 + $0xa]]
        %v3672 = vstv %s3671
        %v3673 = vmul.f32 %v3672, %v3616
        %v3674 = vmul.f32 %v3672, %v3617
        %s3675 = sld [smem:[#allocation8 + $0xb]]
        %v3676 = vstv %s3675
        %v3677 = vmul.f32 %v3676, %v3616
        %v3678 = vmul.f32 %v3676, %v3617
        %s3679 = sld [smem:[#allocation8 + $0xc]]
        %v3680 = vstv %s3679
        %v3681 = vmul.f32 %v3680, %v3616
        %v3682 = vmul.f32 %v3680, %v3617
        %v3683 = vmul.f32 %v3680, %v3618
        %s3684 = sld [smem:[#allocation8 + $0xd]]
        %v3685 = vstv %s3684
        %v3686 = vmul.f32 %v3685, %v3616
        %v3687 = vmul.f32 %v3685, %v3617
        %v3688 = vmul.f32 %v3685, %v3618
        %s3689 = sld [smem:[#allocation8 + $0xe]]
        %v3690 = vstv %s3689
        %v3691 = vmul.f32 %v3690, %v3616
        %v3692 = vmul.f32 %v3690, %v3617
        %v3693 = vmul.f32 %v3690, %v3618
        %s3694 = sld [smem:[#allocation8 + $0xf]]
        %v3695 = vstv %s3694
        %v3696 = vmul.f32 %v3695, %v3616
        %v3697 = vmul.f32 %v3695, %v3617
        %v3698 = vmul.f32 %v3695, %v3618
        %s3699 = sld [smem:[#allocation8 + $0x10]]
        %v3700 = vstv %s3699
        %v3701 = vmul.f32 %v3700, %v3616
        %v3702 = vmul.f32 %v3700, %v3617
        %v3703 = vmul.f32 %v3700, %v3618
        %s3704 = sld [smem:[#allocation8 + $0x11]]
        %v3705 = vstv %s3704
        %v3706 = vmul.f32 %v3705, %v3616
        %v3707 = vmul.f32 %v3705, %v3617
        %v3708 = vmul.f32 %v3705, %v3618
        %s3709 = sld [smem:[#allocation8 + $0x12]]
        %v3710 = vstv %s3709
        %v3711 = vmul.f32 %v3710, %v3619
        %v3712 = vmul.f32 %v3710, %v3620
        %s3713 = sld [smem:[#allocation8 + $0x13]]
        %v3714 = vstv %s3713
        %v3715 = vmul.f32 %v3714, %v3619
        %v3716 = vmul.f32 %v3714, %v3620
        %s3717 = sld [smem:[#allocation8 + $0x14]]
        %v3718 = vstv %s3717
        %v3719 = vmul.f32 %v3718, %v3619
        %v3720 = vmul.f32 %v3718, %v3620
        %s3721 = sld [smem:[#allocation8 + $0x15]]
        %v3722 = vstv %s3721
        %v3723 = vmul.f32 %v3722, %v3619
        %v3724 = vmul.f32 %v3722, %v3620
        %v3725 = vmul.f32 %v3722, %v3621
        %s3726 = sld [smem:[#allocation8 + $0x16]]
        %v3727 = vstv %s3726
        %v3728 = vmul.f32 %v3727, %v3619
        %v3729 = vmul.f32 %v3727, %v3620
        %v3730 = vmul.f32 %v3727, %v3621
        %s3731 = sld [smem:[#allocation8 + $0x17]]
        %v3732 = vstv %s3731
        %v3733 = vmul.f32 %v3732, %v3619
        %v3734 = vmul.f32 %v3732, %v3620
        %v3735 = vmul.f32 %v3732, %v3621
        %s3736 = sld [smem:[#allocation8 + $0x18]]
        %v3737 = vstv %s3736
        %v3738 = vmul.f32 %v3737, %v3619
        %v3739 = vmul.f32 %v3737, %v3620
        %v3740 = vmul.f32 %v3737, %v3621
        %s3741 = sld [smem:[#allocation8 + $0x19]]
        %v3742 = vstv %s3741
        %v3743 = vmul.f32 %v3742, %v3619
        %v3744 = vmul.f32 %v3742, %v3620
        %v3745 = vmul.f32 %v3742, %v3621
        %s3746 = sld [smem:[#allocation8 + $0x1a]]
        %v3747 = vstv %s3746
        %v3748 = vmul.f32 %v3747, %v3619
        %v3749 = vmul.f32 %v3747, %v3620
        %v3750 = vmul.f32 %v3747, %v3621
        %s3751 = sld [smem:[#allocation8 + $0x1b]]
        %v3752 = vstv %s3751
        %v3753 = vmul.f32 %v3752, %v3622
        %v3754 = vmul.f32 %v3752, %v3623
        %s3755 = sld [smem:[#allocation8 + $0x1c]]
        %v3756 = vstv %s3755
        %v3757 = vmul.f32 %v3756, %v3622
        %v3758 = vmul.f32 %v3756, %v3623
        %s3759 = sld [smem:[#allocation8 + $0x1d]]
        %v3760 = vstv %s3759
        %v3761 = vmul.f32 %v3760, %v3622
        %v3762 = vmul.f32 %v3760, %v3623
        %s3763 = sld [smem:[#allocation8 + $0x1e]]
        %v3764 = vstv %s3763
        %v3765 = vmul.f32 %v3764, %v3622
        %v3766 = vmul.f32 %v3764, %v3623
        %v3767 = vmul.f32 %v3764, %v3624
        %s3768 = sld [smem:[#allocation8 + $0x1f]]
        %v3769 = vstv %s3768
        %v3770 = vmul.f32 %v3769, %v3622
        %v3771 = vmul.f32 %v3769, %v3623
        %v3772 = vmul.f32 %v3769, %v3624
        %s3773 = sld [smem:[#allocation8 + $0x20]]
        %v3774 = vstv %s3773
        %v3775 = vmul.f32 %v3774, %v3622
        %v3776 = vmul.f32 %v3774, %v3623
        %v3777 = vmul.f32 %v3774, %v3624
        %s3778 = sld [smem:[#allocation8 + $0x21]]
        %v3779 = vstv %s3778
        %v3780 = vmul.f32 %v3779, %v3622
        %v3781 = vmul.f32 %v3779, %v3623
        %v3782 = vmul.f32 %v3779, %v3624
        %s3783 = sld [smem:[#allocation8 + $0x22]]
        %v3784 = vstv %s3783
        %v3785 = vmul.f32 %v3784, %v3622
        %v3786 = vmul.f32 %v3784, %v3623
        %v3787 = vmul.f32 %v3784, %v3624
        %s3788 = sld [smem:[#allocation8 + $0x23]]
        %v3789 = vstv %s3788
        %v3790 = vmul.f32 %v3789, %v3622
        %v3791 = vmul.f32 %v3789, %v3623
        %v3792 = vmul.f32 %v3789, %v3624
        %3795 = vrot.lane.b32.xlu0 %v3631, 127
        %v3796 = vpop.permute.xlu0 %3795
        %3797 = vrot.lane.b32.xlu0 %v3632, 127
        %v3798 = vpop.permute.xlu0 %3797
        %v3801 = vadd.f32 %v3627, %v3796
        %v3802 = vadd.f32 %v3628, %v3798
        %v3806 = vrot.slane %v3639, 1
        %v3807 = vrot.slane %v3640, 1
        %v3808 = vsel %vm598, %v3806, %v3807
        %v3809 = vrot.slane %v3641, 1
        %v3810 = vsel %vm598, %v3807, %v3809
        %3811 = vrot.lane.b32.xlu0 %v3808, 2
        %v3812 = vpop.permute.xlu0 %3811
        %3813 = vrot.lane.b32.xlu0 %v3810, 2
        %v3814 = vpop.permute.xlu0 %3813
        %v3817 = vadd.f32 %v3635, %v3812
        %v3818 = vadd.f32 %v3636, %v3814
        %3822 = vrot.lane.b32.xlu0 %v3649, 127
        %v3823 = vpop.permute.xlu0 %3822
        %3824 = vrot.lane.b32.xlu0 %v3650, 127
        %v3825 = vpop.permute.xlu0 %3824
        %3826 = vrot.lane.b32.xlu0 %v3651, 127
        %v3827 = vpop.permute.xlu0 %3826
        %v3831 = vadd.f32 %v3644, %v3823
        %v3832 = vadd.f32 %v3645, %v3825
        %v3833 = vadd.f32 %v3646, %v3827
        %3837 = vrot.lane.b32.xlu0 %v3659, 127
        %v3838 = vpop.permute.xlu0 %3837
        %3839 = vrot.lane.b32.xlu0 %v3660, 127
        %v3840 = vpop.permute.xlu0 %3839
        %3841 = vrot.lane.b32.xlu0 %v3661, 127
        %v3842 = vpop.permute.xlu0 %3841
        %v3846 = vadd.f32 %v3654, %v3838
        %v3847 = vadd.f32 %v3655, %v3840
        %v3848 = vadd.f32 %v3656, %v3842
        %v3851 = vrot.slane %v3669, 6
        %v3852 = vrot.slane %v3670, 6
        %v3853 = vsel %vm644, %v3851, %v3852
        %3854 = vrot.lane.b32.xlu0 %v3851, 2
        %v3855 = vpop.permute.xlu0 %3854
        %3856 = vrot.lane.b32.xlu0 %v3853, 2
        %v3857 = vpop.permute.xlu0 %3856
        %3858 = vrot.lane.b32.xlu0 %v3852, 2
        %v3859 = vpop.permute.xlu0 %3858
        %v3863 = vadd.f32 %v3664, %v3855
        %v3864 = vadd.f32 %v3665, %v3857
        %v3865 = vadd.f32 %v3666, %v3859
        %3868 = vrot.lane.b32.xlu0 %v3677, 127
        %v3869 = vpop.permute.xlu0 %3868
        %3870 = vrot.lane.b32.xlu0 %v3678, 127
        %v3871 = vpop.permute.xlu0 %3870
        %v3874 = vadd.f32 %v3673, %v3869
        %v3875 = vadd.f32 %v3674, %v3871
        %3879 = vrot.lane.b32.xlu0 %v3686, 127
        %v3880 = vpop.permute.xlu0 %3879
        %3881 = vrot.lane.b32.xlu0 %v3687, 127
        %v3882 = vpop.permute.xlu0 %3881
        %3883 = vrot.lane.b32.xlu0 %v3688, 127
        %v3884 = vpop.permute.xlu0 %3883
        %v3888 = vadd.f32 %v3681, %v3880
        %v3889 = vadd.f32 %v3682, %v3882
        %v3890 = vadd.f32 %v3683, %v3884
        %v3894 = vrot.slane %v3696, 1
        %v3895 = vrot.slane %v3697, 1
        %v3896 = vsel %vm598, %v3894, %v3895
        %v3897 = vrot.slane %v3698, 1
        %v3898 = vsel %vm598, %v3895, %v3897
        %3899 = vrot.lane.b32.xlu0 %v3896, 2
        %v3900 = vpop.permute.xlu0 %3899
        %3901 = vrot.lane.b32.xlu0 %v3898, 2
        %v3902 = vpop.permute.xlu0 %3901
        %3903 = vrot.lane.b32.xlu0 %v3897, 2
        %v3904 = vpop.permute.xlu0 %3903
        %v3908 = vadd.f32 %v3691, %v3900
        %v3909 = vadd.f32 %v3692, %v3902
        %v3910 = vadd.f32 %v3693, %v3904
        %3914 = vrot.lane.b32.xlu0 %v3706, 127
        %v3915 = vpop.permute.xlu0 %3914
        %3916 = vrot.lane.b32.xlu0 %v3707, 127
        %v3917 = vpop.permute.xlu0 %3916
        %3918 = vrot.lane.b32.xlu0 %v3708, 127
        %v3919 = vpop.permute.xlu0 %3918
        %v3923 = vadd.f32 %v3701, %v3915
        %v3924 = vadd.f32 %v3702, %v3917
        %v3925 = vadd.f32 %v3703, %v3919
        %3928 = vrot.lane.b32.xlu0 %v3715, 127
        %v3929 = vpop.permute.xlu0 %3928
        %3930 = vrot.lane.b32.xlu0 %v3716, 127
        %v3931 = vpop.permute.xlu0 %3930
        %v3934 = vadd.f32 %v3711, %v3929
        %v3935 = vadd.f32 %v3712, %v3931
        %v3939 = vrot.slane %v3723, 1
        %v3940 = vrot.slane %v3724, 1
        %v3941 = vsel %vm598, %v3939, %v3940
        %v3942 = vrot.slane %v3725, 1
        %v3943 = vsel %vm598, %v3940, %v3942
        %3944 = vrot.lane.b32.xlu0 %v3941, 2
        %v3945 = vpop.permute.xlu0 %3944
        %3946 = vrot.lane.b32.xlu0 %v3943, 2
        %v3947 = vpop.permute.xlu0 %3946
        %v3950 = vadd.f32 %v3719, %v3945
        %v3951 = vadd.f32 %v3720, %v3947
        %3955 = vrot.lane.b32.xlu0 %v3733, 127
        %v3956 = vpop.permute.xlu0 %3955
        %3957 = vrot.lane.b32.xlu0 %v3734, 127
        %v3958 = vpop.permute.xlu0 %3957
        %3959 = vrot.lane.b32.xlu0 %v3735, 127
        %v3960 = vpop.permute.xlu0 %3959
        %v3964 = vadd.f32 %v3728, %v3956
        %v3965 = vadd.f32 %v3729, %v3958
        %v3966 = vadd.f32 %v3730, %v3960
        %3970 = vrot.lane.b32.xlu0 %v3743, 127
        %v3971 = vpop.permute.xlu0 %3970
        %3972 = vrot.lane.b32.xlu0 %v3744, 127
        %v3973 = vpop.permute.xlu0 %3972
        %3974 = vrot.lane.b32.xlu0 %v3745, 127
        %v3975 = vpop.permute.xlu0 %3974
        %v3979 = vadd.f32 %v3738, %v3971
        %v3980 = vadd.f32 %v3739, %v3973
        %v3981 = vadd.f32 %v3740, %v3975
        %v3984 = vrot.slane %v3753, 6
        %v3985 = vrot.slane %v3754, 6
        %v3986 = vsel %vm644, %v3984, %v3985
        %3987 = vrot.lane.b32.xlu0 %v3984, 2
        %v3988 = vpop.permute.xlu0 %3987
        %3989 = vrot.lane.b32.xlu0 %v3986, 2
        %v3990 = vpop.permute.xlu0 %3989
        %3991 = vrot.lane.b32.xlu0 %v3985, 2
        %v3992 = vpop.permute.xlu0 %3991
        %v3996 = vadd.f32 %v3748, %v3988
        %v3997 = vadd.f32 %v3749, %v3990
        %v3998 = vadd.f32 %v3750, %v3992
        %4001 = vrot.lane.b32.xlu0 %v3761, 127
        %v4002 = vpop.permute.xlu0 %4001
        %4003 = vrot.lane.b32.xlu0 %v3762, 127
        %v4004 = vpop.permute.xlu0 %4003
        %v4007 = vadd.f32 %v3757, %v4002
        %v4008 = vadd.f32 %v3758, %v4004
        %4012 = vrot.lane.b32.xlu0 %v3770, 127
        %v4013 = vpop.permute.xlu0 %4012
        %4014 = vrot.lane.b32.xlu0 %v3771, 127
        %v4015 = vpop.permute.xlu0 %4014
        %4016 = vrot.lane.b32.xlu0 %v3772, 127
        %v4017 = vpop.permute.xlu0 %4016
        %v4021 = vadd.f32 %v3765, %v4013
        %v4022 = vadd.f32 %v3766, %v4015
        %v4023 = vadd.f32 %v3767, %v4017
        %v4027 = vrot.slane %v3780, 1
        %v4028 = vrot.slane %v3781, 1
        %v4029 = vsel %vm598, %v4027, %v4028
        %v4030 = vrot.slane %v3782, 1
        %v4031 = vsel %vm598, %v4028, %v4030
        %4032 = vrot.lane.b32.xlu0 %v4029, 2
        %v4033 = vpop.permute.xlu0 %4032
        %4034 = vrot.lane.b32.xlu0 %v4031, 2
        %v4035 = vpop.permute.xlu0 %4034
        %4036 = vrot.lane.b32.xlu0 %v4030, 2
        %v4037 = vpop.permute.xlu0 %4036
        %v4041 = vadd.f32 %v3775, %v4033
        %v4042 = vadd.f32 %v3776, %v4035
        %v4043 = vadd.f32 %v3777, %v4037
        %4047 = vrot.lane.b32.xlu0 %v3790, 127
        %v4048 = vpop.permute.xlu0 %4047
        %4049 = vrot.lane.b32.xlu0 %v3791, 127
        %v4050 = vpop.permute.xlu0 %4049
        %4051 = vrot.lane.b32.xlu0 %v3792, 127
        %v4052 = vpop.permute.xlu0 %4051
        %v4056 = vadd.f32 %v3785, %v4048
        %v4057 = vadd.f32 %v3786, %v4050
        %v4058 = vadd.f32 %v3787, %v4052
        %4061 = vrot.lane.b32.xlu0 %v3817, 126
        %v4062 = vpop.permute.xlu0 %4061
        %4063 = vrot.lane.b32.xlu0 %v3818, 126
        %v4064 = vpop.permute.xlu0 %4063
        %v4067 = vadd.f32 %v3801, %v4062
        %v4068 = vadd.f32 %v3802, %v4064
        %v4072 = vrot.slane %v3846, 1
        %v4073 = vrot.slane %v3847, 1
        %v4074 = vsel %vm598, %v4072, %v4073
        %v4075 = vrot.slane %v3848, 1
        %v4076 = vsel %vm598, %v4073, %v4075
        %4077 = vrot.lane.b32.xlu0 %v4074, 1
        %v4078 = vpop.permute.xlu0 %4077
        %4079 = vrot.lane.b32.xlu0 %v4076, 1
        %v4080 = vpop.permute.xlu0 %4079
        %4081 = vrot.lane.b32.xlu0 %v4075, 1
        %v4082 = vpop.permute.xlu0 %4081
        %v4086 = vadd.f32 %v3831, %v4078
        %v4087 = vadd.f32 %v3832, %v4080
        %v4088 = vadd.f32 %v3833, %v4082
        %v4091 = vrot.slane %v3874, 6
        %v4092 = vrot.slane %v3875, 6
        %v4093 = vsel %vm644, %v4091, %v4092
        %4094 = vrot.lane.b32.xlu0 %v4091, 1
        %v4095 = vpop.permute.xlu0 %4094
        %4096 = vrot.lane.b32.xlu0 %v4093, 1
        %v4097 = vpop.permute.xlu0 %4096
        %4098 = vrot.lane.b32.xlu0 %v4092, 1
        %v4099 = vpop.permute.xlu0 %4098
        %v4103 = vadd.f32 %v3863, %v4095
        %v4104 = vadd.f32 %v3864, %v4097
        %v4105 = vadd.f32 %v3865, %v4099
        %4109 = vrot.lane.b32.xlu0 %v3908, 126
        %v4110 = vpop.permute.xlu0 %4109
        %4111 = vrot.lane.b32.xlu0 %v3909, 126
        %v4112 = vpop.permute.xlu0 %4111
        %4113 = vrot.lane.b32.xlu0 %v3910, 126
        %v4114 = vpop.permute.xlu0 %4113
        %v4118 = vadd.f32 %v3888, %v4110
        %v4119 = vadd.f32 %v3889, %v4112
        %v4120 = vadd.f32 %v3890, %v4114
        %v4123 = vrot.slane %v3934, 6
        %v4124 = vrot.slane %v3935, 6
        %v4125 = vsel %vm644, %v4123, %v4124
        %4126 = vrot.lane.b32.xlu0 %v4123, 1
        %v4127 = vpop.permute.xlu0 %4126
        %4128 = vrot.lane.b32.xlu0 %v4125, 1
        %v4129 = vpop.permute.xlu0 %4128
        %4130 = vrot.lane.b32.xlu0 %v4124, 1
        %v4131 = vpop.permute.xlu0 %4130
        %v4135 = vadd.f32 %v3923, %v4127
        %v4136 = vadd.f32 %v3924, %v4129
        %v4137 = vadd.f32 %v3925, %v4131
        %v4141 = vrot.slane %v3964, 1
        %v4142 = vrot.slane %v3965, 1
        %v4143 = vsel %vm598, %v4141, %v4142
        %v4144 = vrot.slane %v3966, 1
        %v4145 = vsel %vm598, %v4142, %v4144
        %4146 = vrot.lane.b32.xlu0 %v4143, 1
        %v4147 = vpop.permute.xlu0 %4146
        %4148 = vrot.lane.b32.xlu0 %v4145, 1
        %v4149 = vpop.permute.xlu0 %4148
        %v4152 = vadd.f32 %v3950, %v4147
        %v4153 = vadd.f32 %v3951, %v4149
        %4157 = vrot.lane.b32.xlu0 %v3996, 126
        %v4158 = vpop.permute.xlu0 %4157
        %4159 = vrot.lane.b32.xlu0 %v3997, 126
        %v4160 = vpop.permute.xlu0 %4159
        %4161 = vrot.lane.b32.xlu0 %v3998, 126
        %v4162 = vpop.permute.xlu0 %4161
        %v4166 = vadd.f32 %v3979, %v4158
        %v4167 = vadd.f32 %v3980, %v4160
        %v4168 = vadd.f32 %v3981, %v4162
        %v4172 = vrot.slane %v4021, 1
        %v4173 = vrot.slane %v4022, 1
        %v4174 = vsel %vm598, %v4172, %v4173
        %v4175 = vrot.slane %v4023, 1
        %v4176 = vsel %vm598, %v4173, %v4175
        %4177 = vrot.lane.b32.xlu0 %v4174, 1
        %v4178 = vpop.permute.xlu0 %4177
        %4179 = vrot.lane.b32.xlu0 %v4176, 1
        %v4180 = vpop.permute.xlu0 %4179
        %v4183 = vadd.f32 %v4007, %v4178
        %v4184 = vadd.f32 %v4008, %v4180
        %v4188 = vrot.slane %v4056, 1
        %v4189 = vrot.slane %v4057, 1
        %v4190 = vsel %vm598, %v4188, %v4189
        %v4191 = vrot.slane %v4058, 1
        %v4192 = vsel %vm598, %v4189, %v4191
        %4193 = vrot.lane.b32.xlu0 %v4190, 1
        %v4194 = vpop.permute.xlu0 %4193
        %4195 = vrot.lane.b32.xlu0 %v4192, 1
        %v4196 = vpop.permute.xlu0 %4195
        %4197 = vrot.lane.b32.xlu0 %v4191, 1
        %v4198 = vpop.permute.xlu0 %4197
        %v4202 = vadd.f32 %v4041, %v4194
        %v4203 = vadd.f32 %v4042, %v4196
        %v4204 = vadd.f32 %v4043, %v4198
        %v4208 = vrot.slane %v4086, 1
        %v4209 = vrot.slane %v4087, 1
        %v4210 = vsel %vm598, %v4208, %v4209
        %v4211 = vrot.slane %v4088, 1
        %v4212 = vsel %vm598, %v4209, %v4211
        %4213 = vrot.lane.b32.xlu0 %v4210, 127
        %v4214 = vpop.permute.xlu0 %4213
        %4215 = vrot.lane.b32.xlu0 %v4212, 127
        %v4216 = vpop.permute.xlu0 %4215
        %v4219 = vadd.f32 %v4067, %v4214
        %v4220 = vadd.f32 %v4068, %v4216
        %v4224 = vrot.slane %v4118, 7
        %v4225 = vrot.slane %v4119, 7
        %v4226 = vsel %vm238, %v4224, %v4225
        %v4227 = vrot.slane %v4120, 7
        %v4228 = vsel %vm238, %v4225, %v4227
        %4229 = vrot.lane.b32.xlu0 %v4224, 2
        %v4230 = vpop.permute.xlu0 %4229
        %4231 = vrot.lane.b32.xlu0 %v4226, 2
        %v4232 = vpop.permute.xlu0 %4231
        %4233 = vrot.lane.b32.xlu0 %v4228, 2
        %v4234 = vpop.permute.xlu0 %4233
        %v4238 = vadd.f32 %v4103, %v4230
        %v4239 = vadd.f32 %v4104, %v4232
        %v4240 = vadd.f32 %v4105, %v4234
        %v4243 = vrot.slane %v4152, 6
        %v4244 = vrot.slane %v4153, 6
        %v4245 = vsel %vm644, %v4243, %v4244
        %4246 = vrot.lane.b32.xlu0 %v4243, 127
        %v4247 = vpop.permute.xlu0 %4246
        %4248 = vrot.lane.b32.xlu0 %v4245, 127
        %v4249 = vpop.permute.xlu0 %4248
        %4250 = vrot.lane.b32.xlu0 %v4244, 127
        %v4251 = vpop.permute.xlu0 %4250
        %v4255 = vadd.f32 %v4135, %v4247
        %v4256 = vadd.f32 %v4136, %v4249
        %v4257 = vadd.f32 %v4137, %v4251
        %v4260 = vrot.slane %v4183, 6
        %v4261 = vrot.slane %v4184, 6
        %v4262 = vsel %vm644, %v4260, %v4261
        %4263 = vrot.lane.b32.xlu0 %v4260, 127
        %v4264 = vpop.permute.xlu0 %4263
        %4265 = vrot.lane.b32.xlu0 %v4262, 127
        %v4266 = vpop.permute.xlu0 %4265
        %4267 = vrot.lane.b32.xlu0 %v4261, 127
        %v4268 = vpop.permute.xlu0 %4267
        %v4272 = vadd.f32 %v4166, %v4264
        %v4273 = vadd.f32 %v4167, %v4266
        %v4274 = vadd.f32 %v4168, %v4268
        %v4278 = vrot.slane %v4238, 2
        %v4279 = vrot.slane %v4239, 2
        %v4280 = vsel %vm1072, %v4278, %v4279
        %v4281 = vrot.slane %v4240, 2
        %v4282 = vsel %vm1072, %v4279, %v4281
        %4283 = vrot.lane.b32.xlu0 %v4280, 126
        %v4284 = vpop.permute.xlu0 %4283
        %4285 = vrot.lane.b32.xlu0 %v4282, 126
        %v4286 = vpop.permute.xlu0 %4285
        %v4289 = vadd.f32 %v4219, %v4284
        %v4290 = vadd.f32 %v4220, %v4286
        %4294 = vrot.lane.b32.xlu0 %v4272, 1
        %v4295 = vpop.permute.xlu0 %4294
        %4296 = vrot.lane.b32.xlu0 %v4273, 1
        %v4297 = vpop.permute.xlu0 %4296
        %4298 = vrot.lane.b32.xlu0 %v4274, 1
        %v4299 = vpop.permute.xlu0 %4298
        %v4303 = vadd.f32 %v4255, %v4295
        %v4304 = vadd.f32 %v4256, %v4297
        %v4305 = vadd.f32 %v4257, %v4299
        %v4309 = vrot.slane %v4303, 2
        %v4310 = vrot.slane %v4304, 2
        %v4311 = vsel %vm1072, %v4309, %v4310
        %v4312 = vrot.slane %v4305, 2
        %v4313 = vsel %vm1072, %v4310, %v4312
        %4314 = vrot.lane.b32.xlu0 %v4311, 127
        %v4315 = vpop.permute.xlu0 %4314
        %4316 = vrot.lane.b32.xlu0 %v4313, 127
        %v4317 = vpop.permute.xlu0 %4316
        %v4320 = vadd.f32 %v4289, %v4315
        %v4321 = vadd.f32 %v4290, %v4317
        %v4325 = vrot.slane %v4202, 1
        %v4326 = vrot.slane %v4203, 1
        %v4327 = vsel %vm598, %v4325, %v4326
        %v4328 = vrot.slane %v4204, 1
        %v4329 = vsel %vm598, %v4326, %v4328
        %4330 = vrot.lane.b32.xlu0 %v4327, 126
        %v4331 = vpop.permute.xlu0 %4330
        %4332 = vrot.lane.b32.xlu0 %v4329, 126
        %v4333 = vpop.permute.xlu0 %4332
        %v4336 = vadd.f32 %v4320, %v4331
        %v4337 = vadd.f32 %v4321, %v4333
        %v4338 = vsel %vm1133, %v4336, 0.0
        %v4339 = vsel %vm1133, %v4337, 0.0
        %v4340 = vadd.f32 %v4338, %v4339
        %4341 = vadd.xlane.f32.xlu0 %v4340
        %v4342 = vpop.xlane.xlu0 %4341
        %v4343 = vrot.slane %v4342, 4
        %v4344 = vadd.f32 %v4342, %v4343
        %v4345 = vrot.slane %v4344, 2
        %v4346 = vadd.f32 %v4344, %v4345
        %v4347 = vrot.slane %v4346, 1
        %v4348 = vadd.f32 %v4346, %v4347
        %s4349 = vtos %v4348
        %v4350 = vstv %s4349
        %v4351 = vmul.f32 %v4350, 0.00390625
        %v4352 = vmul.f32 %v4336, %v4336
        %v4353 = vmul.f32 %v4337, %v4337
        %v4354 = vsel %vm1133, %v4352, 0.0
        %v4355 = vsel %vm1133, %v4353, 0.0
        %v4356 = vadd.f32 %v4354, %v4355
        %4357 = vadd.xlane.f32.xlu0 %v4356
        %v4358 = vpop.xlane.xlu0 %4357
        %v4359 = vrot.slane %v4358, 4
        %v4360 = vadd.f32 %v4358, %v4359
        %v4361 = vrot.slane %v4360, 2
        %v4362 = vadd.f32 %v4360, %v4361
        %v4363 = vrot.slane %v4362, 1
        %v4364 = vadd.f32 %v4362, %v4363
        %s4365 = vtos %v4364
        %v4366 = vstv %s4365
        %v4367 = vmul.f32 %v4366, 0.00390625
        %v4368 = vmul.f32 %v4351, %v4351
        %v4369 = vsub.f32 %v4367, %v4368
        %v4370 = vsub.f32 %v4336, %v4351
        %v4371 = vsub.f32 %v4337, %v4351
        %v4372 = vadd.f32 %v4369, 1e-05
        %v4373 = vrsqrt.pop %v4372
        %v4374 = vmul.f32 %v4370, %v4373
        %v4375 = vmul.f32 %v4371, %v4373
        %s4376 = sld [smem:[#allocation8 + $0x24]]
        %v4377 = vstv %s4376
        %v4378 = vmul.f32 %v4377, %v3613
        %v4379 = vmul.f32 %v4377, %v3614
        %s4380 = sld [smem:[#allocation8 + $0x25]]
        %v4381 = vstv %s4380
        %v4382 = vmul.f32 %v4381, %v3613
        %v4383 = vmul.f32 %v4381, %v3614
        %s4384 = sld [smem:[#allocation8 + $0x26]]
        %v4385 = vstv %s4384
        %v4386 = vmul.f32 %v4385, %v3613
        %v4387 = vmul.f32 %v4385, %v3614
        %s4388 = sld [smem:[#allocation8 + $0x27]]
        %v4389 = vstv %s4388
        %v4390 = vmul.f32 %v4389, %v3613
        %v4391 = vmul.f32 %v4389, %v3614
        %v4392 = vmul.f32 %v4389, %v3615
        %s4393 = sld [smem:[#allocation8 + $0x28]]
        %v4394 = vstv %s4393
        %v4395 = vmul.f32 %v4394, %v3613
        %v4396 = vmul.f32 %v4394, %v3614
        %v4397 = vmul.f32 %v4394, %v3615
        %s4398 = sld [smem:[#allocation8 + $0x29]]
        %v4399 = vstv %s4398
        %v4400 = vmul.f32 %v4399, %v3613
        %v4401 = vmul.f32 %v4399, %v3614
        %v4402 = vmul.f32 %v4399, %v3615
        %s4403 = sld [smem:[#allocation8 + $0x2a]]
        %v4404 = vstv %s4403
        %v4405 = vmul.f32 %v4404, %v3613
        %v4406 = vmul.f32 %v4404, %v3614
        %v4407 = vmul.f32 %v4404, %v3615
        %s4408 = sld [smem:[#allocation8 + $0x2b]]
        %v4409 = vstv %s4408
        %v4410 = vmul.f32 %v4409, %v3613
        %v4411 = vmul.f32 %v4409, %v3614
        %v4412 = vmul.f32 %v4409, %v3615
        %s4413 = sld [smem:[#allocation8 + $0x2c]]
        %v4414 = vstv %s4413
        %v4415 = vmul.f32 %v4414, %v3613
        %v4416 = vmul.f32 %v4414, %v3614
        %v4417 = vmul.f32 %v4414, %v3615
        %s4418 = sld [smem:[#allocation8 + $0x2d]]
        %v4419 = vstv %s4418
        %v4420 = vmul.f32 %v4419, %v3616
        %v4421 = vmul.f32 %v4419, %v3617
        %s4422 = sld [smem:[#allocation8 + $0x2e]]
        %v4423 = vstv %s4422
        %v4424 = vmul.f32 %v4423, %v3616
        %v4425 = vmul.f32 %v4423, %v3617
        %s4426 = sld [smem:[#allocation8 + $0x2f]]
        %v4427 = vstv %s4426
        %v4428 = vmul.f32 %v4427, %v3616
        %v4429 = vmul.f32 %v4427, %v3617
        %s4430 = sld [smem:[#allocation8 + $0x30]]
        %v4431 = vstv %s4430
        %v4432 = vmul.f32 %v4431, %v3616
        %v4433 = vmul.f32 %v4431, %v3617
        %v4434 = vmul.f32 %v4431, %v3618
        %s4435 = sld [smem:[#allocation8 + $0x31]]
        %v4436 = vstv %s4435
        %v4437 = vmul.f32 %v4436, %v3616
        %v4438 = vmul.f32 %v4436, %v3617
        %v4439 = vmul.f32 %v4436, %v3618
        %s4440 = sld [smem:[#allocation8 + $0x32]]
        %v4441 = vstv %s4440
        %v4442 = vmul.f32 %v4441, %v3616
        %v4443 = vmul.f32 %v4441, %v3617
        %v4444 = vmul.f32 %v4441, %v3618
        %s4445 = sld [smem:[#allocation8 + $0x33]]
        %v4446 = vstv %s4445
        %v4447 = vmul.f32 %v4446, %v3616
        %v4448 = vmul.f32 %v4446, %v3617
        %v4449 = vmul.f32 %v4446, %v3618
        %s4450 = sld [smem:[#allocation8 + $0x34]]
        %v4451 = vstv %s4450
        %v4452 = vmul.f32 %v4451, %v3616
        %v4453 = vmul.f32 %v4451, %v3617
        %v4454 = vmul.f32 %v4451, %v3618
        %s4455 = sld [smem:[#allocation8 + $0x35]]
        %v4456 = vstv %s4455
        %v4457 = vmul.f32 %v4456, %v3616
        %v4458 = vmul.f32 %v4456, %v3617
        %v4459 = vmul.f32 %v4456, %v3618
        %s4460 = sld [smem:[#allocation8 + $0x36]]
        %v4461 = vstv %s4460
        %v4462 = vmul.f32 %v4461, %v3619
        %v4463 = vmul.f32 %v4461, %v3620
        %s4464 = sld [smem:[#allocation8 + $0x37]]
        %v4465 = vstv %s4464
        %v4466 = vmul.f32 %v4465, %v3619
        %v4467 = vmul.f32 %v4465, %v3620
        %s4468 = sld [smem:[#allocation8 + $0x38]]
        %v4469 = vstv %s4468
        %v4470 = vmul.f32 %v4469, %v3619
        %v4471 = vmul.f32 %v4469, %v3620
        %s4472 = sld [smem:[#allocation8 + $0x39]]
        %v4473 = vstv %s4472
        %v4474 = vmul.f32 %v4473, %v3619
        %v4475 = vmul.f32 %v4473, %v3620
        %v4476 = vmul.f32 %v4473, %v3621
        %s4477 = sld [smem:[#allocation8 + $0x3a]]
        %v4478 = vstv %s4477
        %v4479 = vmul.f32 %v4478, %v3619
        %v4480 = vmul.f32 %v4478, %v3620
        %v4481 = vmul.f32 %v4478, %v3621
        %s4482 = sld [smem:[#allocation8 + $0x3b]]
        %v4483 = vstv %s4482
        %v4484 = vmul.f32 %v4483, %v3619
        %v4485 = vmul.f32 %v4483, %v3620
        %v4486 = vmul.f32 %v4483, %v3621
        %s4487 = sld [smem:[#allocation8 + $0x3c]]
        %v4488 = vstv %s4487
        %v4489 = vmul.f32 %v4488, %v3619
        %v4490 = vmul.f32 %v4488, %v3620
        %v4491 = vmul.f32 %v4488, %v3621
        %s4492 = sld [smem:[#allocation8 + $0x3d]]
        %v4493 = vstv %s4492
        %v4494 = vmul.f32 %v4493, %v3619
        %v4495 = vmul.f32 %v4493, %v3620
        %v4496 = vmul.f32 %v4493, %v3621
        %s4497 = sld [smem:[#allocation8 + $0x3e]]
        %v4498 = vstv %s4497
        %v4499 = vmul.f32 %v4498, %v3619
        %v4500 = vmul.f32 %v4498, %v3620
        %v4501 = vmul.f32 %v4498, %v3621
        %s4502 = sld [smem:[#allocation8 + $0x3f]]
        %v4503 = vstv %s4502
        %v4504 = vmul.f32 %v4503, %v3622
        %v4505 = vmul.f32 %v4503, %v3623
        %s4506 = sld [smem:[#allocation8 + $0x40]]
        %v4507 = vstv %s4506
        %v4508 = vmul.f32 %v4507, %v3622
        %v4509 = vmul.f32 %v4507, %v3623
        %s4510 = sld [smem:[#allocation8 + $0x41]]
        %v4511 = vstv %s4510
        %v4512 = vmul.f32 %v4511, %v3622
        %v4513 = vmul.f32 %v4511, %v3623
        %s4514 = sld [smem:[#allocation8 + $0x42]]
        %v4515 = vstv %s4514
        %v4516 = vmul.f32 %v4515, %v3622
        %v4517 = vmul.f32 %v4515, %v3623
        %v4518 = vmul.f32 %v4515, %v3624
        %s4519 = sld [smem:[#allocation8 + $0x43]]
        %v4520 = vstv %s4519
        %v4521 = vmul.f32 %v4520, %v3622
        %v4522 = vmul.f32 %v4520, %v3623
        %v4523 = vmul.f32 %v4520, %v3624
        %s4524 = sld [smem:[#allocation8 + $0x44]]
        %v4525 = vstv %s4524
        %v4526 = vmul.f32 %v4525, %v3622
        %v4527 = vmul.f32 %v4525, %v3623
        %v4528 = vmul.f32 %v4525, %v3624
        %s4529 = sld [smem:[#allocation8 + $0x45]]
        %v4530 = vstv %s4529
        %v4531 = vmul.f32 %v4530, %v3622
        %v4532 = vmul.f32 %v4530, %v3623
        %v4533 = vmul.f32 %v4530, %v3624
        %s4534 = sld [smem:[#allocation8 + $0x46]]
        %v4535 = vstv %s4534
        %v4536 = vmul.f32 %v4535, %v3622
        %v4537 = vmul.f32 %v4535, %v3623
        %v4538 = vmul.f32 %v4535, %v3624
        %s4539 = sld [smem:[#allocation8 + $0x47]]
        %v4540 = vstv %s4539
        %v4541 = vmul.f32 %v4540, %v3622
        %v4542 = vmul.f32 %v4540, %v3623
        %v4543 = vmul.f32 %v4540, %v3624
        %4546 = vrot.lane.b32.xlu0 %v4382, 127
        %v4547 = vpop.permute.xlu0 %4546
        %4548 = vrot.lane.b32.xlu0 %v4383, 127
        %v4549 = vpop.permute.xlu0 %4548
        %v4552 = vadd.f32 %v4378, %v4547
        %v4553 = vadd.f32 %v4379, %v4549
        %v4557 = vrot.slane %v4390, 1
        %v4558 = vrot.slane %v4391, 1
        %v4559 = vsel %vm598, %v4557, %v4558
        %v4560 = vrot.slane %v4392, 1
        %v4561 = vsel %vm598, %v4558, %v4560
        %4562 = vrot.lane.b32.xlu0 %v4559, 2
        %v4563 = vpop.permute.xlu0 %4562
        %4564 = vrot.lane.b32.xlu0 %v4561, 2
        %v4565 = vpop.permute.xlu0 %4564
        %v4568 = vadd.f32 %v4386, %v4563
        %v4569 = vadd.f32 %v4387, %v4565
        %4573 = vrot.lane.b32.xlu0 %v4400, 127
        %v4574 = vpop.permute.xlu0 %4573
        %4575 = vrot.lane.b32.xlu0 %v4401, 127
        %v4576 = vpop.permute.xlu0 %4575
        %4577 = vrot.lane.b32.xlu0 %v4402, 127
        %v4578 = vpop.permute.xlu0 %4577
        %v4582 = vadd.f32 %v4395, %v4574
        %v4583 = vadd.f32 %v4396, %v4576
        %v4584 = vadd.f32 %v4397, %v4578
        %4588 = vrot.lane.b32.xlu0 %v4410, 127
        %v4589 = vpop.permute.xlu0 %4588
        %4590 = vrot.lane.b32.xlu0 %v4411, 127
        %v4591 = vpop.permute.xlu0 %4590
        %4592 = vrot.lane.b32.xlu0 %v4412, 127
        %v4593 = vpop.permute.xlu0 %4592
        %v4597 = vadd.f32 %v4405, %v4589
        %v4598 = vadd.f32 %v4406, %v4591
        %v4599 = vadd.f32 %v4407, %v4593
        %v4602 = vrot.slane %v4420, 6
        %v4603 = vrot.slane %v4421, 6
        %v4604 = vsel %vm644, %v4602, %v4603
        %4605 = vrot.lane.b32.xlu0 %v4602, 2
        %v4606 = vpop.permute.xlu0 %4605
        %4607 = vrot.lane.b32.xlu0 %v4604, 2
        %v4608 = vpop.permute.xlu0 %4607
        %4609 = vrot.lane.b32.xlu0 %v4603, 2
        %v4610 = vpop.permute.xlu0 %4609
        %v4614 = vadd.f32 %v4415, %v4606
        %v4615 = vadd.f32 %v4416, %v4608
        %v4616 = vadd.f32 %v4417, %v4610
        %4619 = vrot.lane.b32.xlu0 %v4428, 127
        %v4620 = vpop.permute.xlu0 %4619
        %4621 = vrot.lane.b32.xlu0 %v4429, 127
        %v4622 = vpop.permute.xlu0 %4621
        %v4625 = vadd.f32 %v4424, %v4620
        %v4626 = vadd.f32 %v4425, %v4622
        %4630 = vrot.lane.b32.xlu0 %v4437, 127
        %v4631 = vpop.permute.xlu0 %4630
        %4632 = vrot.lane.b32.xlu0 %v4438, 127
        %v4633 = vpop.permute.xlu0 %4632
        %4634 = vrot.lane.b32.xlu0 %v4439, 127
        %v4635 = vpop.permute.xlu0 %4634
        %v4639 = vadd.f32 %v4432, %v4631
        %v4640 = vadd.f32 %v4433, %v4633
        %v4641 = vadd.f32 %v4434, %v4635
        %v4645 = vrot.slane %v4447, 1
        %v4646 = vrot.slane %v4448, 1
        %v4647 = vsel %vm598, %v4645, %v4646
        %v4648 = vrot.slane %v4449, 1
        %v4649 = vsel %vm598, %v4646, %v4648
        %4650 = vrot.lane.b32.xlu0 %v4647, 2
        %v4651 = vpop.permute.xlu0 %4650
        %4652 = vrot.lane.b32.xlu0 %v4649, 2
        %v4653 = vpop.permute.xlu0 %4652
        %4654 = vrot.lane.b32.xlu0 %v4648, 2
        %v4655 = vpop.permute.xlu0 %4654
        %v4659 = vadd.f32 %v4442, %v4651
        %v4660 = vadd.f32 %v4443, %v4653
        %v4661 = vadd.f32 %v4444, %v4655
        %4665 = vrot.lane.b32.xlu0 %v4457, 127
        %v4666 = vpop.permute.xlu0 %4665
        %4667 = vrot.lane.b32.xlu0 %v4458, 127
        %v4668 = vpop.permute.xlu0 %4667
        %4669 = vrot.lane.b32.xlu0 %v4459, 127
        %v4670 = vpop.permute.xlu0 %4669
        %v4674 = vadd.f32 %v4452, %v4666
        %v4675 = vadd.f32 %v4453, %v4668
        %v4676 = vadd.f32 %v4454, %v4670
        %4679 = vrot.lane.b32.xlu0 %v4466, 127
        %v4680 = vpop.permute.xlu0 %4679
        %4681 = vrot.lane.b32.xlu0 %v4467, 127
        %v4682 = vpop.permute.xlu0 %4681
        %v4685 = vadd.f32 %v4462, %v4680
        %v4686 = vadd.f32 %v4463, %v4682
        %v4690 = vrot.slane %v4474, 1
        %v4691 = vrot.slane %v4475, 1
        %v4692 = vsel %vm598, %v4690, %v4691
        %v4693 = vrot.slane %v4476, 1
        %v4694 = vsel %vm598, %v4691, %v4693
        %4695 = vrot.lane.b32.xlu0 %v4692, 2
        %v4696 = vpop.permute.xlu0 %4695
        %4697 = vrot.lane.b32.xlu0 %v4694, 2
        %v4698 = vpop.permute.xlu0 %4697
        %v4701 = vadd.f32 %v4470, %v4696
        %v4702 = vadd.f32 %v4471, %v4698
        %4706 = vrot.lane.b32.xlu0 %v4484, 127
        %v4707 = vpop.permute.xlu0 %4706
        %4708 = vrot.lane.b32.xlu0 %v4485, 127
        %v4709 = vpop.permute.xlu0 %4708
        %4710 = vrot.lane.b32.xlu0 %v4486, 127
        %v4711 = vpop.permute.xlu0 %4710
        %v4715 = vadd.f32 %v4479, %v4707
        %v4716 = vadd.f32 %v4480, %v4709
        %v4717 = vadd.f32 %v4481, %v4711
        %4721 = vrot.lane.b32.xlu0 %v4494, 127
        %v4722 = vpop.permute.xlu0 %4721
        %4723 = vrot.lane.b32.xlu0 %v4495, 127
        %v4724 = vpop.permute.xlu0 %4723
        %4725 = vrot.lane.b32.xlu0 %v4496, 127
        %v4726 = vpop.permute.xlu0 %4725
        %v4730 = vadd.f32 %v4489, %v4722
        %v4731 = vadd.f32 %v4490, %v4724
        %v4732 = vadd.f32 %v4491, %v4726
        %v4735 = vrot.slane %v4504, 6
        %v4736 = vrot.slane %v4505, 6
        %v4737 = vsel %vm644, %v4735, %v4736
        %4738 = vrot.lane.b32.xlu0 %v4735, 2
        %v4739 = vpop.permute.xlu0 %4738
        %4740 = vrot.lane.b32.xlu0 %v4737, 2
        %v4741 = vpop.permute.xlu0 %4740
        %4742 = vrot.lane.b32.xlu0 %v4736, 2
        %v4743 = vpop.permute.xlu0 %4742
        %v4747 = vadd.f32 %v4499, %v4739
        %v4748 = vadd.f32 %v4500, %v4741
        %v4749 = vadd.f32 %v4501, %v4743
        %4752 = vrot.lane.b32.xlu0 %v4512, 127
        %v4753 = vpop.permute.xlu0 %4752
        %4754 = vrot.lane.b32.xlu0 %v4513, 127
        %v4755 = vpop.permute.xlu0 %4754
        %v4758 = vadd.f32 %v4508, %v4753
        %v4759 = vadd.f32 %v4509, %v4755
        %4763 = vrot.lane.b32.xlu0 %v4521, 127
        %v4764 = vpop.permute.xlu0 %4763
        %4765 = vrot.lane.b32.xlu0 %v4522, 127
        %v4766 = vpop.permute.xlu0 %4765
        %4767 = vrot.lane.b32.xlu0 %v4523, 127
        %v4768 = vpop.permute.xlu0 %4767
        %v4772 = vadd.f32 %v4516, %v4764
        %v4773 = vadd.f32 %v4517, %v4766
        %v4774 = vadd.f32 %v4518, %v4768
        %v4778 = vrot.slane %v4531, 1
        %v4779 = vrot.slane %v4532, 1
        %v4780 = vsel %vm598, %v4778, %v4779
        %v4781 = vrot.slane %v4533, 1
        %v4782 = vsel %vm598, %v4779, %v4781
        %4783 = vrot.lane.b32.xlu0 %v4780, 2
        %v4784 = vpop.permute.xlu0 %4783
        %4785 = vrot.lane.b32.xlu0 %v4782, 2
        %v4786 = vpop.permute.xlu0 %4785
        %4787 = vrot.lane.b32.xlu0 %v4781, 2
        %v4788 = vpop.permute.xlu0 %4787
        %v4792 = vadd.f32 %v4526, %v4784
        %v4793 = vadd.f32 %v4527, %v4786
        %v4794 = vadd.f32 %v4528, %v4788
        %4798 = vrot.lane.b32.xlu0 %v4541, 127
        %v4799 = vpop.permute.xlu0 %4798
        %4800 = vrot.lane.b32.xlu0 %v4542, 127
        %v4801 = vpop.permute.xlu0 %4800
        %4802 = vrot.lane.b32.xlu0 %v4543, 127
        %v4803 = vpop.permute.xlu0 %4802
        %v4807 = vadd.f32 %v4536, %v4799
        %v4808 = vadd.f32 %v4537, %v4801
        %v4809 = vadd.f32 %v4538, %v4803
        %4812 = vrot.lane.b32.xlu0 %v4568, 126
        %v4813 = vpop.permute.xlu0 %4812
        %4814 = vrot.lane.b32.xlu0 %v4569, 126
        %v4815 = vpop.permute.xlu0 %4814
        %v4818 = vadd.f32 %v4552, %v4813
        %v4819 = vadd.f32 %v4553, %v4815
        %v4823 = vrot.slane %v4597, 1
        %v4824 = vrot.slane %v4598, 1
        %v4825 = vsel %vm598, %v4823, %v4824
        %v4826 = vrot.slane %v4599, 1
        %v4827 = vsel %vm598, %v4824, %v4826
        %4828 = vrot.lane.b32.xlu0 %v4825, 1
        %v4829 = vpop.permute.xlu0 %4828
        %4830 = vrot.lane.b32.xlu0 %v4827, 1
        %v4831 = vpop.permute.xlu0 %4830
        %4832 = vrot.lane.b32.xlu0 %v4826, 1
        %v4833 = vpop.permute.xlu0 %4832
        %v4837 = vadd.f32 %v4582, %v4829
        %v4838 = vadd.f32 %v4583, %v4831
        %v4839 = vadd.f32 %v4584, %v4833
        %v4842 = vrot.slane %v4625, 6
        %v4843 = vrot.slane %v4626, 6
        %v4844 = vsel %vm644, %v4842, %v4843
        %4845 = vrot.lane.b32.xlu0 %v4842, 1
        %v4846 = vpop.permute.xlu0 %4845
        %4847 = vrot.lane.b32.xlu0 %v4844, 1
        %v4848 = vpop.permute.xlu0 %4847
        %4849 = vrot.lane.b32.xlu0 %v4843, 1
        %v4850 = vpop.permute.xlu0 %4849
        %v4854 = vadd.f32 %v4614, %v4846
        %v4855 = vadd.f32 %v4615, %v4848
        %v4856 = vadd.f32 %v4616, %v4850
        %4860 = vrot.lane.b32.xlu0 %v4659, 126
        %v4861 = vpop.permute.xlu0 %4860
        %4862 = vrot.lane.b32.xlu0 %v4660, 126
        %v4863 = vpop.permute.xlu0 %4862
        %4864 = vrot.lane.b32.xlu0 %v4661, 126
        %v4865 = vpop.permute.xlu0 %4864
        %v4869 = vadd.f32 %v4639, %v4861
        %v4870 = vadd.f32 %v4640, %v4863
        %v4871 = vadd.f32 %v4641, %v4865
        %v4874 = vrot.slane %v4685, 6
        %v4875 = vrot.slane %v4686, 6
        %v4876 = vsel %vm644, %v4874, %v4875
        %4877 = vrot.lane.b32.xlu0 %v4874, 1
        %v4878 = vpop.permute.xlu0 %4877
        %4879 = vrot.lane.b32.xlu0 %v4876, 1
        %v4880 = vpop.permute.xlu0 %4879
        %4881 = vrot.lane.b32.xlu0 %v4875, 1
        %v4882 = vpop.permute.xlu0 %4881
        %v4886 = vadd.f32 %v4674, %v4878
        %v4887 = vadd.f32 %v4675, %v4880
        %v4888 = vadd.f32 %v4676, %v4882
        %v4892 = vrot.slane %v4715, 1
        %v4893 = vrot.slane %v4716, 1
        %v4894 = vsel %vm598, %v4892, %v4893
        %v4895 = vrot.slane %v4717, 1
        %v4896 = vsel %vm598, %v4893, %v4895
        %4897 = vrot.lane.b32.xlu0 %v4894, 1
        %v4898 = vpop.permute.xlu0 %4897
        %4899 = vrot.lane.b32.xlu0 %v4896, 1
        %v4900 = vpop.permute.xlu0 %4899
        %v4903 = vadd.f32 %v4701, %v4898
        %v4904 = vadd.f32 %v4702, %v4900
        %4908 = vrot.lane.b32.xlu0 %v4747, 126
        %v4909 = vpop.permute.xlu0 %4908
        %4910 = vrot.lane.b32.xlu0 %v4748, 126
        %v4911 = vpop.permute.xlu0 %4910
        %4912 = vrot.lane.b32.xlu0 %v4749, 126
        %v4913 = vpop.permute.xlu0 %4912
        %v4917 = vadd.f32 %v4730, %v4909
        %v4918 = vadd.f32 %v4731, %v4911
        %v4919 = vadd.f32 %v4732, %v4913
        %v4923 = vrot.slane %v4772, 1
        %v4924 = vrot.slane %v4773, 1
        %v4925 = vsel %vm598, %v4923, %v4924
        %v4926 = vrot.slane %v4774, 1
        %v4927 = vsel %vm598, %v4924, %v4926
        %4928 = vrot.lane.b32.xlu0 %v4925, 1
        %v4929 = vpop.permute.xlu0 %4928
        %4930 = vrot.lane.b32.xlu0 %v4927, 1
        %v4931 = vpop.permute.xlu0 %4930
        %v4934 = vadd.f32 %v4758, %v4929
        %v4935 = vadd.f32 %v4759, %v4931
        %v4939 = vrot.slane %v4807, 1
        %v4940 = vrot.slane %v4808, 1
        %v4941 = vsel %vm598, %v4939, %v4940
        %v4942 = vrot.slane %v4809, 1
        %v4943 = vsel %vm598, %v4940, %v4942
        %4944 = vrot.lane.b32.xlu0 %v4941, 1
        %v4945 = vpop.permute.xlu0 %4944
        %4946 = vrot.lane.b32.xlu0 %v4943, 1
        %v4947 = vpop.permute.xlu0 %4946
        %4948 = vrot.lane.b32.xlu0 %v4942, 1
        %v4949 = vpop.permute.xlu0 %4948
        %v4953 = vadd.f32 %v4792, %v4945
        %v4954 = vadd.f32 %v4793, %v4947
        %v4955 = vadd.f32 %v4794, %v4949
        %v4959 = vrot.slane %v4837, 1
        %v4960 = vrot.slane %v4838, 1
        %v4961 = vsel %vm598, %v4959, %v4960
        %v4962 = vrot.slane %v4839, 1
        %v4963 = vsel %vm598, %v4960, %v4962
        %4964 = vrot.lane.b32.xlu0 %v4961, 127
        %v4965 = vpop.permute.xlu0 %4964
        %4966 = vrot.lane.b32.xlu0 %v4963, 127
        %v4967 = vpop.permute.xlu0 %4966
        %v4970 = vadd.f32 %v4818, %v4965
        %v4971 = vadd.f32 %v4819, %v4967
        %v4975 = vrot.slane %v4869, 7
        %v4976 = vrot.slane %v4870, 7
        %v4977 = vsel %vm238, %v4975, %v4976
        %v4978 = vrot.slane %v4871, 7
        %v4979 = vsel %vm238, %v4976, %v4978
        %4980 = vrot.lane.b32.xlu0 %v4975, 2
        %v4981 = vpop.permute.xlu0 %4980
        %4982 = vrot.lane.b32.xlu0 %v4977, 2
        %v4983 = vpop.permute.xlu0 %4982
        %4984 = vrot.lane.b32.xlu0 %v4979, 2
        %v4985 = vpop.permute.xlu0 %4984
        %v4989 = vadd.f32 %v4854, %v4981
        %v4990 = vadd.f32 %v4855, %v4983
        %v4991 = vadd.f32 %v4856, %v4985
        %v4994 = vrot.slane %v4903, 6
        %v4995 = vrot.slane %v4904, 6
        %v4996 = vsel %vm644, %v4994, %v4995
        %4997 = vrot.lane.b32.xlu0 %v4994, 127
        %v4998 = vpop.permute.xlu0 %4997
        %4999 = vrot.lane.b32.xlu0 %v4996, 127
        %v5000 = vpop.permute.xlu0 %4999
        %5001 = vrot.lane.b32.xlu0 %v4995, 127
        %v5002 = vpop.permute.xlu0 %5001
        %v5006 = vadd.f32 %v4886, %v4998
        %v5007 = vadd.f32 %v4887, %v5000
        %v5008 = vadd.f32 %v4888, %v5002
        %v5011 = vrot.slane %v4934, 6
        %v5012 = vrot.slane %v4935, 6
        %v5013 = vsel %vm644, %v5011, %v5012
        %5014 = vrot.lane.b32.xlu0 %v5011, 127
        %v5015 = vpop.permute.xlu0 %5014
        %5016 = vrot.lane.b32.xlu0 %v5013, 127
        %v5017 = vpop.permute.xlu0 %5016
        %5018 = vrot.lane.b32.xlu0 %v5012, 127
        %v5019 = vpop.permute.xlu0 %5018
        %v5023 = vadd.f32 %v4917, %v5015
        %v5024 = vadd.f32 %v4918, %v5017
        %v5025 = vadd.f32 %v4919, %v5019
        %v5029 = vrot.slane %v4989, 2
        %v5030 = vrot.slane %v4990, 2
        %v5031 = vsel %vm1072, %v5029, %v5030
        %v5032 = vrot.slane %v4991, 2
        %v5033 = vsel %vm1072, %v5030, %v5032
        %5034 = vrot.lane.b32.xlu0 %v5031, 126
        %v5035 = vpop.permute.xlu0 %5034
        %5036 = vrot.lane.b32.xlu0 %v5033, 126
        %v5037 = vpop.permute.xlu0 %5036
        %v5040 = vadd.f32 %v4970, %v5035
        %v5041 = vadd.f32 %v4971, %v5037
        %5045 = vrot.lane.b32.xlu0 %v5023, 1
        %v5046 = vpop.permute.xlu0 %5045
        %5047 = vrot.lane.b32.xlu0 %v5024, 1
        %v5048 = vpop.permute.xlu0 %5047
        %5049 = vrot.lane.b32.xlu0 %v5025, 1
        %v5050 = vpop.permute.xlu0 %5049
        %v5054 = vadd.f32 %v5006, %v5046
        %v5055 = vadd.f32 %v5007, %v5048
        %v5056 = vadd.f32 %v5008, %v5050
        %v5060 = vrot.slane %v5054, 2
        %v5061 = vrot.slane %v5055, 2
        %v5062 = vsel %vm1072, %v5060, %v5061
        %v5063 = vrot.slane %v5056, 2
        %v5064 = vsel %vm1072, %v5061, %v5063
        %5065 = vrot.lane.b32.xlu0 %v5062, 127
        %v5066 = vpop.permute.xlu0 %5065
        %5067 = vrot.lane.b32.xlu0 %v5064, 127
        %v5068 = vpop.permute.xlu0 %5067
        %v5071 = vadd.f32 %v5040, %v5066
        %v5072 = vadd.f32 %v5041, %v5068
        %v5076 = vrot.slane %v4953, 1
        %v5077 = vrot.slane %v4954, 1
        %v5078 = vsel %vm598, %v5076, %v5077
        %v5079 = vrot.slane %v4955, 1
        %v5080 = vsel %vm598, %v5077, %v5079
        %5081 = vrot.lane.b32.xlu0 %v5078, 126
        %v5082 = vpop.permute.xlu0 %5081
        %5083 = vrot.lane.b32.xlu0 %v5080, 126
        %v5084 = vpop.permute.xlu0 %5083
        %v5087 = vadd.f32 %v5071, %v5082
        %v5088 = vadd.f32 %v5072, %v5084
        %v5089 = vsel %vm1133, %v5087, 0.0
        %v5090 = vsel %vm1133, %v5088, 0.0
        %v5091 = vadd.f32 %v5089, %v5090
        %5092 = vadd.xlane.f32.xlu0 %v5091
        %v5093 = vpop.xlane.xlu0 %5092
        %v5094 = vrot.slane %v5093, 4
        %v5095 = vadd.f32 %v5093, %v5094
        %v5096 = vrot.slane %v5095, 2
        %v5097 = vadd.f32 %v5095, %v5096
        %v5098 = vrot.slane %v5097, 1
        %v5099 = vadd.f32 %v5097, %v5098
        %s5100 = vtos %v5099
        %v5101 = vstv %s5100
        %v5102 = vmul.f32 %v5101, 0.00390625
        %v5103 = vmul.f32 %v5087, %v5087
        %v5104 = vmul.f32 %v5088, %v5088
        %v5105 = vsel %vm1133, %v5103, 0.0
        %v5106 = vsel %vm1133, %v5104, 0.0
        %v5107 = vadd.f32 %v5105, %v5106
        %5108 = vadd.xlane.f32.xlu0 %v5107
        %v5109 = vpop.xlane.xlu0 %5108
        %v5110 = vrot.slane %v5109, 4
        %v5111 = vadd.f32 %v5109, %v5110
        %v5112 = vrot.slane %v5111, 2
        %v5113 = vadd.f32 %v5111, %v5112
        %v5114 = vrot.slane %v5113, 1
        %v5115 = vadd.f32 %v5113, %v5114
        %s5116 = vtos %v5115
        %v5117 = vstv %s5116
        %v5118 = vmul.f32 %v5117, 0.00390625
        %v5119 = vmul.f32 %v5102, %v5102
        %v5120 = vsub.f32 %v5118, %v5119
        %v5121 = vsub.f32 %v5087, %v5102
        %v5122 = vsub.f32 %v5088, %v5102
        %v5123 = vadd.f32 %v5120, 1e-05
        %v5124 = vrsqrt.pop %v5123
        %v5125 = vmul.f32 %v5121, %v5124
        %v5126 = vmul.f32 %v5122, %v5124
        %s5127 = sld [smem:[#allocation8 + $0x48]]
        %v5128 = vstv %s5127
        %v5129 = vmul.f32 %v5128, %v3613
        %v5130 = vmul.f32 %v5128, %v3614
        %s5131 = sld [smem:[#allocation8 + $0x49]]
        %v5132 = vstv %s5131
        %v5133 = vmul.f32 %v5132, %v3613
        %v5134 = vmul.f32 %v5132, %v3614
        %s5135 = sld [smem:[#allocation8 + $0x4a]]
        %v5136 = vstv %s5135
        %v5137 = vmul.f32 %v5136, %v3613
        %v5138 = vmul.f32 %v5136, %v3614
        %s5139 = sld [smem:[#allocation8 + $0x4b]]
        %v5140 = vstv %s5139
        %v5141 = vmul.f32 %v5140, %v3613
        %v5142 = vmul.f32 %v5140, %v3614
        %v5143 = vmul.f32 %v5140, %v3615
        %s5144 = sld [smem:[#allocation8 + $0x4c]]
        %v5145 = vstv %s5144
        %v5146 = vmul.f32 %v5145, %v3613
        %v5147 = vmul.f32 %v5145, %v3614
        %v5148 = vmul.f32 %v5145, %v3615
        %s5149 = sld [smem:[#allocation8 + $0x4d]]
        %v5150 = vstv %s5149
        %v5151 = vmul.f32 %v5150, %v3613
        %v5152 = vmul.f32 %v5150, %v3614
        %v5153 = vmul.f32 %v5150, %v3615
        %s5154 = sld [smem:[#allocation8 + $0x4e]]
        %v5155 = vstv %s5154
        %v5156 = vmul.f32 %v5155, %v3613
        %v5157 = vmul.f32 %v5155, %v3614
        %v5158 = vmul.f32 %v5155, %v3615
        %s5159 = sld [smem:[#allocation8 + $0x4f]]
        %v5160 = vstv %s5159
        %v5161 = vmul.f32 %v5160, %v3613
        %v5162 = vmul.f32 %v5160, %v3614
        %v5163 = vmul.f32 %v5160, %v3615
        %s5164 = sld [smem:[#allocation8 + $0x50]]
        %v5165 = vstv %s5164
        %v5166 = vmul.f32 %v5165, %v3613
        %v5167 = vmul.f32 %v5165, %v3614
        %v5168 = vmul.f32 %v5165, %v3615
        %s5169 = sld [smem:[#allocation8 + $0x51]]
        %v5170 = vstv %s5169
        %v5171 = vmul.f32 %v5170, %v3616
        %v5172 = vmul.f32 %v5170, %v3617
        %s5173 = sld [smem:[#allocation8 + $0x52]]
        %v5174 = vstv %s5173
        %v5175 = vmul.f32 %v5174, %v3616
        %v5176 = vmul.f32 %v5174, %v3617
        %s5177 = sld [smem:[#allocation8 + $0x53]]
        %v5178 = vstv %s5177
        %v5179 = vmul.f32 %v5178, %v3616
        %v5180 = vmul.f32 %v5178, %v3617
        %s5181 = sld [smem:[#allocation8 + $0x54]]
        %v5182 = vstv %s5181
        %v5183 = vmul.f32 %v5182, %v3616
        %v5184 = vmul.f32 %v5182, %v3617
        %v5185 = vmul.f32 %v5182, %v3618
        %s5186 = sld [smem:[#allocation8 + $0x55]]
        %v5187 = vstv %s5186
        %v5188 = vmul.f32 %v5187, %v3616
        %v5189 = vmul.f32 %v5187, %v3617
        %v5190 = vmul.f32 %v5187, %v3618
        %s5191 = sld [smem:[#allocation8 + $0x56]]
        %v5192 = vstv %s5191
        %v5193 = vmul.f32 %v5192, %v3616
        %v5194 = vmul.f32 %v5192, %v3617
        %v5195 = vmul.f32 %v5192, %v3618
        %s5196 = sld [smem:[#allocation8 + $0x57]]
        %v5197 = vstv %s5196
        %v5198 = vmul.f32 %v5197, %v3616
        %v5199 = vmul.f32 %v5197, %v3617
        %v5200 = vmul.f32 %v5197, %v3618
        %s5201 = sld [smem:[#allocation8 + $0x58]]
        %v5202 = vstv %s5201
        %v5203 = vmul.f32 %v5202, %v3616
        %v5204 = vmul.f32 %v5202, %v3617
        %v5205 = vmul.f32 %v5202, %v3618
        %s5206 = sld [smem:[#allocation8 + $0x59]]
        %v5207 = vstv %s5206
        %v5208 = vmul.f32 %v5207, %v3616
        %v5209 = vmul.f32 %v5207, %v3617
        %v5210 = vmul.f32 %v5207, %v3618
        %s5211 = sld [smem:[#allocation8 + $0x5a]]
        %v5212 = vstv %s5211
        %v5213 = vmul.f32 %v5212, %v3619
        %v5214 = vmul.f32 %v5212, %v3620
        %s5215 = sld [smem:[#allocation8 + $0x5b]]
        %v5216 = vstv %s5215
        %v5217 = vmul.f32 %v5216, %v3619
        %v5218 = vmul.f32 %v5216, %v3620
        %s5219 = sld [smem:[#allocation8 + $0x5c]]
        %v5220 = vstv %s5219
        %v5221 = vmul.f32 %v5220, %v3619
        %v5222 = vmul.f32 %v5220, %v3620
        %s5223 = sld [smem:[#allocation8 + $0x5d]]
        %v5224 = vstv %s5223
        %v5225 = vmul.f32 %v5224, %v3619
        %v5226 = vmul.f32 %v5224, %v3620
        %v5227 = vmul.f32 %v5224, %v3621
        %s5228 = sld [smem:[#allocation8 + $0x5e]]
        %v5229 = vstv %s5228
        %v5230 = vmul.f32 %v5229, %v3619
        %v5231 = vmul.f32 %v5229, %v3620
        %v5232 = vmul.f32 %v5229, %v3621
        %s5233 = sld [smem:[#allocation8 + $0x5f]]
        %v5234 = vstv %s5233
        %v5235 = vmul.f32 %v5234, %v3619
        %v5236 = vmul.f32 %v5234, %v3620
        %v5237 = vmul.f32 %v5234, %v3621
        %s5238 = sld [smem:[#allocation8 + $0x60]]
        %v5239 = vstv %s5238
        %v5240 = vmul.f32 %v5239, %v3619
        %v5241 = vmul.f32 %v5239, %v3620
        %v5242 = vmul.f32 %v5239, %v3621
        %s5243 = sld [smem:[#allocation8 + $0x61]]
        %v5244 = vstv %s5243
        %v5245 = vmul.f32 %v5244, %v3619
        %v5246 = vmul.f32 %v5244, %v3620
        %v5247 = vmul.f32 %v5244, %v3621
        %s5248 = sld [smem:[#allocation8 + $0x62]]
        %v5249 = vstv %s5248
        %v5250 = vmul.f32 %v5249, %v3619
        %v5251 = vmul.f32 %v5249, %v3620
        %v5252 = vmul.f32 %v5249, %v3621
        %s5253 = sld [smem:[#allocation8 + $0x63]]
        %v5254 = vstv %s5253
        %v5255 = vmul.f32 %v5254, %v3622
        %v5256 = vmul.f32 %v5254, %v3623
        %s5257 = sld [smem:[#allocation8 + $0x64]]
        %v5258 = vstv %s5257
        %v5259 = vmul.f32 %v5258, %v3622
        %v5260 = vmul.f32 %v5258, %v3623
        %s5261 = sld [smem:[#allocation8 + $0x65]]
        %v5262 = vstv %s5261
        %v5263 = vmul.f32 %v5262, %v3622
        %v5264 = vmul.f32 %v5262, %v3623
        %s5265 = sld [smem:[#allocation8 + $0x66]]
        %v5266 = vstv %s5265
        %v5267 = vmul.f32 %v5266, %v3622
        %v5268 = vmul.f32 %v5266, %v3623
        %v5269 = vmul.f32 %v5266, %v3624
        %s5270 = sld [smem:[#allocation8 + $0x67]]
        %v5271 = vstv %s5270
        %v5272 = vmul.f32 %v5271, %v3622
        %v5273 = vmul.f32 %v5271, %v3623
        %v5274 = vmul.f32 %v5271, %v3624
        %s5275 = sld [smem:[#allocation8 + $0x68]]
        %v5276 = vstv %s5275
        %v5277 = vmul.f32 %v5276, %v3622
        %v5278 = vmul.f32 %v5276, %v3623
        %v5279 = vmul.f32 %v5276, %v3624
        %s5280 = sld [smem:[#allocation8 + $0x69]]
        %v5281 = vstv %s5280
        %v5282 = vmul.f32 %v5281, %v3622
        %v5283 = vmul.f32 %v5281, %v3623
        %v5284 = vmul.f32 %v5281, %v3624
        %s5285 = sld [smem:[#allocation8 + $0x6a]]
        %v5286 = vstv %s5285
        %v5287 = vmul.f32 %v5286, %v3622
        %v5288 = vmul.f32 %v5286, %v3623
        %v5289 = vmul.f32 %v5286, %v3624
        %s5290 = sld [smem:[#allocation8 + $0x6b]]
        %v5291 = vstv %s5290
        %v5292 = vmul.f32 %v5291, %v3622
        %v5293 = vmul.f32 %v5291, %v3623
        %v5294 = vmul.f32 %v5291, %v3624
        %5297 = vrot.lane.b32.xlu0 %v5133, 127
        %v5298 = vpop.permute.xlu0 %5297
        %5299 = vrot.lane.b32.xlu0 %v5134, 127
        %v5300 = vpop.permute.xlu0 %5299
        %v5303 = vadd.f32 %v5129, %v5298
        %v5304 = vadd.f32 %v5130, %v5300
        %v5308 = vrot.slane %v5141, 1
        %v5309 = vrot.slane %v5142, 1
        %v5310 = vsel %vm598, %v5308, %v5309
        %v5311 = vrot.slane %v5143, 1
        %v5312 = vsel %vm598, %v5309, %v5311
        %5313 = vrot.lane.b32.xlu0 %v5310, 2
        %v5314 = vpop.permute.xlu0 %5313
        %5315 = vrot.lane.b32.xlu0 %v5312, 2
        %v5316 = vpop.permute.xlu0 %5315
        %v5319 = vadd.f32 %v5137, %v5314
        %v5320 = vadd.f32 %v5138, %v5316
        %5324 = vrot.lane.b32.xlu0 %v5151, 127
        %v5325 = vpop.permute.xlu0 %5324
        %5326 = vrot.lane.b32.xlu0 %v5152, 127
        %v5327 = vpop.permute.xlu0 %5326
        %5328 = vrot.lane.b32.xlu0 %v5153, 127
        %v5329 = vpop.permute.xlu0 %5328
        %v5333 = vadd.f32 %v5146, %v5325
        %v5334 = vadd.f32 %v5147, %v5327
        %v5335 = vadd.f32 %v5148, %v5329
        %5339 = vrot.lane.b32.xlu0 %v5161, 127
        %v5340 = vpop.permute.xlu0 %5339
        %5341 = vrot.lane.b32.xlu0 %v5162, 127
        %v5342 = vpop.permute.xlu0 %5341
        %5343 = vrot.lane.b32.xlu0 %v5163, 127
        %v5344 = vpop.permute.xlu0 %5343
        %v5348 = vadd.f32 %v5156, %v5340
        %v5349 = vadd.f32 %v5157, %v5342
        %v5350 = vadd.f32 %v5158, %v5344
        %v5353 = vrot.slane %v5171, 6
        %v5354 = vrot.slane %v5172, 6
        %v5355 = vsel %vm644, %v5353, %v5354
        %5356 = vrot.lane.b32.xlu0 %v5353, 2
        %v5357 = vpop.permute.xlu0 %5356
        %5358 = vrot.lane.b32.xlu0 %v5355, 2
        %v5359 = vpop.permute.xlu0 %5358
        %5360 = vrot.lane.b32.xlu0 %v5354, 2
        %v5361 = vpop.permute.xlu0 %5360
        %v5365 = vadd.f32 %v5166, %v5357
        %v5366 = vadd.f32 %v5167, %v5359
        %v5367 = vadd.f32 %v5168, %v5361
        %5370 = vrot.lane.b32.xlu0 %v5179, 127
        %v5371 = vpop.permute.xlu0 %5370
        %5372 = vrot.lane.b32.xlu0 %v5180, 127
        %v5373 = vpop.permute.xlu0 %5372
        %v5376 = vadd.f32 %v5175, %v5371
        %v5377 = vadd.f32 %v5176, %v5373
        %5381 = vrot.lane.b32.xlu0 %v5188, 127
        %v5382 = vpop.permute.xlu0 %5381
        %5383 = vrot.lane.b32.xlu0 %v5189, 127
        %v5384 = vpop.permute.xlu0 %5383
        %5385 = vrot.lane.b32.xlu0 %v5190, 127
        %v5386 = vpop.permute.xlu0 %5385
        %v5390 = vadd.f32 %v5183, %v5382
        %v5391 = vadd.f32 %v5184, %v5384
        %v5392 = vadd.f32 %v5185, %v5386
        %v5396 = vrot.slane %v5198, 1
        %v5397 = vrot.slane %v5199, 1
        %v5398 = vsel %vm598, %v5396, %v5397
        %v5399 = vrot.slane %v5200, 1
        %v5400 = vsel %vm598, %v5397, %v5399
        %5401 = vrot.lane.b32.xlu0 %v5398, 2
        %v5402 = vpop.permute.xlu0 %5401
        %5403 = vrot.lane.b32.xlu0 %v5400, 2
        %v5404 = vpop.permute.xlu0 %5403
        %5405 = vrot.lane.b32.xlu0 %v5399, 2
        %v5406 = vpop.permute.xlu0 %5405
        %v5410 = vadd.f32 %v5193, %v5402
        %v5411 = vadd.f32 %v5194, %v5404
        %v5412 = vadd.f32 %v5195, %v5406
        %5416 = vrot.lane.b32.xlu0 %v5208, 127
        %v5417 = vpop.permute.xlu0 %5416
        %5418 = vrot.lane.b32.xlu0 %v5209, 127
        %v5419 = vpop.permute.xlu0 %5418
        %5420 = vrot.lane.b32.xlu0 %v5210, 127
        %v5421 = vpop.permute.xlu0 %5420
        %v5425 = vadd.f32 %v5203, %v5417
        %v5426 = vadd.f32 %v5204, %v5419
        %v5427 = vadd.f32 %v5205, %v5421
        %5430 = vrot.lane.b32.xlu0 %v5217, 127
        %v5431 = vpop.permute.xlu0 %5430
        %5432 = vrot.lane.b32.xlu0 %v5218, 127
        %v5433 = vpop.permute.xlu0 %5432
        %v5436 = vadd.f32 %v5213, %v5431
        %v5437 = vadd.f32 %v5214, %v5433
        %v5441 = vrot.slane %v5225, 1
        %v5442 = vrot.slane %v5226, 1
        %v5443 = vsel %vm598, %v5441, %v5442
        %v5444 = vrot.slane %v5227, 1
        %v5445 = vsel %vm598, %v5442, %v5444
        %5446 = vrot.lane.b32.xlu0 %v5443, 2
        %v5447 = vpop.permute.xlu0 %5446
        %5448 = vrot.lane.b32.xlu0 %v5445, 2
        %v5449 = vpop.permute.xlu0 %5448
        %v5452 = vadd.f32 %v5221, %v5447
        %v5453 = vadd.f32 %v5222, %v5449
        %5457 = vrot.lane.b32.xlu0 %v5235, 127
        %v5458 = vpop.permute.xlu0 %5457
        %5459 = vrot.lane.b32.xlu0 %v5236, 127
        %v5460 = vpop.permute.xlu0 %5459
        %5461 = vrot.lane.b32.xlu0 %v5237, 127
        %v5462 = vpop.permute.xlu0 %5461
        %v5466 = vadd.f32 %v5230, %v5458
        %v5467 = vadd.f32 %v5231, %v5460
        %v5468 = vadd.f32 %v5232, %v5462
        %5472 = vrot.lane.b32.xlu0 %v5245, 127
        %v5473 = vpop.permute.xlu0 %5472
        %5474 = vrot.lane.b32.xlu0 %v5246, 127
        %v5475 = vpop.permute.xlu0 %5474
        %5476 = vrot.lane.b32.xlu0 %v5247, 127
        %v5477 = vpop.permute.xlu0 %5476
        %v5481 = vadd.f32 %v5240, %v5473
        %v5482 = vadd.f32 %v5241, %v5475
        %v5483 = vadd.f32 %v5242, %v5477
        %v5486 = vrot.slane %v5255, 6
        %v5487 = vrot.slane %v5256, 6
        %v5488 = vsel %vm644, %v5486, %v5487
        %5489 = vrot.lane.b32.xlu0 %v5486, 2
        %v5490 = vpop.permute.xlu0 %5489
        %5491 = vrot.lane.b32.xlu0 %v5488, 2
        %v5492 = vpop.permute.xlu0 %5491
        %5493 = vrot.lane.b32.xlu0 %v5487, 2
        %v5494 = vpop.permute.xlu0 %5493
        %v5498 = vadd.f32 %v5250, %v5490
        %v5499 = vadd.f32 %v5251, %v5492
        %v5500 = vadd.f32 %v5252, %v5494
        %5503 = vrot.lane.b32.xlu0 %v5263, 127
        %v5504 = vpop.permute.xlu0 %5503
        %5505 = vrot.lane.b32.xlu0 %v5264, 127
        %v5506 = vpop.permute.xlu0 %5505
        %v5509 = vadd.f32 %v5259, %v5504
        %v5510 = vadd.f32 %v5260, %v5506
        %5514 = vrot.lane.b32.xlu0 %v5272, 127
        %v5515 = vpop.permute.xlu0 %5514
        %5516 = vrot.lane.b32.xlu0 %v5273, 127
        %v5517 = vpop.permute.xlu0 %5516
        %5518 = vrot.lane.b32.xlu0 %v5274, 127
        %v5519 = vpop.permute.xlu0 %5518
        %v5523 = vadd.f32 %v5267, %v5515
        %v5524 = vadd.f32 %v5268, %v5517
        %v5525 = vadd.f32 %v5269, %v5519
        %v5529 = vrot.slane %v5282, 1
        %v5530 = vrot.slane %v5283, 1
        %v5531 = vsel %vm598, %v5529, %v5530
        %v5532 = vrot.slane %v5284, 1
        %v5533 = vsel %vm598, %v5530, %v5532
        %5534 = vrot.lane.b32.xlu0 %v5531, 2
        %v5535 = vpop.permute.xlu0 %5534
        %5536 = vrot.lane.b32.xlu0 %v5533, 2
        %v5537 = vpop.permute.xlu0 %5536
        %5538 = vrot.lane.b32.xlu0 %v5532, 2
        %v5539 = vpop.permute.xlu0 %5538
        %v5543 = vadd.f32 %v5277, %v5535
        %v5544 = vadd.f32 %v5278, %v5537
        %v5545 = vadd.f32 %v5279, %v5539
        %5549 = vrot.lane.b32.xlu0 %v5292, 127
        %v5550 = vpop.permute.xlu0 %5549
        %5551 = vrot.lane.b32.xlu0 %v5293, 127
        %v5552 = vpop.permute.xlu0 %5551
        %5553 = vrot.lane.b32.xlu0 %v5294, 127
        %v5554 = vpop.permute.xlu0 %5553
        %v5558 = vadd.f32 %v5287, %v5550
        %v5559 = vadd.f32 %v5288, %v5552
        %v5560 = vadd.f32 %v5289, %v5554
        %5563 = vrot.lane.b32.xlu0 %v5319, 126
        %v5564 = vpop.permute.xlu0 %5563
        %5565 = vrot.lane.b32.xlu0 %v5320, 126
        %v5566 = vpop.permute.xlu0 %5565
        %v5569 = vadd.f32 %v5303, %v5564
        %v5570 = vadd.f32 %v5304, %v5566
        %v5574 = vrot.slane %v5348, 1
        %v5575 = vrot.slane %v5349, 1
        %v5576 = vsel %vm598, %v5574, %v5575
        %v5577 = vrot.slane %v5350, 1
        %v5578 = vsel %vm598, %v5575, %v5577
        %5579 = vrot.lane.b32.xlu0 %v5576, 1
        %v5580 = vpop.permute.xlu0 %5579
        %5581 = vrot.lane.b32.xlu0 %v5578, 1
        %v5582 = vpop.permute.xlu0 %5581
        %5583 = vrot.lane.b32.xlu0 %v5577, 1
        %v5584 = vpop.permute.xlu0 %5583
        %v5588 = vadd.f32 %v5333, %v5580
        %v5589 = vadd.f32 %v5334, %v5582
        %v5590 = vadd.f32 %v5335, %v5584
        %v5593 = vrot.slane %v5376, 6
        %v5594 = vrot.slane %v5377, 6
        %v5595 = vsel %vm644, %v5593, %v5594
        %5596 = vrot.lane.b32.xlu0 %v5593, 1
        %v5597 = vpop.permute.xlu0 %5596
        %5598 = vrot.lane.b32.xlu0 %v5595, 1
        %v5599 = vpop.permute.xlu0 %5598
        %5600 = vrot.lane.b32.xlu0 %v5594, 1
        %v5601 = vpop.permute.xlu0 %5600
        %v5605 = vadd.f32 %v5365, %v5597
        %v5606 = vadd.f32 %v5366, %v5599
        %v5607 = vadd.f32 %v5367, %v5601
        %5611 = vrot.lane.b32.xlu0 %v5410, 126
        %v5612 = vpop.permute.xlu0 %5611
        %5613 = vrot.lane.b32.xlu0 %v5411, 126
        %v5614 = vpop.permute.xlu0 %5613
        %5615 = vrot.lane.b32.xlu0 %v5412, 126
        %v5616 = vpop.permute.xlu0 %5615
        %v5620 = vadd.f32 %v5390, %v5612
        %v5621 = vadd.f32 %v5391, %v5614
        %v5622 = vadd.f32 %v5392, %v5616
        %v5625 = vrot.slane %v5436, 6
        %v5626 = vrot.slane %v5437, 6
        %v5627 = vsel %vm644, %v5625, %v5626
        %5628 = vrot.lane.b32.xlu0 %v5625, 1
        %v5629 = vpop.permute.xlu0 %5628
        %5630 = vrot.lane.b32.xlu0 %v5627, 1
        %v5631 = vpop.permute.xlu0 %5630
        %5632 = vrot.lane.b32.xlu0 %v5626, 1
        %v5633 = vpop.permute.xlu0 %5632
        %v5637 = vadd.f32 %v5425, %v5629
        %v5638 = vadd.f32 %v5426, %v5631
        %v5639 = vadd.f32 %v5427, %v5633
        %v5643 = vrot.slane %v5466, 1
        %v5644 = vrot.slane %v5467, 1
        %v5645 = vsel %vm598, %v5643, %v5644
        %v5646 = vrot.slane %v5468, 1
        %v5647 = vsel %vm598, %v5644, %v5646
        %5648 = vrot.lane.b32.xlu0 %v5645, 1
        %v5649 = vpop.permute.xlu0 %5648
        %5650 = vrot.lane.b32.xlu0 %v5647, 1
        %v5651 = vpop.permute.xlu0 %5650
        %v5654 = vadd.f32 %v5452, %v5649
        %v5655 = vadd.f32 %v5453, %v5651
        %5659 = vrot.lane.b32.xlu0 %v5498, 126
        %v5660 = vpop.permute.xlu0 %5659
        %5661 = vrot.lane.b32.xlu0 %v5499, 126
        %v5662 = vpop.permute.xlu0 %5661
        %5663 = vrot.lane.b32.xlu0 %v5500, 126
        %v5664 = vpop.permute.xlu0 %5663
        %v5668 = vadd.f32 %v5481, %v5660
        %v5669 = vadd.f32 %v5482, %v5662
        %v5670 = vadd.f32 %v5483, %v5664
        %v5674 = vrot.slane %v5523, 1
        %v5675 = vrot.slane %v5524, 1
        %v5676 = vsel %vm598, %v5674, %v5675
        %v5677 = vrot.slane %v5525, 1
        %v5678 = vsel %vm598, %v5675, %v5677
        %5679 = vrot.lane.b32.xlu0 %v5676, 1
        %v5680 = vpop.permute.xlu0 %5679
        %5681 = vrot.lane.b32.xlu0 %v5678, 1
        %v5682 = vpop.permute.xlu0 %5681
        %v5685 = vadd.f32 %v5509, %v5680
        %v5686 = vadd.f32 %v5510, %v5682
        %v5690 = vrot.slane %v5558, 1
        %v5691 = vrot.slane %v5559, 1
        %v5692 = vsel %vm598, %v5690, %v5691
        %v5693 = vrot.slane %v5560, 1
        %v5694 = vsel %vm598, %v5691, %v5693
        %5695 = vrot.lane.b32.xlu0 %v5692, 1
        %v5696 = vpop.permute.xlu0 %5695
        %5697 = vrot.lane.b32.xlu0 %v5694, 1
        %v5698 = vpop.permute.xlu0 %5697
        %5699 = vrot.lane.b32.xlu0 %v5693, 1
        %v5700 = vpop.permute.xlu0 %5699
        %v5704 = vadd.f32 %v5543, %v5696
        %v5705 = vadd.f32 %v5544, %v5698
        %v5706 = vadd.f32 %v5545, %v5700
        %v5710 = vrot.slane %v5588, 1
        %v5711 = vrot.slane %v5589, 1
        %v5712 = vsel %vm598, %v5710, %v5711
        %v5713 = vrot.slane %v5590, 1
        %v5714 = vsel %vm598, %v5711, %v5713
        %5715 = vrot.lane.b32.xlu0 %v5712, 127
        %v5716 = vpop.permute.xlu0 %5715
        %5717 = vrot.lane.b32.xlu0 %v5714, 127
        %v5718 = vpop.permute.xlu0 %5717
        %v5721 = vadd.f32 %v5569, %v5716
        %v5722 = vadd.f32 %v5570, %v5718
        %v5726 = vrot.slane %v5620, 7
        %v5727 = vrot.slane %v5621, 7
        %v5728 = vsel %vm238, %v5726, %v5727
        %v5729 = vrot.slane %v5622, 7
        %v5730 = vsel %vm238, %v5727, %v5729
        %5731 = vrot.lane.b32.xlu0 %v5726, 2
        %v5732 = vpop.permute.xlu0 %5731
        %5733 = vrot.lane.b32.xlu0 %v5728, 2
        %v5734 = vpop.permute.xlu0 %5733
        %5735 = vrot.lane.b32.xlu0 %v5730, 2
        %v5736 = vpop.permute.xlu0 %5735
        %v5740 = vadd.f32 %v5605, %v5732
        %v5741 = vadd.f32 %v5606, %v5734
        %v5742 = vadd.f32 %v5607, %v5736
        %v5745 = vrot.slane %v5654, 6
        %v5746 = vrot.slane %v5655, 6
        %v5747 = vsel %vm644, %v5745, %v5746
        %5748 = vrot.lane.b32.xlu0 %v5745, 127
        %v5749 = vpop.permute.xlu0 %5748
        %5750 = vrot.lane.b32.xlu0 %v5747, 127
        %v5751 = vpop.permute.xlu0 %5750
        %5752 = vrot.lane.b32.xlu0 %v5746, 127
        %v5753 = vpop.permute.xlu0 %5752
        %v5757 = vadd.f32 %v5637, %v5749
        %v5758 = vadd.f32 %v5638, %v5751
        %v5759 = vadd.f32 %v5639, %v5753
        %v5762 = vrot.slane %v5685, 6
        %v5763 = vrot.slane %v5686, 6
        %v5764 = vsel %vm644, %v5762, %v5763
        %5765 = vrot.lane.b32.xlu0 %v5762, 127
        %v5766 = vpop.permute.xlu0 %5765
        %5767 = vrot.lane.b32.xlu0 %v5764, 127
        %v5768 = vpop.permute.xlu0 %5767
        %5769 = vrot.lane.b32.xlu0 %v5763, 127
        %v5770 = vpop.permute.xlu0 %5769
        %v5774 = vadd.f32 %v5668, %v5766
        %v5775 = vadd.f32 %v5669, %v5768
        %v5776 = vadd.f32 %v5670, %v5770
        %v5780 = vrot.slane %v5740, 2
        %v5781 = vrot.slane %v5741, 2
        %v5782 = vsel %vm1072, %v5780, %v5781
        %v5783 = vrot.slane %v5742, 2
        %v5784 = vsel %vm1072, %v5781, %v5783
        %5785 = vrot.lane.b32.xlu0 %v5782, 126
        %v5786 = vpop.permute.xlu0 %5785
        %5787 = vrot.lane.b32.xlu0 %v5784, 126
        %v5788 = vpop.permute.xlu0 %5787
        %v5791 = vadd.f32 %v5721, %v5786
        %v5792 = vadd.f32 %v5722, %v5788
        %5796 = vrot.lane.b32.xlu0 %v5774, 1
        %v5797 = vpop.permute.xlu0 %5796
        %5798 = vrot.lane.b32.xlu0 %v5775, 1
        %v5799 = vpop.permute.xlu0 %5798
        %5800 = vrot.lane.b32.xlu0 %v5776, 1
        %v5801 = vpop.permute.xlu0 %5800
        %v5805 = vadd.f32 %v5757, %v5797
        %v5806 = vadd.f32 %v5758, %v5799
        %v5807 = vadd.f32 %v5759, %v5801
        %v5811 = vrot.slane %v5805, 2
        %v5812 = vrot.slane %v5806, 2
        %v5813 = vsel %vm1072, %v5811, %v5812
        %v5814 = vrot.slane %v5807, 2
        %v5815 = vsel %vm1072, %v5812, %v5814
        %5816 = vrot.lane.b32.xlu0 %v5813, 127
        %v5817 = vpop.permute.xlu0 %5816
        %5818 = vrot.lane.b32.xlu0 %v5815, 127
        %v5819 = vpop.permute.xlu0 %5818
        %v5822 = vadd.f32 %v5791, %v5817
        %v5823 = vadd.f32 %v5792, %v5819
        %v5827 = vrot.slane %v5704, 1
        %v5828 = vrot.slane %v5705, 1
        %v5829 = vsel %vm598, %v5827, %v5828
        %v5830 = vrot.slane %v5706, 1
        %v5831 = vsel %vm598, %v5828, %v5830
        %5832 = vrot.lane.b32.xlu0 %v5829, 126
        %v5833 = vpop.permute.xlu0 %5832
        %5834 = vrot.lane.b32.xlu0 %v5831, 126
        %v5835 = vpop.permute.xlu0 %5834
        %v5838 = vadd.f32 %v5822, %v5833
        %v5839 = vadd.f32 %v5823, %v5835
        %v5840 = vsel %vm1133, %v5838, 0.0
        %v5841 = vsel %vm1133, %v5839, 0.0
        %v5842 = vadd.f32 %v5840, %v5841
        %5843 = vadd.xlane.f32.xlu0 %v5842
        %v5844 = vpop.xlane.xlu0 %5843
        %v5845 = vrot.slane %v5844, 4
        %v5846 = vadd.f32 %v5844, %v5845
        %v5847 = vrot.slane %v5846, 2
        %v5848 = vadd.f32 %v5846, %v5847
        %v5849 = vrot.slane %v5848, 1
        %v5850 = vadd.f32 %v5848, %v5849
        %s5851 = vtos %v5850
        %v5852 = vstv %s5851
        %v5853 = vmul.f32 %v5852, 0.00390625
        %v5854 = vmul.f32 %v5838, %v5838
        %v5855 = vmul.f32 %v5839, %v5839
        %v5856 = vsel %vm1133, %v5854, 0.0
        %v5857 = vsel %vm1133, %v5855, 0.0
        %v5858 = vadd.f32 %v5856, %v5857
        %5859 = vadd.xlane.f32.xlu0 %v5858
        %v5860 = vpop.xlane.xlu0 %5859
        %v5861 = vrot.slane %v5860, 4
        %v5862 = vadd.f32 %v5860, %v5861
        %v5863 = vrot.slane %v5862, 2
        %v5864 = vadd.f32 %v5862, %v5863
        %v5865 = vrot.slane %v5864, 1
        %v5866 = vadd.f32 %v5864, %v5865
        %s5867 = vtos %v5866
        %v5868 = vstv %s5867
        %v5869 = vmul.f32 %v5868, 0.00390625
        %v5870 = vmul.f32 %v5853, %v5853
        %v5871 = vsub.f32 %v5869, %v5870
        %v5872 = vsub.f32 %v5838, %v5853
        %v5873 = vsub.f32 %v5839, %v5853
        %v5874 = vadd.f32 %v5871, 1e-05
        %v5875 = vrsqrt.pop %v5874
        %v5876 = vmul.f32 %v5872, %v5875
        %v5877 = vmul.f32 %v5873, %v5875
        %s5878 = sld [smem:[#allocation8 + $0x6c]]
        %v5879 = vstv %s5878
        %v5880 = vmul.f32 %v5879, %v3613
        %v5881 = vmul.f32 %v5879, %v3614
        %s5882 = sld [smem:[#allocation8 + $0x6d]]
        %v5883 = vstv %s5882
        %v5884 = vmul.f32 %v5883, %v3613
        %v5885 = vmul.f32 %v5883, %v3614
        %s5886 = sld [smem:[#allocation8 + $0x6e]]
        %v5887 = vstv %s5886
        %v5888 = vmul.f32 %v5887, %v3613
        %v5889 = vmul.f32 %v5887, %v3614
        %s5890 = sld [smem:[#allocation8 + $0x6f]]
        %v5891 = vstv %s5890
        %v5892 = vmul.f32 %v5891, %v3613
        %v5893 = vmul.f32 %v5891, %v3614
        %v5894 = vmul.f32 %v5891, %v3615
        %s5895 = sld [smem:[#allocation8 + $0x70]]
        %v5896 = vstv %s5895
        %v5897 = vmul.f32 %v5896, %v3613
        %v5898 = vmul.f32 %v5896, %v3614
        %v5899 = vmul.f32 %v5896, %v3615
        %s5900 = sld [smem:[#allocation8 + $0x71]]
        %v5901 = vstv %s5900
        %v5902 = vmul.f32 %v5901, %v3613
        %v5903 = vmul.f32 %v5901, %v3614
        %v5904 = vmul.f32 %v5901, %v3615
        %s5905 = sld [smem:[#allocation8 + $0x72]]
        %v5906 = vstv %s5905
        %v5907 = vmul.f32 %v5906, %v3613
        %v5908 = vmul.f32 %v5906, %v3614
        %v5909 = vmul.f32 %v5906, %v3615
        %s5910 = sld [smem:[#allocation8 + $0x73]]
        %v5911 = vstv %s5910
        %v5912 = vmul.f32 %v5911, %v3613
        %v5913 = vmul.f32 %v5911, %v3614
        %v5914 = vmul.f32 %v5911, %v3615
        %s5915 = sld [smem:[#allocation8 + $0x74]]
        %v5916 = vstv %s5915
        %v5917 = vmul.f32 %v5916, %v3613
        %v5918 = vmul.f32 %v5916, %v3614
        %v5919 = vmul.f32 %v5916, %v3615
        %s5920 = sld [smem:[#allocation8 + $0x75]]
        %v5921 = vstv %s5920
        %v5922 = vmul.f32 %v5921, %v3616
        %v5923 = vmul.f32 %v5921, %v3617
        %s5924 = sld [smem:[#allocation8 + $0x76]]
        %v5925 = vstv %s5924
        %v5926 = vmul.f32 %v5925, %v3616
        %v5927 = vmul.f32 %v5925, %v3617
        %s5928 = sld [smem:[#allocation8 + $0x77]]
        %v5929 = vstv %s5928
        %v5930 = vmul.f32 %v5929, %v3616
        %v5931 = vmul.f32 %v5929, %v3617
        %s5932 = sld [smem:[#allocation8 + $0x78]]
        %v5933 = vstv %s5932
        %v5934 = vmul.f32 %v5933, %v3616
        %v5935 = vmul.f32 %v5933, %v3617
        %v5936 = vmul.f32 %v5933, %v3618
        %s5937 = sld [smem:[#allocation8 + $0x79]]
        %v5938 = vstv %s5937
        %v5939 = vmul.f32 %v5938, %v3616
        %v5940 = vmul.f32 %v5938, %v3617
        %v5941 = vmul.f32 %v5938, %v3618
        %s5942 = sld [smem:[#allocation8 + $0x7a]]
        %v5943 = vstv %s5942
        %v5944 = vmul.f32 %v5943, %v3616
        %v5945 = vmul.f32 %v5943, %v3617
        %v5946 = vmul.f32 %v5943, %v3618
        %s5947 = sld [smem:[#allocation8 + $0x7b]]
        %v5948 = vstv %s5947
        %v5949 = vmul.f32 %v5948, %v3616
        %v5950 = vmul.f32 %v5948, %v3617
        %v5951 = vmul.f32 %v5948, %v3618
        %s5952 = sld [smem:[#allocation8 + $0x7c]]
        %v5953 = vstv %s5952
        %v5954 = vmul.f32 %v5953, %v3616
        %v5955 = vmul.f32 %v5953, %v3617
        %v5956 = vmul.f32 %v5953, %v3618
        %s5957 = sld [smem:[#allocation8 + $0x7d]]
        %v5958 = vstv %s5957
        %v5959 = vmul.f32 %v5958, %v3616
        %v5960 = vmul.f32 %v5958, %v3617
        %v5961 = vmul.f32 %v5958, %v3618
        %s5962 = sld [smem:[#allocation8 + $0x7e]]
        %v5963 = vstv %s5962
        %v5964 = vmul.f32 %v5963, %v3619
        %v5965 = vmul.f32 %v5963, %v3620
        %s5966 = sld [smem:[#allocation8 + $0x7f]]
        %v5967 = vstv %s5966
        %v5968 = vmul.f32 %v5967, %v3619
        %v5969 = vmul.f32 %v5967, %v3620
        %s5970 = sld [smem:[#allocation8 + $0x80]]
        %v5971 = vstv %s5970
        %v5972 = vmul.f32 %v5971, %v3619
        %v5973 = vmul.f32 %v5971, %v3620
        %s5974 = sld [smem:[#allocation8 + $0x81]]
        %v5975 = vstv %s5974
        %v5976 = vmul.f32 %v5975, %v3619
        %v5977 = vmul.f32 %v5975, %v3620
        %v5978 = vmul.f32 %v5975, %v3621
        %s5979 = sld [smem:[#allocation8 + $0x82]]
        %v5980 = vstv %s5979
        %v5981 = vmul.f32 %v5980, %v3619
        %v5982 = vmul.f32 %v5980, %v3620
        %v5983 = vmul.f32 %v5980, %v3621
        %s5984 = sld [smem:[#allocation8 + $0x83]]
        %v5985 = vstv %s5984
        %v5986 = vmul.f32 %v5985, %v3619
        %v5987 = vmul.f32 %v5985, %v3620
        %v5988 = vmul.f32 %v5985, %v3621
        %s5989 = sld [smem:[#allocation8 + $0x84]]
        %v5990 = vstv %s5989
        %v5991 = vmul.f32 %v5990, %v3619
        %v5992 = vmul.f32 %v5990, %v3620
        %v5993 = vmul.f32 %v5990, %v3621
        %s5994 = sld [smem:[#allocation8 + $0x85]]
        %v5995 = vstv %s5994
        %v5996 = vmul.f32 %v5995, %v3619
        %v5997 = vmul.f32 %v5995, %v3620
        %v5998 = vmul.f32 %v5995, %v3621
        %s5999 = sld [smem:[#allocation8 + $0x86]]
        %v6000 = vstv %s5999
        %v6001 = vmul.f32 %v6000, %v3619
        %v6002 = vmul.f32 %v6000, %v3620
        %v6003 = vmul.f32 %v6000, %v3621
        %s6004 = sld [smem:[#allocation8 + $0x87]]
        %v6005 = vstv %s6004
        %v6006 = vmul.f32 %v6005, %v3622
        %v6007 = vmul.f32 %v6005, %v3623
        %s6008 = sld [smem:[#allocation8 + $0x88]]
        %v6009 = vstv %s6008
        %v6010 = vmul.f32 %v6009, %v3622
        %v6011 = vmul.f32 %v6009, %v3623
        %s6012 = sld [smem:[#allocation8 + $0x89]]
        %v6013 = vstv %s6012
        %v6014 = vmul.f32 %v6013, %v3622
        %v6015 = vmul.f32 %v6013, %v3623
        %s6016 = sld [smem:[#allocation8 + $0x8a]]
        %v6017 = vstv %s6016
        %v6018 = vmul.f32 %v6017, %v3622
        %v6019 = vmul.f32 %v6017, %v3623
        %v6020 = vmul.f32 %v6017, %v3624
        %s6021 = sld [smem:[#allocation8 + $0x8b]]
        %v6022 = vstv %s6021
        %v6023 = vmul.f32 %v6022, %v3622
        %v6024 = vmul.f32 %v6022, %v3623
        %v6025 = vmul.f32 %v6022, %v3624
        %s6026 = sld [smem:[#allocation8 + $0x8c]]
        %v6027 = vstv %s6026
        %v6028 = vmul.f32 %v6027, %v3622
        %v6029 = vmul.f32 %v6027, %v3623
        %v6030 = vmul.f32 %v6027, %v3624
        %s6031 = sld [smem:[#allocation8 + $0x8d]]
        %v6032 = vstv %s6031
        %v6033 = vmul.f32 %v6032, %v3622
        %v6034 = vmul.f32 %v6032, %v3623
        %v6035 = vmul.f32 %v6032, %v3624
        %s6036 = sld [smem:[#allocation8 + $0x8e]]
        %v6037 = vstv %s6036
        %v6038 = vmul.f32 %v6037, %v3622
        %v6039 = vmul.f32 %v6037, %v3623
        %v6040 = vmul.f32 %v6037, %v3624
        %s6041 = sld [smem:[#allocation8 + $0x8f]]
        %v6042 = vstv %s6041
        %v6043 = vmul.f32 %v6042, %v3622
        %v6044 = vmul.f32 %v6042, %v3623
        %v6045 = vmul.f32 %v6042, %v3624
        %6048 = vrot.lane.b32.xlu0 %v5884, 127
        %v6049 = vpop.permute.xlu0 %6048
        %6050 = vrot.lane.b32.xlu0 %v5885, 127
        %v6051 = vpop.permute.xlu0 %6050
        %v6054 = vadd.f32 %v5880, %v6049
        %v6055 = vadd.f32 %v5881, %v6051
        %v6059 = vrot.slane %v5892, 1
        %v6060 = vrot.slane %v5893, 1
        %v6061 = vsel %vm598, %v6059, %v6060
        %v6062 = vrot.slane %v5894, 1
        %v6063 = vsel %vm598, %v6060, %v6062
        %6064 = vrot.lane.b32.xlu0 %v6061, 2
        %v6065 = vpop.permute.xlu0 %6064
        %6066 = vrot.lane.b32.xlu0 %v6063, 2
        %v6067 = vpop.permute.xlu0 %6066
        %v6070 = vadd.f32 %v5888, %v6065
        %v6071 = vadd.f32 %v5889, %v6067
        %6075 = vrot.lane.b32.xlu0 %v5902, 127
        %v6076 = vpop.permute.xlu0 %6075
        %6077 = vrot.lane.b32.xlu0 %v5903, 127
        %v6078 = vpop.permute.xlu0 %6077
        %6079 = vrot.lane.b32.xlu0 %v5904, 127
        %v6080 = vpop.permute.xlu0 %6079
        %v6084 = vadd.f32 %v5897, %v6076
        %v6085 = vadd.f32 %v5898, %v6078
        %v6086 = vadd.f32 %v5899, %v6080
        %6090 = vrot.lane.b32.xlu0 %v5912, 127
        %v6091 = vpop.permute.xlu0 %6090
        %6092 = vrot.lane.b32.xlu0 %v5913, 127
        %v6093 = vpop.permute.xlu0 %6092
        %6094 = vrot.lane.b32.xlu0 %v5914, 127
        %v6095 = vpop.permute.xlu0 %6094
        %v6099 = vadd.f32 %v5907, %v6091
        %v6100 = vadd.f32 %v5908, %v6093
        %v6101 = vadd.f32 %v5909, %v6095
        %v6104 = vrot.slane %v5922, 6
        %v6105 = vrot.slane %v5923, 6
        %v6106 = vsel %vm644, %v6104, %v6105
        %6107 = vrot.lane.b32.xlu0 %v6104, 2
        %v6108 = vpop.permute.xlu0 %6107
        %6109 = vrot.lane.b32.xlu0 %v6106, 2
        %v6110 = vpop.permute.xlu0 %6109
        %6111 = vrot.lane.b32.xlu0 %v6105, 2
        %v6112 = vpop.permute.xlu0 %6111
        %v6116 = vadd.f32 %v5917, %v6108
        %v6117 = vadd.f32 %v5918, %v6110
        %v6118 = vadd.f32 %v5919, %v6112
        %6121 = vrot.lane.b32.xlu0 %v5930, 127
        %v6122 = vpop.permute.xlu0 %6121
        %6123 = vrot.lane.b32.xlu0 %v5931, 127
        %v6124 = vpop.permute.xlu0 %6123
        %v6127 = vadd.f32 %v5926, %v6122
        %v6128 = vadd.f32 %v5927, %v6124
        %6132 = vrot.lane.b32.xlu0 %v5939, 127
        %v6133 = vpop.permute.xlu0 %6132
        %6134 = vrot.lane.b32.xlu0 %v5940, 127
        %v6135 = vpop.permute.xlu0 %6134
        %6136 = vrot.lane.b32.xlu0 %v5941, 127
        %v6137 = vpop.permute.xlu0 %6136
        %v6141 = vadd.f32 %v5934, %v6133
        %v6142 = vadd.f32 %v5935, %v6135
        %v6143 = vadd.f32 %v5936, %v6137
        %v6147 = vrot.slane %v5949, 1
        %v6148 = vrot.slane %v5950, 1
        %v6149 = vsel %vm598, %v6147, %v6148
        %v6150 = vrot.slane %v5951, 1
        %v6151 = vsel %vm598, %v6148, %v6150
        %6152 = vrot.lane.b32.xlu0 %v6149, 2
        %v6153 = vpop.permute.xlu0 %6152
        %6154 = vrot.lane.b32.xlu0 %v6151, 2
        %v6155 = vpop.permute.xlu0 %6154
        %6156 = vrot.lane.b32.xlu0 %v6150, 2
        %v6157 = vpop.permute.xlu0 %6156
        %v6161 = vadd.f32 %v5944, %v6153
        %v6162 = vadd.f32 %v5945, %v6155
        %v6163 = vadd.f32 %v5946, %v6157
        %6167 = vrot.lane.b32.xlu0 %v5959, 127
        %v6168 = vpop.permute.xlu0 %6167
        %6169 = vrot.lane.b32.xlu0 %v5960, 127
        %v6170 = vpop.permute.xlu0 %6169
        %6171 = vrot.lane.b32.xlu0 %v5961, 127
        %v6172 = vpop.permute.xlu0 %6171
        %v6176 = vadd.f32 %v5954, %v6168
        %v6177 = vadd.f32 %v5955, %v6170
        %v6178 = vadd.f32 %v5956, %v6172
        %6181 = vrot.lane.b32.xlu0 %v5968, 127
        %v6182 = vpop.permute.xlu0 %6181
        %6183 = vrot.lane.b32.xlu0 %v5969, 127
        %v6184 = vpop.permute.xlu0 %6183
        %v6187 = vadd.f32 %v5964, %v6182
        %v6188 = vadd.f32 %v5965, %v6184
        %v6192 = vrot.slane %v5976, 1
        %v6193 = vrot.slane %v5977, 1
        %v6194 = vsel %vm598, %v6192, %v6193
        %v6195 = vrot.slane %v5978, 1
        %v6196 = vsel %vm598, %v6193, %v6195
        %6197 = vrot.lane.b32.xlu0 %v6194, 2
        %v6198 = vpop.permute.xlu0 %6197
        %6199 = vrot.lane.b32.xlu0 %v6196, 2
        %v6200 = vpop.permute.xlu0 %6199
        %v6203 = vadd.f32 %v5972, %v6198
        %v6204 = vadd.f32 %v5973, %v6200
        %6208 = vrot.lane.b32.xlu0 %v5986, 127
        %v6209 = vpop.permute.xlu0 %6208
        %6210 = vrot.lane.b32.xlu0 %v5987, 127
        %v6211 = vpop.permute.xlu0 %6210
        %6212 = vrot.lane.b32.xlu0 %v5988, 127
        %v6213 = vpop.permute.xlu0 %6212
        %v6217 = vadd.f32 %v5981, %v6209
        %v6218 = vadd.f32 %v5982, %v6211
        %v6219 = vadd.f32 %v5983, %v6213
        %6223 = vrot.lane.b32.xlu0 %v5996, 127
        %v6224 = vpop.permute.xlu0 %6223
        %6225 = vrot.lane.b32.xlu0 %v5997, 127
        %v6226 = vpop.permute.xlu0 %6225
        %6227 = vrot.lane.b32.xlu0 %v5998, 127
        %v6228 = vpop.permute.xlu0 %6227
        %v6232 = vadd.f32 %v5991, %v6224
        %v6233 = vadd.f32 %v5992, %v6226
        %v6234 = vadd.f32 %v5993, %v6228
        %v6237 = vrot.slane %v6006, 6
        %v6238 = vrot.slane %v6007, 6
        %v6239 = vsel %vm644, %v6237, %v6238
        %6240 = vrot.lane.b32.xlu0 %v6237, 2
        %v6241 = vpop.permute.xlu0 %6240
        %6242 = vrot.lane.b32.xlu0 %v6239, 2
        %v6243 = vpop.permute.xlu0 %6242
        %6244 = vrot.lane.b32.xlu0 %v6238, 2
        %v6245 = vpop.permute.xlu0 %6244
        %v6249 = vadd.f32 %v6001, %v6241
        %v6250 = vadd.f32 %v6002, %v6243
        %v6251 = vadd.f32 %v6003, %v6245
        %6254 = vrot.lane.b32.xlu0 %v6014, 127
        %v6255 = vpop.permute.xlu0 %6254
        %6256 = vrot.lane.b32.xlu0 %v6015, 127
        %v6257 = vpop.permute.xlu0 %6256
        %v6260 = vadd.f32 %v6010, %v6255
        %v6261 = vadd.f32 %v6011, %v6257
        %6265 = vrot.lane.b32.xlu0 %v6023, 127
        %v6266 = vpop.permute.xlu0 %6265
        %6267 = vrot.lane.b32.xlu0 %v6024, 127
        %v6268 = vpop.permute.xlu0 %6267
        %6269 = vrot.lane.b32.xlu0 %v6025, 127
        %v6270 = vpop.permute.xlu0 %6269
        %v6274 = vadd.f32 %v6018, %v6266
        %v6275 = vadd.f32 %v6019, %v6268
        %v6276 = vadd.f32 %v6020, %v6270
        %v6280 = vrot.slane %v6033, 1
        %v6281 = vrot.slane %v6034, 1
        %v6282 = vsel %vm598, %v6280, %v6281
        %v6283 = vrot.slane %v6035, 1
        %v6284 = vsel %vm598, %v6281, %v6283
        %6285 = vrot.lane.b32.xlu0 %v6282, 2
        %v6286 = vpop.permute.xlu0 %6285
        %6287 = vrot.lane.b32.xlu0 %v6284, 2
        %v6288 = vpop.permute.xlu0 %6287
        %6289 = vrot.lane.b32.xlu0 %v6283, 2
        %v6290 = vpop.permute.xlu0 %6289
        %v6294 = vadd.f32 %v6028, %v6286
        %v6295 = vadd.f32 %v6029, %v6288
        %v6296 = vadd.f32 %v6030, %v6290
        %6300 = vrot.lane.b32.xlu0 %v6043, 127
        %v6301 = vpop.permute.xlu0 %6300
        %6302 = vrot.lane.b32.xlu0 %v6044, 127
        %v6303 = vpop.permute.xlu0 %6302
        %6304 = vrot.lane.b32.xlu0 %v6045, 127
        %v6305 = vpop.permute.xlu0 %6304
        %v6309 = vadd.f32 %v6038, %v6301
        %v6310 = vadd.f32 %v6039, %v6303
        %v6311 = vadd.f32 %v6040, %v6305
        %6314 = vrot.lane.b32.xlu0 %v6070, 126
        %v6315 = vpop.permute.xlu0 %6314
        %6316 = vrot.lane.b32.xlu0 %v6071, 126
        %v6317 = vpop.permute.xlu0 %6316
        %v6320 = vadd.f32 %v6054, %v6315
        %v6321 = vadd.f32 %v6055, %v6317
        %v6325 = vrot.slane %v6099, 1
        %v6326 = vrot.slane %v6100, 1
        %v6327 = vsel %vm598, %v6325, %v6326
        %v6328 = vrot.slane %v6101, 1
        %v6329 = vsel %vm598, %v6326, %v6328
        %6330 = vrot.lane.b32.xlu0 %v6327, 1
        %v6331 = vpop.permute.xlu0 %6330
        %6332 = vrot.lane.b32.xlu0 %v6329, 1
        %v6333 = vpop.permute.xlu0 %6332
        %6334 = vrot.lane.b32.xlu0 %v6328, 1
        %v6335 = vpop.permute.xlu0 %6334
        %v6339 = vadd.f32 %v6084, %v6331
        %v6340 = vadd.f32 %v6085, %v6333
        %v6341 = vadd.f32 %v6086, %v6335
        %v6344 = vrot.slane %v6127, 6
        %v6345 = vrot.slane %v6128, 6
        %v6346 = vsel %vm644, %v6344, %v6345
        %6347 = vrot.lane.b32.xlu0 %v6344, 1
        %v6348 = vpop.permute.xlu0 %6347
        %6349 = vrot.lane.b32.xlu0 %v6346, 1
        %v6350 = vpop.permute.xlu0 %6349
        %6351 = vrot.lane.b32.xlu0 %v6345, 1
        %v6352 = vpop.permute.xlu0 %6351
        %v6356 = vadd.f32 %v6116, %v6348
        %v6357 = vadd.f32 %v6117, %v6350
        %v6358 = vadd.f32 %v6118, %v6352
        %6362 = vrot.lane.b32.xlu0 %v6161, 126
        %v6363 = vpop.permute.xlu0 %6362
        %6364 = vrot.lane.b32.xlu0 %v6162, 126
        %v6365 = vpop.permute.xlu0 %6364
        %6366 = vrot.lane.b32.xlu0 %v6163, 126
        %v6367 = vpop.permute.xlu0 %6366
        %v6371 = vadd.f32 %v6141, %v6363
        %v6372 = vadd.f32 %v6142, %v6365
        %v6373 = vadd.f32 %v6143, %v6367
        %v6376 = vrot.slane %v6187, 6
        %v6377 = vrot.slane %v6188, 6
        %v6378 = vsel %vm644, %v6376, %v6377
        %6379 = vrot.lane.b32.xlu0 %v6376, 1
        %v6380 = vpop.permute.xlu0 %6379
        %6381 = vrot.lane.b32.xlu0 %v6378, 1
        %v6382 = vpop.permute.xlu0 %6381
        %6383 = vrot.lane.b32.xlu0 %v6377, 1
        %v6384 = vpop.permute.xlu0 %6383
        %v6388 = vadd.f32 %v6176, %v6380
        %v6389 = vadd.f32 %v6177, %v6382
        %v6390 = vadd.f32 %v6178, %v6384
        %v6394 = vrot.slane %v6217, 1
        %v6395 = vrot.slane %v6218, 1
        %v6396 = vsel %vm598, %v6394, %v6395
        %v6397 = vrot.slane %v6219, 1
        %v6398 = vsel %vm598, %v6395, %v6397
        %6399 = vrot.lane.b32.xlu0 %v6396, 1
        %v6400 = vpop.permute.xlu0 %6399
        %6401 = vrot.lane.b32.xlu0 %v6398, 1
        %v6402 = vpop.permute.xlu0 %6401
        %v6405 = vadd.f32 %v6203, %v6400
        %v6406 = vadd.f32 %v6204, %v6402
        %6410 = vrot.lane.b32.xlu0 %v6249, 126
        %v6411 = vpop.permute.xlu0 %6410
        %6412 = vrot.lane.b32.xlu0 %v6250, 126
        %v6413 = vpop.permute.xlu0 %6412
        %6414 = vrot.lane.b32.xlu0 %v6251, 126
        %v6415 = vpop.permute.xlu0 %6414
        %v6419 = vadd.f32 %v6232, %v6411
        %v6420 = vadd.f32 %v6233, %v6413
        %v6421 = vadd.f32 %v6234, %v6415
        %v6425 = vrot.slane %v6274, 1
        %v6426 = vrot.slane %v6275, 1
        %v6427 = vsel %vm598, %v6425, %v6426
        %v6428 = vrot.slane %v6276, 1
        %v6429 = vsel %vm598, %v6426, %v6428
        %6430 = vrot.lane.b32.xlu0 %v6427, 1
        %v6431 = vpop.permute.xlu0 %6430
        %6432 = vrot.lane.b32.xlu0 %v6429, 1
        %v6433 = vpop.permute.xlu0 %6432
        %v6436 = vadd.f32 %v6260, %v6431
        %v6437 = vadd.f32 %v6261, %v6433
        %v6441 = vrot.slane %v6309, 1
        %v6442 = vrot.slane %v6310, 1
        %v6443 = vsel %vm598, %v6441, %v6442
        %v6444 = vrot.slane %v6311, 1
        %v6445 = vsel %vm598, %v6442, %v6444
        %6446 = vrot.lane.b32.xlu0 %v6443, 1
        %v6447 = vpop.permute.xlu0 %6446
        %6448 = vrot.lane.b32.xlu0 %v6445, 1
        %v6449 = vpop.permute.xlu0 %6448
        %6450 = vrot.lane.b32.xlu0 %v6444, 1
        %v6451 = vpop.permute.xlu0 %6450
        %v6455 = vadd.f32 %v6294, %v6447
        %v6456 = vadd.f32 %v6295, %v6449
        %v6457 = vadd.f32 %v6296, %v6451
        %v6461 = vrot.slane %v6339, 1
        %v6462 = vrot.slane %v6340, 1
        %v6463 = vsel %vm598, %v6461, %v6462
        %v6464 = vrot.slane %v6341, 1
        %v6465 = vsel %vm598, %v6462, %v6464
        %6466 = vrot.lane.b32.xlu0 %v6463, 127
        %v6467 = vpop.permute.xlu0 %6466
        %6468 = vrot.lane.b32.xlu0 %v6465, 127
        %v6469 = vpop.permute.xlu0 %6468
        %v6472 = vadd.f32 %v6320, %v6467
        %v6473 = vadd.f32 %v6321, %v6469
        %v6477 = vrot.slane %v6371, 7
        %v6478 = vrot.slane %v6372, 7
        %v6479 = vsel %vm238, %v6477, %v6478
        %v6480 = vrot.slane %v6373, 7
        %v6481 = vsel %vm238, %v6478, %v6480
        %6482 = vrot.lane.b32.xlu0 %v6477, 2
        %v6483 = vpop.permute.xlu0 %6482
        %6484 = vrot.lane.b32.xlu0 %v6479, 2
        %v6485 = vpop.permute.xlu0 %6484
        %6486 = vrot.lane.b32.xlu0 %v6481, 2
        %v6487 = vpop.permute.xlu0 %6486
        %v6491 = vadd.f32 %v6356, %v6483
        %v6492 = vadd.f32 %v6357, %v6485
        %v6493 = vadd.f32 %v6358, %v6487
        %v6496 = vrot.slane %v6405, 6
        %v6497 = vrot.slane %v6406, 6
        %v6498 = vsel %vm644, %v6496, %v6497
        %6499 = vrot.lane.b32.xlu0 %v6496, 127
        %v6500 = vpop.permute.xlu0 %6499
        %6501 = vrot.lane.b32.xlu0 %v6498, 127
        %v6502 = vpop.permute.xlu0 %6501
        %6503 = vrot.lane.b32.xlu0 %v6497, 127
        %v6504 = vpop.permute.xlu0 %6503
        %v6508 = vadd.f32 %v6388, %v6500
        %v6509 = vadd.f32 %v6389, %v6502
        %v6510 = vadd.f32 %v6390, %v6504
        %v6513 = vrot.slane %v6436, 6
        %v6514 = vrot.slane %v6437, 6
        %v6515 = vsel %vm644, %v6513, %v6514
        %6516 = vrot.lane.b32.xlu0 %v6513, 127
        %v6517 = vpop.permute.xlu0 %6516
        %6518 = vrot.lane.b32.xlu0 %v6515, 127
        %v6519 = vpop.permute.xlu0 %6518
        %6520 = vrot.lane.b32.xlu0 %v6514, 127
        %v6521 = vpop.permute.xlu0 %6520
        %v6525 = vadd.f32 %v6419, %v6517
        %v6526 = vadd.f32 %v6420, %v6519
        %v6527 = vadd.f32 %v6421, %v6521
        %v6531 = vrot.slane %v6491, 2
        %v6532 = vrot.slane %v6492, 2
        %v6533 = vsel %vm1072, %v6531, %v6532
        %v6534 = vrot.slane %v6493, 2
        %v6535 = vsel %vm1072, %v6532, %v6534
        %6536 = vrot.lane.b32.xlu0 %v6533, 126
        %v6537 = vpop.permute.xlu0 %6536
        %6538 = vrot.lane.b32.xlu0 %v6535, 126
        %v6539 = vpop.permute.xlu0 %6538
        %v6542 = vadd.f32 %v6472, %v6537
        %v6543 = vadd.f32 %v6473, %v6539
        %6547 = vrot.lane.b32.xlu0 %v6525, 1
        %v6548 = vpop.permute.xlu0 %6547
        %6549 = vrot.lane.b32.xlu0 %v6526, 1
        %v6550 = vpop.permute.xlu0 %6549
        %6551 = vrot.lane.b32.xlu0 %v6527, 1
        %v6552 = vpop.permute.xlu0 %6551
        %v6556 = vadd.f32 %v6508, %v6548
        %v6557 = vadd.f32 %v6509, %v6550
        %v6558 = vadd.f32 %v6510, %v6552
        %v6562 = vrot.slane %v6556, 2
        %v6563 = vrot.slane %v6557, 2
        %v6564 = vsel %vm1072, %v6562, %v6563
        %v6565 = vrot.slane %v6558, 2
        %v6566 = vsel %vm1072, %v6563, %v6565
        %6567 = vrot.lane.b32.xlu0 %v6564, 127
        %v6568 = vpop.permute.xlu0 %6567
        %6569 = vrot.lane.b32.xlu0 %v6566, 127
        %v6570 = vpop.permute.xlu0 %6569
        %v6573 = vadd.f32 %v6542, %v6568
        %v6574 = vadd.f32 %v6543, %v6570
        %v6578 = vrot.slane %v6455, 1
        %v6579 = vrot.slane %v6456, 1
        %v6580 = vsel %vm598, %v6578, %v6579
        %v6581 = vrot.slane %v6457, 1
        %v6582 = vsel %vm598, %v6579, %v6581
        %6583 = vrot.lane.b32.xlu0 %v6580, 126
        %v6584 = vpop.permute.xlu0 %6583
        %6585 = vrot.lane.b32.xlu0 %v6582, 126
        %v6586 = vpop.permute.xlu0 %6585
        %v6589 = vadd.f32 %v6573, %v6584
        %v6590 = vadd.f32 %v6574, %v6586
        %v6591 = vsel %vm1133, %v6589, 0.0
        %v6592 = vsel %vm1133, %v6590, 0.0
        %v6593 = vadd.f32 %v6591, %v6592
        %6594 = vadd.xlane.f32.xlu0 %v6593
        %v6595 = vpop.xlane.xlu0 %6594
        %v6596 = vrot.slane %v6595, 4
        %v6597 = vadd.f32 %v6595, %v6596
        %v6598 = vrot.slane %v6597, 2
        %v6599 = vadd.f32 %v6597, %v6598
        %v6600 = vrot.slane %v6599, 1
        %v6601 = vadd.f32 %v6599, %v6600
        %s6602 = vtos %v6601
        %v6603 = vstv %s6602
        %v6604 = vmul.f32 %v6603, 0.00390625
        %v6605 = vmul.f32 %v6589, %v6589
        %v6606 = vmul.f32 %v6590, %v6590
        %v6607 = vsel %vm1133, %v6605, 0.0
        %v6608 = vsel %vm1133, %v6606, 0.0
        %v6609 = vadd.f32 %v6607, %v6608
        %6610 = vadd.xlane.f32.xlu0 %v6609
        %v6611 = vpop.xlane.xlu0 %6610
        %v6612 = vrot.slane %v6611, 4
        %v6613 = vadd.f32 %v6611, %v6612
        %v6614 = vrot.slane %v6613, 2
        %v6615 = vadd.f32 %v6613, %v6614
        %v6616 = vrot.slane %v6615, 1
        %v6617 = vadd.f32 %v6615, %v6616
        %s6618 = vtos %v6617
        %v6619 = vstv %s6618
        %v6620 = vmul.f32 %v6619, 0.00390625
        %v6621 = vmul.f32 %v6604, %v6604
        %v6622 = vsub.f32 %v6620, %v6621
        %v6623 = vsub.f32 %v6589, %v6604
        %v6624 = vsub.f32 %v6590, %v6604
        %v6625 = vadd.f32 %v6622, 1e-05
        %v6626 = vrsqrt.pop %v6625
        %v6627 = vmul.f32 %v6623, %v6626
        %v6628 = vmul.f32 %v6624, %v6626
        %v6629 = vadd.f32 %v214, %v4374
        %v6630 = vadd.f32 %v215, %v4375
        %v6631 = vadd.f32 %v216, %v5125
        %v6632 = vadd.f32 %v217, %v5126
        %v6633 = vadd.f32 %v218, %v5876
        %v6634 = vadd.f32 %v219, %v5877
        %v6635 = vadd.f32 %v220, %v6627
        %v6636 = vadd.f32 %v221, %v6628
        %6637 = vst.msk [vmem:[%s213] sm:$0xff] %vm1133, %v6629
        %6638 = vst.msk [vmem:[%s213 + $0x8] sm:$0xff] %vm1133, %v6630
        %6639 = vst.msk [vmem:[%s213 + $0x10] sm:$0xff] %vm1133, %v6631
        %6640 = vst.msk [vmem:[%s213 + $0x18] sm:$0xff] %vm1133, %v6632
        %6641 = vst.msk [vmem:[%s213 + $0x20] sm:$0xff] %vm1133, %v6633
        %6642 = vst.msk [vmem:[%s213 + $0x28] sm:$0xff] %vm1133, %v6634
        %6643 = vst.msk [vmem:[%s213 + $0x30] sm:$0xff] %vm1133, %v6635
        %6644 = vst.msk [vmem:[%s213 + $0x38] sm:$0xff] %vm1133, %v6636
        %s6645 = sand.u32 %s98, 1
        %s6646 = scalar_lea.sflag [#allocation4], %s6645
        %s6647 = sand.u32 %s98, 1
        %s6648 = smul.addr %s6647, 64
        %s6649 = scalar_lea.vmem [#allocation9], %s6648
        // Predicated region
        $region45: #{tpu_custom_call.1} parent=31 // pred_check
          %p6650 = pneg %p108
        $region46: #{tpu_custom_call.1} parent=31 // pred_check_branch
          %6652 = sbr.rel (%p6650) target = $region48
        $region47: #{tpu_custom_call.1} parent=31 // pred_region
          %s6654 = ssub.s32 1024, 1024
          %6655 = vsyncadd %s6646, %s6654
          %s6656 = smul.addr %s22, 8
          %s6657 = smul.addr %s6656, 128
          %s6658 = scalar_lea.hbm %s3, %s6657
          %s6659 = sshll.u32 %s6649, 4
          %s6660 = int_to_ptr.vmem [resolvable:$true] %s6659
          %6665 = dma.vmem_to_hbm [thread:$0]  %s6660, 1024, %s6658, %s6646, 128, 128, 8
        $region48: #{tpu_custom_call.1} parent=31 // pred_fallthru
          _
      $region32: #{tpu_custom_call.1} parent=5 // pred_fallthru
        _
      %p6666 = scmp.le.s32.totalorder 2, %s17
      // Predicated region
      $region49: #{tpu_custom_call.1} parent=5 // pred_check
        %p6667 = pneg %p6666
      $region50: #{tpu_custom_call.1} parent=5 // pred_check_branch
        %6669 = sbr.rel (%p6667) target = $region52
      $region51: #{tpu_custom_call.1} parent=5 // pred_region
        %s6670 = ssub.s32 %s17, 2
        // Predicated region
        $region53: #{tpu_custom_call.1} parent=51 // pred_check
          %p6671 = pneg %p114
        $region54: #{tpu_custom_call.1} parent=51 // pred_check_branch
          %6673 = sbr.rel (%p6671) target = $region56
        $region55: #{tpu_custom_call.1} parent=51 // pred_region
          %s6674 = sand.u32 %s99, 1
          %s6675 = scalar_lea.sflag [#allocation4], %s6674
          %s6676 = sand.u32 %s99, 1
          %s6677 = smul.addr %s6676, 64
          %s6678 = scalar_lea.vmem [#allocation9], %s6677
          %6679 = dma.done %s6675, 1024
        $region56: #{tpu_custom_call.1} parent=51 // pred_fallthru
          _
      $region52: #{tpu_custom_call.1} parent=5 // pred_fallthru
        _
    $region6: #{tpu_custom_call.1} parent=1 // loop_footer
      %s21 = sadd.s32 1, %s17
    $region7: #{tpu_custom_call.1} parent=1 // loop_footer_branch
      %16 = sbr.rel target = $region3
    $region8: #{tpu_custom_call.1} parent=1 // loop_exit
      _
    %6680 = vsyncpa [#allocation3], 1
    %s6681 = scalar_lea.sflag [#allocation3], 1
    %6682 = vsyncpa %s6681, 1
    %6683 = vsyncpa [#allocation4], 1
    %s6684 = scalar_lea.sflag [#allocation4], 1
    %6685 = vsyncpa %s6684, 1
    %6686 = vsyncpa [#allocation5], 1
    %s6687 = scalar_lea.sflag [#allocation5], 1
    %6688 = vsyncpa %s6687, 1
    %6689 = vsyncpa [#allocation6], 1
    %s6690 = scalar_lea.sflag [#allocation6], 1
    %6691 = vsyncpa %s6690, 1

</llo_original>
